<compile_context>
chip_gen: v7x
topology: tpu7x:2x2x1
jax: 0.10.0
libtpu: 0.0.40
codegen_flags: <defaults>
</compile_context>

<pallas_src>
import math
import functools

import jax
import jax.numpy as jnp
from jax.experimental import pallas as pl
from jax.experimental.pallas import tpu as pltpu

PAD = 128  # lane-block width per attention head


def _layernorm(x, w, b, eps=1e-5):
    mu = jnp.mean(x, axis=-1, keepdims=True)
    xc = x - mu
    var = jnp.mean(xc * xc, axis=-1, keepdims=True)
    return xc * jax.lax.rsqrt(var + eps) * w + b


def _softmax(x, axis):
    m = jnp.max(x, axis=axis, keepdims=True)
    e = jnp.exp(x - m)
    # EUP reciprocal: frees the VPU divide slot in this overhead-bound kernel.
    return e * pl.reciprocal(jnp.sum(e, axis=axis, keepdims=True), approx=True)


def _net_kernel(x_ref, wqkv_ref, bqkv_ref, wo_ref, bo_ref,
                w1_ref, b1_ref, w2_ref, b2_ref,
                ln1w_ref, ln1b_ref, ln2w_ref, ln2b_ref,
                out_ref, qkv_s, ao_s, *, B, S, D, L, H):
    BS = B * S

    # x = F.relu(x); activations are batch-folded to (B*S, D) by the wrapper.
    h = jnp.maximum(x_ref[...], 0.0)

    # Block-diagonal (same-batch) additive mask, generated in-kernel and hoisted
    # out of the layer loop.  floor((i + 0.5)/S) is a robust integer block id.
    ri = jax.lax.broadcasted_iota(jnp.int32, (BS, BS), 0).astype(jnp.float32)
    ci = jax.lax.broadcasted_iota(jnp.int32, (BS, BS), 1).astype(jnp.float32)
    inv_s = 1.0 / float(S)
    same = jnp.floor((ri + 0.5) * inv_s) == jnp.floor((ci + 0.5) * inv_s)
    mask = jnp.where(same, 0.0, -1e30).astype(jnp.float32)

    # Fully unrolled layer loop (L static) -> static weight-ref addressing.
    for li in range(L):
        # ---- fused QKV projection: one MXU op for all batches/heads/q/k/v ----
        # (1/sqrt(head_dim) is pre-folded into the Q columns of wqkv/bqkv.)
        qkv_s[...] = (jnp.dot(h, wqkv_ref[li], preferred_element_type=jnp.float32)
                      + bqkv_ref[li])                       # (B*S, 3*H*PAD)

        # ---- attention core, batch-folded via the block-diagonal mask ----
        for hh in range(H):
            # Static 128-aligned full-block slices (zero pad lanes beyond HD).
            q = qkv_s[:, hh * PAD:(hh + 1) * PAD]
            k = qkv_s[:, (H + hh) * PAD:(H + hh + 1) * PAD]
            v = qkv_s[:, (2 * H + hh) * PAD:(2 * H + hh + 1) * PAD]
            # scores = q @ k^T (pad lanes are zero in both -> no contribution).
            s = jax.lax.dot_general(q, k, (((1,), (1,)), ((), ())),
                                    preferred_element_type=jnp.float32) + mask
            p = _softmax(s, axis=-1)
            # Full 128-lane aligned store (v pad lanes are zero -> product pad
            # lanes are zero).
            ao_s[:, hh * PAD:(hh + 1) * PAD] = jnp.dot(
                p, v, preferred_element_type=jnp.float32)

        # ---- fused out-projection over all batches / heads (zero pad rows) ----
        attn = (jnp.dot(ao_s[...], wo_ref[li], preferred_element_type=jnp.float32)
                + bo_ref[li])
        h = _layernorm(h + attn, ln1w_ref[li], ln1b_ref[li])

        # ---- feed-forward (linear -> relu -> linear), batch-folded ----
        f = jnp.dot(h, w1_ref[li], preferred_element_type=jnp.float32) + b1_ref[li]
        f = jnp.maximum(f, 0.0)
        f = jnp.dot(f, w2_ref[li], preferred_element_type=jnp.float32) + b2_ref[li]
        h = _layernorm(h + f, ln2w_ref[li], ln2b_ref[li])

    # ---- head: x1 = softmax(out1, dim=1); x2 = softmax(out1^T, dim=2) == x1^T;
    #      out = hardtanh(x1 + x2, 0, 1).  Static value slices per batch (no
    #      scratch round-trip). ----
    for b in range(B):
        hb = h[b * S:(b + 1) * S, :]               # (S, D)
        x1 = _softmax(hb, axis=0)                  # F.softmax(out1, 1)
        out_ref[b] = jnp.clip(x1 + x1.T, 0.0, 1.0)


def net_forward(x, params, *, nhead):
    B, S, D = x.shape
    assert S == D, "Net requires a square (TSP_size x TSP_size) input"
    L = params["wqkv"].shape[0]
    H = nhead
    BS = B * S

    # Batch folded into the sublane axis (free HBM-layout reshape).
    xf = x.reshape(BS, D)

    kernel = functools.partial(_net_kernel, B=B, S=S, D=D, L=L, H=H)
    args = (xf,
            params["wqkv"], params["bqkv"], params["wo"], params["bo"],
            params["w1"], params["b1"], params["w2"], params["b2"],
            params["ln1w"], params["ln1b"], params["ln2w"], params["ln2b"])

    vmem = pltpu.MemorySpace.VMEM
    return pl.pallas_call(
        kernel,
        out_shape=jax.ShapeDtypeStruct((B, S, D), jnp.float32),
        in_specs=[pl.BlockSpec(memory_space=vmem) for _ in args],
        out_specs=pl.BlockSpec(memory_space=vmem),
        scratch_shapes=[pltpu.VMEM((BS, 3 * H * PAD), jnp.float32),  # fused qkv
                        pltpu.VMEM((BS, H * PAD), jnp.float32)],     # attn out
    )(*args)


def make_params(key, tsp_size, ff_dim, nhead, n_layers):
    D, FF, H, L = tsp_size, ff_dim, nhead, n_layers
    HD = D // H
    sd = 0.05
    f32 = jnp.float32
    ks = jax.random.split(key, 8)

    # Fused in_proj, pre-transposed (activations @ W). Columns ordered
    # [Q head0..H-1 | K head0..H-1 | V head0..H-1], each head HD wide.
    wqkv = jax.random.normal(ks[0], (L, D, 3 * D), f32) * sd
    bqkv = jax.random.normal(ks[1], (L, 1, 3 * D), f32) * sd
    # Fold the 1/sqrt(head_dim) attention scale into the query projection.
    q_scale = jnp.concatenate([jnp.full((D,), 1.0 / math.sqrt(HD), f32),
                               jnp.ones((2 * D,), f32)])
    wqkv = wqkv * q_scale
    bqkv = bqkv * q_scale

    def pad_lane_blocks(w):
        # Pad each HD-wide head block (last dim) to a 128-lane block with zeros.
        lead = w.shape[:-1]
        nb = w.shape[-1] // HD
        wb = w.reshape(*lead, nb, HD)
        out = jnp.zeros(lead + (nb, PAD), f32).at[..., :HD].set(wb)
        return out.reshape(*lead, nb * PAD)

    wqkv_p = pad_lane_blocks(wqkv)     # (L, D, 3*H*128)
    bqkv_p = pad_lane_blocks(bqkv)     # (L, 1, 3*H*128)

    # out_proj, pre-transposed; rows indexed by the concatenated-head dim.
    # Zero-pad each head's HD rows up to 128 to match the padded ao_s layout.
    wo = jax.random.normal(ks[2], (L, D, D), f32) * sd
    wo_p = jnp.zeros((L, H, PAD, D), f32).at[:, :, :HD, :].set(
        wo.reshape(L, H, HD, D)).reshape(L, H * PAD, D)

    return dict(
        wqkv=wqkv_p, bqkv=bqkv_p,
        wo=wo_p,
        bo=jax.random.normal(ks[3], (L, 1, D), f32) * sd,
        # feed-forward (pre-transposed)
        w1=jax.random.normal(ks[4], (L, D, FF), f32) * sd,
        b1=jax.random.normal(ks[5], (L, 1, FF), f32) * sd,
        w2=jax.random.normal(ks[6], (L, FF, D), f32) * sd,
        b2=jax.random.normal(ks[7], (L, 1, D), f32) * sd,
        # layer norms
        ln1w=jnp.ones((L, 1, D), f32), ln1b=jnp.zeros((L, 1, D), f32),
        ln2w=jnp.ones((L, 1, D), f32), ln2b=jnp.zeros((L, 1, D), f32),
    )


if __name__ == "__main__":
    TSP_size = 20                                  # d_model == seq_len (square input)
    ff_dim = 64                                    # small dim_feedforward for the demo
    batch = 2
    nhead = TSP_size // 10                         # as in the PyTorch __init__ (=2)
    n_layers = math.ceil(math.log(TSP_size, 2))    # = 5

    key = jax.random.PRNGKey(0)
    kp, kx = jax.random.split(key)
    params = make_params(kp, TSP_size, ff_dim, nhead, n_layers)
    x = jax.random.normal(kx, (batch, TSP_size, TSP_size), jnp.float32)

    out = net_forward(x, params, nhead=nhead)
    out = jax.block_until_ready(out)
    assert out.shape == (batch, TSP_size, TSP_size)
    assert bool(jnp.all(jnp.isfinite(out)))
    assert bool(jnp.all((out >= 0.0) & (out <= 1.0)))
    print("KERNEL_OK")
</pallas_src>

<mosaic_0001>
module attributes {stable_mosaic.version = 11 : i64} {
  func.func @_net_kernel(%arg0: memref<40x20xf32, #tpu.memory_space<vmem>>, %arg1: memref<5x20x768xf32, #tpu.memory_space<vmem>>, %arg2: memref<5x1x768xf32, #tpu.memory_space<vmem>>, %arg3: memref<5x256x20xf32, #tpu.memory_space<vmem>>, %arg4: memref<5x1x20xf32, #tpu.memory_space<vmem>>, %arg5: memref<5x20x64xf32, #tpu.memory_space<vmem>>, %arg6: memref<5x1x64xf32, #tpu.memory_space<vmem>>, %arg7: memref<5x64x20xf32, #tpu.memory_space<vmem>>, %arg8: memref<5x1x20xf32, #tpu.memory_space<vmem>>, %arg9: memref<5x1x20xf32, #tpu.memory_space<vmem>>, %arg10: memref<5x1x20xf32, #tpu.memory_space<vmem>>, %arg11: memref<5x1x20xf32, #tpu.memory_space<vmem>>, %arg12: memref<5x1x20xf32, #tpu.memory_space<vmem>>, %arg13: memref<2x20x20xf32, #tpu.memory_space<vmem>>, %arg14: memref<40x768xf32, #tpu.memory_space<vmem>>, %arg15: memref<40x256xf32, #tpu.memory_space<vmem>>) attributes {dimension_semantics = [], scalar_prefetch = 0 : i64, scratch_operands = 2 : i64, tpu.core_type = #tpu.core_type<tc>} {
    %c0 = arith.constant 0 : index
    %c0_0 = arith.constant 0 : index
    %0 = vector.load %arg0[%c0, %c0_0] : memref<40x20xf32, #tpu.memory_space<vmem>>, vector<40x20xf32>
    %cst = arith.constant 0.000000e+00 : f32
    %1 = vector.broadcast %cst : f32 to vector<40x20xf32>
    %2 = arith.maximumf %0, %1 : vector<40x20xf32>
    %3 = tpu.iota {dimensions = array<i32: 0>} : vector<40x40xi32>
    %4 = arith.sitofp %3 : vector<40x40xi32> to vector<40x40xf32>
    %5 = tpu.iota {dimensions = array<i32: 1>} : vector<40x40xi32>
    %6 = arith.sitofp %5 : vector<40x40xi32> to vector<40x40xf32>
    %cst_1 = arith.constant 5.000000e-01 : f32
    %7 = vector.broadcast %cst_1 : f32 to vector<40x40xf32>
    %8 = arith.addf %4, %7 : vector<40x40xf32>
    %cst_2 = arith.constant 5.000000e-02 : f32
    %9 = vector.broadcast %cst_2 : f32 to vector<40x40xf32>
    %10 = arith.mulf %8, %9 : vector<40x40xf32>
    %11 = math.floor %10 : vector<40x40xf32>
    %cst_3 = arith.constant 5.000000e-01 : f32
    %12 = vector.broadcast %cst_3 : f32 to vector<40x40xf32>
    %13 = arith.addf %6, %12 : vector<40x40xf32>
    %cst_4 = arith.constant 5.000000e-02 : f32
    %14 = vector.broadcast %cst_4 : f32 to vector<40x40xf32>
    %15 = arith.mulf %13, %14 : vector<40x40xf32>
    %16 = math.floor %15 : vector<40x40xf32>
    %17 = arith.cmpf oeq, %11, %16 : vector<40x40xf32>
    %cst_5 = arith.constant 0.000000e+00 : f32
    %cst_6 = arith.constant -1.000000e+30 : f32
    %18 = vector.broadcast %cst_5 : f32 to vector<40x40xf32>
    %19 = vector.broadcast %cst_6 : f32 to vector<40x40xf32>
    %20 = arith.select %17, %18, %19 : vector<40x40xi1>, vector<40x40xf32>
    %c0_7 = arith.constant 0 : index
    %c0_8 = arith.constant 0 : index
    %c0_9 = arith.constant 0 : index
    %21 = vector.load %arg1[%c0_7, %c0_8, %c0_9] : memref<5x20x768xf32, #tpu.memory_space<vmem>>, vector<1x20x768xf32>
    %22 = vector.shape_cast %21 : vector<1x20x768xf32> to vector<20x768xf32>
    %cst_10 = arith.constant dense<0.000000e+00> : vector<40x768xf32>
    %23 = tpu.matmul %2, %22, %cst_10 {dimension_numbers = #tpu.dot_dimension_numbers<[1], [0], [0], [1], [0, 0, 1, 1], [], []>} : vector<40x20xf32>, vector<20x768xf32>, vector<40x768xf32> -> vector<40x768xf32>
    %c0_11 = arith.constant 0 : index
    %c0_12 = arith.constant 0 : index
    %c0_13 = arith.constant 0 : index
    %24 = vector.load %arg2[%c0_11, %c0_12, %c0_13] : memref<5x1x768xf32, #tpu.memory_space<vmem>>, vector<1x1x768xf32>
    %25 = vector.shape_cast %24 : vector<1x1x768xf32> to vector<1x768xf32>
    %26 = vector.broadcast %25 : vector<1x768xf32> to vector<40x768xf32>
    %27 = arith.addf %23, %26 : vector<40x768xf32>
    %c0_14 = arith.constant 0 : index
    %c0_15 = arith.constant 0 : index
    %28 = vector.load %arg14[%c0_14, %c0_15] : memref<40x768xf32, #tpu.memory_space<vmem>>, vector<40x768xf32>
    tpu.vector_store %arg14[%c0_14, %c0_15], %27 {strides = array<i32>} : memref<40x768xf32, #tpu.memory_space<vmem>>, vector<40x768xf32>,
    %c0_16 = arith.constant 0 : index
    %c0_17 = arith.constant 0 : index
    %29 = vector.load %arg14[%c0_16, %c0_17] : memref<40x768xf32, #tpu.memory_space<vmem>>, vector<40x128xf32>
    %c0_18 = arith.constant 0 : index
    %c256 = arith.constant 256 : index
    %30 = vector.load %arg14[%c0_18, %c256] : memref<40x768xf32, #tpu.memory_space<vmem>>, vector<40x128xf32>
    %c0_19 = arith.constant 0 : index
    %c512 = arith.constant 512 : index
    %31 = vector.load %arg14[%c0_19, %c512] : memref<40x768xf32, #tpu.memory_space<vmem>>, vector<40x128xf32>
    %cst_20 = arith.constant dense<0.000000e+00> : vector<40x40xf32>
    %32 = tpu.matmul %29, %30, %cst_20 {dimension_numbers = #tpu.dot_dimension_numbers<[1], [1], [0], [0], [0, 0, 1, 0], [], []>} : vector<40x128xf32>, vector<40x128xf32>, vector<40x40xf32> -> vector<40x40xf32>
    %33 = arith.addf %32, %20 : vector<40x40xf32>
    %cst_21 = arith.constant dense<0xFF800000> : vector<40xf32>
    %34 = vector.multi_reduction <maximumf>, %33, %cst_21 [1] : vector<40x40xf32> to vector<40xf32>
    %35 = vector.shape_cast %34 : vector<40xf32> to vector<40x1xf32>
    %36 = vector.broadcast %35 : vector<40x1xf32> to vector<40x40xf32>
    %37 = arith.subf %33, %36 : vector<40x40xf32>
    %38 = math.exp %37 : vector<40x40xf32>
    %cst_22 = arith.constant dense<0.000000e+00> : vector<40xf32>
    %39 = vector.multi_reduction <add>, %38, %cst_22 [1] : vector<40x40xf32> to vector<40xf32>
    %40 = vector.shape_cast %39 : vector<40xf32> to vector<40x1xf32>
    %41 = tpu.reciprocal %40 {approx = true} : vector<40x1xf32> -> vector<40x1xf32>
    %42 = vector.broadcast %41 : vector<40x1xf32> to vector<40x40xf32>
    %43 = arith.mulf %38, %42 : vector<40x40xf32>
    %cst_23 = arith.constant dense<0.000000e+00> : vector<40x128xf32>
    %44 = tpu.matmul %43, %31, %cst_23 {dimension_numbers = #tpu.dot_dimension_numbers<[1], [0], [0], [1], [0, 0, 1, 1], [], []>} : vector<40x40xf32>, vector<40x128xf32>, vector<40x128xf32> -> vector<40x128xf32>
    %c0_24 = arith.constant 0 : index
    %c0_25 = arith.constant 0 : index
    %45 = vector.load %arg15[%c0_24, %c0_25] : memref<40x256xf32, #tpu.memory_space<vmem>>, vector<40x128xf32>
    tpu.vector_store %arg15[%c0_24, %c0_25], %44 {strides = array<i32>} : memref<40x256xf32, #tpu.memory_space<vmem>>, vector<40x128xf32>,
    %c0_26 = arith.constant 0 : index
    %c128 = arith.constant 128 : index
    %46 = vector.load %arg14[%c0_26, %c128] : memref<40x768xf32, #tpu.memory_space<vmem>>, vector<40x128xf32>
    %c0_27 = arith.constant 0 : index
    %c384 = arith.constant 384 : index
    %47 = vector.load %arg14[%c0_27, %c384] : memref<40x768xf32, #tpu.memory_space<vmem>>, vector<40x128xf32>
    %c0_28 = arith.constant 0 : index
    %c640 = arith.constant 640 : index
    %48 = vector.load %arg14[%c0_28, %c640] : memref<40x768xf32, #tpu.memory_space<vmem>>, vector<40x128xf32>
    %cst_29 = arith.constant dense<0.000000e+00> : vector<40x40xf32>
    %49 = tpu.matmul %46, %47, %cst_29 {dimension_numbers = #tpu.dot_dimension_numbers<[1], [1], [0], [0], [0, 0, 1, 0], [], []>} : vector<40x128xf32>, vector<40x128xf32>, vector<40x40xf32> -> vector<40x40xf32>
    %50 = arith.addf %49, %20 : vector<40x40xf32>
    %cst_30 = arith.constant dense<0xFF800000> : vector<40xf32>
    %51 = vector.multi_reduction <maximumf>, %50, %cst_30 [1] : vector<40x40xf32> to vector<40xf32>
    %52 = vector.shape_cast %51 : vector<40xf32> to vector<40x1xf32>
    %53 = vector.broadcast %52 : vector<40x1xf32> to vector<40x40xf32>
    %54 = arith.subf %50, %53 : vector<40x40xf32>
    %55 = math.exp %54 : vector<40x40xf32>
    %cst_31 = arith.constant dense<0.000000e+00> : vector<40xf32>
    %56 = vector.multi_reduction <add>, %55, %cst_31 [1] : vector<40x40xf32> to vector<40xf32>
    %57 = vector.shape_cast %56 : vector<40xf32> to vector<40x1xf32>
    %58 = tpu.reciprocal %57 {approx = true} : vector<40x1xf32> -> vector<40x1xf32>
    %59 = vector.broadcast %58 : vector<40x1xf32> to vector<40x40xf32>
    %60 = arith.mulf %55, %59 : vector<40x40xf32>
    %cst_32 = arith.constant dense<0.000000e+00> : vector<40x128xf32>
    %61 = tpu.matmul %60, %48, %cst_32 {dimension_numbers = #tpu.dot_dimension_numbers<[1], [0], [0], [1], [0, 0, 1, 1], [], []>} : vector<40x40xf32>, vector<40x128xf32>, vector<40x128xf32> -> vector<40x128xf32>
    %c0_33 = arith.constant 0 : index
    %c128_34 = arith.constant 128 : index
    %62 = vector.load %arg15[%c0_33, %c128_34] : memref<40x256xf32, #tpu.memory_space<vmem>>, vector<40x128xf32>
    tpu.vector_store %arg15[%c0_33, %c128_34], %61 {strides = array<i32>} : memref<40x256xf32, #tpu.memory_space<vmem>>, vector<40x128xf32>,
    %c0_35 = arith.constant 0 : index
    %c0_36 = arith.constant 0 : index
    %63 = vector.load %arg15[%c0_35, %c0_36] : memref<40x256xf32, #tpu.memory_space<vmem>>, vector<40x256xf32>
    %c0_37 = arith.constant 0 : index
    %c0_38 = arith.constant 0 : index
    %c0_39 = arith.constant 0 : index
    %64 = vector.load %arg3[%c0_37, %c0_38, %c0_39] : memref<5x256x20xf32, #tpu.memory_space<vmem>>, vector<1x256x20xf32>
    %65 = vector.shape_cast %64 : vector<1x256x20xf32> to vector<256x20xf32>
    %cst_40 = arith.constant dense<0.000000e+00> : vector<40x20xf32>
    %66 = tpu.matmul %63, %65, %cst_40 {dimension_numbers = #tpu.dot_dimension_numbers<[1], [0], [0], [1], [0, 0, 1, 1], [], []>} : vector<40x256xf32>, vector<256x20xf32>, vector<40x20xf32> -> vector<40x20xf32>
    %c0_41 = arith.constant 0 : index
    %c0_42 = arith.constant 0 : index
    %c0_43 = arith.constant 0 : index
    %67 = vector.load %arg4[%c0_41, %c0_42, %c0_43] : memref<5x1x20xf32, #tpu.memory_space<vmem>>, vector<1x1x20xf32>
    %68 = vector.shape_cast %67 : vector<1x1x20xf32> to vector<1x20xf32>
    %69 = vector.broadcast %68 : vector<1x20xf32> to vector<40x20xf32>
    %70 = arith.addf %66, %69 : vector<40x20xf32>
    %71 = arith.addf %2, %70 : vector<40x20xf32>
    %c0_44 = arith.constant 0 : index
    %c0_45 = arith.constant 0 : index
    %c0_46 = arith.constant 0 : index
    %72 = vector.load %arg9[%c0_44, %c0_45, %c0_46] : memref<5x1x20xf32, #tpu.memory_space<vmem>>, vector<1x1x20xf32>
    %73 = vector.shape_cast %72 : vector<1x1x20xf32> to vector<1x20xf32>
    %c0_47 = arith.constant 0 : index
    %c0_48 = arith.constant 0 : index
    %c0_49 = arith.constant 0 : index
    %74 = vector.load %arg10[%c0_47, %c0_48, %c0_49] : memref<5x1x20xf32, #tpu.memory_space<vmem>>, vector<1x1x20xf32>
    %75 = vector.shape_cast %74 : vector<1x1x20xf32> to vector<1x20xf32>
    %cst_50 = arith.constant dense<0.000000e+00> : vector<40xf32>
    %76 = vector.multi_reduction <add>, %71, %cst_50 [1] : vector<40x20xf32> to vector<40xf32>
    %77 = vector.shape_cast %76 : vector<40xf32> to vector<40x1xf32>
    %cst_51 = arith.constant 2.000000e+01 : f32
    %78 = vector.broadcast %cst_51 : f32 to vector<40x1xf32>
    %79 = arith.divf %77, %78 : vector<40x1xf32>
    %80 = vector.broadcast %79 : vector<40x1xf32> to vector<40x20xf32>
    %81 = arith.subf %71, %80 : vector<40x20xf32>
    %82 = arith.mulf %81, %81 : vector<40x20xf32>
    %cst_52 = arith.constant dense<0.000000e+00> : vector<40xf32>
    %83 = vector.multi_reduction <add>, %82, %cst_52 [1] : vector<40x20xf32> to vector<40xf32>
    %84 = vector.shape_cast %83 : vector<40xf32> to vector<40x1xf32>
    %cst_53 = arith.constant 2.000000e+01 : f32
    %85 = vector.broadcast %cst_53 : f32 to vector<40x1xf32>
    %86 = arith.divf %84, %85 : vector<40x1xf32>
    %cst_54 = arith.constant 9.99999974E-6 : f32
    %87 = vector.broadcast %cst_54 : f32 to vector<40x1xf32>
    %88 = arith.addf %86, %87 : vector<40x1xf32>
    %89 = math.rsqrt %88 : vector<40x1xf32>
    %90 = vector.broadcast %89 : vector<40x1xf32> to vector<40x20xf32>
    %91 = arith.mulf %81, %90 : vector<40x20xf32>
    %92 = vector.broadcast %73 : vector<1x20xf32> to vector<40x20xf32>
    %93 = arith.mulf %91, %92 : vector<40x20xf32>
    %94 = vector.broadcast %75 : vector<1x20xf32> to vector<40x20xf32>
    %95 = arith.addf %93, %94 : vector<40x20xf32>
    %c0_55 = arith.constant 0 : index
    %c0_56 = arith.constant 0 : index
    %c0_57 = arith.constant 0 : index
    %96 = vector.load %arg5[%c0_55, %c0_56, %c0_57] : memref<5x20x64xf32, #tpu.memory_space<vmem>>, vector<1x20x64xf32>
    %97 = vector.shape_cast %96 : vector<1x20x64xf32> to vector<20x64xf32>
    %cst_58 = arith.constant dense<0.000000e+00> : vector<40x64xf32>
    %98 = tpu.matmul %95, %97, %cst_58 {dimension_numbers = #tpu.dot_dimension_numbers<[1], [0], [0], [1], [0, 0, 1, 1], [], []>} : vector<40x20xf32>, vector<20x64xf32>, vector<40x64xf32> -> vector<40x64xf32>
    %c0_59 = arith.constant 0 : index
    %c0_60 = arith.constant 0 : index
    %c0_61 = arith.constant 0 : index
    %99 = vector.load %arg6[%c0_59, %c0_60, %c0_61] : memref<5x1x64xf32, #tpu.memory_space<vmem>>, vector<1x1x64xf32>
    %100 = vector.shape_cast %99 : vector<1x1x64xf32> to vector<1x64xf32>
    %101 = vector.broadcast %100 : vector<1x64xf32> to vector<40x64xf32>
    %102 = arith.addf %98, %101 : vector<40x64xf32>
    %cst_62 = arith.constant 0.000000e+00 : f32
    %103 = vector.broadcast %cst_62 : f32 to vector<40x64xf32>
    %104 = arith.maximumf %102, %103 : vector<40x64xf32>
    %c0_63 = arith.constant 0 : index
    %c0_64 = arith.constant 0 : index
    %c0_65 = arith.constant 0 : index
    %105 = vector.load %arg7[%c0_63, %c0_64, %c0_65] : memref<5x64x20xf32, #tpu.memory_space<vmem>>, vector<1x64x20xf32>
    %106 = vector.shape_cast %105 : vector<1x64x20xf32> to vector<64x20xf32>
    %cst_66 = arith.constant dense<0.000000e+00> : vector<40x20xf32>
    %107 = tpu.matmul %104, %106, %cst_66 {dimension_numbers = #tpu.dot_dimension_numbers<[1], [0], [0], [1], [0, 0, 1, 1], [], []>} : vector<40x64xf32>, vector<64x20xf32>, vector<40x20xf32> -> vector<40x20xf32>
    %c0_67 = arith.constant 0 : index
    %c0_68 = arith.constant 0 : index
    %c0_69 = arith.constant 0 : index
    %108 = vector.load %arg8[%c0_67, %c0_68, %c0_69] : memref<5x1x20xf32, #tpu.memory_space<vmem>>, vector<1x1x20xf32>
    %109 = vector.shape_cast %108 : vector<1x1x20xf32> to vector<1x20xf32>
    %110 = vector.broadcast %109 : vector<1x20xf32> to vector<40x20xf32>
    %111 = arith.addf %107, %110 : vector<40x20xf32>
    %112 = arith.addf %95, %111 : vector<40x20xf32>
    %c0_70 = arith.constant 0 : index
    %c0_71 = arith.constant 0 : index
    %c0_72 = arith.constant 0 : index
    %113 = vector.load %arg11[%c0_70, %c0_71, %c0_72] : memref<5x1x20xf32, #tpu.memory_space<vmem>>, vector<1x1x20xf32>
    %114 = vector.shape_cast %113 : vector<1x1x20xf32> to vector<1x20xf32>
    %c0_73 = arith.constant 0 : index
    %c0_74 = arith.constant 0 : index
    %c0_75 = arith.constant 0 : index
    %115 = vector.load %arg12[%c0_73, %c0_74, %c0_75] : memref<5x1x20xf32, #tpu.memory_space<vmem>>, vector<1x1x20xf32>
    %116 = vector.shape_cast %115 : vector<1x1x20xf32> to vector<1x20xf32>
    %cst_76 = arith.constant dense<0.000000e+00> : vector<40xf32>
    %117 = vector.multi_reduction <add>, %112, %cst_76 [1] : vector<40x20xf32> to vector<40xf32>
    %118 = vector.shape_cast %117 : vector<40xf32> to vector<40x1xf32>
    %cst_77 = arith.constant 2.000000e+01 : f32
    %119 = vector.broadcast %cst_77 : f32 to vector<40x1xf32>
    %120 = arith.divf %118, %119 : vector<40x1xf32>
    %121 = vector.broadcast %120 : vector<40x1xf32> to vector<40x20xf32>
    %122 = arith.subf %112, %121 : vector<40x20xf32>
    %123 = arith.mulf %122, %122 : vector<40x20xf32>
    %cst_78 = arith.constant dense<0.000000e+00> : vector<40xf32>
    %124 = vector.multi_reduction <add>, %123, %cst_78 [1] : vector<40x20xf32> to vector<40xf32>
    %125 = vector.shape_cast %124 : vector<40xf32> to vector<40x1xf32>
    %cst_79 = arith.constant 2.000000e+01 : f32
    %126 = vector.broadcast %cst_79 : f32 to vector<40x1xf32>
    %127 = arith.divf %125, %126 : vector<40x1xf32>
    %cst_80 = arith.constant 9.99999974E-6 : f32
    %128 = vector.broadcast %cst_80 : f32 to vector<40x1xf32>
    %129 = arith.addf %127, %128 : vector<40x1xf32>
    %130 = math.rsqrt %129 : vector<40x1xf32>
    %131 = vector.broadcast %130 : vector<40x1xf32> to vector<40x20xf32>
    %132 = arith.mulf %122, %131 : vector<40x20xf32>
    %133 = vector.broadcast %114 : vector<1x20xf32> to vector<40x20xf32>
    %134 = arith.mulf %132, %133 : vector<40x20xf32>
    %135 = vector.broadcast %116 : vector<1x20xf32> to vector<40x20xf32>
    %136 = arith.addf %134, %135 : vector<40x20xf32>
    %c1 = arith.constant 1 : index
    %c0_81 = arith.constant 0 : index
    %c0_82 = arith.constant 0 : index
    %137 = vector.load %arg1[%c1, %c0_81, %c0_82] : memref<5x20x768xf32, #tpu.memory_space<vmem>>, vector<1x20x768xf32>
    %138 = vector.shape_cast %137 : vector<1x20x768xf32> to vector<20x768xf32>
    %cst_83 = arith.constant dense<0.000000e+00> : vector<40x768xf32>
    %139 = tpu.matmul %136, %138, %cst_83 {dimension_numbers = #tpu.dot_dimension_numbers<[1], [0], [0], [1], [0, 0, 1, 1], [], []>} : vector<40x20xf32>, vector<20x768xf32>, vector<40x768xf32> -> vector<40x768xf32>
    %c1_84 = arith.constant 1 : index
    %c0_85 = arith.constant 0 : index
    %c0_86 = arith.constant 0 : index
    %140 = vector.load %arg2[%c1_84, %c0_85, %c0_86] : memref<5x1x768xf32, #tpu.memory_space<vmem>>, vector<1x1x768xf32>
    %141 = vector.shape_cast %140 : vector<1x1x768xf32> to vector<1x768xf32>
    %142 = vector.broadcast %141 : vector<1x768xf32> to vector<40x768xf32>
    %143 = arith.addf %139, %142 : vector<40x768xf32>
    %c0_87 = arith.constant 0 : index
    %c0_88 = arith.constant 0 : index
    %144 = vector.load %arg14[%c0_87, %c0_88] : memref<40x768xf32, #tpu.memory_space<vmem>>, vector<40x768xf32>
    tpu.vector_store %arg14[%c0_87, %c0_88], %143 {strides = array<i32>} : memref<40x768xf32, #tpu.memory_space<vmem>>, vector<40x768xf32>,
    %c0_89 = arith.constant 0 : index
    %c0_90 = arith.constant 0 : index
    %145 = vector.load %arg14[%c0_89, %c0_90] : memref<40x768xf32, #tpu.memory_space<vmem>>, vector<40x128xf32>
    %c0_91 = arith.constant 0 : index
    %c256_92 = arith.constant 256 : index
    %146 = vector.load %arg14[%c0_91, %c256_92] : memref<40x768xf32, #tpu.memory_space<vmem>>, vector<40x128xf32>
    %c0_93 = arith.constant 0 : index
    %c512_94 = arith.constant 512 : index
    %147 = vector.load %arg14[%c0_93, %c512_94] : memref<40x768xf32, #tpu.memory_space<vmem>>, vector<40x128xf32>
    %cst_95 = arith.constant dense<0.000000e+00> : vector<40x40xf32>
    %148 = tpu.matmul %145, %146, %cst_95 {dimension_numbers = #tpu.dot_dimension_numbers<[1], [1], [0], [0], [0, 0, 1, 0], [], []>} : vector<40x128xf32>, vector<40x128xf32>, vector<40x40xf32> -> vector<40x40xf32>
    %149 = arith.addf %148, %20 : vector<40x40xf32>
    %cst_96 = arith.constant dense<0xFF800000> : vector<40xf32>
    %150 = vector.multi_reduction <maximumf>, %149, %cst_96 [1] : vector<40x40xf32> to vector<40xf32>
    %151 = vector.shape_cast %150 : vector<40xf32> to vector<40x1xf32>
    %152 = vector.broadcast %151 : vector<40x1xf32> to vector<40x40xf32>
    %153 = arith.subf %149, %152 : vector<40x40xf32>
    %154 = math.exp %153 : vector<40x40xf32>
    %cst_97 = arith.constant dense<0.000000e+00> : vector<40xf32>
    %155 = vector.multi_reduction <add>, %154, %cst_97 [1] : vector<40x40xf32> to vector<40xf32>
    %156 = vector.shape_cast %155 : vector<40xf32> to vector<40x1xf32>
    %157 = tpu.reciprocal %156 {approx = true} : vector<40x1xf32> -> vector<40x1xf32>
    %158 = vector.broadcast %157 : vector<40x1xf32> to vector<40x40xf32>
    %159 = arith.mulf %154, %158 : vector<40x40xf32>
    %cst_98 = arith.constant dense<0.000000e+00> : vector<40x128xf32>
    %160 = tpu.matmul %159, %147, %cst_98 {dimension_numbers = #tpu.dot_dimension_numbers<[1], [0], [0], [1], [0, 0, 1, 1], [], []>} : vector<40x40xf32>, vector<40x128xf32>, vector<40x128xf32> -> vector<40x128xf32>
    %c0_99 = arith.constant 0 : index
    %c0_100 = arith.constant 0 : index
    %161 = vector.load %arg15[%c0_99, %c0_100] : memref<40x256xf32, #tpu.memory_space<vmem>>, vector<40x128xf32>
    tpu.vector_store %arg15[%c0_99, %c0_100], %160 {strides = array<i32>} : memref<40x256xf32, #tpu.memory_space<vmem>>, vector<40x128xf32>,
    %c0_101 = arith.constant 0 : index
    %c128_102 = arith.constant 128 : index
    %162 = vector.load %arg14[%c0_101, %c128_102] : memref<40x768xf32, #tpu.memory_space<vmem>>, vector<40x128xf32>
    %c0_103 = arith.constant 0 : index
    %c384_104 = arith.constant 384 : index
    %163 = vector.load %arg14[%c0_103, %c384_104] : memref<40x768xf32, #tpu.memory_space<vmem>>, vector<40x128xf32>
    %c0_105 = arith.constant 0 : index
    %c640_106 = arith.constant 640 : index
    %164 = vector.load %arg14[%c0_105, %c640_106] : memref<40x768xf32, #tpu.memory_space<vmem>>, vector<40x128xf32>
    %cst_107 = arith.constant dense<0.000000e+00> : vector<40x40xf32>
    %165 = tpu.matmul %162, %163, %cst_107 {dimension_numbers = #tpu.dot_dimension_numbers<[1], [1], [0], [0], [0, 0, 1, 0], [], []>} : vector<40x128xf32>, vector<40x128xf32>, vector<40x40xf32> -> vector<40x40xf32>
    %166 = arith.addf %165, %20 : vector<40x40xf32>
    %cst_108 = arith.constant dense<0xFF800000> : vector<40xf32>
    %167 = vector.multi_reduction <maximumf>, %166, %cst_108 [1] : vector<40x40xf32> to vector<40xf32>
    %168 = vector.shape_cast %167 : vector<40xf32> to vector<40x1xf32>
    %169 = vector.broadcast %168 : vector<40x1xf32> to vector<40x40xf32>
    %170 = arith.subf %166, %169 : vector<40x40xf32>
    %171 = math.exp %170 : vector<40x40xf32>
    %cst_109 = arith.constant dense<0.000000e+00> : vector<40xf32>
    %172 = vector.multi_reduction <add>, %171, %cst_109 [1] : vector<40x40xf32> to vector<40xf32>
    %173 = vector.shape_cast %172 : vector<40xf32> to vector<40x1xf32>
    %174 = tpu.reciprocal %173 {approx = true} : vector<40x1xf32> -> vector<40x1xf32>
    %175 = vector.broadcast %174 : vector<40x1xf32> to vector<40x40xf32>
    %176 = arith.mulf %171, %175 : vector<40x40xf32>
    %cst_110 = arith.constant dense<0.000000e+00> : vector<40x128xf32>
    %177 = tpu.matmul %176, %164, %cst_110 {dimension_numbers = #tpu.dot_dimension_numbers<[1], [0], [0], [1], [0, 0, 1, 1], [], []>} : vector<40x40xf32>, vector<40x128xf32>, vector<40x128xf32> -> vector<40x128xf32>
    %c0_111 = arith.constant 0 : index
    %c128_112 = arith.constant 128 : index
    %178 = vector.load %arg15[%c0_111, %c128_112] : memref<40x256xf32, #tpu.memory_space<vmem>>, vector<40x128xf32>
    tpu.vector_store %arg15[%c0_111, %c128_112], %177 {strides = array<i32>} : memref<40x256xf32, #tpu.memory_space<vmem>>, vector<40x128xf32>,
    %c0_113 = arith.constant 0 : index
    %c0_114 = arith.constant 0 : index
    %179 = vector.load %arg15[%c0_113, %c0_114] : memref<40x256xf32, #tpu.memory_space<vmem>>, vector<40x256xf32>
    %c1_115 = arith.constant 1 : index
    %c0_116 = arith.constant 0 : index
    %c0_117 = arith.constant 0 : index
    %180 = vector.load %arg3[%c1_115, %c0_116, %c0_117] : memref<5x256x20xf32, #tpu.memory_space<vmem>>, vector<1x256x20xf32>
    %181 = vector.shape_cast %180 : vector<1x256x20xf32> to vector<256x20xf32>
    %cst_118 = arith.constant dense<0.000000e+00> : vector<40x20xf32>
    %182 = tpu.matmul %179, %181, %cst_118 {dimension_numbers = #tpu.dot_dimension_numbers<[1], [0], [0], [1], [0, 0, 1, 1], [], []>} : vector<40x256xf32>, vector<256x20xf32>, vector<40x20xf32> -> vector<40x20xf32>
    %c1_119 = arith.constant 1 : index
    %c0_120 = arith.constant 0 : index
    %c0_121 = arith.constant 0 : index
    %183 = vector.load %arg4[%c1_119, %c0_120, %c0_121] : memref<5x1x20xf32, #tpu.memory_space<vmem>>, vector<1x1x20xf32>
    %184 = vector.shape_cast %183 : vector<1x1x20xf32> to vector<1x20xf32>
    %185 = vector.broadcast %184 : vector<1x20xf32> to vector<40x20xf32>
    %186 = arith.addf %182, %185 : vector<40x20xf32>
    %187 = arith.addf %136, %186 : vector<40x20xf32>
    %c1_122 = arith.constant 1 : index
    %c0_123 = arith.constant 0 : index
    %c0_124 = arith.constant 0 : index
    %188 = vector.load %arg9[%c1_122, %c0_123, %c0_124] : memref<5x1x20xf32, #tpu.memory_space<vmem>>, vector<1x1x20xf32>
    %189 = vector.shape_cast %188 : vector<1x1x20xf32> to vector<1x20xf32>
    %c1_125 = arith.constant 1 : index
    %c0_126 = arith.constant 0 : index
    %c0_127 = arith.constant 0 : index
    %190 = vector.load %arg10[%c1_125, %c0_126, %c0_127] : memref<5x1x20xf32, #tpu.memory_space<vmem>>, vector<1x1x20xf32>
    %191 = vector.shape_cast %190 : vector<1x1x20xf32> to vector<1x20xf32>
    %cst_128 = arith.constant dense<0.000000e+00> : vector<40xf32>
    %192 = vector.multi_reduction <add>, %187, %cst_128 [1] : vector<40x20xf32> to vector<40xf32>
    %193 = vector.shape_cast %192 : vector<40xf32> to vector<40x1xf32>
    %cst_129 = arith.constant 2.000000e+01 : f32
    %194 = vector.broadcast %cst_129 : f32 to vector<40x1xf32>
    %195 = arith.divf %193, %194 : vector<40x1xf32>
    %196 = vector.broadcast %195 : vector<40x1xf32> to vector<40x20xf32>
    %197 = arith.subf %187, %196 : vector<40x20xf32>
    %198 = arith.mulf %197, %197 : vector<40x20xf32>
    %cst_130 = arith.constant dense<0.000000e+00> : vector<40xf32>
    %199 = vector.multi_reduction <add>, %198, %cst_130 [1] : vector<40x20xf32> to vector<40xf32>
    %200 = vector.shape_cast %199 : vector<40xf32> to vector<40x1xf32>
    %cst_131 = arith.constant 2.000000e+01 : f32
    %201 = vector.broadcast %cst_131 : f32 to vector<40x1xf32>
    %202 = arith.divf %200, %201 : vector<40x1xf32>
    %cst_132 = arith.constant 9.99999974E-6 : f32
    %203 = vector.broadcast %cst_132 : f32 to vector<40x1xf32>
    %204 = arith.addf %202, %203 : vector<40x1xf32>
    %205 = math.rsqrt %204 : vector<40x1xf32>
    %206 = vector.broadcast %205 : vector<40x1xf32> to vector<40x20xf32>
    %207 = arith.mulf %197, %206 : vector<40x20xf32>
    %208 = vector.broadcast %189 : vector<1x20xf32> to vector<40x20xf32>
    %209 = arith.mulf %207, %208 : vector<40x20xf32>
    %210 = vector.broadcast %191 : vector<1x20xf32> to vector<40x20xf32>
    %211 = arith.addf %209, %210 : vector<40x20xf32>
    %c1_133 = arith.constant 1 : index
    %c0_134 = arith.constant 0 : index
    %c0_135 = arith.constant 0 : index
    %212 = vector.load %arg5[%c1_133, %c0_134, %c0_135] : memref<5x20x64xf32, #tpu.memory_space<vmem>>, vector<1x20x64xf32>
    %213 = vector.shape_cast %212 : vector<1x20x64xf32> to vector<20x64xf32>
    %cst_136 = arith.constant dense<0.000000e+00> : vector<40x64xf32>
    %214 = tpu.matmul %211, %213, %cst_136 {dimension_numbers = #tpu.dot_dimension_numbers<[1], [0], [0], [1], [0, 0, 1, 1], [], []>} : vector<40x20xf32>, vector<20x64xf32>, vector<40x64xf32> -> vector<40x64xf32>
    %c1_137 = arith.constant 1 : index
    %c0_138 = arith.constant 0 : index
    %c0_139 = arith.constant 0 : index
    %215 = vector.load %arg6[%c1_137, %c0_138, %c0_139] : memref<5x1x64xf32, #tpu.memory_space<vmem>>, vector<1x1x64xf32>
    %216 = vector.shape_cast %215 : vector<1x1x64xf32> to vector<1x64xf32>
    %217 = vector.broadcast %216 : vector<1x64xf32> to vector<40x64xf32>
    %218 = arith.addf %214, %217 : vector<40x64xf32>
    %cst_140 = arith.constant 0.000000e+00 : f32
    %219 = vector.broadcast %cst_140 : f32 to vector<40x64xf32>
    %220 = arith.maximumf %218, %219 : vector<40x64xf32>
    %c1_141 = arith.constant 1 : index
    %c0_142 = arith.constant 0 : index
    %c0_143 = arith.constant 0 : index
    %221 = vector.load %arg7[%c1_141, %c0_142, %c0_143] : memref<5x64x20xf32, #tpu.memory_space<vmem>>, vector<1x64x20xf32>
    %222 = vector.shape_cast %221 : vector<1x64x20xf32> to vector<64x20xf32>
    %cst_144 = arith.constant dense<0.000000e+00> : vector<40x20xf32>
    %223 = tpu.matmul %220, %222, %cst_144 {dimension_numbers = #tpu.dot_dimension_numbers<[1], [0], [0], [1], [0, 0, 1, 1], [], []>} : vector<40x64xf32>, vector<64x20xf32>, vector<40x20xf32> -> vector<40x20xf32>
    %c1_145 = arith.constant 1 : index
    %c0_146 = arith.constant 0 : index
    %c0_147 = arith.constant 0 : index
    %224 = vector.load %arg8[%c1_145, %c0_146, %c0_147] : memref<5x1x20xf32, #tpu.memory_space<vmem>>, vector<1x1x20xf32>
    %225 = vector.shape_cast %224 : vector<1x1x20xf32> to vector<1x20xf32>
    %226 = vector.broadcast %225 : vector<1x20xf32> to vector<40x20xf32>
    %227 = arith.addf %223, %226 : vector<40x20xf32>
    %228 = arith.addf %211, %227 : vector<40x20xf32>
    %c1_148 = arith.constant 1 : index
    %c0_149 = arith.constant 0 : index
    %c0_150 = arith.constant 0 : index
    %229 = vector.load %arg11[%c1_148, %c0_149, %c0_150] : memref<5x1x20xf32, #tpu.memory_space<vmem>>, vector<1x1x20xf32>
    %230 = vector.shape_cast %229 : vector<1x1x20xf32> to vector<1x20xf32>
    %c1_151 = arith.constant 1 : index
    %c0_152 = arith.constant 0 : index
    %c0_153 = arith.constant 0 : index
    %231 = vector.load %arg12[%c1_151, %c0_152, %c0_153] : memref<5x1x20xf32, #tpu.memory_space<vmem>>, vector<1x1x20xf32>
    %232 = vector.shape_cast %231 : vector<1x1x20xf32> to vector<1x20xf32>
    %cst_154 = arith.constant dense<0.000000e+00> : vector<40xf32>
    %233 = vector.multi_reduction <add>, %228, %cst_154 [1] : vector<40x20xf32> to vector<40xf32>
    %234 = vector.shape_cast %233 : vector<40xf32> to vector<40x1xf32>
    %cst_155 = arith.constant 2.000000e+01 : f32
    %235 = vector.broadcast %cst_155 : f32 to vector<40x1xf32>
    %236 = arith.divf %234, %235 : vector<40x1xf32>
    %237 = vector.broadcast %236 : vector<40x1xf32> to vector<40x20xf32>
    %238 = arith.subf %228, %237 : vector<40x20xf32>
    %239 = arith.mulf %238, %238 : vector<40x20xf32>
    %cst_156 = arith.constant dense<0.000000e+00> : vector<40xf32>
    %240 = vector.multi_reduction <add>, %239, %cst_156 [1] : vector<40x20xf32> to vector<40xf32>
    %241 = vector.shape_cast %240 : vector<40xf32> to vector<40x1xf32>
    %cst_157 = arith.constant 2.000000e+01 : f32
    %242 = vector.broadcast %cst_157 : f32 to vector<40x1xf32>
    %243 = arith.divf %241, %242 : vector<40x1xf32>
    %cst_158 = arith.constant 9.99999974E-6 : f32
    %244 = vector.broadcast %cst_158 : f32 to vector<40x1xf32>
    %245 = arith.addf %243, %244 : vector<40x1xf32>
    %246 = math.rsqrt %245 : vector<40x1xf32>
    %247 = vector.broadcast %246 : vector<40x1xf32> to vector<40x20xf32>
    %248 = arith.mulf %238, %247 : vector<40x20xf32>
    %249 = vector.broadcast %230 : vector<1x20xf32> to vector<40x20xf32>
    %250 = arith.mulf %248, %249 : vector<40x20xf32>
    %251 = vector.broadcast %232 : vector<1x20xf32> to vector<40x20xf32>
    %252 = arith.addf %250, %251 : vector<40x20xf32>
    %c2 = arith.constant 2 : index
    %c0_159 = arith.constant 0 : index
    %c0_160 = arith.constant 0 : index
    %253 = vector.load %arg1[%c2, %c0_159, %c0_160] : memref<5x20x768xf32, #tpu.memory_space<vmem>>, vector<1x20x768xf32>
    %254 = vector.shape_cast %253 : vector<1x20x768xf32> to vector<20x768xf32>
    %cst_161 = arith.constant dense<0.000000e+00> : vector<40x768xf32>
    %255 = tpu.matmul %252, %254, %cst_161 {dimension_numbers = #tpu.dot_dimension_numbers<[1], [0], [0], [1], [0, 0, 1, 1], [], []>} : vector<40x20xf32>, vector<20x768xf32>, vector<40x768xf32> -> vector<40x768xf32>
    %c2_162 = arith.constant 2 : index
    %c0_163 = arith.constant 0 : index
    %c0_164 = arith.constant 0 : index
    %256 = vector.load %arg2[%c2_162, %c0_163, %c0_164] : memref<5x1x768xf32, #tpu.memory_space<vmem>>, vector<1x1x768xf32>
    %257 = vector.shape_cast %256 : vector<1x1x768xf32> to vector<1x768xf32>
    %258 = vector.broadcast %257 : vector<1x768xf32> to vector<40x768xf32>
    %259 = arith.addf %255, %258 : vector<40x768xf32>
    %c0_165 = arith.constant 0 : index
    %c0_166 = arith.constant 0 : index
    %260 = vector.load %arg14[%c0_165, %c0_166] : memref<40x768xf32, #tpu.memory_space<vmem>>, vector<40x768xf32>
    tpu.vector_store %arg14[%c0_165, %c0_166], %259 {strides = array<i32>} : memref<40x768xf32, #tpu.memory_space<vmem>>, vector<40x768xf32>,
    %c0_167 = arith.constant 0 : index
    %c0_168 = arith.constant 0 : index
    %261 = vector.load %arg14[%c0_167, %c0_168] : memref<40x768xf32, #tpu.memory_space<vmem>>, vector<40x128xf32>
    %c0_169 = arith.constant 0 : index
    %c256_170 = arith.constant 256 : index
    %262 = vector.load %arg14[%c0_169, %c256_170] : memref<40x768xf32, #tpu.memory_space<vmem>>, vector<40x128xf32>
    %c0_171 = arith.constant 0 : index
    %c512_172 = arith.constant 512 : index
    %263 = vector.load %arg14[%c0_171, %c512_172] : memref<40x768xf32, #tpu.memory_space<vmem>>, vector<40x128xf32>
    %cst_173 = arith.constant dense<0.000000e+00> : vector<40x40xf32>
    %264 = tpu.matmul %261, %262, %cst_173 {dimension_numbers = #tpu.dot_dimension_numbers<[1], [1], [0], [0], [0, 0, 1, 0], [], []>} : vector<40x128xf32>, vector<40x128xf32>, vector<40x40xf32> -> vector<40x40xf32>
    %265 = arith.addf %264, %20 : vector<40x40xf32>
    %cst_174 = arith.constant dense<0xFF800000> : vector<40xf32>
    %266 = vector.multi_reduction <maximumf>, %265, %cst_174 [1] : vector<40x40xf32> to vector<40xf32>
    %267 = vector.shape_cast %266 : vector<40xf32> to vector<40x1xf32>
    %268 = vector.broadcast %267 : vector<40x1xf32> to vector<40x40xf32>
    %269 = arith.subf %265, %268 : vector<40x40xf32>
    %270 = math.exp %269 : vector<40x40xf32>
    %cst_175 = arith.constant dense<0.000000e+00> : vector<40xf32>
    %271 = vector.multi_reduction <add>, %270, %cst_175 [1] : vector<40x40xf32> to vector<40xf32>
    %272 = vector.shape_cast %271 : vector<40xf32> to vector<40x1xf32>
    %273 = tpu.reciprocal %272 {approx = true} : vector<40x1xf32> -> vector<40x1xf32>
    %274 = vector.broadcast %273 : vector<40x1xf32> to vector<40x40xf32>
    %275 = arith.mulf %270, %274 : vector<40x40xf32>
    %cst_176 = arith.constant dense<0.000000e+00> : vector<40x128xf32>
    %276 = tpu.matmul %275, %263, %cst_176 {dimension_numbers = #tpu.dot_dimension_numbers<[1], [0], [0], [1], [0, 0, 1, 1], [], []>} : vector<40x40xf32>, vector<40x128xf32>, vector<40x128xf32> -> vector<40x128xf32>
    %c0_177 = arith.constant 0 : index
    %c0_178 = arith.constant 0 : index
    %277 = vector.load %arg15[%c0_177, %c0_178] : memref<40x256xf32, #tpu.memory_space<vmem>>, vector<40x128xf32>
    tpu.vector_store %arg15[%c0_177, %c0_178], %276 {strides = array<i32>} : memref<40x256xf32, #tpu.memory_space<vmem>>, vector<40x128xf32>,
    %c0_179 = arith.constant 0 : index
    %c128_180 = arith.constant 128 : index
    %278 = vector.load %arg14[%c0_179, %c128_180] : memref<40x768xf32, #tpu.memory_space<vmem>>, vector<40x128xf32>
    %c0_181 = arith.constant 0 : index
    %c384_182 = arith.constant 384 : index
    %279 = vector.load %arg14[%c0_181, %c384_182] : memref<40x768xf32, #tpu.memory_space<vmem>>, vector<40x128xf32>
    %c0_183 = arith.constant 0 : index
    %c640_184 = arith.constant 640 : index
    %280 = vector.load %arg14[%c0_183, %c640_184] : memref<40x768xf32, #tpu.memory_space<vmem>>, vector<40x128xf32>
    %cst_185 = arith.constant dense<0.000000e+00> : vector<40x40xf32>
    %281 = tpu.matmul %278, %279, %cst_185 {dimension_numbers = #tpu.dot_dimension_numbers<[1], [1], [0], [0], [0, 0, 1, 0], [], []>} : vector<40x128xf32>, vector<40x128xf32>, vector<40x40xf32> -> vector<40x40xf32>
    %282 = arith.addf %281, %20 : vector<40x40xf32>
    %cst_186 = arith.constant dense<0xFF800000> : vector<40xf32>
    %283 = vector.multi_reduction <maximumf>, %282, %cst_186 [1] : vector<40x40xf32> to vector<40xf32>
    %284 = vector.shape_cast %283 : vector<40xf32> to vector<40x1xf32>
    %285 = vector.broadcast %284 : vector<40x1xf32> to vector<40x40xf32>
    %286 = arith.subf %282, %285 : vector<40x40xf32>
    %287 = math.exp %286 : vector<40x40xf32>
    %cst_187 = arith.constant dense<0.000000e+00> : vector<40xf32>
    %288 = vector.multi_reduction <add>, %287, %cst_187 [1] : vector<40x40xf32> to vector<40xf32>
    %289 = vector.shape_cast %288 : vector<40xf32> to vector<40x1xf32>
    %290 = tpu.reciprocal %289 {approx = true} : vector<40x1xf32> -> vector<40x1xf32>
    %291 = vector.broadcast %290 : vector<40x1xf32> to vector<40x40xf32>
    %292 = arith.mulf %287, %291 : vector<40x40xf32>
    %cst_188 = arith.constant dense<0.000000e+00> : vector<40x128xf32>
    %293 = tpu.matmul %292, %280, %cst_188 {dimension_numbers = #tpu.dot_dimension_numbers<[1], [0], [0], [1], [0, 0, 1, 1], [], []>} : vector<40x40xf32>, vector<40x128xf32>, vector<40x128xf32> -> vector<40x128xf32>
    %c0_189 = arith.constant 0 : index
    %c128_190 = arith.constant 128 : index
    %294 = vector.load %arg15[%c0_189, %c128_190] : memref<40x256xf32, #tpu.memory_space<vmem>>, vector<40x128xf32>
    tpu.vector_store %arg15[%c0_189, %c128_190], %293 {strides = array<i32>} : memref<40x256xf32, #tpu.memory_space<vmem>>, vector<40x128xf32>,
    %c0_191 = arith.constant 0 : index
    %c0_192 = arith.constant 0 : index
    %295 = vector.load %arg15[%c0_191, %c0_192] : memref<40x256xf32, #tpu.memory_space<vmem>>, vector<40x256xf32>
    %c2_193 = arith.constant 2 : index
    %c0_194 = arith.constant 0 : index
    %c0_195 = arith.constant 0 : index
    %296 = vector.load %arg3[%c2_193, %c0_194, %c0_195] : memref<5x256x20xf32, #tpu.memory_space<vmem>>, vector<1x256x20xf32>
    %297 = vector.shape_cast %296 : vector<1x256x20xf32> to vector<256x20xf32>
    %cst_196 = arith.constant dense<0.000000e+00> : vector<40x20xf32>
    %298 = tpu.matmul %295, %297, %cst_196 {dimension_numbers = #tpu.dot_dimension_numbers<[1], [0], [0], [1], [0, 0, 1, 1], [], []>} : vector<40x256xf32>, vector<256x20xf32>, vector<40x20xf32> -> vector<40x20xf32>
    %c2_197 = arith.constant 2 : index
    %c0_198 = arith.constant 0 : index
    %c0_199 = arith.constant 0 : index
    %299 = vector.load %arg4[%c2_197, %c0_198, %c0_199] : memref<5x1x20xf32, #tpu.memory_space<vmem>>, vector<1x1x20xf32>
    %300 = vector.shape_cast %299 : vector<1x1x20xf32> to vector<1x20xf32>
    %301 = vector.broadcast %300 : vector<1x20xf32> to vector<40x20xf32>
    %302 = arith.addf %298, %301 : vector<40x20xf32>
    %303 = arith.addf %252, %302 : vector<40x20xf32>
    %c2_200 = arith.constant 2 : index
    %c0_201 = arith.constant 0 : index
    %c0_202 = arith.constant 0 : index
    %304 = vector.load %arg9[%c2_200, %c0_201, %c0_202] : memref<5x1x20xf32, #tpu.memory_space<vmem>>, vector<1x1x20xf32>
    %305 = vector.shape_cast %304 : vector<1x1x20xf32> to vector<1x20xf32>
    %c2_203 = arith.constant 2 : index
    %c0_204 = arith.constant 0 : index
    %c0_205 = arith.constant 0 : index
    %306 = vector.load %arg10[%c2_203, %c0_204, %c0_205] : memref<5x1x20xf32, #tpu.memory_space<vmem>>, vector<1x1x20xf32>
    %307 = vector.shape_cast %306 : vector<1x1x20xf32> to vector<1x20xf32>
    %cst_206 = arith.constant dense<0.000000e+00> : vector<40xf32>
    %308 = vector.multi_reduction <add>, %303, %cst_206 [1] : vector<40x20xf32> to vector<40xf32>
    %309 = vector.shape_cast %308 : vector<40xf32> to vector<40x1xf32>
    %cst_207 = arith.constant 2.000000e+01 : f32
    %310 = vector.broadcast %cst_207 : f32 to vector<40x1xf32>
    %311 = arith.divf %309, %310 : vector<40x1xf32>
    %312 = vector.broadcast %311 : vector<40x1xf32> to vector<40x20xf32>
    %313 = arith.subf %303, %312 : vector<40x20xf32>
    %314 = arith.mulf %313, %313 : vector<40x20xf32>
    %cst_208 = arith.constant dense<0.000000e+00> : vector<40xf32>
    %315 = vector.multi_reduction <add>, %314, %cst_208 [1] : vector<40x20xf32> to vector<40xf32>
    %316 = vector.shape_cast %315 : vector<40xf32> to vector<40x1xf32>
    %cst_209 = arith.constant 2.000000e+01 : f32
    %317 = vector.broadcast %cst_209 : f32 to vector<40x1xf32>
    %318 = arith.divf %316, %317 : vector<40x1xf32>
    %cst_210 = arith.constant 9.99999974E-6 : f32
    %319 = vector.broadcast %cst_210 : f32 to vector<40x1xf32>
    %320 = arith.addf %318, %319 : vector<40x1xf32>
    %321 = math.rsqrt %320 : vector<40x1xf32>
    %322 = vector.broadcast %321 : vector<40x1xf32> to vector<40x20xf32>
    %323 = arith.mulf %313, %322 : vector<40x20xf32>
    %324 = vector.broadcast %305 : vector<1x20xf32> to vector<40x20xf32>
    %325 = arith.mulf %323, %324 : vector<40x20xf32>
    %326 = vector.broadcast %307 : vector<1x20xf32> to vector<40x20xf32>
    %327 = arith.addf %325, %326 : vector<40x20xf32>
    %c2_211 = arith.constant 2 : index
    %c0_212 = arith.constant 0 : index
    %c0_213 = arith.constant 0 : index
    %328 = vector.load %arg5[%c2_211, %c0_212, %c0_213] : memref<5x20x64xf32, #tpu.memory_space<vmem>>, vector<1x20x64xf32>
    %329 = vector.shape_cast %328 : vector<1x20x64xf32> to vector<20x64xf32>
    %cst_214 = arith.constant dense<0.000000e+00> : vector<40x64xf32>
    %330 = tpu.matmul %327, %329, %cst_214 {dimension_numbers = #tpu.dot_dimension_numbers<[1], [0], [0], [1], [0, 0, 1, 1], [], []>} : vector<40x20xf32>, vector<20x64xf32>, vector<40x64xf32> -> vector<40x64xf32>
    %c2_215 = arith.constant 2 : index
    %c0_216 = arith.constant 0 : index
    %c0_217 = arith.constant 0 : index
    %331 = vector.load %arg6[%c2_215, %c0_216, %c0_217] : memref<5x1x64xf32, #tpu.memory_space<vmem>>, vector<1x1x64xf32>
    %332 = vector.shape_cast %331 : vector<1x1x64xf32> to vector<1x64xf32>
    %333 = vector.broadcast %332 : vector<1x64xf32> to vector<40x64xf32>
    %334 = arith.addf %330, %333 : vector<40x64xf32>
    %cst_218 = arith.constant 0.000000e+00 : f32
    %335 = vector.broadcast %cst_218 : f32 to vector<40x64xf32>
    %336 = arith.maximumf %334, %335 : vector<40x64xf32>
    %c2_219 = arith.constant 2 : index
    %c0_220 = arith.constant 0 : index
    %c0_221 = arith.constant 0 : index
    %337 = vector.load %arg7[%c2_219, %c0_220, %c0_221] : memref<5x64x20xf32, #tpu.memory_space<vmem>>, vector<1x64x20xf32>
    %338 = vector.shape_cast %337 : vector<1x64x20xf32> to vector<64x20xf32>
    %cst_222 = arith.constant dense<0.000000e+00> : vector<40x20xf32>
    %339 = tpu.matmul %336, %338, %cst_222 {dimension_numbers = #tpu.dot_dimension_numbers<[1], [0], [0], [1], [0, 0, 1, 1], [], []>} : vector<40x64xf32>, vector<64x20xf32>, vector<40x20xf32> -> vector<40x20xf32>
    %c2_223 = arith.constant 2 : index
    %c0_224 = arith.constant 0 : index
    %c0_225 = arith.constant 0 : index
    %340 = vector.load %arg8[%c2_223, %c0_224, %c0_225] : memref<5x1x20xf32, #tpu.memory_space<vmem>>, vector<1x1x20xf32>
    %341 = vector.shape_cast %340 : vector<1x1x20xf32> to vector<1x20xf32>
    %342 = vector.broadcast %341 : vector<1x20xf32> to vector<40x20xf32>
    %343 = arith.addf %339, %342 : vector<40x20xf32>
    %344 = arith.addf %327, %343 : vector<40x20xf32>
    %c2_226 = arith.constant 2 : index
    %c0_227 = arith.constant 0 : index
    %c0_228 = arith.constant 0 : index
    %345 = vector.load %arg11[%c2_226, %c0_227, %c0_228] : memref<5x1x20xf32, #tpu.memory_space<vmem>>, vector<1x1x20xf32>
    %346 = vector.shape_cast %345 : vector<1x1x20xf32> to vector<1x20xf32>
    %c2_229 = arith.constant 2 : index
    %c0_230 = arith.constant 0 : index
    %c0_231 = arith.constant 0 : index
    %347 = vector.load %arg12[%c2_229, %c0_230, %c0_231] : memref<5x1x20xf32, #tpu.memory_space<vmem>>, vector<1x1x20xf32>
    %348 = vector.shape_cast %347 : vector<1x1x20xf32> to vector<1x20xf32>
    %cst_232 = arith.constant dense<0.000000e+00> : vector<40xf32>
    %349 = vector.multi_reduction <add>, %344, %cst_232 [1] : vector<40x20xf32> to vector<40xf32>
    %350 = vector.shape_cast %349 : vector<40xf32> to vector<40x1xf32>
    %cst_233 = arith.constant 2.000000e+01 : f32
    %351 = vector.broadcast %cst_233 : f32 to vector<40x1xf32>
    %352 = arith.divf %350, %351 : vector<40x1xf32>
    %353 = vector.broadcast %352 : vector<40x1xf32> to vector<40x20xf32>
    %354 = arith.subf %344, %353 : vector<40x20xf32>
    %355 = arith.mulf %354, %354 : vector<40x20xf32>
    %cst_234 = arith.constant dense<0.000000e+00> : vector<40xf32>
    %356 = vector.multi_reduction <add>, %355, %cst_234 [1] : vector<40x20xf32> to vector<40xf32>
    %357 = vector.shape_cast %356 : vector<40xf32> to vector<40x1xf32>
    %cst_235 = arith.constant 2.000000e+01 : f32
    %358 = vector.broadcast %cst_235 : f32 to vector<40x1xf32>
    %359 = arith.divf %357, %358 : vector<40x1xf32>
    %cst_236 = arith.constant 9.99999974E-6 : f32
    %360 = vector.broadcast %cst_236 : f32 to vector<40x1xf32>
    %361 = arith.addf %359, %360 : vector<40x1xf32>
    %362 = math.rsqrt %361 : vector<40x1xf32>
    %363 = vector.broadcast %362 : vector<40x1xf32> to vector<40x20xf32>
    %364 = arith.mulf %354, %363 : vector<40x20xf32>
    %365 = vector.broadcast %346 : vector<1x20xf32> to vector<40x20xf32>
    %366 = arith.mulf %364, %365 : vector<40x20xf32>
    %367 = vector.broadcast %348 : vector<1x20xf32> to vector<40x20xf32>
    %368 = arith.addf %366, %367 : vector<40x20xf32>
    %c3 = arith.constant 3 : index
    %c0_237 = arith.constant 0 : index
    %c0_238 = arith.constant 0 : index
    %369 = vector.load %arg1[%c3, %c0_237, %c0_238] : memref<5x20x768xf32, #tpu.memory_space<vmem>>, vector<1x20x768xf32>
    %370 = vector.shape_cast %369 : vector<1x20x768xf32> to vector<20x768xf32>
    %cst_239 = arith.constant dense<0.000000e+00> : vector<40x768xf32>
    %371 = tpu.matmul %368, %370, %cst_239 {dimension_numbers = #tpu.dot_dimension_numbers<[1], [0], [0], [1], [0, 0, 1, 1], [], []>} : vector<40x20xf32>, vector<20x768xf32>, vector<40x768xf32> -> vector<40x768xf32>
    %c3_240 = arith.constant 3 : index
    %c0_241 = arith.constant 0 : index
    %c0_242 = arith.constant 0 : index
    %372 = vector.load %arg2[%c3_240, %c0_241, %c0_242] : memref<5x1x768xf32, #tpu.memory_space<vmem>>, vector<1x1x768xf32>
    %373 = vector.shape_cast %372 : vector<1x1x768xf32> to vector<1x768xf32>
    %374 = vector.broadcast %373 : vector<1x768xf32> to vector<40x768xf32>
    %375 = arith.addf %371, %374 : vector<40x768xf32>
    %c0_243 = arith.constant 0 : index
    %c0_244 = arith.constant 0 : index
    %376 = vector.load %arg14[%c0_243, %c0_244] : memref<40x768xf32, #tpu.memory_space<vmem>>, vector<40x768xf32>
    tpu.vector_store %arg14[%c0_243, %c0_244], %375 {strides = array<i32>} : memref<40x768xf32, #tpu.memory_space<vmem>>, vector<40x768xf32>,
    %c0_245 = arith.constant 0 : index
    %c0_246 = arith.constant 0 : index
    %377 = vector.load %arg14[%c0_245, %c0_246] : memref<40x768xf32, #tpu.memory_space<vmem>>, vector<40x128xf32>
    %c0_247 = arith.constant 0 : index
    %c256_248 = arith.constant 256 : index
    %378 = vector.load %arg14[%c0_247, %c256_248] : memref<40x768xf32, #tpu.memory_space<vmem>>, vector<40x128xf32>
    %c0_249 = arith.constant 0 : index
    %c512_250 = arith.constant 512 : index
    %379 = vector.load %arg14[%c0_249, %c512_250] : memref<40x768xf32, #tpu.memory_space<vmem>>, vector<40x128xf32>
    %cst_251 = arith.constant dense<0.000000e+00> : vector<40x40xf32>
    %380 = tpu.matmul %377, %378, %cst_251 {dimension_numbers = #tpu.dot_dimension_numbers<[1], [1], [0], [0], [0, 0, 1, 0], [], []>} : vector<40x128xf32>, vector<40x128xf32>, vector<40x40xf32> -> vector<40x40xf32>
    %381 = arith.addf %380, %20 : vector<40x40xf32>
    %cst_252 = arith.constant dense<0xFF800000> : vector<40xf32>
    %382 = vector.multi_reduction <maximumf>, %381, %cst_252 [1] : vector<40x40xf32> to vector<40xf32>
    %383 = vector.shape_cast %382 : vector<40xf32> to vector<40x1xf32>
    %384 = vector.broadcast %383 : vector<40x1xf32> to vector<40x40xf32>
    %385 = arith.subf %381, %384 : vector<40x40xf32>
    %386 = math.exp %385 : vector<40x40xf32>
    %cst_253 = arith.constant dense<0.000000e+00> : vector<40xf32>
    %387 = vector.multi_reduction <add>, %386, %cst_253 [1] : vector<40x40xf32> to vector<40xf32>
    %388 = vector.shape_cast %387 : vector<40xf32> to vector<40x1xf32>
    %389 = tpu.reciprocal %388 {approx = true} : vector<40x1xf32> -> vector<40x1xf32>
    %390 = vector.broadcast %389 : vector<40x1xf32> to vector<40x40xf32>
    %391 = arith.mulf %386, %390 : vector<40x40xf32>
    %cst_254 = arith.constant dense<0.000000e+00> : vector<40x128xf32>
    %392 = tpu.matmul %391, %379, %cst_254 {dimension_numbers = #tpu.dot_dimension_numbers<[1], [0], [0], [1], [0, 0, 1, 1], [], []>} : vector<40x40xf32>, vector<40x128xf32>, vector<40x128xf32> -> vector<40x128xf32>
    %c0_255 = arith.constant 0 : index
    %c0_256 = arith.constant 0 : index
    %393 = vector.load %arg15[%c0_255, %c0_256] : memref<40x256xf32, #tpu.memory_space<vmem>>, vector<40x128xf32>
    tpu.vector_store %arg15[%c0_255, %c0_256], %392 {strides = array<i32>} : memref<40x256xf32, #tpu.memory_space<vmem>>, vector<40x128xf32>,
    %c0_257 = arith.constant 0 : index
    %c128_258 = arith.constant 128 : index
    %394 = vector.load %arg14[%c0_257, %c128_258] : memref<40x768xf32, #tpu.memory_space<vmem>>, vector<40x128xf32>
    %c0_259 = arith.constant 0 : index
    %c384_260 = arith.constant 384 : index
    %395 = vector.load %arg14[%c0_259, %c384_260] : memref<40x768xf32, #tpu.memory_space<vmem>>, vector<40x128xf32>
    %c0_261 = arith.constant 0 : index
    %c640_262 = arith.constant 640 : index
    %396 = vector.load %arg14[%c0_261, %c640_262] : memref<40x768xf32, #tpu.memory_space<vmem>>, vector<40x128xf32>
    %cst_263 = arith.constant dense<0.000000e+00> : vector<40x40xf32>
    %397 = tpu.matmul %394, %395, %cst_263 {dimension_numbers = #tpu.dot_dimension_numbers<[1], [1], [0], [0], [0, 0, 1, 0], [], []>} : vector<40x128xf32>, vector<40x128xf32>, vector<40x40xf32> -> vector<40x40xf32>
    %398 = arith.addf %397, %20 : vector<40x40xf32>
    %cst_264 = arith.constant dense<0xFF800000> : vector<40xf32>
    %399 = vector.multi_reduction <maximumf>, %398, %cst_264 [1] : vector<40x40xf32> to vector<40xf32>
    %400 = vector.shape_cast %399 : vector<40xf32> to vector<40x1xf32>
    %401 = vector.broadcast %400 : vector<40x1xf32> to vector<40x40xf32>
    %402 = arith.subf %398, %401 : vector<40x40xf32>
    %403 = math.exp %402 : vector<40x40xf32>
    %cst_265 = arith.constant dense<0.000000e+00> : vector<40xf32>
    %404 = vector.multi_reduction <add>, %403, %cst_265 [1] : vector<40x40xf32> to vector<40xf32>
    %405 = vector.shape_cast %404 : vector<40xf32> to vector<40x1xf32>
    %406 = tpu.reciprocal %405 {approx = true} : vector<40x1xf32> -> vector<40x1xf32>
    %407 = vector.broadcast %406 : vector<40x1xf32> to vector<40x40xf32>
    %408 = arith.mulf %403, %407 : vector<40x40xf32>
    %cst_266 = arith.constant dense<0.000000e+00> : vector<40x128xf32>
    %409 = tpu.matmul %408, %396, %cst_266 {dimension_numbers = #tpu.dot_dimension_numbers<[1], [0], [0], [1], [0, 0, 1, 1], [], []>} : vector<40x40xf32>, vector<40x128xf32>, vector<40x128xf32> -> vector<40x128xf32>
    %c0_267 = arith.constant 0 : index
    %c128_268 = arith.constant 128 : index
    %410 = vector.load %arg15[%c0_267, %c128_268] : memref<40x256xf32, #tpu.memory_space<vmem>>, vector<40x128xf32>
    tpu.vector_store %arg15[%c0_267, %c128_268], %409 {strides = array<i32>} : memref<40x256xf32, #tpu.memory_space<vmem>>, vector<40x128xf32>,
    %c0_269 = arith.constant 0 : index
    %c0_270 = arith.constant 0 : index
    %411 = vector.load %arg15[%c0_269, %c0_270] : memref<40x256xf32, #tpu.memory_space<vmem>>, vector<40x256xf32>
    %c3_271 = arith.constant 3 : index
    %c0_272 = arith.constant 0 : index
    %c0_273 = arith.constant 0 : index
    %412 = vector.load %arg3[%c3_271, %c0_272, %c0_273] : memref<5x256x20xf32, #tpu.memory_space<vmem>>, vector<1x256x20xf32>
    %413 = vector.shape_cast %412 : vector<1x256x20xf32> to vector<256x20xf32>
    %cst_274 = arith.constant dense<0.000000e+00> : vector<40x20xf32>
    %414 = tpu.matmul %411, %413, %cst_274 {dimension_numbers = #tpu.dot_dimension_numbers<[1], [0], [0], [1], [0, 0, 1, 1], [], []>} : vector<40x256xf32>, vector<256x20xf32>, vector<40x20xf32> -> vector<40x20xf32>
    %c3_275 = arith.constant 3 : index
    %c0_276 = arith.constant 0 : index
    %c0_277 = arith.constant 0 : index
    %415 = vector.load %arg4[%c3_275, %c0_276, %c0_277] : memref<5x1x20xf32, #tpu.memory_space<vmem>>, vector<1x1x20xf32>
    %416 = vector.shape_cast %415 : vector<1x1x20xf32> to vector<1x20xf32>
    %417 = vector.broadcast %416 : vector<1x20xf32> to vector<40x20xf32>
    %418 = arith.addf %414, %417 : vector<40x20xf32>
    %419 = arith.addf %368, %418 : vector<40x20xf32>
    %c3_278 = arith.constant 3 : index
    %c0_279 = arith.constant 0 : index
    %c0_280 = arith.constant 0 : index
    %420 = vector.load %arg9[%c3_278, %c0_279, %c0_280] : memref<5x1x20xf32, #tpu.memory_space<vmem>>, vector<1x1x20xf32>
    %421 = vector.shape_cast %420 : vector<1x1x20xf32> to vector<1x20xf32>
    %c3_281 = arith.constant 3 : index
    %c0_282 = arith.constant 0 : index
    %c0_283 = arith.constant 0 : index
    %422 = vector.load %arg10[%c3_281, %c0_282, %c0_283] : memref<5x1x20xf32, #tpu.memory_space<vmem>>, vector<1x1x20xf32>
    %423 = vector.shape_cast %422 : vector<1x1x20xf32> to vector<1x20xf32>
    %cst_284 = arith.constant dense<0.000000e+00> : vector<40xf32>
    %424 = vector.multi_reduction <add>, %419, %cst_284 [1] : vector<40x20xf32> to vector<40xf32>
    %425 = vector.shape_cast %424 : vector<40xf32> to vector<40x1xf32>
    %cst_285 = arith.constant 2.000000e+01 : f32
    %426 = vector.broadcast %cst_285 : f32 to vector<40x1xf32>
    %427 = arith.divf %425, %426 : vector<40x1xf32>
    %428 = vector.broadcast %427 : vector<40x1xf32> to vector<40x20xf32>
    %429 = arith.subf %419, %428 : vector<40x20xf32>
    %430 = arith.mulf %429, %429 : vector<40x20xf32>
    %cst_286 = arith.constant dense<0.000000e+00> : vector<40xf32>
    %431 = vector.multi_reduction <add>, %430, %cst_286 [1] : vector<40x20xf32> to vector<40xf32>
    %432 = vector.shape_cast %431 : vector<40xf32> to vector<40x1xf32>
    %cst_287 = arith.constant 2.000000e+01 : f32
    %433 = vector.broadcast %cst_287 : f32 to vector<40x1xf32>
    %434 = arith.divf %432, %433 : vector<40x1xf32>
    %cst_288 = arith.constant 9.99999974E-6 : f32
    %435 = vector.broadcast %cst_288 : f32 to vector<40x1xf32>
    %436 = arith.addf %434, %435 : vector<40x1xf32>
    %437 = math.rsqrt %436 : vector<40x1xf32>
    %438 = vector.broadcast %437 : vector<40x1xf32> to vector<40x20xf32>
    %439 = arith.mulf %429, %438 : vector<40x20xf32>
    %440 = vector.broadcast %421 : vector<1x20xf32> to vector<40x20xf32>
    %441 = arith.mulf %439, %440 : vector<40x20xf32>
    %442 = vector.broadcast %423 : vector<1x20xf32> to vector<40x20xf32>
    %443 = arith.addf %441, %442 : vector<40x20xf32>
    %c3_289 = arith.constant 3 : index
    %c0_290 = arith.constant 0 : index
    %c0_291 = arith.constant 0 : index
    %444 = vector.load %arg5[%c3_289, %c0_290, %c0_291] : memref<5x20x64xf32, #tpu.memory_space<vmem>>, vector<1x20x64xf32>
    %445 = vector.shape_cast %444 : vector<1x20x64xf32> to vector<20x64xf32>
    %cst_292 = arith.constant dense<0.000000e+00> : vector<40x64xf32>
    %446 = tpu.matmul %443, %445, %cst_292 {dimension_numbers = #tpu.dot_dimension_numbers<[1], [0], [0], [1], [0, 0, 1, 1], [], []>} : vector<40x20xf32>, vector<20x64xf32>, vector<40x64xf32> -> vector<40x64xf32>
    %c3_293 = arith.constant 3 : index
    %c0_294 = arith.constant 0 : index
    %c0_295 = arith.constant 0 : index
    %447 = vector.load %arg6[%c3_293, %c0_294, %c0_295] : memref<5x1x64xf32, #tpu.memory_space<vmem>>, vector<1x1x64xf32>
    %448 = vector.shape_cast %447 : vector<1x1x64xf32> to vector<1x64xf32>
    %449 = vector.broadcast %448 : vector<1x64xf32> to vector<40x64xf32>
    %450 = arith.addf %446, %449 : vector<40x64xf32>
    %cst_296 = arith.constant 0.000000e+00 : f32
    %451 = vector.broadcast %cst_296 : f32 to vector<40x64xf32>
    %452 = arith.maximumf %450, %451 : vector<40x64xf32>
    %c3_297 = arith.constant 3 : index
    %c0_298 = arith.constant 0 : index
    %c0_299 = arith.constant 0 : index
    %453 = vector.load %arg7[%c3_297, %c0_298, %c0_299] : memref<5x64x20xf32, #tpu.memory_space<vmem>>, vector<1x64x20xf32>
    %454 = vector.shape_cast %453 : vector<1x64x20xf32> to vector<64x20xf32>
    %cst_300 = arith.constant dense<0.000000e+00> : vector<40x20xf32>
    %455 = tpu.matmul %452, %454, %cst_300 {dimension_numbers = #tpu.dot_dimension_numbers<[1], [0], [0], [1], [0, 0, 1, 1], [], []>} : vector<40x64xf32>, vector<64x20xf32>, vector<40x20xf32> -> vector<40x20xf32>
    %c3_301 = arith.constant 3 : index
    %c0_302 = arith.constant 0 : index
    %c0_303 = arith.constant 0 : index
    %456 = vector.load %arg8[%c3_301, %c0_302, %c0_303] : memref<5x1x20xf32, #tpu.memory_space<vmem>>, vector<1x1x20xf32>
    %457 = vector.shape_cast %456 : vector<1x1x20xf32> to vector<1x20xf32>
    %458 = vector.broadcast %457 : vector<1x20xf32> to vector<40x20xf32>
    %459 = arith.addf %455, %458 : vector<40x20xf32>
    %460 = arith.addf %443, %459 : vector<40x20xf32>
    %c3_304 = arith.constant 3 : index
    %c0_305 = arith.constant 0 : index
    %c0_306 = arith.constant 0 : index
    %461 = vector.load %arg11[%c3_304, %c0_305, %c0_306] : memref<5x1x20xf32, #tpu.memory_space<vmem>>, vector<1x1x20xf32>
    %462 = vector.shape_cast %461 : vector<1x1x20xf32> to vector<1x20xf32>
    %c3_307 = arith.constant 3 : index
    %c0_308 = arith.constant 0 : index
    %c0_309 = arith.constant 0 : index
    %463 = vector.load %arg12[%c3_307, %c0_308, %c0_309] : memref<5x1x20xf32, #tpu.memory_space<vmem>>, vector<1x1x20xf32>
    %464 = vector.shape_cast %463 : vector<1x1x20xf32> to vector<1x20xf32>
    %cst_310 = arith.constant dense<0.000000e+00> : vector<40xf32>
    %465 = vector.multi_reduction <add>, %460, %cst_310 [1] : vector<40x20xf32> to vector<40xf32>
    %466 = vector.shape_cast %465 : vector<40xf32> to vector<40x1xf32>
    %cst_311 = arith.constant 2.000000e+01 : f32
    %467 = vector.broadcast %cst_311 : f32 to vector<40x1xf32>
    %468 = arith.divf %466, %467 : vector<40x1xf32>
    %469 = vector.broadcast %468 : vector<40x1xf32> to vector<40x20xf32>
    %470 = arith.subf %460, %469 : vector<40x20xf32>
    %471 = arith.mulf %470, %470 : vector<40x20xf32>
    %cst_312 = arith.constant dense<0.000000e+00> : vector<40xf32>
    %472 = vector.multi_reduction <add>, %471, %cst_312 [1] : vector<40x20xf32> to vector<40xf32>
    %473 = vector.shape_cast %472 : vector<40xf32> to vector<40x1xf32>
    %cst_313 = arith.constant 2.000000e+01 : f32
    %474 = vector.broadcast %cst_313 : f32 to vector<40x1xf32>
    %475 = arith.divf %473, %474 : vector<40x1xf32>
    %cst_314 = arith.constant 9.99999974E-6 : f32
    %476 = vector.broadcast %cst_314 : f32 to vector<40x1xf32>
    %477 = arith.addf %475, %476 : vector<40x1xf32>
    %478 = math.rsqrt %477 : vector<40x1xf32>
    %479 = vector.broadcast %478 : vector<40x1xf32> to vector<40x20xf32>
    %480 = arith.mulf %470, %479 : vector<40x20xf32>
    %481 = vector.broadcast %462 : vector<1x20xf32> to vector<40x20xf32>
    %482 = arith.mulf %480, %481 : vector<40x20xf32>
    %483 = vector.broadcast %464 : vector<1x20xf32> to vector<40x20xf32>
    %484 = arith.addf %482, %483 : vector<40x20xf32>
    %c4 = arith.constant 4 : index
    %c0_315 = arith.constant 0 : index
    %c0_316 = arith.constant 0 : index
    %485 = vector.load %arg1[%c4, %c0_315, %c0_316] : memref<5x20x768xf32, #tpu.memory_space<vmem>>, vector<1x20x768xf32>
    %486 = vector.shape_cast %485 : vector<1x20x768xf32> to vector<20x768xf32>
    %cst_317 = arith.constant dense<0.000000e+00> : vector<40x768xf32>
    %487 = tpu.matmul %484, %486, %cst_317 {dimension_numbers = #tpu.dot_dimension_numbers<[1], [0], [0], [1], [0, 0, 1, 1], [], []>} : vector<40x20xf32>, vector<20x768xf32>, vector<40x768xf32> -> vector<40x768xf32>
    %c4_318 = arith.constant 4 : index
    %c0_319 = arith.constant 0 : index
    %c0_320 = arith.constant 0 : index
    %488 = vector.load %arg2[%c4_318, %c0_319, %c0_320] : memref<5x1x768xf32, #tpu.memory_space<vmem>>, vector<1x1x768xf32>
    %489 = vector.shape_cast %488 : vector<1x1x768xf32> to vector<1x768xf32>
    %490 = vector.broadcast %489 : vector<1x768xf32> to vector<40x768xf32>
    %491 = arith.addf %487, %490 : vector<40x768xf32>
    %c0_321 = arith.constant 0 : index
    %c0_322 = arith.constant 0 : index
    %492 = vector.load %arg14[%c0_321, %c0_322] : memref<40x768xf32, #tpu.memory_space<vmem>>, vector<40x768xf32>
    tpu.vector_store %arg14[%c0_321, %c0_322], %491 {strides = array<i32>} : memref<40x768xf32, #tpu.memory_space<vmem>>, vector<40x768xf32>,
    %c0_323 = arith.constant 0 : index
    %c0_324 = arith.constant 0 : index
    %493 = vector.load %arg14[%c0_323, %c0_324] : memref<40x768xf32, #tpu.memory_space<vmem>>, vector<40x128xf32>
    %c0_325 = arith.constant 0 : index
    %c256_326 = arith.constant 256 : index
    %494 = vector.load %arg14[%c0_325, %c256_326] : memref<40x768xf32, #tpu.memory_space<vmem>>, vector<40x128xf32>
    %c0_327 = arith.constant 0 : index
    %c512_328 = arith.constant 512 : index
    %495 = vector.load %arg14[%c0_327, %c512_328] : memref<40x768xf32, #tpu.memory_space<vmem>>, vector<40x128xf32>
    %cst_329 = arith.constant dense<0.000000e+00> : vector<40x40xf32>
    %496 = tpu.matmul %493, %494, %cst_329 {dimension_numbers = #tpu.dot_dimension_numbers<[1], [1], [0], [0], [0, 0, 1, 0], [], []>} : vector<40x128xf32>, vector<40x128xf32>, vector<40x40xf32> -> vector<40x40xf32>
    %497 = arith.addf %496, %20 : vector<40x40xf32>
    %cst_330 = arith.constant dense<0xFF800000> : vector<40xf32>
    %498 = vector.multi_reduction <maximumf>, %497, %cst_330 [1] : vector<40x40xf32> to vector<40xf32>
    %499 = vector.shape_cast %498 : vector<40xf32> to vector<40x1xf32>
    %500 = vector.broadcast %499 : vector<40x1xf32> to vector<40x40xf32>
    %501 = arith.subf %497, %500 : vector<40x40xf32>
    %502 = math.exp %501 : vector<40x40xf32>
    %cst_331 = arith.constant dense<0.000000e+00> : vector<40xf32>
    %503 = vector.multi_reduction <add>, %502, %cst_331 [1] : vector<40x40xf32> to vector<40xf32>
    %504 = vector.shape_cast %503 : vector<40xf32> to vector<40x1xf32>
    %505 = tpu.reciprocal %504 {approx = true} : vector<40x1xf32> -> vector<40x1xf32>
    %506 = vector.broadcast %505 : vector<40x1xf32> to vector<40x40xf32>
    %507 = arith.mulf %502, %506 : vector<40x40xf32>
    %cst_332 = arith.constant dense<0.000000e+00> : vector<40x128xf32>
    %508 = tpu.matmul %507, %495, %cst_332 {dimension_numbers = #tpu.dot_dimension_numbers<[1], [0], [0], [1], [0, 0, 1, 1], [], []>} : vector<40x40xf32>, vector<40x128xf32>, vector<40x128xf32> -> vector<40x128xf32>
    %c0_333 = arith.constant 0 : index
    %c0_334 = arith.constant 0 : index
    %509 = vector.load %arg15[%c0_333, %c0_334] : memref<40x256xf32, #tpu.memory_space<vmem>>, vector<40x128xf32>
    tpu.vector_store %arg15[%c0_333, %c0_334], %508 {strides = array<i32>} : memref<40x256xf32, #tpu.memory_space<vmem>>, vector<40x128xf32>,
    %c0_335 = arith.constant 0 : index
    %c128_336 = arith.constant 128 : index
    %510 = vector.load %arg14[%c0_335, %c128_336] : memref<40x768xf32, #tpu.memory_space<vmem>>, vector<40x128xf32>
    %c0_337 = arith.constant 0 : index
    %c384_338 = arith.constant 384 : index
    %511 = vector.load %arg14[%c0_337, %c384_338] : memref<40x768xf32, #tpu.memory_space<vmem>>, vector<40x128xf32>
    %c0_339 = arith.constant 0 : index
    %c640_340 = arith.constant 640 : index
    %512 = vector.load %arg14[%c0_339, %c640_340] : memref<40x768xf32, #tpu.memory_space<vmem>>, vector<40x128xf32>
    %cst_341 = arith.constant dense<0.000000e+00> : vector<40x40xf32>
    %513 = tpu.matmul %510, %511, %cst_341 {dimension_numbers = #tpu.dot_dimension_numbers<[1], [1], [0], [0], [0, 0, 1, 0], [], []>} : vector<40x128xf32>, vector<40x128xf32>, vector<40x40xf32> -> vector<40x40xf32>
    %514 = arith.addf %513, %20 : vector<40x40xf32>
    %cst_342 = arith.constant dense<0xFF800000> : vector<40xf32>
    %515 = vector.multi_reduction <maximumf>, %514, %cst_342 [1] : vector<40x40xf32> to vector<40xf32>
    %516 = vector.shape_cast %515 : vector<40xf32> to vector<40x1xf32>
    %517 = vector.broadcast %516 : vector<40x1xf32> to vector<40x40xf32>
    %518 = arith.subf %514, %517 : vector<40x40xf32>
    %519 = math.exp %518 : vector<40x40xf32>
    %cst_343 = arith.constant dense<0.000000e+00> : vector<40xf32>
    %520 = vector.multi_reduction <add>, %519, %cst_343 [1] : vector<40x40xf32> to vector<40xf32>
    %521 = vector.shape_cast %520 : vector<40xf32> to vector<40x1xf32>
    %522 = tpu.reciprocal %521 {approx = true} : vector<40x1xf32> -> vector<40x1xf32>
    %523 = vector.broadcast %522 : vector<40x1xf32> to vector<40x40xf32>
    %524 = arith.mulf %519, %523 : vector<40x40xf32>
    %cst_344 = arith.constant dense<0.000000e+00> : vector<40x128xf32>
    %525 = tpu.matmul %524, %512, %cst_344 {dimension_numbers = #tpu.dot_dimension_numbers<[1], [0], [0], [1], [0, 0, 1, 1], [], []>} : vector<40x40xf32>, vector<40x128xf32>, vector<40x128xf32> -> vector<40x128xf32>
    %c0_345 = arith.constant 0 : index
    %c128_346 = arith.constant 128 : index
    %526 = vector.load %arg15[%c0_345, %c128_346] : memref<40x256xf32, #tpu.memory_space<vmem>>, vector<40x128xf32>
    tpu.vector_store %arg15[%c0_345, %c128_346], %525 {strides = array<i32>} : memref<40x256xf32, #tpu.memory_space<vmem>>, vector<40x128xf32>,
    %c0_347 = arith.constant 0 : index
    %c0_348 = arith.constant 0 : index
    %527 = vector.load %arg15[%c0_347, %c0_348] : memref<40x256xf32, #tpu.memory_space<vmem>>, vector<40x256xf32>
    %c4_349 = arith.constant 4 : index
    %c0_350 = arith.constant 0 : index
    %c0_351 = arith.constant 0 : index
    %528 = vector.load %arg3[%c4_349, %c0_350, %c0_351] : memref<5x256x20xf32, #tpu.memory_space<vmem>>, vector<1x256x20xf32>
    %529 = vector.shape_cast %528 : vector<1x256x20xf32> to vector<256x20xf32>
    %cst_352 = arith.constant dense<0.000000e+00> : vector<40x20xf32>
    %530 = tpu.matmul %527, %529, %cst_352 {dimension_numbers = #tpu.dot_dimension_numbers<[1], [0], [0], [1], [0, 0, 1, 1], [], []>} : vector<40x256xf32>, vector<256x20xf32>, vector<40x20xf32> -> vector<40x20xf32>
    %c4_353 = arith.constant 4 : index
    %c0_354 = arith.constant 0 : index
    %c0_355 = arith.constant 0 : index
    %531 = vector.load %arg4[%c4_353, %c0_354, %c0_355] : memref<5x1x20xf32, #tpu.memory_space<vmem>>, vector<1x1x20xf32>
    %532 = vector.shape_cast %531 : vector<1x1x20xf32> to vector<1x20xf32>
    %533 = vector.broadcast %532 : vector<1x20xf32> to vector<40x20xf32>
    %534 = arith.addf %530, %533 : vector<40x20xf32>
    %535 = arith.addf %484, %534 : vector<40x20xf32>
    %c4_356 = arith.constant 4 : index
    %c0_357 = arith.constant 0 : index
    %c0_358 = arith.constant 0 : index
    %536 = vector.load %arg9[%c4_356, %c0_357, %c0_358] : memref<5x1x20xf32, #tpu.memory_space<vmem>>, vector<1x1x20xf32>
    %537 = vector.shape_cast %536 : vector<1x1x20xf32> to vector<1x20xf32>
    %c4_359 = arith.constant 4 : index
    %c0_360 = arith.constant 0 : index
    %c0_361 = arith.constant 0 : index
    %538 = vector.load %arg10[%c4_359, %c0_360, %c0_361] : memref<5x1x20xf32, #tpu.memory_space<vmem>>, vector<1x1x20xf32>
    %539 = vector.shape_cast %538 : vector<1x1x20xf32> to vector<1x20xf32>
    %cst_362 = arith.constant dense<0.000000e+00> : vector<40xf32>
    %540 = vector.multi_reduction <add>, %535, %cst_362 [1] : vector<40x20xf32> to vector<40xf32>
    %541 = vector.shape_cast %540 : vector<40xf32> to vector<40x1xf32>
    %cst_363 = arith.constant 2.000000e+01 : f32
    %542 = vector.broadcast %cst_363 : f32 to vector<40x1xf32>
    %543 = arith.divf %541, %542 : vector<40x1xf32>
    %544 = vector.broadcast %543 : vector<40x1xf32> to vector<40x20xf32>
    %545 = arith.subf %535, %544 : vector<40x20xf32>
    %546 = arith.mulf %545, %545 : vector<40x20xf32>
    %cst_364 = arith.constant dense<0.000000e+00> : vector<40xf32>
    %547 = vector.multi_reduction <add>, %546, %cst_364 [1] : vector<40x20xf32> to vector<40xf32>
    %548 = vector.shape_cast %547 : vector<40xf32> to vector<40x1xf32>
    %cst_365 = arith.constant 2.000000e+01 : f32
    %549 = vector.broadcast %cst_365 : f32 to vector<40x1xf32>
    %550 = arith.divf %548, %549 : vector<40x1xf32>
    %cst_366 = arith.constant 9.99999974E-6 : f32
    %551 = vector.broadcast %cst_366 : f32 to vector<40x1xf32>
    %552 = arith.addf %550, %551 : vector<40x1xf32>
    %553 = math.rsqrt %552 : vector<40x1xf32>
    %554 = vector.broadcast %553 : vector<40x1xf32> to vector<40x20xf32>
    %555 = arith.mulf %545, %554 : vector<40x20xf32>
    %556 = vector.broadcast %537 : vector<1x20xf32> to vector<40x20xf32>
    %557 = arith.mulf %555, %556 : vector<40x20xf32>
    %558 = vector.broadcast %539 : vector<1x20xf32> to vector<40x20xf32>
    %559 = arith.addf %557, %558 : vector<40x20xf32>
    %c4_367 = arith.constant 4 : index
    %c0_368 = arith.constant 0 : index
    %c0_369 = arith.constant 0 : index
    %560 = vector.load %arg5[%c4_367, %c0_368, %c0_369] : memref<5x20x64xf32, #tpu.memory_space<vmem>>, vector<1x20x64xf32>
    %561 = vector.shape_cast %560 : vector<1x20x64xf32> to vector<20x64xf32>
    %cst_370 = arith.constant dense<0.000000e+00> : vector<40x64xf32>
    %562 = tpu.matmul %559, %561, %cst_370 {dimension_numbers = #tpu.dot_dimension_numbers<[1], [0], [0], [1], [0, 0, 1, 1], [], []>} : vector<40x20xf32>, vector<20x64xf32>, vector<40x64xf32> -> vector<40x64xf32>
    %c4_371 = arith.constant 4 : index
    %c0_372 = arith.constant 0 : index
    %c0_373 = arith.constant 0 : index
    %563 = vector.load %arg6[%c4_371, %c0_372, %c0_373] : memref<5x1x64xf32, #tpu.memory_space<vmem>>, vector<1x1x64xf32>
    %564 = vector.shape_cast %563 : vector<1x1x64xf32> to vector<1x64xf32>
    %565 = vector.broadcast %564 : vector<1x64xf32> to vector<40x64xf32>
    %566 = arith.addf %562, %565 : vector<40x64xf32>
    %cst_374 = arith.constant 0.000000e+00 : f32
    %567 = vector.broadcast %cst_374 : f32 to vector<40x64xf32>
    %568 = arith.maximumf %566, %567 : vector<40x64xf32>
    %c4_375 = arith.constant 4 : index
    %c0_376 = arith.constant 0 : index
    %c0_377 = arith.constant 0 : index
    %569 = vector.load %arg7[%c4_375, %c0_376, %c0_377] : memref<5x64x20xf32, #tpu.memory_space<vmem>>, vector<1x64x20xf32>
    %570 = vector.shape_cast %569 : vector<1x64x20xf32> to vector<64x20xf32>
    %cst_378 = arith.constant dense<0.000000e+00> : vector<40x20xf32>
    %571 = tpu.matmul %568, %570, %cst_378 {dimension_numbers = #tpu.dot_dimension_numbers<[1], [0], [0], [1], [0, 0, 1, 1], [], []>} : vector<40x64xf32>, vector<64x20xf32>, vector<40x20xf32> -> vector<40x20xf32>
    %c4_379 = arith.constant 4 : index
    %c0_380 = arith.constant 0 : index
    %c0_381 = arith.constant 0 : index
    %572 = vector.load %arg8[%c4_379, %c0_380, %c0_381] : memref<5x1x20xf32, #tpu.memory_space<vmem>>, vector<1x1x20xf32>
    %573 = vector.shape_cast %572 : vector<1x1x20xf32> to vector<1x20xf32>
    %574 = vector.broadcast %573 : vector<1x20xf32> to vector<40x20xf32>
    %575 = arith.addf %571, %574 : vector<40x20xf32>
    %576 = arith.addf %559, %575 : vector<40x20xf32>
    %c4_382 = arith.constant 4 : index
    %c0_383 = arith.constant 0 : index
    %c0_384 = arith.constant 0 : index
    %577 = vector.load %arg11[%c4_382, %c0_383, %c0_384] : memref<5x1x20xf32, #tpu.memory_space<vmem>>, vector<1x1x20xf32>
    %578 = vector.shape_cast %577 : vector<1x1x20xf32> to vector<1x20xf32>
    %c4_385 = arith.constant 4 : index
    %c0_386 = arith.constant 0 : index
    %c0_387 = arith.constant 0 : index
    %579 = vector.load %arg12[%c4_385, %c0_386, %c0_387] : memref<5x1x20xf32, #tpu.memory_space<vmem>>, vector<1x1x20xf32>
    %580 = vector.shape_cast %579 : vector<1x1x20xf32> to vector<1x20xf32>
    %cst_388 = arith.constant dense<0.000000e+00> : vector<40xf32>
    %581 = vector.multi_reduction <add>, %576, %cst_388 [1] : vector<40x20xf32> to vector<40xf32>
    %582 = vector.shape_cast %581 : vector<40xf32> to vector<40x1xf32>
    %cst_389 = arith.constant 2.000000e+01 : f32
    %583 = vector.broadcast %cst_389 : f32 to vector<40x1xf32>
    %584 = arith.divf %582, %583 : vector<40x1xf32>
    %585 = vector.broadcast %584 : vector<40x1xf32> to vector<40x20xf32>
    %586 = arith.subf %576, %585 : vector<40x20xf32>
    %587 = arith.mulf %586, %586 : vector<40x20xf32>
    %cst_390 = arith.constant dense<0.000000e+00> : vector<40xf32>
    %588 = vector.multi_reduction <add>, %587, %cst_390 [1] : vector<40x20xf32> to vector<40xf32>
    %589 = vector.shape_cast %588 : vector<40xf32> to vector<40x1xf32>
    %cst_391 = arith.constant 2.000000e+01 : f32
    %590 = vector.broadcast %cst_391 : f32 to vector<40x1xf32>
    %591 = arith.divf %589, %590 : vector<40x1xf32>
    %cst_392 = arith.constant 9.99999974E-6 : f32
    %592 = vector.broadcast %cst_392 : f32 to vector<40x1xf32>
    %593 = arith.addf %591, %592 : vector<40x1xf32>
    %594 = math.rsqrt %593 : vector<40x1xf32>
    %595 = vector.broadcast %594 : vector<40x1xf32> to vector<40x20xf32>
    %596 = arith.mulf %586, %595 : vector<40x20xf32>
    %597 = vector.broadcast %578 : vector<1x20xf32> to vector<40x20xf32>
    %598 = arith.mulf %596, %597 : vector<40x20xf32>
    %599 = vector.broadcast %580 : vector<1x20xf32> to vector<40x20xf32>
    %600 = arith.addf %598, %599 : vector<40x20xf32>
    %601 = vector.extract_strided_slice %600 {offsets = [0, 0], sizes = [20, 20], strides = [1, 1]} : vector<40x20xf32> to vector<20x20xf32>
    %cst_393 = arith.constant dense<0xFF800000> : vector<20xf32>
    %602 = vector.multi_reduction <maximumf>, %601, %cst_393 [0] : vector<20x20xf32> to vector<20xf32>
    %603 = vector.shape_cast %602 : vector<20xf32> to vector<1x20xf32>
    %604 = vector.broadcast %603 : vector<1x20xf32> to vector<20x20xf32>
    %605 = arith.subf %601, %604 : vector<20x20xf32>
    %606 = math.exp %605 : vector<20x20xf32>
    %cst_394 = arith.constant dense<0.000000e+00> : vector<20xf32>
    %607 = vector.multi_reduction <add>, %606, %cst_394 [0] : vector<20x20xf32> to vector<20xf32>
    %608 = vector.shape_cast %607 : vector<20xf32> to vector<1x20xf32>
    %609 = tpu.reciprocal %608 {approx = true} : vector<1x20xf32> -> vector<1x20xf32>
    %610 = vector.broadcast %609 : vector<1x20xf32> to vector<20x20xf32>
    %611 = arith.mulf %606, %610 : vector<20x20xf32>
    %612 = tpu.transpose %611, [1, 0] : vector<20x20xf32> -> vector<20x20xf32>
    %613 = arith.addf %611, %612 : vector<20x20xf32>
    %cst_395 = arith.constant 0.000000e+00 : f32
    %cst_396 = arith.constant 1.000000e+00 : f32
    %614 = vector.broadcast %cst_395 : f32 to vector<20x20xf32>
    %615 = arith.maximumf %614, %613 : vector<20x20xf32>
    %616 = vector.broadcast %cst_396 : f32 to vector<20x20xf32>
    %617 = arith.minimumf %616, %615 : vector<20x20xf32>
    %c0_397 = arith.constant 0 : index
    %c0_398 = arith.constant 0 : index
    %c0_399 = arith.constant 0 : index
    %618 = vector.load %arg13[%c0_397, %c0_398, %c0_399] : memref<2x20x20xf32, #tpu.memory_space<vmem>>, vector<1x20x20xf32>
    %619 = vector.shape_cast %618 : vector<1x20x20xf32> to vector<20x20xf32>
    %620 = vector.shape_cast %617 : vector<20x20xf32> to vector<1x20x20xf32>
    tpu.vector_store %arg13[%c0_397, %c0_398, %c0_399], %620 {strides = array<i32>} : memref<2x20x20xf32, #tpu.memory_space<vmem>>, vector<1x20x20xf32>,
    %621 = vector.extract_strided_slice %600 {offsets = [20, 0], sizes = [20, 20], strides = [1, 1]} : vector<40x20xf32> to vector<20x20xf32>
    %cst_400 = arith.constant dense<0xFF800000> : vector<20xf32>
    %622 = vector.multi_reduction <maximumf>, %621, %cst_400 [0] : vector<20x20xf32> to vector<20xf32>
    %623 = vector.shape_cast %622 : vector<20xf32> to vector<1x20xf32>
    %624 = vector.broadcast %623 : vector<1x20xf32> to vector<20x20xf32>
    %625 = arith.subf %621, %624 : vector<20x20xf32>
    %626 = math.exp %625 : vector<20x20xf32>
    %cst_401 = arith.constant dense<0.000000e+00> : vector<20xf32>
    %627 = vector.multi_reduction <add>, %626, %cst_401 [0] : vector<20x20xf32> to vector<20xf32>
    %628 = vector.shape_cast %627 : vector<20xf32> to vector<1x20xf32>
    %629 = tpu.reciprocal %628 {approx = true} : vector<1x20xf32> -> vector<1x20xf32>
    %630 = vector.broadcast %629 : vector<1x20xf32> to vector<20x20xf32>
    %631 = arith.mulf %626, %630 : vector<20x20xf32>
    %632 = tpu.transpose %631, [1, 0] : vector<20x20xf32> -> vector<20x20xf32>
    %633 = arith.addf %631, %632 : vector<20x20xf32>
    %cst_402 = arith.constant 0.000000e+00 : f32
    %cst_403 = arith.constant 1.000000e+00 : f32
    %634 = vector.broadcast %cst_402 : f32 to vector<20x20xf32>
    %635 = arith.maximumf %634, %633 : vector<20x20xf32>
    %636 = vector.broadcast %cst_403 : f32 to vector<20x20xf32>
    %637 = arith.minimumf %636, %635 : vector<20x20xf32>
    %c1_404 = arith.constant 1 : index
    %c0_405 = arith.constant 0 : index
    %c0_406 = arith.constant 0 : index
    %638 = vector.load %arg13[%c1_404, %c0_405, %c0_406] : memref<2x20x20xf32, #tpu.memory_space<vmem>>, vector<1x20x20xf32>
    %639 = vector.shape_cast %638 : vector<1x20x20xf32> to vector<20x20xf32>
    %640 = vector.shape_cast %637 : vector<20x20xf32> to vector<1x20x20xf32>
    tpu.vector_store %arg13[%c1_404, %c0_405, %c0_406], %640 {strides = array<i32>} : memref<2x20x20xf32, #tpu.memory_space<vmem>>, vector<1x20x20xf32>,
    return
  }
}

</mosaic_0001>

<llo_original>
// kernel: tpu_custom_call.1
$region0: #{tpu_custom_call.1}
  #allocation0 [shape = 'u32[]', space=smem, size = 0x4, offset = 0x4, fixed_abs, tag = 'smem constant byte address 0x4 - core index']
  #allocation1 [shape = 'u32[144,128]{1,0:T(1,128)}', space=vmem, size = 0x12000, scoped, tag = 'internal scratch']
  #allocation2 [shape = 'f32[40,768]{1,0:T(8,128)}', space=vmem, size = 0x1e000, scoped, tag = 'scratch operand']
  #allocation3 [shape = 'f32[40,256]{1,0:T(8,128)}', space=vmem, size = 0xa000, scoped, tag = 'scratch operand']
  %s0 = inlined_call_operand.vmem [shape: f32[40,20], index: 0, kind: input, shape index: {}]
  %s1 = inlined_call_operand.vmem [shape: f32[5,20,768], index: 1, kind: input, shape index: {}]
  %s2 = inlined_call_operand.vmem [shape: f32[5,1,768], index: 2, kind: input, shape index: {}]
  %s3 = inlined_call_operand.vmem [shape: f32[5,256,20], index: 3, kind: input, shape index: {}]
  %s4 = inlined_call_operand.vmem [shape: f32[5,1,20], index: 4, kind: input, shape index: {}]
  %s5 = inlined_call_operand.vmem [shape: f32[5,20,64], index: 5, kind: input, shape index: {}]
  %s6 = inlined_call_operand.vmem [shape: f32[5,1,64], index: 6, kind: input, shape index: {}]
  %s7 = inlined_call_operand.vmem [shape: f32[5,64,20], index: 7, kind: input, shape index: {}]
  %s8 = inlined_call_operand.vmem [shape: f32[5,1,20], index: 8, kind: input, shape index: {}]
  %s9 = inlined_call_operand.vmem [shape: f32[5,1,20], index: 9, kind: input, shape index: {}]
  %s10 = inlined_call_operand.vmem [shape: f32[5,1,20], index: 10, kind: input, shape index: {}]
  %s11 = inlined_call_operand.vmem [shape: f32[5,1,20], index: 11, kind: input, shape index: {}]
  %s12 = inlined_call_operand.vmem [shape: f32[5,1,20], index: 12, kind: input, shape index: {}]
  %s13 = inlined_call_operand.vmem [shape: f32[2,20,20], index: 13, kind: output, shape index: {}]
  %s14 = sld [smem:[#allocation0]]
  $region62: #{tpu_custom_call.1} parent=0
    _
  %s16 = ssub.s32 1, %s14
  %s17 = scalar_select 0, %s16, %s14
  // Predicated region
  $region2: #{tpu_custom_call.1} parent=0 // pred_check
    _
  $region3: #{tpu_custom_call.1} parent=0 // pred_check_branch
    %19 = sbr.rel (0) target = $region5
  $region4: #{tpu_custom_call.1} parent=0 // pred_region
    _
  $region5: #{tpu_custom_call.1} parent=0 // pred_fallthru
    _
  // Predicated region
  $region6: #{tpu_custom_call.1} parent=0 // pred_check
    _
  $region7: #{tpu_custom_call.1} parent=0 // pred_check_branch
    %21 = sbr.rel (0) target = $region9
  $region8: #{tpu_custom_call.1} parent=0 // pred_region
    _
  $region9: #{tpu_custom_call.1} parent=0 // pred_fallthru
    _
  // Predicated region
  $region10: #{tpu_custom_call.1} parent=0 // pred_check
    _
  $region11: #{tpu_custom_call.1} parent=0 // pred_check_branch
    %23 = sbr.rel (0) target = $region13
  $region12: #{tpu_custom_call.1} parent=0 // pred_region
    _
  $region13: #{tpu_custom_call.1} parent=0 // pred_fallthru
    _
  // Predicated region
  $region14: #{tpu_custom_call.1} parent=0 // pred_check
    _
  $region15: #{tpu_custom_call.1} parent=0 // pred_check_branch
    %25 = sbr.rel (0) target = $region17
  $region16: #{tpu_custom_call.1} parent=0 // pred_region
    _
  $region17: #{tpu_custom_call.1} parent=0 // pred_fallthru
    _
  // Predicated region
  $region18: #{tpu_custom_call.1} parent=0 // pred_check
    _
  $region19: #{tpu_custom_call.1} parent=0 // pred_check_branch
    %27 = sbr.rel (0) target = $region21
  $region20: #{tpu_custom_call.1} parent=0 // pred_region
    _
  $region21: #{tpu_custom_call.1} parent=0 // pred_fallthru
    _
  // Predicated region
  $region22: #{tpu_custom_call.1} parent=0 // pred_check
    _
  $region23: #{tpu_custom_call.1} parent=0 // pred_check_branch
    %29 = sbr.rel (0) target = $region25
  $region24: #{tpu_custom_call.1} parent=0 // pred_region
    _
  $region25: #{tpu_custom_call.1} parent=0 // pred_fallthru
    _
  // Predicated region
  $region26: #{tpu_custom_call.1} parent=0 // pred_check
    _
  $region27: #{tpu_custom_call.1} parent=0 // pred_check_branch
    %31 = sbr.rel (0) target = $region29
  $region28: #{tpu_custom_call.1} parent=0 // pred_region
    _
  $region29: #{tpu_custom_call.1} parent=0 // pred_fallthru
    _
  // Predicated region
  $region30: #{tpu_custom_call.1} parent=0 // pred_check
    _
  $region31: #{tpu_custom_call.1} parent=0 // pred_check_branch
    %33 = sbr.rel (0) target = $region33
  $region32: #{tpu_custom_call.1} parent=0 // pred_region
    _
  $region33: #{tpu_custom_call.1} parent=0 // pred_fallthru
    _
  // Predicated region
  $region34: #{tpu_custom_call.1} parent=0 // pred_check
    _
  $region35: #{tpu_custom_call.1} parent=0 // pred_check_branch
    %35 = sbr.rel (0) target = $region37
  $region36: #{tpu_custom_call.1} parent=0 // pred_region
    _
  $region37: #{tpu_custom_call.1} parent=0 // pred_fallthru
    _
  // Predicated region
  $region38: #{tpu_custom_call.1} parent=0 // pred_check
    _
  $region39: #{tpu_custom_call.1} parent=0 // pred_check_branch
    %37 = sbr.rel (0) target = $region41
  $region40: #{tpu_custom_call.1} parent=0 // pred_region
    _
  $region41: #{tpu_custom_call.1} parent=0 // pred_fallthru
    _
  // Predicated region
  $region42: #{tpu_custom_call.1} parent=0 // pred_check
    _
  $region43: #{tpu_custom_call.1} parent=0 // pred_check_branch
    %39 = sbr.rel (0) target = $region45
  $region44: #{tpu_custom_call.1} parent=0 // pred_region
    _
  $region45: #{tpu_custom_call.1} parent=0 // pred_fallthru
    _
  // Predicated region
  $region46: #{tpu_custom_call.1} parent=0 // pred_check
    _
  $region47: #{tpu_custom_call.1} parent=0 // pred_check_branch
    %41 = sbr.rel (0) target = $region49
  $region48: #{tpu_custom_call.1} parent=0 // pred_region
    _
  $region49: #{tpu_custom_call.1} parent=0 // pred_fallthru
    _
  // Predicated region
  $region50: #{tpu_custom_call.1} parent=0 // pred_check
    _
  $region51: #{tpu_custom_call.1} parent=0 // pred_check_branch
    %43 = sbr.rel (0) target = $region53
  $region52: #{tpu_custom_call.1} parent=0 // pred_region
    _
  $region53: #{tpu_custom_call.1} parent=0 // pred_fallthru
    _
  %v44 = vld [vmem:[%s0] sm:$0xff]
  %v45 = vld [vmem:[%s0 + $0x8] sm:$0xff]
  %v46 = vld [vmem:[%s0 + $0x10] sm:$0xff]
  %v47 = vld [vmem:[%s0 + $0x18] sm:$0xff]
  %v48 = vld [vmem:[%s0 + $0x20] sm:$0xff]
  %v49 = vmax.f32 %v44, 0.0
  %v50 = vmax.f32 %v45, 0.0
  %v51 = vmax.f32 %v46, 0.0
  %v52 = vmax.f32 %v47, 0.0
  %v53 = vmax.f32 %v48, 0.0
  %v54 = vlaneseq
  %v55 = vshrl.u32 %v54, 7
  %v56 = vadd.s32 %v55, 8
  %v57 = vadd.s32 %v55, 16
  %v58 = vadd.s32 %v55, 24
  %v59 = vadd.s32 %v55, 32
  %v60 = vcvt.s32.f32 %v55
  %v61 = vcvt.s32.f32 %v56
  %v62 = vcvt.s32.f32 %v57
  %v63 = vcvt.s32.f32 %v58
  %v64 = vcvt.s32.f32 %v59
  %v65 = vlaneseq
  %v66 = vand.u32 %v65, 127
  %v67 = vcvt.s32.f32 %v66
  %v68 = vadd.f32 %v60, 0.5
  %v69 = vadd.f32 %v61, 0.5
  %v70 = vadd.f32 %v62, 0.5
  %v71 = vadd.f32 %v63, 0.5
  %v72 = vadd.f32 %v64, 0.5
  %v73 = vmul.f32 %v68, 0.05
  %v74 = vmul.f32 %v69, 0.05
  %v75 = vmul.f32 %v70, 0.05
  %v76 = vmul.f32 %v71, 0.05
  %v77 = vmul.f32 %v72, 0.05
  %v78 = vfloor.f32 %v73
  %v79 = vfloor.f32 %v74
  %v80 = vfloor.f32 %v75
  %v81 = vfloor.f32 %v76
  %v82 = vfloor.f32 %v77
  %v83 = vadd.f32 %v67, 0.5
  %v84 = vmul.f32 %v83, 0.05
  %v85 = vfloor.f32 %v84
  %vm86 = vcmp.eq.f32.partialorder %v78, %v85
  %vm87 = vcmp.eq.f32.partialorder %v79, %v85
  %vm88 = vcmp.eq.f32.partialorder %v80, %v85
  %vm89 = vcmp.eq.f32.partialorder %v81, %v85
  %vm90 = vcmp.eq.f32.partialorder %v82, %v85
  %v91 = vsel %vm86, 0.0, -1e+30
  %v92 = vsel %vm87, 0.0, -1e+30
  %v93 = vsel %vm88, 0.0, -1e+30
  %v94 = vsel %vm89, 0.0, -1e+30
  %v95 = vsel %vm90, 0.0, -1e+30
  %v96 = vld [vmem:[%s1] sm:$0xff]
  %v97 = vld [vmem:[%s1 + $0x8] sm:$0xff]
  %v98 = vld [vmem:[%s1 + $0x10] sm:$0xff]
  %v99 = vld [vmem:[%s1 + $0x18] sm:$0xff]
  %v100 = vld [vmem:[%s1 + $0x20] sm:$0xff]
  %v101 = vld [vmem:[%s1 + $0x28] sm:$0xff]
  %v102 = vld [vmem:[%s1 + $0x30] sm:$0xff]
  %v103 = vld [vmem:[%s1 + $0x38] sm:$0xff]
  %v104 = vld [vmem:[%s1 + $0x40] sm:$0xff]
  %v105 = vld [vmem:[%s1 + $0x48] sm:$0xff]
  %v106 = vld [vmem:[%s1 + $0x50] sm:$0xff]
  %v107 = vld [vmem:[%s1 + $0x58] sm:$0xff]
  %v108 = vld [vmem:[%s1 + $0x60] sm:$0xf]
  %v109 = vld [vmem:[%s1 + $0x68] sm:$0xf]
  %v110 = vld [vmem:[%s1 + $0x70] sm:$0xf]
  %v111 = vld [vmem:[%s1 + $0x78] sm:$0xf]
  %v112 = vld [vmem:[%s1 + $0x80] sm:$0xf]
  %v113 = vld [vmem:[%s1 + $0x88] sm:$0xf]
  %v114 = vld [vmem:[%s2] sm:$0x3f]
  %v116 = vlaneseq
  %v117 = vshrl.u32 %v116, 7
  %v118 = vsub.s32 0, %v117
  %v119 = vrot.slane %v114, %v118
  %v120 = vlaneseq
  %v121 = vshrl.u32 %v120, 7
  %v122 = vsub.s32 1, %v121
  %v123 = vrot.slane %v114, %v122
  %v124 = vlaneseq
  %v125 = vshrl.u32 %v124, 7
  %v126 = vsub.s32 2, %v125
  %v127 = vrot.slane %v114, %v126
  %v128 = vlaneseq
  %v129 = vshrl.u32 %v128, 7
  %v130 = vsub.s32 3, %v129
  %v131 = vrot.slane %v114, %v130
  %v132 = vlaneseq
  %v133 = vshrl.u32 %v132, 7
  %v134 = vsub.s32 4, %v133
  %v135 = vrot.slane %v114, %v134
  %v136 = vlaneseq
  %v137 = vshrl.u32 %v136, 7
  %v138 = vsub.s32 5, %v137
  %v139 = vrot.slane %v114, %v138
  %vm146 = vcmask 162816
  %v148 = vsel %vm146, %v49, 0
  %v151 = vsel %vm146, %v50, 0
  %v154 = vsel %vm146, %v51, 0
  %v157 = vsel %vm146, %v52, 0
  %v160 = vsel %vm146, %v53, 0
  %vm162 = vcmask 1043456
  %v164 = vsel %vm162, %v108, 0
  %v167 = vsel %vm162, %v109, 0
  %v170 = vsel %vm162, %v110, 0
  %v173 = vsel %vm162, %v111, 0
  %v176 = vsel %vm162, %v112, 0
  %v179 = vsel %vm162, %v113, 0
  %181 = vmatprep.subr.mxu0 %v97
  %182 = vmatpush1.msra.mxu0 %v96
  %183 = vmatprep.subr.mxu0 %v103
  %184 = vmatpush1.msra.mxu0 %v102
  %185 = vmatprep.subr.mxu0 %v167
  %186 = vmatpush1.msra.mxu0 %v164
  %187 = vmatprep.subr.mxu0 0.0
  %188 = vmatpush1.msra.mxu0 0.0
  %189 = vmatprep.subr.mxu0 0.0
  %190 = vmatpush1.msra.mxu0 0.0
  %191 = vmatprep.subr.mxu0 0.0
  %192 = vmatpush1.msra.mxu0 0.0
  %193 = vmatprep.subr.mxu0 0.0
  %194 = vmatpush1.msra.mxu0 0.0
  %195 = vmatprep.subr.mxu0 0.0
  %196 = vmatpush1.msra.mxu0 0.0
  %197 = vmatprep.subr.mxu0 0.0
  %198 = vmatpush1.msra.mxu0 0.0
  %199 = vmatprep.subr.mxu0 0.0
  %200 = vmatpush1.msra.mxu0 0.0
  %201 = vmatprep.subr.mxu0 0.0
  %202 = vmatpush1.msra.mxu0 0.0
  %203 = vmatprep.subr.mxu0 0.0
  %204 = vmatpush1.msra.mxu0 0.0
  %205 = vmatprep.subr.mxu0 0.0
  %206 = vmatpush1.msra.mxu0 0.0
  %207 = vmatprep.subr.mxu0 0.0
  %208 = vmatpush1.msra.mxu0 0.0
  %209 = vmatprep.subr.mxu0 0.0
  %210 = vmatpush1.msra.mxu0 0.0
  %211 = vmatprep.subr.mxu0 0.0
  %212 = vmatpush1.msra.mxu0 0.0
  %213 = vmatprep.subr.mxu0 0.0
  %214 = vmatpush1.msra.mxu0 0.0
  %215 = vmatprep.subr.mxu0 0.0
  %216 = vmatpush1.msra.mxu0 0.0
  %217 = vmatprep.subr.mxu0 0.0
  %218 = vmatpush1.msra.mxu0 0.0
  %219 = vmatprep.subr.mxu0 0.0
  %220 = vmatpush1.msra.mxu0 0.0
  %221 = vmatprep.subr.mxu0 0.0
  %222 = vmatpush1.msra.mxu0 0.0
  %223 = vmatprep.subr.mxu0 0.0
  %224 = vmatpush1.msra.mxu0 0.0
  %225 = vmatprep.subr.mxu0 0.0
  %226 = vmatpush1.msra.mxu0 0.0
  %227 = vmatprep.subr.mxu0 0.0
  %228 = vmatpush1.msra.mxu0 0.0
  %229 = vmatprep.subr.mxu0 0.0
  %230 = vmatpush1.msra.mxu0 0.0
  %231 = vmatprep.subr.mxu0 0.0
  %232 = vmatpush1.msra.mxu0 0.0
  %233 = vmatprep.subr.mxu0 0.0
  %234 = vmatpush1.msra.mxu0 0.0
  %235 = vmatprep.subr.mxu0 0.0
  %236 = vmatpush1.msra.mxu0 0.0
  %237 = vmatprep.subr.mxu0 0.0
  %238 = vmatpush1.msra.mxu0 0.0
  %239 = vmatprep.subr.mxu0 0.0
  %240 = vmatpush1.msra.mxu0 0.0
  %241 = vmatprep.subr.mxu0 0.0
  %242 = vmatpush1.msra.mxu0 0.0
  %243 = vmatprep.subr.mxu0 0.0
  %244 = vmatpush1.msra.mxu0 0.0
  %245 = vmatprep.mubr.f32.mxu0 0.0
  %246 = vmatmul.mubr.f32.gmra.mrb[0].mxu0 %v148
  %v247 = vpop.f32.mrb[0].mxu0
  %v248 = vadd.f32 %v119, %v247
  %v249 = vpop.f32.mrb[0].mxu0
  %v250 = vadd.f32 %v123, %v249
  %251 = vmatprep.mubr.f32.mxu0 0.0
  %252 = vmatmul.mubr.f32.gmra.mrb[0].mxu0 %v151
  %v253 = vpop.f32.mrb[0].mxu0
  %v254 = vadd.f32 %v119, %v253
  %v255 = vpop.f32.mrb[0].mxu0
  %v256 = vadd.f32 %v123, %v255
  %257 = vmatprep.mubr.f32.mxu0 0.0
  %258 = vmatmul.mubr.f32.gmra.mrb[0].mxu0 %v154
  %v259 = vpop.f32.mrb[0].mxu0
  %v260 = vadd.f32 %v119, %v259
  %v261 = vpop.f32.mrb[0].mxu0
  %v262 = vadd.f32 %v123, %v261
  %263 = vmatprep.mubr.f32.mxu0 0.0
  %264 = vmatmul.mubr.f32.gmra.mrb[0].mxu0 %v157
  %v265 = vpop.f32.mrb[0].mxu0
  %v266 = vadd.f32 %v119, %v265
  %v267 = vpop.f32.mrb[0].mxu0
  %v268 = vadd.f32 %v123, %v267
  %269 = vmatprep.mubr.f32.mxu0 0.0
  %270 = vmatmul.mubr.f32.gmra.mrb[0].mxu0 %v160
  %v271 = vpop.f32.mrb[0].mxu0
  %v272 = vadd.f32 %v119, %v271
  %v273 = vpop.f32.mrb[0].mxu0
  %v274 = vadd.f32 %v123, %v273
  %275 = vdwg.mxu0
  %276 = vmatprep.subr.mxu0 %v99
  %277 = vmatpush1.msra.mxu0 %v98
  %278 = vmatprep.subr.mxu0 %v105
  %279 = vmatpush1.msra.mxu0 %v104
  %280 = vmatprep.subr.mxu0 %v173
  %281 = vmatpush1.msra.mxu0 %v170
  %282 = vmatprep.subr.mxu0 0.0
  %283 = vmatpush1.msra.mxu0 0.0
  %284 = vmatprep.subr.mxu0 0.0
  %285 = vmatpush1.msra.mxu0 0.0
  %286 = vmatprep.subr.mxu0 0.0
  %287 = vmatpush1.msra.mxu0 0.0
  %288 = vmatprep.subr.mxu0 0.0
  %289 = vmatpush1.msra.mxu0 0.0
  %290 = vmatprep.subr.mxu0 0.0
  %291 = vmatpush1.msra.mxu0 0.0
  %292 = vmatprep.subr.mxu0 0.0
  %293 = vmatpush1.msra.mxu0 0.0
  %294 = vmatprep.subr.mxu0 0.0
  %295 = vmatpush1.msra.mxu0 0.0
  %296 = vmatprep.subr.mxu0 0.0
  %297 = vmatpush1.msra.mxu0 0.0
  %298 = vmatprep.subr.mxu0 0.0
  %299 = vmatpush1.msra.mxu0 0.0
  %300 = vmatprep.subr.mxu0 0.0
  %301 = vmatpush1.msra.mxu0 0.0
  %302 = vmatprep.subr.mxu0 0.0
  %303 = vmatpush1.msra.mxu0 0.0
  %304 = vmatprep.subr.mxu0 0.0
  %305 = vmatpush1.msra.mxu0 0.0
  %306 = vmatprep.subr.mxu0 0.0
  %307 = vmatpush1.msra.mxu0 0.0
  %308 = vmatprep.subr.mxu0 0.0
  %309 = vmatpush1.msra.mxu0 0.0
  %310 = vmatprep.subr.mxu0 0.0
  %311 = vmatpush1.msra.mxu0 0.0
  %312 = vmatprep.subr.mxu0 0.0
  %313 = vmatpush1.msra.mxu0 0.0
  %314 = vmatprep.subr.mxu0 0.0
  %315 = vmatpush1.msra.mxu0 0.0
  %316 = vmatprep.subr.mxu0 0.0
  %317 = vmatpush1.msra.mxu0 0.0
  %318 = vmatprep.subr.mxu0 0.0
  %319 = vmatpush1.msra.mxu0 0.0
  %320 = vmatprep.subr.mxu0 0.0
  %321 = vmatpush1.msra.mxu0 0.0
  %322 = vmatprep.subr.mxu0 0.0
  %323 = vmatpush1.msra.mxu0 0.0
  %324 = vmatprep.subr.mxu0 0.0
  %325 = vmatpush1.msra.mxu0 0.0
  %326 = vmatprep.subr.mxu0 0.0
  %327 = vmatpush1.msra.mxu0 0.0
  %328 = vmatprep.subr.mxu0 0.0
  %329 = vmatpush1.msra.mxu0 0.0
  %330 = vmatprep.subr.mxu0 0.0
  %331 = vmatpush1.msra.mxu0 0.0
  %332 = vmatprep.subr.mxu0 0.0
  %333 = vmatpush1.msra.mxu0 0.0
  %334 = vmatprep.subr.mxu0 0.0
  %335 = vmatpush1.msra.mxu0 0.0
  %336 = vmatprep.subr.mxu0 0.0
  %337 = vmatpush1.msra.mxu0 0.0
  %338 = vmatprep.subr.mxu0 0.0
  %339 = vmatpush1.msra.mxu0 0.0
  %340 = vmatprep.mubr.f32.mxu0 0.0
  %341 = vmatmul.mubr.f32.gmra.mrb[0].mxu0 %v148
  %v342 = vpop.f32.mrb[0].mxu0
  %v343 = vadd.f32 %v127, %v342
  %v344 = vpop.f32.mrb[0].mxu0
  %v345 = vadd.f32 %v131, %v344
  %346 = vmatprep.mubr.f32.mxu0 0.0
  %347 = vmatmul.mubr.f32.gmra.mrb[0].mxu0 %v151
  %v348 = vpop.f32.mrb[0].mxu0
  %v349 = vadd.f32 %v127, %v348
  %v350 = vpop.f32.mrb[0].mxu0
  %v351 = vadd.f32 %v131, %v350
  %352 = vmatprep.mubr.f32.mxu0 0.0
  %353 = vmatmul.mubr.f32.gmra.mrb[0].mxu0 %v154
  %v354 = vpop.f32.mrb[0].mxu0
  %v355 = vadd.f32 %v127, %v354
  %v356 = vpop.f32.mrb[0].mxu0
  %v357 = vadd.f32 %v131, %v356
  %358 = vmatprep.mubr.f32.mxu0 0.0
  %359 = vmatmul.mubr.f32.gmra.mrb[0].mxu0 %v157
  %v360 = vpop.f32.mrb[0].mxu0
  %v361 = vadd.f32 %v127, %v360
  %v362 = vpop.f32.mrb[0].mxu0
  %v363 = vadd.f32 %v131, %v362
  %364 = vmatprep.mubr.f32.mxu0 0.0
  %365 = vmatmul.mubr.f32.gmra.mrb[0].mxu0 %v160
  %v366 = vpop.f32.mrb[0].mxu0
  %v367 = vadd.f32 %v127, %v366
  %v368 = vpop.f32.mrb[0].mxu0
  %v369 = vadd.f32 %v131, %v368
  %370 = vdwg.mxu0
  %371 = vmatprep.subr.mxu0 %v101
  %372 = vmatpush1.msra.mxu0 %v100
  %373 = vmatprep.subr.mxu0 %v107
  %374 = vmatpush1.msra.mxu0 %v106
  %375 = vmatprep.subr.mxu0 %v179
  %376 = vmatpush1.msra.mxu0 %v176
  %377 = vmatprep.subr.mxu0 0.0
  %378 = vmatpush1.msra.mxu0 0.0
  %379 = vmatprep.subr.mxu0 0.0
  %380 = vmatpush1.msra.mxu0 0.0
  %381 = vmatprep.subr.mxu0 0.0
  %382 = vmatpush1.msra.mxu0 0.0
  %383 = vmatprep.subr.mxu0 0.0
  %384 = vmatpush1.msra.mxu0 0.0
  %385 = vmatprep.subr.mxu0 0.0
  %386 = vmatpush1.msra.mxu0 0.0
  %387 = vmatprep.subr.mxu0 0.0
  %388 = vmatpush1.msra.mxu0 0.0
  %389 = vmatprep.subr.mxu0 0.0
  %390 = vmatpush1.msra.mxu0 0.0
  %391 = vmatprep.subr.mxu0 0.0
  %392 = vmatpush1.msra.mxu0 0.0
  %393 = vmatprep.subr.mxu0 0.0
  %394 = vmatpush1.msra.mxu0 0.0
  %395 = vmatprep.subr.mxu0 0.0
  %396 = vmatpush1.msra.mxu0 0.0
  %397 = vmatprep.subr.mxu0 0.0
  %398 = vmatpush1.msra.mxu0 0.0
  %399 = vmatprep.subr.mxu0 0.0
  %400 = vmatpush1.msra.mxu0 0.0
  %401 = vmatprep.subr.mxu0 0.0
  %402 = vmatpush1.msra.mxu0 0.0
  %403 = vmatprep.subr.mxu0 0.0
  %404 = vmatpush1.msra.mxu0 0.0
  %405 = vmatprep.subr.mxu0 0.0
  %406 = vmatpush1.msra.mxu0 0.0
  %407 = vmatprep.subr.mxu0 0.0
  %408 = vmatpush1.msra.mxu0 0.0
  %409 = vmatprep.subr.mxu0 0.0
  %410 = vmatpush1.msra.mxu0 0.0
  %411 = vmatprep.subr.mxu0 0.0
  %412 = vmatpush1.msra.mxu0 0.0
  %413 = vmatprep.subr.mxu0 0.0
  %414 = vmatpush1.msra.mxu0 0.0
  %415 = vmatprep.subr.mxu0 0.0
  %416 = vmatpush1.msra.mxu0 0.0
  %417 = vmatprep.subr.mxu0 0.0
  %418 = vmatpush1.msra.mxu0 0.0
  %419 = vmatprep.subr.mxu0 0.0
  %420 = vmatpush1.msra.mxu0 0.0
  %421 = vmatprep.subr.mxu0 0.0
  %422 = vmatpush1.msra.mxu0 0.0
  %423 = vmatprep.subr.mxu0 0.0
  %424 = vmatpush1.msra.mxu0 0.0
  %425 = vmatprep.subr.mxu0 0.0
  %426 = vmatpush1.msra.mxu0 0.0
  %427 = vmatprep.subr.mxu0 0.0
  %428 = vmatpush1.msra.mxu0 0.0
  %429 = vmatprep.subr.mxu0 0.0
  %430 = vmatpush1.msra.mxu0 0.0
  %431 = vmatprep.subr.mxu0 0.0
  %432 = vmatpush1.msra.mxu0 0.0
  %433 = vmatprep.subr.mxu0 0.0
  %434 = vmatpush1.msra.mxu0 0.0
  %435 = vmatprep.mubr.f32.mxu0 0.0
  %436 = vmatmul.mubr.f32.gmra.mrb[0].mxu0 %v148
  %v437 = vpop.f32.mrb[0].mxu0
  %v438 = vadd.f32 %v135, %v437
  %v439 = vpop.f32.mrb[0].mxu0
  %v440 = vadd.f32 %v139, %v439
  %441 = vmatprep.mubr.f32.mxu0 0.0
  %442 = vmatmul.mubr.f32.gmra.mrb[0].mxu0 %v151
  %v443 = vpop.f32.mrb[0].mxu0
  %v444 = vadd.f32 %v135, %v443
  %v445 = vpop.f32.mrb[0].mxu0
  %v446 = vadd.f32 %v139, %v445
  %447 = vmatprep.mubr.f32.mxu0 0.0
  %448 = vmatmul.mubr.f32.gmra.mrb[0].mxu0 %v154
  %v449 = vpop.f32.mrb[0].mxu0
  %v450 = vadd.f32 %v135, %v449
  %v451 = vpop.f32.mrb[0].mxu0
  %v452 = vadd.f32 %v139, %v451
  %453 = vmatprep.mubr.f32.mxu0 0.0
  %454 = vmatmul.mubr.f32.gmra.mrb[0].mxu0 %v157
  %v455 = vpop.f32.mrb[0].mxu0
  %v456 = vadd.f32 %v135, %v455
  %v457 = vpop.f32.mrb[0].mxu0
  %v458 = vadd.f32 %v139, %v457
  %459 = vmatprep.mubr.f32.mxu0 0.0
  %460 = vmatmul.mubr.f32.gmra.mrb[0].mxu0 %v160
  %v461 = vpop.f32.mrb[0].mxu0
  %v462 = vadd.f32 %v135, %v461
  %v463 = vpop.f32.mrb[0].mxu0
  %v464 = vadd.f32 %v139, %v463
  %465 = vdwg.mxu0
  %466 = vst [vmem:[#allocation2] sm:$0xff] %v248
  %467 = vst [vmem:[#allocation2 + $0x8] sm:$0xff] %v250
  %468 = vst [vmem:[#allocation2 + $0x10] sm:$0xff] %v343
  %469 = vst [vmem:[#allocation2 + $0x18] sm:$0xff] %v345
  %470 = vst [vmem:[#allocation2 + $0x20] sm:$0xff] %v438
  %471 = vst [vmem:[#allocation2 + $0x28] sm:$0xff] %v440
  %472 = vst [vmem:[#allocation2 + $0x30] sm:$0xff] %v254
  %473 = vst [vmem:[#allocation2 + $0x38] sm:$0xff] %v256
  %474 = vst [vmem:[#allocation2 + $0x40] sm:$0xff] %v349
  %475 = vst [vmem:[#allocation2 + $0x48] sm:$0xff] %v351
  %476 = vst [vmem:[#allocation2 + $0x50] sm:$0xff] %v444
  %477 = vst [vmem:[#allocation2 + $0x58] sm:$0xff] %v446
  %478 = vst [vmem:[#allocation2 + $0x60] sm:$0xff] %v260
  %479 = vst [vmem:[#allocation2 + $0x68] sm:$0xff] %v262
  %480 = vst [vmem:[#allocation2 + $0x70] sm:$0xff] %v355
  %481 = vst [vmem:[#allocation2 + $0x78] sm:$0xff] %v357
  %482 = vst [vmem:[#allocation2 + $0x80] sm:$0xff] %v450
  %483 = vst [vmem:[#allocation2 + $0x88] sm:$0xff] %v452
  %484 = vst [vmem:[#allocation2 + $0x90] sm:$0xff] %v266
  %485 = vst [vmem:[#allocation2 + $0x98] sm:$0xff] %v268
  %486 = vst [vmem:[#allocation2 + $0xa0] sm:$0xff] %v361
  %487 = vst [vmem:[#allocation2 + $0xa8] sm:$0xff] %v363
  %488 = vst [vmem:[#allocation2 + $0xb0] sm:$0xff] %v456
  %489 = vst [vmem:[#allocation2 + $0xb8] sm:$0xff] %v458
  %490 = vst [vmem:[#allocation2 + $0xc0] sm:$0xff] %v272
  %491 = vst [vmem:[#allocation2 + $0xc8] sm:$0xff] %v274
  %492 = vst [vmem:[#allocation2 + $0xd0] sm:$0xff] %v367
  %493 = vst [vmem:[#allocation2 + $0xd8] sm:$0xff] %v369
  %494 = vst [vmem:[#allocation2 + $0xe0] sm:$0xff] %v462
  %495 = vst [vmem:[#allocation2 + $0xe8] sm:$0xff] %v464
  %v496 = vld [vmem:[#allocation2] sm:$0xff]
  %v497 = vld [vmem:[#allocation2 + $0x30] sm:$0xff]
  %v498 = vld [vmem:[#allocation2 + $0x60] sm:$0xff]
  %v499 = vld [vmem:[#allocation2 + $0x90] sm:$0xff]
  %v500 = vld [vmem:[#allocation2 + $0xc0] sm:$0xff]
  %v501 = vld [vmem:[#allocation2 + $0x10] sm:$0xff]
  %v502 = vld [vmem:[#allocation2 + $0x40] sm:$0xff]
  %v503 = vld [vmem:[#allocation2 + $0x70] sm:$0xff]
  %v504 = vld [vmem:[#allocation2 + $0xa0] sm:$0xff]
  %v505 = vld [vmem:[#allocation2 + $0xd0] sm:$0xff]
  %v506 = vld [vmem:[#allocation2 + $0x20] sm:$0xff]
  %v507 = vld [vmem:[#allocation2 + $0x50] sm:$0xff]
  %v508 = vld [vmem:[#allocation2 + $0x80] sm:$0xff]
  %v509 = vld [vmem:[#allocation2 + $0xb0] sm:$0xff]
  %v510 = vld [vmem:[#allocation2 + $0xe0] sm:$0xff]
  %511 = vmatprep.subr.mxu0 0.0
  %512 = vmatpush1.xpose.msra.mxu0 %v501
  %513 = vmatprep.subr.mxu0 0.0
  %514 = vmatpush1.xpose.msra.mxu0 %v502
  %515 = vmatprep.subr.mxu0 0.0
  %516 = vmatpush1.xpose.msra.mxu0 %v503
  %517 = vmatprep.subr.mxu0 0.0
  %518 = vmatpush1.xpose.msra.mxu0 %v504
  %519 = vmatprep.subr.mxu0 0.0
  %520 = vmatpush1.xpose.msra.mxu0 %v505
  %521 = vmatprep.subr.mxu0 0.0
  %522 = vmatpush1.xpose.msra.mxu0 0.0
  %523 = vmatprep.subr.mxu0 0.0
  %524 = vmatpush1.xpose.msra.mxu0 0.0
  %525 = vmatprep.subr.mxu0 0.0
  %526 = vmatpush1.xpose.msra.mxu0 0.0
  %527 = vmatprep.subr.mxu0 0.0
  %528 = vmatpush1.xpose.msra.mxu0 0.0
  %529 = vmatprep.subr.mxu0 0.0
  %530 = vmatpush1.xpose.msra.mxu0 0.0
  %531 = vmatprep.subr.mxu0 0.0
  %532 = vmatpush1.xpose.msra.mxu0 0.0
  %533 = vmatprep.subr.mxu0 0.0
  %534 = vmatpush1.xpose.msra.mxu0 0.0
  %535 = vmatprep.subr.mxu0 0.0
  %536 = vmatpush1.xpose.msra.mxu0 0.0
  %537 = vmatprep.subr.mxu0 0.0
  %538 = vmatpush1.xpose.msra.mxu0 0.0
  %539 = vmatprep.subr.mxu0 0.0
  %540 = vmatpush1.xpose.msra.mxu0 0.0
  %541 = vmatprep.subr.mxu0 0.0
  %542 = vmatpush1.xpose.msra.mxu0 0.0
  %543 = vmatprep.subr.mxu0 0.0
  %544 = vmatpush1.xpose.msra.mxu0 0.0
  %545 = vmatprep.subr.mxu0 0.0
  %546 = vmatpush1.xpose.msra.mxu0 0.0
  %547 = vmatprep.subr.mxu0 0.0
  %548 = vmatpush1.xpose.msra.mxu0 0.0
  %549 = vmatprep.subr.mxu0 0.0
  %550 = vmatpush1.xpose.msra.mxu0 0.0
  %551 = vmatprep.subr.mxu0 0.0
  %552 = vmatpush1.xpose.msra.mxu0 0.0
  %553 = vmatprep.subr.mxu0 0.0
  %554 = vmatpush1.xpose.msra.mxu0 0.0
  %555 = vmatprep.subr.mxu0 0.0
  %556 = vmatpush1.xpose.msra.mxu0 0.0
  %557 = vmatprep.subr.mxu0 0.0
  %558 = vmatpush1.xpose.msra.mxu0 0.0
  %559 = vmatprep.subr.mxu0 0.0
  %560 = vmatpush1.xpose.msra.mxu0 0.0
  %561 = vmatprep.subr.mxu0 0.0
  %562 = vmatpush1.xpose.msra.mxu0 0.0
  %563 = vmatprep.subr.mxu0 0.0
  %564 = vmatpush1.xpose.msra.mxu0 0.0
  %565 = vmatprep.subr.mxu0 0.0
  %566 = vmatpush1.xpose.msra.mxu0 0.0
  %567 = vmatprep.subr.mxu0 0.0
  %568 = vmatpush1.xpose.msra.mxu0 0.0
  %569 = vmatprep.subr.mxu0 0.0
  %570 = vmatpush1.xpose.msra.mxu0 0.0
  %571 = vmatprep.subr.mxu0 0.0
  %572 = vmatpush1.xpose.msra.mxu0 0.0
  %573 = vmatprep.subr.mxu0 0.0
  %574 = vmatpush1.xpose.msra.mxu0 0.0
  %575 = vmatprep.mubr.f32.mxu0 0.0
  %576 = vmatmul.mubr.f32.gmra.mrb[0].mxu0 %v496
  %v577 = vpop.f32.mrb[0].mxu0
  %v578 = vadd.f32 %v91, %v577
  %v579 = vpop.f32.mrb[0].mxu0
  %580 = vmatprep.mubr.f32.mxu0 0.0
  %581 = vmatmul.mubr.f32.gmra.mrb[0].mxu0 %v497
  %v582 = vpop.f32.mrb[0].mxu0
  %v583 = vadd.f32 %v92, %v582
  %v584 = vpop.f32.mrb[0].mxu0
  %585 = vmatprep.mubr.f32.mxu0 0.0
  %586 = vmatmul.mubr.f32.gmra.mrb[0].mxu0 %v498
  %v587 = vpop.f32.mrb[0].mxu0
  %v588 = vadd.f32 %v93, %v587
  %v589 = vpop.f32.mrb[0].mxu0
  %590 = vmatprep.mubr.f32.mxu0 0.0
  %591 = vmatmul.mubr.f32.gmra.mrb[0].mxu0 %v499
  %v592 = vpop.f32.mrb[0].mxu0
  %v593 = vadd.f32 %v94, %v592
  %v594 = vpop.f32.mrb[0].mxu0
  %595 = vmatprep.mubr.f32.mxu0 0.0
  %596 = vmatmul.mubr.f32.gmra.mrb[0].mxu0 %v500
  %v597 = vpop.f32.mrb[0].mxu0
  %v598 = vadd.f32 %v95, %v597
  %v599 = vpop.f32.mrb[0].mxu0
  %600 = vdwg.mxu0
  %vm601 = vcmask 326656
  %v602 = vsel %vm601, %v578, -inf
  %603 = vmax.xlane.f32.xlu0 %v602
  %v604 = vpop.xlane.xlu0 %603
  %v605 = vsel %vm601, %v583, -inf
  %606 = vmax.xlane.f32.xlu0 %v605
  %v607 = vpop.xlane.xlu0 %606
  %v608 = vsel %vm601, %v588, -inf
  %609 = vmax.xlane.f32.xlu0 %v608
  %v610 = vpop.xlane.xlu0 %609
  %v611 = vsel %vm601, %v593, -inf
  %612 = vmax.xlane.f32.xlu0 %v611
  %v613 = vpop.xlane.xlu0 %612
  %v614 = vsel %vm601, %v598, -inf
  %615 = vmax.xlane.f32.xlu0 %v614
  %v616 = vpop.xlane.xlu0 %615
  %v617 = vsub.f32 %v578, %v604
  %v618 = vsub.f32 %v583, %v607
  %v619 = vsub.f32 %v588, %v610
  %v620 = vsub.f32 %v593, %v613
  %v621 = vsub.f32 %v598, %v616
  %v622 = vmul.f32 %v617, 1.442695
  %v623 = vpow.pop %v622
  %v624 = vmul.f32 %v618, 1.442695
  %v625 = vpow.pop %v624
  %v626 = vmul.f32 %v619, 1.442695
  %v627 = vpow.pop %v626
  %v628 = vmul.f32 %v620, 1.442695
  %v629 = vpow.pop %v628
  %v630 = vmul.f32 %v621, 1.442695
  %v631 = vpow.pop %v630
  %v632 = vsel %vm601, %v623, 0.0
  %633 = vadd.xlane.f32.xlu0 %v632
  %v634 = vpop.xlane.xlu0 %633
  %v635 = vsel %vm601, %v625, 0.0
  %636 = vadd.xlane.f32.xlu0 %v635
  %v637 = vpop.xlane.xlu0 %636
  %v638 = vsel %vm601, %v627, 0.0
  %639 = vadd.xlane.f32.xlu0 %v638
  %v640 = vpop.xlane.xlu0 %639
  %v641 = vsel %vm601, %v629, 0.0
  %642 = vadd.xlane.f32.xlu0 %v641
  %v643 = vpop.xlane.xlu0 %642
  %v644 = vsel %vm601, %v631, 0.0
  %645 = vadd.xlane.f32.xlu0 %v644
  %v646 = vpop.xlane.xlu0 %645
  %v647 = vrcp.pop %v634
  %v648 = vrcp.pop %v637
  %v649 = vrcp.pop %v640
  %v650 = vrcp.pop %v643
  %v651 = vrcp.pop %v646
  %v652 = vmul.f32 %v623, %v647
  %v653 = vmul.f32 %v625, %v648
  %v654 = vmul.f32 %v627, %v649
  %v655 = vmul.f32 %v629, %v650
  %v656 = vmul.f32 %v631, %v651
  %v658 = vsel %vm601, %v652, 0
  %v661 = vsel %vm601, %v653, 0
  %v664 = vsel %vm601, %v654, 0
  %v667 = vsel %vm601, %v655, 0
  %v670 = vsel %vm601, %v656, 0
  %672 = vmatprep.subr.mxu0 0.0
  %673 = vmatpush1.msra.mxu0 %v506
  %674 = vmatprep.subr.mxu0 0.0
  %675 = vmatpush1.msra.mxu0 %v507
  %676 = vmatprep.subr.mxu0 0.0
  %677 = vmatpush1.msra.mxu0 %v508
  %678 = vmatprep.subr.mxu0 0.0
  %679 = vmatpush1.msra.mxu0 %v509
  %680 = vmatprep.subr.mxu0 0.0
  %681 = vmatpush1.msra.mxu0 %v510
  %682 = vmatprep.subr.mxu0 0.0
  %683 = vmatpush1.msra.mxu0 0.0
  %684 = vmatprep.subr.mxu0 0.0
  %685 = vmatpush1.msra.mxu0 0.0
  %686 = vmatprep.subr.mxu0 0.0
  %687 = vmatpush1.msra.mxu0 0.0
  %688 = vmatprep.subr.mxu0 0.0
  %689 = vmatpush1.msra.mxu0 0.0
  %690 = vmatprep.subr.mxu0 0.0
  %691 = vmatpush1.msra.mxu0 0.0
  %692 = vmatprep.subr.mxu0 0.0
  %693 = vmatpush1.msra.mxu0 0.0
  %694 = vmatprep.subr.mxu0 0.0
  %695 = vmatpush1.msra.mxu0 0.0
  %696 = vmatprep.subr.mxu0 0.0
  %697 = vmatpush1.msra.mxu0 0.0
  %698 = vmatprep.subr.mxu0 0.0
  %699 = vmatpush1.msra.mxu0 0.0
  %700 = vmatprep.subr.mxu0 0.0
  %701 = vmatpush1.msra.mxu0 0.0
  %702 = vmatprep.subr.mxu0 0.0
  %703 = vmatpush1.msra.mxu0 0.0
  %704 = vmatprep.subr.mxu0 0.0
  %705 = vmatpush1.msra.mxu0 0.0
  %706 = vmatprep.subr.mxu0 0.0
  %707 = vmatpush1.msra.mxu0 0.0
  %708 = vmatprep.subr.mxu0 0.0
  %709 = vmatpush1.msra.mxu0 0.0
  %710 = vmatprep.subr.mxu0 0.0
  %711 = vmatpush1.msra.mxu0 0.0
  %712 = vmatprep.subr.mxu0 0.0
  %713 = vmatpush1.msra.mxu0 0.0
  %714 = vmatprep.subr.mxu0 0.0
  %715 = vmatpush1.msra.mxu0 0.0
  %716 = vmatprep.subr.mxu0 0.0
  %717 = vmatpush1.msra.mxu0 0.0
  %718 = vmatprep.subr.mxu0 0.0
  %719 = vmatpush1.msra.mxu0 0.0
  %720 = vmatprep.subr.mxu0 0.0
  %721 = vmatpush1.msra.mxu0 0.0
  %722 = vmatprep.subr.mxu0 0.0
  %723 = vmatpush1.msra.mxu0 0.0
  %724 = vmatprep.subr.mxu0 0.0
  %725 = vmatpush1.msra.mxu0 0.0
  %726 = vmatprep.subr.mxu0 0.0
  %727 = vmatpush1.msra.mxu0 0.0
  %728 = vmatprep.subr.mxu0 0.0
  %729 = vmatpush1.msra.mxu0 0.0
  %730 = vmatprep.subr.mxu0 0.0
  %731 = vmatpush1.msra.mxu0 0.0
  %732 = vmatprep.subr.mxu0 0.0
  %733 = vmatpush1.msra.mxu0 0.0
  %734 = vmatprep.subr.mxu0 0.0
  %735 = vmatpush1.msra.mxu0 0.0
  %736 = vmatprep.mubr.f32.mxu0 0.0
  %737 = vmatmul.mubr.f32.gmra.mrb[0].mxu0 %v658
  %v738 = vpop.f32.mrb[0].mxu0
  %v739 = vadd.f32 0.0, %v738
  %v740 = vpop.f32.mrb[0].mxu0
  %741 = vmatprep.mubr.f32.mxu0 0.0
  %742 = vmatmul.mubr.f32.gmra.mrb[0].mxu0 %v661
  %v743 = vpop.f32.mrb[0].mxu0
  %v744 = vadd.f32 0.0, %v743
  %v745 = vpop.f32.mrb[0].mxu0
  %746 = vmatprep.mubr.f32.mxu0 0.0
  %747 = vmatmul.mubr.f32.gmra.mrb[0].mxu0 %v664
  %v748 = vpop.f32.mrb[0].mxu0
  %v749 = vadd.f32 0.0, %v748
  %v750 = vpop.f32.mrb[0].mxu0
  %751 = vmatprep.mubr.f32.mxu0 0.0
  %752 = vmatmul.mubr.f32.gmra.mrb[0].mxu0 %v667
  %v753 = vpop.f32.mrb[0].mxu0
  %v754 = vadd.f32 0.0, %v753
  %v755 = vpop.f32.mrb[0].mxu0
  %756 = vmatprep.mubr.f32.mxu0 0.0
  %757 = vmatmul.mubr.f32.gmra.mrb[0].mxu0 %v670
  %v758 = vpop.f32.mrb[0].mxu0
  %v759 = vadd.f32 0.0, %v758
  %v760 = vpop.f32.mrb[0].mxu0
  %761 = vdwg.mxu0
  %762 = vst [vmem:[#allocation3] sm:$0xff] %v739
  %763 = vst [vmem:[#allocation3 + $0x10] sm:$0xff] %v744
  %764 = vst [vmem:[#allocation3 + $0x20] sm:$0xff] %v749
  %765 = vst [vmem:[#allocation3 + $0x30] sm:$0xff] %v754
  %766 = vst [vmem:[#allocation3 + $0x40] sm:$0xff] %v759
  %v767 = vld [vmem:[#allocation2 + $0x8] sm:$0xff]
  %v768 = vld [vmem:[#allocation2 + $0x38] sm:$0xff]
  %v769 = vld [vmem:[#allocation2 + $0x68] sm:$0xff]
  %v770 = vld [vmem:[#allocation2 + $0x98] sm:$0xff]
  %v771 = vld [vmem:[#allocation2 + $0xc8] sm:$0xff]
  %v772 = vld [vmem:[#allocation2 + $0x18] sm:$0xff]
  %v773 = vld [vmem:[#allocation2 + $0x48] sm:$0xff]
  %v774 = vld [vmem:[#allocation2 + $0x78] sm:$0xff]
  %v775 = vld [vmem:[#allocation2 + $0xa8] sm:$0xff]
  %v776 = vld [vmem:[#allocation2 + $0xd8] sm:$0xff]
  %v777 = vld [vmem:[#allocation2 + $0x28] sm:$0xff]
  %v778 = vld [vmem:[#allocation2 + $0x58] sm:$0xff]
  %v779 = vld [vmem:[#allocation2 + $0x88] sm:$0xff]
  %v780 = vld [vmem:[#allocation2 + $0xb8] sm:$0xff]
  %v781 = vld [vmem:[#allocation2 + $0xe8] sm:$0xff]
  %782 = vmatprep.subr.mxu0 0.0
  %783 = vmatpush1.xpose.msra.mxu0 %v772
  %784 = vmatprep.subr.mxu0 0.0
  %785 = vmatpush1.xpose.msra.mxu0 %v773
  %786 = vmatprep.subr.mxu0 0.0
  %787 = vmatpush1.xpose.msra.mxu0 %v774
  %788 = vmatprep.subr.mxu0 0.0
  %789 = vmatpush1.xpose.msra.mxu0 %v775
  %790 = vmatprep.subr.mxu0 0.0
  %791 = vmatpush1.xpose.msra.mxu0 %v776
  %792 = vmatprep.subr.mxu0 0.0
  %793 = vmatpush1.xpose.msra.mxu0 0.0
  %794 = vmatprep.subr.mxu0 0.0
  %795 = vmatpush1.xpose.msra.mxu0 0.0
  %796 = vmatprep.subr.mxu0 0.0
  %797 = vmatpush1.xpose.msra.mxu0 0.0
  %798 = vmatprep.subr.mxu0 0.0
  %799 = vmatpush1.xpose.msra.mxu0 0.0
  %800 = vmatprep.subr.mxu0 0.0
  %801 = vmatpush1.xpose.msra.mxu0 0.0
  %802 = vmatprep.subr.mxu0 0.0
  %803 = vmatpush1.xpose.msra.mxu0 0.0
  %804 = vmatprep.subr.mxu0 0.0
  %805 = vmatpush1.xpose.msra.mxu0 0.0
  %806 = vmatprep.subr.mxu0 0.0
  %807 = vmatpush1.xpose.msra.mxu0 0.0
  %808 = vmatprep.subr.mxu0 0.0
  %809 = vmatpush1.xpose.msra.mxu0 0.0
  %810 = vmatprep.subr.mxu0 0.0
  %811 = vmatpush1.xpose.msra.mxu0 0.0
  %812 = vmatprep.subr.mxu0 0.0
  %813 = vmatpush1.xpose.msra.mxu0 0.0
  %814 = vmatprep.subr.mxu0 0.0
  %815 = vmatpush1.xpose.msra.mxu0 0.0
  %816 = vmatprep.subr.mxu0 0.0
  %817 = vmatpush1.xpose.msra.mxu0 0.0
  %818 = vmatprep.subr.mxu0 0.0
  %819 = vmatpush1.xpose.msra.mxu0 0.0
  %820 = vmatprep.subr.mxu0 0.0
  %821 = vmatpush1.xpose.msra.mxu0 0.0
  %822 = vmatprep.subr.mxu0 0.0
  %823 = vmatpush1.xpose.msra.mxu0 0.0
  %824 = vmatprep.subr.mxu0 0.0
  %825 = vmatpush1.xpose.msra.mxu0 0.0
  %826 = vmatprep.subr.mxu0 0.0
  %827 = vmatpush1.xpose.msra.mxu0 0.0
  %828 = vmatprep.subr.mxu0 0.0
  %829 = vmatpush1.xpose.msra.mxu0 0.0
  %830 = vmatprep.subr.mxu0 0.0
  %831 = vmatpush1.xpose.msra.mxu0 0.0
  %832 = vmatprep.subr.mxu0 0.0
  %833 = vmatpush1.xpose.msra.mxu0 0.0
  %834 = vmatprep.subr.mxu0 0.0
  %835 = vmatpush1.xpose.msra.mxu0 0.0
  %836 = vmatprep.subr.mxu0 0.0
  %837 = vmatpush1.xpose.msra.mxu0 0.0
  %838 = vmatprep.subr.mxu0 0.0
  %839 = vmatpush1.xpose.msra.mxu0 0.0
  %840 = vmatprep.subr.mxu0 0.0
  %841 = vmatpush1.xpose.msra.mxu0 0.0
  %842 = vmatprep.subr.mxu0 0.0
  %843 = vmatpush1.xpose.msra.mxu0 0.0
  %844 = vmatprep.subr.mxu0 0.0
  %845 = vmatpush1.xpose.msra.mxu0 0.0
  %846 = vmatprep.mubr.f32.mxu0 0.0
  %847 = vmatmul.mubr.f32.gmra.mrb[0].mxu0 %v767
  %v848 = vpop.f32.mrb[0].mxu0
  %v849 = vadd.f32 %v91, %v848
  %v850 = vpop.f32.mrb[0].mxu0
  %851 = vmatprep.mubr.f32.mxu0 0.0
  %852 = vmatmul.mubr.f32.gmra.mrb[0].mxu0 %v768
  %v853 = vpop.f32.mrb[0].mxu0
  %v854 = vadd.f32 %v92, %v853
  %v855 = vpop.f32.mrb[0].mxu0
  %856 = vmatprep.mubr.f32.mxu0 0.0
  %857 = vmatmul.mubr.f32.gmra.mrb[0].mxu0 %v769
  %v858 = vpop.f32.mrb[0].mxu0
  %v859 = vadd.f32 %v93, %v858
  %v860 = vpop.f32.mrb[0].mxu0
  %861 = vmatprep.mubr.f32.mxu0 0.0
  %862 = vmatmul.mubr.f32.gmra.mrb[0].mxu0 %v770
  %v863 = vpop.f32.mrb[0].mxu0
  %v864 = vadd.f32 %v94, %v863
  %v865 = vpop.f32.mrb[0].mxu0
  %866 = vmatprep.mubr.f32.mxu0 0.0
  %867 = vmatmul.mubr.f32.gmra.mrb[0].mxu0 %v771
  %v868 = vpop.f32.mrb[0].mxu0
  %v869 = vadd.f32 %v95, %v868
  %v870 = vpop.f32.mrb[0].mxu0
  %871 = vdwg.mxu0
  %v872 = vsel %vm601, %v849, -inf
  %873 = vmax.xlane.f32.xlu0 %v872
  %v874 = vpop.xlane.xlu0 %873
  %v875 = vsel %vm601, %v854, -inf
  %876 = vmax.xlane.f32.xlu0 %v875
  %v877 = vpop.xlane.xlu0 %876
  %v878 = vsel %vm601, %v859, -inf
  %879 = vmax.xlane.f32.xlu0 %v878
  %v880 = vpop.xlane.xlu0 %879
  %v881 = vsel %vm601, %v864, -inf
  %882 = vmax.xlane.f32.xlu0 %v881
  %v883 = vpop.xlane.xlu0 %882
  %v884 = vsel %vm601, %v869, -inf
  %885 = vmax.xlane.f32.xlu0 %v884
  %v886 = vpop.xlane.xlu0 %885
  %v887 = vsub.f32 %v849, %v874
  %v888 = vsub.f32 %v854, %v877
  %v889 = vsub.f32 %v859, %v880
  %v890 = vsub.f32 %v864, %v883
  %v891 = vsub.f32 %v869, %v886
  %v892 = vmul.f32 %v887, 1.442695
  %v893 = vpow.pop %v892
  %v894 = vmul.f32 %v888, 1.442695
  %v895 = vpow.pop %v894
  %v896 = vmul.f32 %v889, 1.442695
  %v897 = vpow.pop %v896
  %v898 = vmul.f32 %v890, 1.442695
  %v899 = vpow.pop %v898
  %v900 = vmul.f32 %v891, 1.442695
  %v901 = vpow.pop %v900
  %v902 = vsel %vm601, %v893, 0.0
  %903 = vadd.xlane.f32.xlu0 %v902
  %v904 = vpop.xlane.xlu0 %903
  %v905 = vsel %vm601, %v895, 0.0
  %906 = vadd.xlane.f32.xlu0 %v905
  %v907 = vpop.xlane.xlu0 %906
  %v908 = vsel %vm601, %v897, 0.0
  %909 = vadd.xlane.f32.xlu0 %v908
  %v910 = vpop.xlane.xlu0 %909
  %v911 = vsel %vm601, %v899, 0.0
  %912 = vadd.xlane.f32.xlu0 %v911
  %v913 = vpop.xlane.xlu0 %912
  %v914 = vsel %vm601, %v901, 0.0
  %915 = vadd.xlane.f32.xlu0 %v914
  %v916 = vpop.xlane.xlu0 %915
  %v917 = vrcp.pop %v904
  %v918 = vrcp.pop %v907
  %v919 = vrcp.pop %v910
  %v920 = vrcp.pop %v913
  %v921 = vrcp.pop %v916
  %v922 = vmul.f32 %v893, %v917
  %v923 = vmul.f32 %v895, %v918
  %v924 = vmul.f32 %v897, %v919
  %v925 = vmul.f32 %v899, %v920
  %v926 = vmul.f32 %v901, %v921
  %v928 = vsel %vm601, %v922, 0
  %v931 = vsel %vm601, %v923, 0
  %v934 = vsel %vm601, %v924, 0
  %v937 = vsel %vm601, %v925, 0
  %v940 = vsel %vm601, %v926, 0
  %942 = vmatprep.subr.mxu0 0.0
  %943 = vmatpush1.msra.mxu0 %v777
  %944 = vmatprep.subr.mxu0 0.0
  %945 = vmatpush1.msra.mxu0 %v778
  %946 = vmatprep.subr.mxu0 0.0
  %947 = vmatpush1.msra.mxu0 %v779
  %948 = vmatprep.subr.mxu0 0.0
  %949 = vmatpush1.msra.mxu0 %v780
  %950 = vmatprep.subr.mxu0 0.0
  %951 = vmatpush1.msra.mxu0 %v781
  %952 = vmatprep.subr.mxu0 0.0
  %953 = vmatpush1.msra.mxu0 0.0
  %954 = vmatprep.subr.mxu0 0.0
  %955 = vmatpush1.msra.mxu0 0.0
  %956 = vmatprep.subr.mxu0 0.0
  %957 = vmatpush1.msra.mxu0 0.0
  %958 = vmatprep.subr.mxu0 0.0
  %959 = vmatpush1.msra.mxu0 0.0
  %960 = vmatprep.subr.mxu0 0.0
  %961 = vmatpush1.msra.mxu0 0.0
  %962 = vmatprep.subr.mxu0 0.0
  %963 = vmatpush1.msra.mxu0 0.0
  %964 = vmatprep.subr.mxu0 0.0
  %965 = vmatpush1.msra.mxu0 0.0
  %966 = vmatprep.subr.mxu0 0.0
  %967 = vmatpush1.msra.mxu0 0.0
  %968 = vmatprep.subr.mxu0 0.0
  %969 = vmatpush1.msra.mxu0 0.0
  %970 = vmatprep.subr.mxu0 0.0
  %971 = vmatpush1.msra.mxu0 0.0
  %972 = vmatprep.subr.mxu0 0.0
  %973 = vmatpush1.msra.mxu0 0.0
  %974 = vmatprep.subr.mxu0 0.0
  %975 = vmatpush1.msra.mxu0 0.0
  %976 = vmatprep.subr.mxu0 0.0
  %977 = vmatpush1.msra.mxu0 0.0
  %978 = vmatprep.subr.mxu0 0.0
  %979 = vmatpush1.msra.mxu0 0.0
  %980 = vmatprep.subr.mxu0 0.0
  %981 = vmatpush1.msra.mxu0 0.0
  %982 = vmatprep.subr.mxu0 0.0
  %983 = vmatpush1.msra.mxu0 0.0
  %984 = vmatprep.subr.mxu0 0.0
  %985 = vmatpush1.msra.mxu0 0.0
  %986 = vmatprep.subr.mxu0 0.0
  %987 = vmatpush1.msra.mxu0 0.0
  %988 = vmatprep.subr.mxu0 0.0
  %989 = vmatpush1.msra.mxu0 0.0
  %990 = vmatprep.subr.mxu0 0.0
  %991 = vmatpush1.msra.mxu0 0.0
  %992 = vmatprep.subr.mxu0 0.0
  %993 = vmatpush1.msra.mxu0 0.0
  %994 = vmatprep.subr.mxu0 0.0
  %995 = vmatpush1.msra.mxu0 0.0
  %996 = vmatprep.subr.mxu0 0.0
  %997 = vmatpush1.msra.mxu0 0.0
  %998 = vmatprep.subr.mxu0 0.0
  %999 = vmatpush1.msra.mxu0 0.0
  %1000 = vmatprep.subr.mxu0 0.0
  %1001 = vmatpush1.msra.mxu0 0.0
  %1002 = vmatprep.subr.mxu0 0.0
  %1003 = vmatpush1.msra.mxu0 0.0
  %1004 = vmatprep.subr.mxu0 0.0
  %1005 = vmatpush1.msra.mxu0 0.0
  %1006 = vmatprep.mubr.f32.mxu0 0.0
  %1007 = vmatmul.mubr.f32.gmra.mrb[0].mxu0 %v928
  %v1008 = vpop.f32.mrb[0].mxu0
  %v1009 = vadd.f32 0.0, %v1008
  %v1010 = vpop.f32.mrb[0].mxu0
  %1011 = vmatprep.mubr.f32.mxu0 0.0
  %1012 = vmatmul.mubr.f32.gmra.mrb[0].mxu0 %v931
  %v1013 = vpop.f32.mrb[0].mxu0
  %v1014 = vadd.f32 0.0, %v1013
  %v1015 = vpop.f32.mrb[0].mxu0
  %1016 = vmatprep.mubr.f32.mxu0 0.0
  %1017 = vmatmul.mubr.f32.gmra.mrb[0].mxu0 %v934
  %v1018 = vpop.f32.mrb[0].mxu0
  %v1019 = vadd.f32 0.0, %v1018
  %v1020 = vpop.f32.mrb[0].mxu0
  %1021 = vmatprep.mubr.f32.mxu0 0.0
  %1022 = vmatmul.mubr.f32.gmra.mrb[0].mxu0 %v937
  %v1023 = vpop.f32.mrb[0].mxu0
  %v1024 = vadd.f32 0.0, %v1023
  %v1025 = vpop.f32.mrb[0].mxu0
  %1026 = vmatprep.mubr.f32.mxu0 0.0
  %1027 = vmatmul.mubr.f32.gmra.mrb[0].mxu0 %v940
  %v1028 = vpop.f32.mrb[0].mxu0
  %v1029 = vadd.f32 0.0, %v1028
  %v1030 = vpop.f32.mrb[0].mxu0
  %1031 = vdwg.mxu0
  %1032 = vst [vmem:[#allocation3 + $0x8] sm:$0xff] %v1009
  %1033 = vst [vmem:[#allocation3 + $0x18] sm:$0xff] %v1014
  %1034 = vst [vmem:[#allocation3 + $0x28] sm:$0xff] %v1019
  %1035 = vst [vmem:[#allocation3 + $0x38] sm:$0xff] %v1024
  %1036 = vst [vmem:[#allocation3 + $0x48] sm:$0xff] %v1029
  %v1037 = vld [vmem:[#allocation3] sm:$0xff]
  %v1038 = vld [vmem:[#allocation3 + $0x8] sm:$0xff]
  %v1039 = vld [vmem:[#allocation3 + $0x10] sm:$0xff]
  %v1040 = vld [vmem:[#allocation3 + $0x18] sm:$0xff]
  %v1041 = vld [vmem:[#allocation3 + $0x20] sm:$0xff]
  %v1042 = vld [vmem:[#allocation3 + $0x28] sm:$0xff]
  %v1043 = vld [vmem:[#allocation3 + $0x30] sm:$0xff]
  %v1044 = vld [vmem:[#allocation3 + $0x38] sm:$0xff]
  %v1045 = vld [vmem:[#allocation3 + $0x40] sm:$0xff]
  %v1046 = vld [vmem:[#allocation3 + $0x48] sm:$0xff]
  %v1047 = vld [vmem:[%s3] sm:$0xff]
  %v1048 = vld [vmem:[%s3 + $0x8] sm:$0xff]
  %v1049 = vld [vmem:[%s3 + $0x10] sm:$0xff]
  %v1050 = vld [vmem:[%s3 + $0x18] sm:$0xff]
  %v1051 = vld [vmem:[%s3 + $0x20] sm:$0xff]
  %v1052 = vld [vmem:[%s3 + $0x28] sm:$0xff]
  %v1053 = vld [vmem:[%s3 + $0x30] sm:$0xff]
  %v1054 = vld [vmem:[%s3 + $0x38] sm:$0xff]
  %v1055 = vld [vmem:[%s3 + $0x40] sm:$0xff]
  %v1056 = vld [vmem:[%s3 + $0x48] sm:$0xff]
  %v1057 = vld [vmem:[%s3 + $0x50] sm:$0xff]
  %v1058 = vld [vmem:[%s3 + $0x58] sm:$0xff]
  %v1059 = vld [vmem:[%s3 + $0x60] sm:$0xff]
  %v1060 = vld [vmem:[%s3 + $0x68] sm:$0xff]
  %v1061 = vld [vmem:[%s3 + $0x70] sm:$0xff]
  %v1062 = vld [vmem:[%s3 + $0x78] sm:$0xff]
  %v1063 = vld [vmem:[%s3 + $0x80] sm:$0xff]
  %v1064 = vld [vmem:[%s3 + $0x88] sm:$0xff]
  %v1065 = vld [vmem:[%s3 + $0x90] sm:$0xff]
  %v1066 = vld [vmem:[%s3 + $0x98] sm:$0xff]
  %v1067 = vld [vmem:[%s3 + $0xa0] sm:$0xff]
  %v1068 = vld [vmem:[%s3 + $0xa8] sm:$0xff]
  %v1069 = vld [vmem:[%s3 + $0xb0] sm:$0xff]
  %v1070 = vld [vmem:[%s3 + $0xb8] sm:$0xff]
  %v1071 = vld [vmem:[%s3 + $0xc0] sm:$0xff]
  %v1072 = vld [vmem:[%s3 + $0xc8] sm:$0xff]
  %v1073 = vld [vmem:[%s3 + $0xd0] sm:$0xff]
  %v1074 = vld [vmem:[%s3 + $0xd8] sm:$0xff]
  %v1075 = vld [vmem:[%s3 + $0xe0] sm:$0xff]
  %v1076 = vld [vmem:[%s3 + $0xe8] sm:$0xff]
  %v1077 = vld [vmem:[%s3 + $0xf0] sm:$0xff]
  %v1078 = vld [vmem:[%s3 + $0xf8] sm:$0xff]
  %v1079 = vld [vmem:[%s4] sm:$0x1]
  %v1081 = vlaneseq
  %v1082 = vshrl.u32 %v1081, 7
  %v1083 = vsub.s32 0, %v1082
  %v1084 = vrot.slane %v1079, %v1083
  %1086 = vmatprep.subr.mxu0 0.0
  %1087 = vmatpush1.msra.mxu0 %v1047
  %1088 = vmatprep.subr.mxu0 0.0
  %1089 = vmatpush1.msra.mxu0 %v1048
  %1090 = vmatprep.subr.mxu0 0.0
  %1091 = vmatpush1.msra.mxu0 %v1049
  %1092 = vmatprep.subr.mxu0 0.0
  %1093 = vmatpush1.msra.mxu0 %v1050
  %1094 = vmatprep.subr.mxu0 0.0
  %1095 = vmatpush1.msra.mxu0 %v1051
  %1096 = vmatprep.subr.mxu0 0.0
  %1097 = vmatpush1.msra.mxu0 %v1052
  %1098 = vmatprep.subr.mxu0 0.0
  %1099 = vmatpush1.msra.mxu0 %v1053
  %1100 = vmatprep.subr.mxu0 0.0
  %1101 = vmatpush1.msra.mxu0 %v1054
  %1102 = vmatprep.subr.mxu0 0.0
  %1103 = vmatpush1.msra.mxu0 %v1055
  %1104 = vmatprep.subr.mxu0 0.0
  %1105 = vmatpush1.msra.mxu0 %v1056
  %1106 = vmatprep.subr.mxu0 0.0
  %1107 = vmatpush1.msra.mxu0 %v1057
  %1108 = vmatprep.subr.mxu0 0.0
  %1109 = vmatpush1.msra.mxu0 %v1058
  %1110 = vmatprep.subr.mxu0 0.0
  %1111 = vmatpush1.msra.mxu0 %v1059
  %1112 = vmatprep.subr.mxu0 0.0
  %1113 = vmatpush1.msra.mxu0 %v1060
  %1114 = vmatprep.subr.mxu0 0.0
  %1115 = vmatpush1.msra.mxu0 %v1061
  %1116 = vmatprep.subr.mxu0 0.0
  %1117 = vmatpush1.msra.mxu0 %v1062
  %1118 = vmatprep.subr.mxu0 0.0
  %1119 = vmatpush1.msra.mxu0 %v1063
  %1120 = vmatprep.subr.mxu0 0.0
  %1121 = vmatpush1.msra.mxu0 %v1064
  %1122 = vmatprep.subr.mxu0 0.0
  %1123 = vmatpush1.msra.mxu0 %v1065
  %1124 = vmatprep.subr.mxu0 0.0
  %1125 = vmatpush1.msra.mxu0 %v1066
  %1126 = vmatprep.subr.mxu0 0.0
  %1127 = vmatpush1.msra.mxu0 %v1067
  %1128 = vmatprep.subr.mxu0 0.0
  %1129 = vmatpush1.msra.mxu0 %v1068
  %1130 = vmatprep.subr.mxu0 0.0
  %1131 = vmatpush1.msra.mxu0 %v1069
  %1132 = vmatprep.subr.mxu0 0.0
  %1133 = vmatpush1.msra.mxu0 %v1070
  %1134 = vmatprep.subr.mxu0 0.0
  %1135 = vmatpush1.msra.mxu0 %v1071
  %1136 = vmatprep.subr.mxu0 0.0
  %1137 = vmatpush1.msra.mxu0 %v1072
  %1138 = vmatprep.subr.mxu0 0.0
  %1139 = vmatpush1.msra.mxu0 %v1073
  %1140 = vmatprep.subr.mxu0 0.0
  %1141 = vmatpush1.msra.mxu0 %v1074
  %1142 = vmatprep.subr.mxu0 0.0
  %1143 = vmatpush1.msra.mxu0 %v1075
  %1144 = vmatprep.subr.mxu0 0.0
  %1145 = vmatpush1.msra.mxu0 %v1076
  %1146 = vmatprep.subr.mxu0 0.0
  %1147 = vmatpush1.msra.mxu0 %v1077
  %1148 = vmatprep.subr.mxu0 0.0
  %1149 = vmatpush1.msra.mxu0 %v1078
  %1150 = vmatprep.mubr.f32.mxu0 %v1038
  %1151 = vmatmul.mubr.f32.gmra.mrb[0].mxu0 %v1037
  %v1152 = vpop.f32.mrb[0].mxu0
  %v1153 = vadd.f32 %v1084, %v1152
  %v1154 = vpop.f32.mrb[0].mxu0
  %1155 = vmatprep.mubr.f32.mxu0 %v1040
  %1156 = vmatmul.mubr.f32.gmra.mrb[0].mxu0 %v1039
  %v1157 = vpop.f32.mrb[0].mxu0
  %v1158 = vadd.f32 %v1084, %v1157
  %v1159 = vpop.f32.mrb[0].mxu0
  %1160 = vmatprep.mubr.f32.mxu0 %v1042
  %1161 = vmatmul.mubr.f32.gmra.mrb[0].mxu0 %v1041
  %v1162 = vpop.f32.mrb[0].mxu0
  %v1163 = vadd.f32 %v1084, %v1162
  %v1164 = vpop.f32.mrb[0].mxu0
  %1165 = vmatprep.mubr.f32.mxu0 %v1044
  %1166 = vmatmul.mubr.f32.gmra.mrb[0].mxu0 %v1043
  %v1167 = vpop.f32.mrb[0].mxu0
  %v1168 = vadd.f32 %v1084, %v1167
  %v1169 = vpop.f32.mrb[0].mxu0
  %1170 = vmatprep.mubr.f32.mxu0 %v1046
  %1171 = vmatmul.mubr.f32.gmra.mrb[0].mxu0 %v1045
  %v1172 = vpop.f32.mrb[0].mxu0
  %v1173 = vadd.f32 %v1084, %v1172
  %v1174 = vpop.f32.mrb[0].mxu0
  %1175 = vdwg.mxu0
  %v1176 = vadd.f32 %v49, %v1153
  %v1177 = vadd.f32 %v50, %v1158
  %v1178 = vadd.f32 %v51, %v1163
  %v1179 = vadd.f32 %v52, %v1168
  %v1180 = vadd.f32 %v53, %v1173
  %v1181 = vld [vmem:[%s9] sm:$0x1]
  %v1182 = vld [vmem:[%s10] sm:$0x1]
  %v1183 = vsel %vm146, %v1176, 0.0
  %1184 = vadd.xlane.f32.xlu0 %v1183
  %v1185 = vpop.xlane.xlu0 %1184
  %v1186 = vsel %vm146, %v1177, 0.0
  %1187 = vadd.xlane.f32.xlu0 %v1186
  %v1188 = vpop.xlane.xlu0 %1187
  %v1189 = vsel %vm146, %v1178, 0.0
  %1190 = vadd.xlane.f32.xlu0 %v1189
  %v1191 = vpop.xlane.xlu0 %1190
  %v1192 = vsel %vm146, %v1179, 0.0
  %1193 = vadd.xlane.f32.xlu0 %v1192
  %v1194 = vpop.xlane.xlu0 %1193
  %v1195 = vsel %vm146, %v1180, 0.0
  %1196 = vadd.xlane.f32.xlu0 %v1195
  %v1197 = vpop.xlane.xlu0 %1196
  %v1198 = vrcp.pop 20.0
  %v1199 = vmul.f32 %v1185, %v1198
  %v1200 = vmul.f32 %v1188, %v1198
  %v1201 = vmul.f32 %v1191, %v1198
  %v1202 = vmul.f32 %v1194, %v1198
  %v1203 = vmul.f32 %v1197, %v1198
  %v1204 = vsub.f32 %v1176, %v1199
  %v1205 = vsub.f32 %v1177, %v1200
  %v1206 = vsub.f32 %v1178, %v1201
  %v1207 = vsub.f32 %v1179, %v1202
  %v1208 = vsub.f32 %v1180, %v1203
  %v1209 = vmul.f32 %v1204, %v1204
  %v1210 = vmul.f32 %v1205, %v1205
  %v1211 = vmul.f32 %v1206, %v1206
  %v1212 = vmul.f32 %v1207, %v1207
  %v1213 = vmul.f32 %v1208, %v1208
  %v1214 = vsel %vm146, %v1209, 0.0
  %1215 = vadd.xlane.f32.xlu0 %v1214
  %v1216 = vpop.xlane.xlu0 %1215
  %v1217 = vsel %vm146, %v1210, 0.0
  %1218 = vadd.xlane.f32.xlu0 %v1217
  %v1219 = vpop.xlane.xlu0 %1218
  %v1220 = vsel %vm146, %v1211, 0.0
  %1221 = vadd.xlane.f32.xlu0 %v1220
  %v1222 = vpop.xlane.xlu0 %1221
  %v1223 = vsel %vm146, %v1212, 0.0
  %1224 = vadd.xlane.f32.xlu0 %v1223
  %v1225 = vpop.xlane.xlu0 %1224
  %v1226 = vsel %vm146, %v1213, 0.0
  %1227 = vadd.xlane.f32.xlu0 %v1226
  %v1228 = vpop.xlane.xlu0 %1227
  %v1229 = vmul.f32 %v1216, %v1198
  %v1230 = vmul.f32 %v1219, %v1198
  %v1231 = vmul.f32 %v1222, %v1198
  %v1232 = vmul.f32 %v1225, %v1198
  %v1233 = vmul.f32 %v1228, %v1198
  %v1234 = vadd.f32 %v1229, 1e-05
  %v1235 = vadd.f32 %v1230, 1e-05
  %v1236 = vadd.f32 %v1231, 1e-05
  %v1237 = vadd.f32 %v1232, 1e-05
  %v1238 = vadd.f32 %v1233, 1e-05
  %v1239 = vrsqrt.pop %v1234
  %v1240 = vrsqrt.pop %v1235
  %v1241 = vrsqrt.pop %v1236
  %v1242 = vrsqrt.pop %v1237
  %v1243 = vrsqrt.pop %v1238
  %v1244 = vmul.f32 %v1204, %v1239
  %v1245 = vmul.f32 %v1205, %v1240
  %v1246 = vmul.f32 %v1206, %v1241
  %v1247 = vmul.f32 %v1207, %v1242
  %v1248 = vmul.f32 %v1208, %v1243
  %v1250 = vlaneseq
  %v1251 = vshrl.u32 %v1250, 7
  %v1252 = vsub.s32 0, %v1251
  %v1253 = vrot.slane %v1181, %v1252
  %v1255 = vmul.f32 %v1244, %v1253
  %v1256 = vmul.f32 %v1245, %v1253
  %v1257 = vmul.f32 %v1246, %v1253
  %v1258 = vmul.f32 %v1247, %v1253
  %v1259 = vmul.f32 %v1248, %v1253
  %v1261 = vlaneseq
  %v1262 = vshrl.u32 %v1261, 7
  %v1263 = vsub.s32 0, %v1262
  %v1264 = vrot.slane %v1182, %v1263
  %v1266 = vadd.f32 %v1255, %v1264
  %v1267 = vadd.f32 %v1256, %v1264
  %v1268 = vadd.f32 %v1257, %v1264
  %v1269 = vadd.f32 %v1258, %v1264
  %v1270 = vadd.f32 %v1259, %v1264
  %v1271 = vld [vmem:[%s5] sm:$0xff]
  %v1272 = vld [vmem:[%s5 + $0x8] sm:$0xff]
  %v1273 = vld [vmem:[%s5 + $0x10] sm:$0xf]
  %v1274 = vld [vmem:[%s6] sm:$0x1]
  %v1276 = vlaneseq
  %v1277 = vshrl.u32 %v1276, 7
  %v1278 = vsub.s32 0, %v1277
  %v1279 = vrot.slane %v1274, %v1278
  %v1282 = vsel %vm146, %v1266, 0
  %v1285 = vsel %vm146, %v1267, 0
  %v1288 = vsel %vm146, %v1268, 0
  %v1291 = vsel %vm146, %v1269, 0
  %v1294 = vsel %vm146, %v1270, 0
  %v1297 = vsel %vm162, %v1273, 0
  %1299 = vmatprep.subr.mxu0 0.0
  %1300 = vmatpush1.msra.mxu0 %v1271
  %1301 = vmatprep.subr.mxu0 0.0
  %1302 = vmatpush1.msra.mxu0 %v1272
  %1303 = vmatprep.subr.mxu0 0.0
  %1304 = vmatpush1.msra.mxu0 %v1297
  %1305 = vmatprep.subr.mxu0 0.0
  %1306 = vmatpush1.msra.mxu0 0.0
  %1307 = vmatprep.subr.mxu0 0.0
  %1308 = vmatpush1.msra.mxu0 0.0
  %1309 = vmatprep.subr.mxu0 0.0
  %1310 = vmatpush1.msra.mxu0 0.0
  %1311 = vmatprep.subr.mxu0 0.0
  %1312 = vmatpush1.msra.mxu0 0.0
  %1313 = vmatprep.subr.mxu0 0.0
  %1314 = vmatpush1.msra.mxu0 0.0
  %1315 = vmatprep.subr.mxu0 0.0
  %1316 = vmatpush1.msra.mxu0 0.0
  %1317 = vmatprep.subr.mxu0 0.0
  %1318 = vmatpush1.msra.mxu0 0.0
  %1319 = vmatprep.subr.mxu0 0.0
  %1320 = vmatpush1.msra.mxu0 0.0
  %1321 = vmatprep.subr.mxu0 0.0
  %1322 = vmatpush1.msra.mxu0 0.0
  %1323 = vmatprep.subr.mxu0 0.0
  %1324 = vmatpush1.msra.mxu0 0.0
  %1325 = vmatprep.subr.mxu0 0.0
  %1326 = vmatpush1.msra.mxu0 0.0
  %1327 = vmatprep.subr.mxu0 0.0
  %1328 = vmatpush1.msra.mxu0 0.0
  %1329 = vmatprep.subr.mxu0 0.0
  %1330 = vmatpush1.msra.mxu0 0.0
  %1331 = vmatprep.subr.mxu0 0.0
  %1332 = vmatpush1.msra.mxu0 0.0
  %1333 = vmatprep.subr.mxu0 0.0
  %1334 = vmatpush1.msra.mxu0 0.0
  %1335 = vmatprep.subr.mxu0 0.0
  %1336 = vmatpush1.msra.mxu0 0.0
  %1337 = vmatprep.subr.mxu0 0.0
  %1338 = vmatpush1.msra.mxu0 0.0
  %1339 = vmatprep.subr.mxu0 0.0
  %1340 = vmatpush1.msra.mxu0 0.0
  %1341 = vmatprep.subr.mxu0 0.0
  %1342 = vmatpush1.msra.mxu0 0.0
  %1343 = vmatprep.subr.mxu0 0.0
  %1344 = vmatpush1.msra.mxu0 0.0
  %1345 = vmatprep.subr.mxu0 0.0
  %1346 = vmatpush1.msra.mxu0 0.0
  %1347 = vmatprep.subr.mxu0 0.0
  %1348 = vmatpush1.msra.mxu0 0.0
  %1349 = vmatprep.subr.mxu0 0.0
  %1350 = vmatpush1.msra.mxu0 0.0
  %1351 = vmatprep.subr.mxu0 0.0
  %1352 = vmatpush1.msra.mxu0 0.0
  %1353 = vmatprep.subr.mxu0 0.0
  %1354 = vmatpush1.msra.mxu0 0.0
  %1355 = vmatprep.subr.mxu0 0.0
  %1356 = vmatpush1.msra.mxu0 0.0
  %1357 = vmatprep.subr.mxu0 0.0
  %1358 = vmatpush1.msra.mxu0 0.0
  %1359 = vmatprep.subr.mxu0 0.0
  %1360 = vmatpush1.msra.mxu0 0.0
  %1361 = vmatprep.subr.mxu0 0.0
  %1362 = vmatpush1.msra.mxu0 0.0
  %1363 = vmatprep.mubr.f32.mxu0 0.0
  %1364 = vmatmul.mubr.f32.gmra.mrb[0].mxu0 %v1282
  %v1365 = vpop.f32.mrb[0].mxu0
  %v1366 = vadd.f32 %v1279, %v1365
  %v1367 = vpop.f32.mrb[0].mxu0
  %1368 = vmatprep.mubr.f32.mxu0 0.0
  %1369 = vmatmul.mubr.f32.gmra.mrb[0].mxu0 %v1285
  %v1370 = vpop.f32.mrb[0].mxu0
  %v1371 = vadd.f32 %v1279, %v1370
  %v1372 = vpop.f32.mrb[0].mxu0
  %1373 = vmatprep.mubr.f32.mxu0 0.0
  %1374 = vmatmul.mubr.f32.gmra.mrb[0].mxu0 %v1288
  %v1375 = vpop.f32.mrb[0].mxu0
  %v1376 = vadd.f32 %v1279, %v1375
  %v1377 = vpop.f32.mrb[0].mxu0
  %1378 = vmatprep.mubr.f32.mxu0 0.0
  %1379 = vmatmul.mubr.f32.gmra.mrb[0].mxu0 %v1291
  %v1380 = vpop.f32.mrb[0].mxu0
  %v1381 = vadd.f32 %v1279, %v1380
  %v1382 = vpop.f32.mrb[0].mxu0
  %1383 = vmatprep.mubr.f32.mxu0 0.0
  %1384 = vmatmul.mubr.f32.gmra.mrb[0].mxu0 %v1294
  %v1385 = vpop.f32.mrb[0].mxu0
  %v1386 = vadd.f32 %v1279, %v1385
  %v1387 = vpop.f32.mrb[0].mxu0
  %1388 = vdwg.mxu0
  %v1389 = vmax.f32 %v1366, 0.0
  %v1390 = vmax.f32 %v1371, 0.0
  %v1391 = vmax.f32 %v1376, 0.0
  %v1392 = vmax.f32 %v1381, 0.0
  %v1393 = vmax.f32 %v1386, 0.0
  %v1394 = vld [vmem:[%s7] sm:$0xff]
  %v1395 = vld [vmem:[%s7 + $0x8] sm:$0xff]
  %v1396 = vld [vmem:[%s7 + $0x10] sm:$0xff]
  %v1397 = vld [vmem:[%s7 + $0x18] sm:$0xff]
  %v1398 = vld [vmem:[%s7 + $0x20] sm:$0xff]
  %v1399 = vld [vmem:[%s7 + $0x28] sm:$0xff]
  %v1400 = vld [vmem:[%s7 + $0x30] sm:$0xff]
  %v1401 = vld [vmem:[%s7 + $0x38] sm:$0xff]
  %v1402 = vld [vmem:[%s8] sm:$0x1]
  %v1404 = vlaneseq
  %v1405 = vshrl.u32 %v1404, 7
  %v1406 = vsub.s32 0, %v1405
  %v1407 = vrot.slane %v1402, %v1406
  %vm1409 = vcmask 523264
  %v1411 = vsel %vm1409, %v1389, 0
  %v1414 = vsel %vm1409, %v1390, 0
  %v1417 = vsel %vm1409, %v1391, 0
  %v1420 = vsel %vm1409, %v1392, 0
  %v1423 = vsel %vm1409, %v1393, 0
  %1425 = vmatprep.subr.mxu0 0.0
  %1426 = vmatpush1.msra.mxu0 %v1394
  %1427 = vmatprep.subr.mxu0 0.0
  %1428 = vmatpush1.msra.mxu0 %v1395
  %1429 = vmatprep.subr.mxu0 0.0
  %1430 = vmatpush1.msra.mxu0 %v1396
  %1431 = vmatprep.subr.mxu0 0.0
  %1432 = vmatpush1.msra.mxu0 %v1397
  %1433 = vmatprep.subr.mxu0 0.0
  %1434 = vmatpush1.msra.mxu0 %v1398
  %1435 = vmatprep.subr.mxu0 0.0
  %1436 = vmatpush1.msra.mxu0 %v1399
  %1437 = vmatprep.subr.mxu0 0.0
  %1438 = vmatpush1.msra.mxu0 %v1400
  %1439 = vmatprep.subr.mxu0 0.0
  %1440 = vmatpush1.msra.mxu0 %v1401
  %1441 = vmatprep.subr.mxu0 0.0
  %1442 = vmatpush1.msra.mxu0 0.0
  %1443 = vmatprep.subr.mxu0 0.0
  %1444 = vmatpush1.msra.mxu0 0.0
  %1445 = vmatprep.subr.mxu0 0.0
  %1446 = vmatpush1.msra.mxu0 0.0
  %1447 = vmatprep.subr.mxu0 0.0
  %1448 = vmatpush1.msra.mxu0 0.0
  %1449 = vmatprep.subr.mxu0 0.0
  %1450 = vmatpush1.msra.mxu0 0.0
  %1451 = vmatprep.subr.mxu0 0.0
  %1452 = vmatpush1.msra.mxu0 0.0
  %1453 = vmatprep.subr.mxu0 0.0
  %1454 = vmatpush1.msra.mxu0 0.0
  %1455 = vmatprep.subr.mxu0 0.0
  %1456 = vmatpush1.msra.mxu0 0.0
  %1457 = vmatprep.subr.mxu0 0.0
  %1458 = vmatpush1.msra.mxu0 0.0
  %1459 = vmatprep.subr.mxu0 0.0
  %1460 = vmatpush1.msra.mxu0 0.0
  %1461 = vmatprep.subr.mxu0 0.0
  %1462 = vmatpush1.msra.mxu0 0.0
  %1463 = vmatprep.subr.mxu0 0.0
  %1464 = vmatpush1.msra.mxu0 0.0
  %1465 = vmatprep.subr.mxu0 0.0
  %1466 = vmatpush1.msra.mxu0 0.0
  %1467 = vmatprep.subr.mxu0 0.0
  %1468 = vmatpush1.msra.mxu0 0.0
  %1469 = vmatprep.subr.mxu0 0.0
  %1470 = vmatpush1.msra.mxu0 0.0
  %1471 = vmatprep.subr.mxu0 0.0
  %1472 = vmatpush1.msra.mxu0 0.0
  %1473 = vmatprep.subr.mxu0 0.0
  %1474 = vmatpush1.msra.mxu0 0.0
  %1475 = vmatprep.subr.mxu0 0.0
  %1476 = vmatpush1.msra.mxu0 0.0
  %1477 = vmatprep.subr.mxu0 0.0
  %1478 = vmatpush1.msra.mxu0 0.0
  %1479 = vmatprep.subr.mxu0 0.0
  %1480 = vmatpush1.msra.mxu0 0.0
  %1481 = vmatprep.subr.mxu0 0.0
  %1482 = vmatpush1.msra.mxu0 0.0
  %1483 = vmatprep.subr.mxu0 0.0
  %1484 = vmatpush1.msra.mxu0 0.0
  %1485 = vmatprep.subr.mxu0 0.0
  %1486 = vmatpush1.msra.mxu0 0.0
  %1487 = vmatprep.subr.mxu0 0.0
  %1488 = vmatpush1.msra.mxu0 0.0
  %1489 = vmatprep.mubr.f32.mxu0 0.0
  %1490 = vmatmul.mubr.f32.gmra.mrb[0].mxu0 %v1411
  %v1491 = vpop.f32.mrb[0].mxu0
  %v1492 = vadd.f32 %v1407, %v1491
  %v1493 = vpop.f32.mrb[0].mxu0
  %1494 = vmatprep.mubr.f32.mxu0 0.0
  %1495 = vmatmul.mubr.f32.gmra.mrb[0].mxu0 %v1414
  %v1496 = vpop.f32.mrb[0].mxu0
  %v1497 = vadd.f32 %v1407, %v1496
  %v1498 = vpop.f32.mrb[0].mxu0
  %1499 = vmatprep.mubr.f32.mxu0 0.0
  %1500 = vmatmul.mubr.f32.gmra.mrb[0].mxu0 %v1417
  %v1501 = vpop.f32.mrb[0].mxu0
  %v1502 = vadd.f32 %v1407, %v1501
  %v1503 = vpop.f32.mrb[0].mxu0
  %1504 = vmatprep.mubr.f32.mxu0 0.0
  %1505 = vmatmul.mubr.f32.gmra.mrb[0].mxu0 %v1420
  %v1506 = vpop.f32.mrb[0].mxu0
  %v1507 = vadd.f32 %v1407, %v1506
  %v1508 = vpop.f32.mrb[0].mxu0
  %1509 = vmatprep.mubr.f32.mxu0 0.0
  %1510 = vmatmul.mubr.f32.gmra.mrb[0].mxu0 %v1423
  %v1511 = vpop.f32.mrb[0].mxu0
  %v1512 = vadd.f32 %v1407, %v1511
  %v1513 = vpop.f32.mrb[0].mxu0
  %1514 = vdwg.mxu0
  %v1515 = vadd.f32 %v1266, %v1492
  %v1516 = vadd.f32 %v1267, %v1497
  %v1517 = vadd.f32 %v1268, %v1502
  %v1518 = vadd.f32 %v1269, %v1507
  %v1519 = vadd.f32 %v1270, %v1512
  %v1520 = vld [vmem:[%s11] sm:$0x1]
  %v1521 = vld [vmem:[%s12] sm:$0x1]
  %v1522 = vsel %vm146, %v1515, 0.0
  %1523 = vadd.xlane.f32.xlu0 %v1522
  %v1524 = vpop.xlane.xlu0 %1523
  %v1525 = vsel %vm146, %v1516, 0.0
  %1526 = vadd.xlane.f32.xlu0 %v1525
  %v1527 = vpop.xlane.xlu0 %1526
  %v1528 = vsel %vm146, %v1517, 0.0
  %1529 = vadd.xlane.f32.xlu0 %v1528
  %v1530 = vpop.xlane.xlu0 %1529
  %v1531 = vsel %vm146, %v1518, 0.0
  %1532 = vadd.xlane.f32.xlu0 %v1531
  %v1533 = vpop.xlane.xlu0 %1532
  %v1534 = vsel %vm146, %v1519, 0.0
  %1535 = vadd.xlane.f32.xlu0 %v1534
  %v1536 = vpop.xlane.xlu0 %1535
  %v1537 = vmul.f32 %v1524, %v1198
  %v1538 = vmul.f32 %v1527, %v1198
  %v1539 = vmul.f32 %v1530, %v1198
  %v1540 = vmul.f32 %v1533, %v1198
  %v1541 = vmul.f32 %v1536, %v1198
  %v1542 = vsub.f32 %v1515, %v1537
  %v1543 = vsub.f32 %v1516, %v1538
  %v1544 = vsub.f32 %v1517, %v1539
  %v1545 = vsub.f32 %v1518, %v1540
  %v1546 = vsub.f32 %v1519, %v1541
  %v1547 = vmul.f32 %v1542, %v1542
  %v1548 = vmul.f32 %v1543, %v1543
  %v1549 = vmul.f32 %v1544, %v1544
  %v1550 = vmul.f32 %v1545, %v1545
  %v1551 = vmul.f32 %v1546, %v1546
  %v1552 = vsel %vm146, %v1547, 0.0
  %1553 = vadd.xlane.f32.xlu0 %v1552
  %v1554 = vpop.xlane.xlu0 %1553
  %v1555 = vsel %vm146, %v1548, 0.0
  %1556 = vadd.xlane.f32.xlu0 %v1555
  %v1557 = vpop.xlane.xlu0 %1556
  %v1558 = vsel %vm146, %v1549, 0.0
  %1559 = vadd.xlane.f32.xlu0 %v1558
  %v1560 = vpop.xlane.xlu0 %1559
  %v1561 = vsel %vm146, %v1550, 0.0
  %1562 = vadd.xlane.f32.xlu0 %v1561
  %v1563 = vpop.xlane.xlu0 %1562
  %v1564 = vsel %vm146, %v1551, 0.0
  %1565 = vadd.xlane.f32.xlu0 %v1564
  %v1566 = vpop.xlane.xlu0 %1565
  %v1567 = vmul.f32 %v1554, %v1198
  %v1568 = vmul.f32 %v1557, %v1198
  %v1569 = vmul.f32 %v1560, %v1198
  %v1570 = vmul.f32 %v1563, %v1198
  %v1571 = vmul.f32 %v1566, %v1198
  %v1572 = vadd.f32 %v1567, 1e-05
  %v1573 = vadd.f32 %v1568, 1e-05
  %v1574 = vadd.f32 %v1569, 1e-05
  %v1575 = vadd.f32 %v1570, 1e-05
  %v1576 = vadd.f32 %v1571, 1e-05
  %v1577 = vrsqrt.pop %v1572
  %v1578 = vrsqrt.pop %v1573
  %v1579 = vrsqrt.pop %v1574
  %v1580 = vrsqrt.pop %v1575
  %v1581 = vrsqrt.pop %v1576
  %v1582 = vmul.f32 %v1542, %v1577
  %v1583 = vmul.f32 %v1543, %v1578
  %v1584 = vmul.f32 %v1544, %v1579
  %v1585 = vmul.f32 %v1545, %v1580
  %v1586 = vmul.f32 %v1546, %v1581
  %v1588 = vlaneseq
  %v1589 = vshrl.u32 %v1588, 7
  %v1590 = vsub.s32 0, %v1589
  %v1591 = vrot.slane %v1520, %v1590
  %v1593 = vmul.f32 %v1582, %v1591
  %v1594 = vmul.f32 %v1583, %v1591
  %v1595 = vmul.f32 %v1584, %v1591
  %v1596 = vmul.f32 %v1585, %v1591
  %v1597 = vmul.f32 %v1586, %v1591
  %v1599 = vlaneseq
  %v1600 = vshrl.u32 %v1599, 7
  %v1601 = vsub.s32 0, %v1600
  %v1602 = vrot.slane %v1521, %v1601
  %v1604 = vadd.f32 %v1593, %v1602
  %v1605 = vadd.f32 %v1594, %v1602
  %v1606 = vadd.f32 %v1595, %v1602
  %v1607 = vadd.f32 %v1596, %v1602
  %v1608 = vadd.f32 %v1597, %v1602
  %s1609 = scalar_lea.vmem %s1, 144
  %v1610 = vld [vmem:[%s1609] sm:$0xff]
  %v1611 = vld [vmem:[%s1609 + $0x8] sm:$0xff]
  %v1612 = vld [vmem:[%s1609 + $0x10] sm:$0xff]
  %v1613 = vld [vmem:[%s1609 + $0x18] sm:$0xff]
  %v1614 = vld [vmem:[%s1609 + $0x20] sm:$0xff]
  %v1615 = vld [vmem:[%s1609 + $0x28] sm:$0xff]
  %v1616 = vld [vmem:[%s1609 + $0x30] sm:$0xff]
  %v1617 = vld [vmem:[%s1609 + $0x38] sm:$0xff]
  %v1618 = vld [vmem:[%s1609 + $0x40] sm:$0xff]
  %v1619 = vld [vmem:[%s1609 + $0x48] sm:$0xff]
  %v1620 = vld [vmem:[%s1609 + $0x50] sm:$0xff]
  %v1621 = vld [vmem:[%s1609 + $0x58] sm:$0xff]
  %v1622 = vld [vmem:[%s1609 + $0x60] sm:$0xf]
  %v1623 = vld [vmem:[%s1609 + $0x68] sm:$0xf]
  %v1624 = vld [vmem:[%s1609 + $0x70] sm:$0xf]
  %v1625 = vld [vmem:[%s1609 + $0x78] sm:$0xf]
  %v1626 = vld [vmem:[%s1609 + $0x80] sm:$0xf]
  %v1627 = vld [vmem:[%s1609 + $0x88] sm:$0xf]
  %s1628 = scalar_lea.vmem %s2, 6
  %v1629 = vld [vmem:[%s1628] sm:$0x3f]
  %v1631 = vlaneseq
  %v1632 = vshrl.u32 %v1631, 7
  %v1633 = vsub.s32 0, %v1632
  %v1634 = vrot.slane %v1629, %v1633
  %v1635 = vlaneseq
  %v1636 = vshrl.u32 %v1635, 7
  %v1637 = vsub.s32 1, %v1636
  %v1638 = vrot.slane %v1629, %v1637
  %v1639 = vlaneseq
  %v1640 = vshrl.u32 %v1639, 7
  %v1641 = vsub.s32 2, %v1640
  %v1642 = vrot.slane %v1629, %v1641
  %v1643 = vlaneseq
  %v1644 = vshrl.u32 %v1643, 7
  %v1645 = vsub.s32 3, %v1644
  %v1646 = vrot.slane %v1629, %v1645
  %v1647 = vlaneseq
  %v1648 = vshrl.u32 %v1647, 7
  %v1649 = vsub.s32 4, %v1648
  %v1650 = vrot.slane %v1629, %v1649
  %v1651 = vlaneseq
  %v1652 = vshrl.u32 %v1651, 7
  %v1653 = vsub.s32 5, %v1652
  %v1654 = vrot.slane %v1629, %v1653
  %v1662 = vsel %vm146, %v1604, 0
  %v1665 = vsel %vm146, %v1605, 0
  %v1668 = vsel %vm146, %v1606, 0
  %v1671 = vsel %vm146, %v1607, 0
  %v1674 = vsel %vm146, %v1608, 0
  %v1677 = vsel %vm162, %v1622, 0
  %v1680 = vsel %vm162, %v1623, 0
  %v1683 = vsel %vm162, %v1624, 0
  %v1686 = vsel %vm162, %v1625, 0
  %v1689 = vsel %vm162, %v1626, 0
  %v1692 = vsel %vm162, %v1627, 0
  %1694 = vmatprep.subr.mxu0 %v1611
  %1695 = vmatpush1.msra.mxu0 %v1610
  %1696 = vmatprep.subr.mxu0 %v1617
  %1697 = vmatpush1.msra.mxu0 %v1616
  %1698 = vmatprep.subr.mxu0 %v1680
  %1699 = vmatpush1.msra.mxu0 %v1677
  %1700 = vmatprep.subr.mxu0 0.0
  %1701 = vmatpush1.msra.mxu0 0.0
  %1702 = vmatprep.subr.mxu0 0.0
  %1703 = vmatpush1.msra.mxu0 0.0
  %1704 = vmatprep.subr.mxu0 0.0
  %1705 = vmatpush1.msra.mxu0 0.0
  %1706 = vmatprep.subr.mxu0 0.0
  %1707 = vmatpush1.msra.mxu0 0.0
  %1708 = vmatprep.subr.mxu0 0.0
  %1709 = vmatpush1.msra.mxu0 0.0
  %1710 = vmatprep.subr.mxu0 0.0
  %1711 = vmatpush1.msra.mxu0 0.0
  %1712 = vmatprep.subr.mxu0 0.0
  %1713 = vmatpush1.msra.mxu0 0.0
  %1714 = vmatprep.subr.mxu0 0.0
  %1715 = vmatpush1.msra.mxu0 0.0
  %1716 = vmatprep.subr.mxu0 0.0
  %1717 = vmatpush1.msra.mxu0 0.0
  %1718 = vmatprep.subr.mxu0 0.0
  %1719 = vmatpush1.msra.mxu0 0.0
  %1720 = vmatprep.subr.mxu0 0.0
  %1721 = vmatpush1.msra.mxu0 0.0
  %1722 = vmatprep.subr.mxu0 0.0
  %1723 = vmatpush1.msra.mxu0 0.0
  %1724 = vmatprep.subr.mxu0 0.0
  %1725 = vmatpush1.msra.mxu0 0.0
  %1726 = vmatprep.subr.mxu0 0.0
  %1727 = vmatpush1.msra.mxu0 0.0
  %1728 = vmatprep.subr.mxu0 0.0
  %1729 = vmatpush1.msra.mxu0 0.0
  %1730 = vmatprep.subr.mxu0 0.0
  %1731 = vmatpush1.msra.mxu0 0.0
  %1732 = vmatprep.subr.mxu0 0.0
  %1733 = vmatpush1.msra.mxu0 0.0
  %1734 = vmatprep.subr.mxu0 0.0
  %1735 = vmatpush1.msra.mxu0 0.0
  %1736 = vmatprep.subr.mxu0 0.0
  %1737 = vmatpush1.msra.mxu0 0.0
  %1738 = vmatprep.subr.mxu0 0.0
  %1739 = vmatpush1.msra.mxu0 0.0
  %1740 = vmatprep.subr.mxu0 0.0
  %1741 = vmatpush1.msra.mxu0 0.0
  %1742 = vmatprep.subr.mxu0 0.0
  %1743 = vmatpush1.msra.mxu0 0.0
  %1744 = vmatprep.subr.mxu0 0.0
  %1745 = vmatpush1.msra.mxu0 0.0
  %1746 = vmatprep.subr.mxu0 0.0
  %1747 = vmatpush1.msra.mxu0 0.0
  %1748 = vmatprep.subr.mxu0 0.0
  %1749 = vmatpush1.msra.mxu0 0.0
  %1750 = vmatprep.subr.mxu0 0.0
  %1751 = vmatpush1.msra.mxu0 0.0
  %1752 = vmatprep.subr.mxu0 0.0
  %1753 = vmatpush1.msra.mxu0 0.0
  %1754 = vmatprep.subr.mxu0 0.0
  %1755 = vmatpush1.msra.mxu0 0.0
  %1756 = vmatprep.subr.mxu0 0.0
  %1757 = vmatpush1.msra.mxu0 0.0
  %1758 = vmatprep.mubr.f32.mxu0 0.0
  %1759 = vmatmul.mubr.f32.gmra.mrb[0].mxu0 %v1662
  %v1760 = vpop.f32.mrb[0].mxu0
  %v1761 = vadd.f32 %v1634, %v1760
  %v1762 = vpop.f32.mrb[0].mxu0
  %v1763 = vadd.f32 %v1638, %v1762
  %1764 = vmatprep.mubr.f32.mxu0 0.0
  %1765 = vmatmul.mubr.f32.gmra.mrb[0].mxu0 %v1665
  %v1766 = vpop.f32.mrb[0].mxu0
  %v1767 = vadd.f32 %v1634, %v1766
  %v1768 = vpop.f32.mrb[0].mxu0
  %v1769 = vadd.f32 %v1638, %v1768
  %1770 = vmatprep.mubr.f32.mxu0 0.0
  %1771 = vmatmul.mubr.f32.gmra.mrb[0].mxu0 %v1668
  %v1772 = vpop.f32.mrb[0].mxu0
  %v1773 = vadd.f32 %v1634, %v1772
  %v1774 = vpop.f32.mrb[0].mxu0
  %v1775 = vadd.f32 %v1638, %v1774
  %1776 = vmatprep.mubr.f32.mxu0 0.0
  %1777 = vmatmul.mubr.f32.gmra.mrb[0].mxu0 %v1671
  %v1778 = vpop.f32.mrb[0].mxu0
  %v1779 = vadd.f32 %v1634, %v1778
  %v1780 = vpop.f32.mrb[0].mxu0
  %v1781 = vadd.f32 %v1638, %v1780
  %1782 = vmatprep.mubr.f32.mxu0 0.0
  %1783 = vmatmul.mubr.f32.gmra.mrb[0].mxu0 %v1674
  %v1784 = vpop.f32.mrb[0].mxu0
  %v1785 = vadd.f32 %v1634, %v1784
  %v1786 = vpop.f32.mrb[0].mxu0
  %v1787 = vadd.f32 %v1638, %v1786
  %1788 = vdwg.mxu0
  %1789 = vmatprep.subr.mxu0 %v1613
  %1790 = vmatpush1.msra.mxu0 %v1612
  %1791 = vmatprep.subr.mxu0 %v1619
  %1792 = vmatpush1.msra.mxu0 %v1618
  %1793 = vmatprep.subr.mxu0 %v1686
  %1794 = vmatpush1.msra.mxu0 %v1683
  %1795 = vmatprep.subr.mxu0 0.0
  %1796 = vmatpush1.msra.mxu0 0.0
  %1797 = vmatprep.subr.mxu0 0.0
  %1798 = vmatpush1.msra.mxu0 0.0
  %1799 = vmatprep.subr.mxu0 0.0
  %1800 = vmatpush1.msra.mxu0 0.0
  %1801 = vmatprep.subr.mxu0 0.0
  %1802 = vmatpush1.msra.mxu0 0.0
  %1803 = vmatprep.subr.mxu0 0.0
  %1804 = vmatpush1.msra.mxu0 0.0
  %1805 = vmatprep.subr.mxu0 0.0
  %1806 = vmatpush1.msra.mxu0 0.0
  %1807 = vmatprep.subr.mxu0 0.0
  %1808 = vmatpush1.msra.mxu0 0.0
  %1809 = vmatprep.subr.mxu0 0.0
  %1810 = vmatpush1.msra.mxu0 0.0
  %1811 = vmatprep.subr.mxu0 0.0
  %1812 = vmatpush1.msra.mxu0 0.0
  %1813 = vmatprep.subr.mxu0 0.0
  %1814 = vmatpush1.msra.mxu0 0.0
  %1815 = vmatprep.subr.mxu0 0.0
  %1816 = vmatpush1.msra.mxu0 0.0
  %1817 = vmatprep.subr.mxu0 0.0
  %1818 = vmatpush1.msra.mxu0 0.0
  %1819 = vmatprep.subr.mxu0 0.0
  %1820 = vmatpush1.msra.mxu0 0.0
  %1821 = vmatprep.subr.mxu0 0.0
  %1822 = vmatpush1.msra.mxu0 0.0
  %1823 = vmatprep.subr.mxu0 0.0
  %1824 = vmatpush1.msra.mxu0 0.0
  %1825 = vmatprep.subr.mxu0 0.0
  %1826 = vmatpush1.msra.mxu0 0.0
  %1827 = vmatprep.subr.mxu0 0.0
  %1828 = vmatpush1.msra.mxu0 0.0
  %1829 = vmatprep.subr.mxu0 0.0
  %1830 = vmatpush1.msra.mxu0 0.0
  %1831 = vmatprep.subr.mxu0 0.0
  %1832 = vmatpush1.msra.mxu0 0.0
  %1833 = vmatprep.subr.mxu0 0.0
  %1834 = vmatpush1.msra.mxu0 0.0
  %1835 = vmatprep.subr.mxu0 0.0
  %1836 = vmatpush1.msra.mxu0 0.0
  %1837 = vmatprep.subr.mxu0 0.0
  %1838 = vmatpush1.msra.mxu0 0.0
  %1839 = vmatprep.subr.mxu0 0.0
  %1840 = vmatpush1.msra.mxu0 0.0
  %1841 = vmatprep.subr.mxu0 0.0
  %1842 = vmatpush1.msra.mxu0 0.0
  %1843 = vmatprep.subr.mxu0 0.0
  %1844 = vmatpush1.msra.mxu0 0.0
  %1845 = vmatprep.subr.mxu0 0.0
  %1846 = vmatpush1.msra.mxu0 0.0
  %1847 = vmatprep.subr.mxu0 0.0
  %1848 = vmatpush1.msra.mxu0 0.0
  %1849 = vmatprep.subr.mxu0 0.0
  %1850 = vmatpush1.msra.mxu0 0.0
  %1851 = vmatprep.subr.mxu0 0.0
  %1852 = vmatpush1.msra.mxu0 0.0
  %1853 = vmatprep.mubr.f32.mxu0 0.0
  %1854 = vmatmul.mubr.f32.gmra.mrb[0].mxu0 %v1662
  %v1855 = vpop.f32.mrb[0].mxu0
  %v1856 = vadd.f32 %v1642, %v1855
  %v1857 = vpop.f32.mrb[0].mxu0
  %v1858 = vadd.f32 %v1646, %v1857
  %1859 = vmatprep.mubr.f32.mxu0 0.0
  %1860 = vmatmul.mubr.f32.gmra.mrb[0].mxu0 %v1665
  %v1861 = vpop.f32.mrb[0].mxu0
  %v1862 = vadd.f32 %v1642, %v1861
  %v1863 = vpop.f32.mrb[0].mxu0
  %v1864 = vadd.f32 %v1646, %v1863
  %1865 = vmatprep.mubr.f32.mxu0 0.0
  %1866 = vmatmul.mubr.f32.gmra.mrb[0].mxu0 %v1668
  %v1867 = vpop.f32.mrb[0].mxu0
  %v1868 = vadd.f32 %v1642, %v1867
  %v1869 = vpop.f32.mrb[0].mxu0
  %v1870 = vadd.f32 %v1646, %v1869
  %1871 = vmatprep.mubr.f32.mxu0 0.0
  %1872 = vmatmul.mubr.f32.gmra.mrb[0].mxu0 %v1671
  %v1873 = vpop.f32.mrb[0].mxu0
  %v1874 = vadd.f32 %v1642, %v1873
  %v1875 = vpop.f32.mrb[0].mxu0
  %v1876 = vadd.f32 %v1646, %v1875
  %1877 = vmatprep.mubr.f32.mxu0 0.0
  %1878 = vmatmul.mubr.f32.gmra.mrb[0].mxu0 %v1674
  %v1879 = vpop.f32.mrb[0].mxu0
  %v1880 = vadd.f32 %v1642, %v1879
  %v1881 = vpop.f32.mrb[0].mxu0
  %v1882 = vadd.f32 %v1646, %v1881
  %1883 = vdwg.mxu0
  %1884 = vmatprep.subr.mxu0 %v1615
  %1885 = vmatpush1.msra.mxu0 %v1614
  %1886 = vmatprep.subr.mxu0 %v1621
  %1887 = vmatpush1.msra.mxu0 %v1620
  %1888 = vmatprep.subr.mxu0 %v1692
  %1889 = vmatpush1.msra.mxu0 %v1689
  %1890 = vmatprep.subr.mxu0 0.0
  %1891 = vmatpush1.msra.mxu0 0.0
  %1892 = vmatprep.subr.mxu0 0.0
  %1893 = vmatpush1.msra.mxu0 0.0
  %1894 = vmatprep.subr.mxu0 0.0
  %1895 = vmatpush1.msra.mxu0 0.0
  %1896 = vmatprep.subr.mxu0 0.0
  %1897 = vmatpush1.msra.mxu0 0.0
  %1898 = vmatprep.subr.mxu0 0.0
  %1899 = vmatpush1.msra.mxu0 0.0
  %1900 = vmatprep.subr.mxu0 0.0
  %1901 = vmatpush1.msra.mxu0 0.0
  %1902 = vmatprep.subr.mxu0 0.0
  %1903 = vmatpush1.msra.mxu0 0.0
  %1904 = vmatprep.subr.mxu0 0.0
  %1905 = vmatpush1.msra.mxu0 0.0
  %1906 = vmatprep.subr.mxu0 0.0
  %1907 = vmatpush1.msra.mxu0 0.0
  %1908 = vmatprep.subr.mxu0 0.0
  %1909 = vmatpush1.msra.mxu0 0.0
  %1910 = vmatprep.subr.mxu0 0.0
  %1911 = vmatpush1.msra.mxu0 0.0
  %1912 = vmatprep.subr.mxu0 0.0
  %1913 = vmatpush1.msra.mxu0 0.0
  %1914 = vmatprep.subr.mxu0 0.0
  %1915 = vmatpush1.msra.mxu0 0.0
  %1916 = vmatprep.subr.mxu0 0.0
  %1917 = vmatpush1.msra.mxu0 0.0
  %1918 = vmatprep.subr.mxu0 0.0
  %1919 = vmatpush1.msra.mxu0 0.0
  %1920 = vmatprep.subr.mxu0 0.0
  %1921 = vmatpush1.msra.mxu0 0.0
  %1922 = vmatprep.subr.mxu0 0.0
  %1923 = vmatpush1.msra.mxu0 0.0
  %1924 = vmatprep.subr.mxu0 0.0
  %1925 = vmatpush1.msra.mxu0 0.0
  %1926 = vmatprep.subr.mxu0 0.0
  %1927 = vmatpush1.msra.mxu0 0.0
  %1928 = vmatprep.subr.mxu0 0.0
  %1929 = vmatpush1.msra.mxu0 0.0
  %1930 = vmatprep.subr.mxu0 0.0
  %1931 = vmatpush1.msra.mxu0 0.0
  %1932 = vmatprep.subr.mxu0 0.0
  %1933 = vmatpush1.msra.mxu0 0.0
  %1934 = vmatprep.subr.mxu0 0.0
  %1935 = vmatpush1.msra.mxu0 0.0
  %1936 = vmatprep.subr.mxu0 0.0
  %1937 = vmatpush1.msra.mxu0 0.0
  %1938 = vmatprep.subr.mxu0 0.0
  %1939 = vmatpush1.msra.mxu0 0.0
  %1940 = vmatprep.subr.mxu0 0.0
  %1941 = vmatpush1.msra.mxu0 0.0
  %1942 = vmatprep.subr.mxu0 0.0
  %1943 = vmatpush1.msra.mxu0 0.0
  %1944 = vmatprep.subr.mxu0 0.0
  %1945 = vmatpush1.msra.mxu0 0.0
  %1946 = vmatprep.subr.mxu0 0.0
  %1947 = vmatpush1.msra.mxu0 0.0
  %1948 = vmatprep.mubr.f32.mxu0 0.0
  %1949 = vmatmul.mubr.f32.gmra.mrb[0].mxu0 %v1662
  %v1950 = vpop.f32.mrb[0].mxu0
  %v1951 = vadd.f32 %v1650, %v1950
  %v1952 = vpop.f32.mrb[0].mxu0
  %v1953 = vadd.f32 %v1654, %v1952
  %1954 = vmatprep.mubr.f32.mxu0 0.0
  %1955 = vmatmul.mubr.f32.gmra.mrb[0].mxu0 %v1665
  %v1956 = vpop.f32.mrb[0].mxu0
  %v1957 = vadd.f32 %v1650, %v1956
  %v1958 = vpop.f32.mrb[0].mxu0
  %v1959 = vadd.f32 %v1654, %v1958
  %1960 = vmatprep.mubr.f32.mxu0 0.0
  %1961 = vmatmul.mubr.f32.gmra.mrb[0].mxu0 %v1668
  %v1962 = vpop.f32.mrb[0].mxu0
  %v1963 = vadd.f32 %v1650, %v1962
  %v1964 = vpop.f32.mrb[0].mxu0
  %v1965 = vadd.f32 %v1654, %v1964
  %1966 = vmatprep.mubr.f32.mxu0 0.0
  %1967 = vmatmul.mubr.f32.gmra.mrb[0].mxu0 %v1671
  %v1968 = vpop.f32.mrb[0].mxu0
  %v1969 = vadd.f32 %v1650, %v1968
  %v1970 = vpop.f32.mrb[0].mxu0
  %v1971 = vadd.f32 %v1654, %v1970
  %1972 = vmatprep.mubr.f32.mxu0 0.0
  %1973 = vmatmul.mubr.f32.gmra.mrb[0].mxu0 %v1674
  %v1974 = vpop.f32.mrb[0].mxu0
  %v1975 = vadd.f32 %v1650, %v1974
  %v1976 = vpop.f32.mrb[0].mxu0
  %v1977 = vadd.f32 %v1654, %v1976
  %1978 = vdwg.mxu0
  %1979 = vst [vmem:[#allocation2] sm:$0xff] %v1761
  %1980 = vst [vmem:[#allocation2 + $0x8] sm:$0xff] %v1763
  %1981 = vst [vmem:[#allocation2 + $0x10] sm:$0xff] %v1856
  %1982 = vst [vmem:[#allocation2 + $0x18] sm:$0xff] %v1858
  %1983 = vst [vmem:[#allocation2 + $0x20] sm:$0xff] %v1951
  %1984 = vst [vmem:[#allocation2 + $0x28] sm:$0xff] %v1953
  %1985 = vst [vmem:[#allocation2 + $0x30] sm:$0xff] %v1767
  %1986 = vst [vmem:[#allocation2 + $0x38] sm:$0xff] %v1769
  %1987 = vst [vmem:[#allocation2 + $0x40] sm:$0xff] %v1862
  %1988 = vst [vmem:[#allocation2 + $0x48] sm:$0xff] %v1864
  %1989 = vst [vmem:[#allocation2 + $0x50] sm:$0xff] %v1957
  %1990 = vst [vmem:[#allocation2 + $0x58] sm:$0xff] %v1959
  %1991 = vst [vmem:[#allocation2 + $0x60] sm:$0xff] %v1773
  %1992 = vst [vmem:[#allocation2 + $0x68] sm:$0xff] %v1775
  %1993 = vst [vmem:[#allocation2 + $0x70] sm:$0xff] %v1868
  %1994 = vst [vmem:[#allocation2 + $0x78] sm:$0xff] %v1870
  %1995 = vst [vmem:[#allocation2 + $0x80] sm:$0xff] %v1963
  %1996 = vst [vmem:[#allocation2 + $0x88] sm:$0xff] %v1965
  %1997 = vst [vmem:[#allocation2 + $0x90] sm:$0xff] %v1779
  %1998 = vst [vmem:[#allocation2 + $0x98] sm:$0xff] %v1781
  %1999 = vst [vmem:[#allocation2 + $0xa0] sm:$0xff] %v1874
  %2000 = vst [vmem:[#allocation2 + $0xa8] sm:$0xff] %v1876
  %2001 = vst [vmem:[#allocation2 + $0xb0] sm:$0xff] %v1969
  %2002 = vst [vmem:[#allocation2 + $0xb8] sm:$0xff] %v1971
  %2003 = vst [vmem:[#allocation2 + $0xc0] sm:$0xff] %v1785
  %2004 = vst [vmem:[#allocation2 + $0xc8] sm:$0xff] %v1787
  %2005 = vst [vmem:[#allocation2 + $0xd0] sm:$0xff] %v1880
  %2006 = vst [vmem:[#allocation2 + $0xd8] sm:$0xff] %v1882
  %2007 = vst [vmem:[#allocation2 + $0xe0] sm:$0xff] %v1975
  %2008 = vst [vmem:[#allocation2 + $0xe8] sm:$0xff] %v1977
  %v2009 = vld [vmem:[#allocation2] sm:$0xff]
  %v2010 = vld [vmem:[#allocation2 + $0x30] sm:$0xff]
  %v2011 = vld [vmem:[#allocation2 + $0x60] sm:$0xff]
  %v2012 = vld [vmem:[#allocation2 + $0x90] sm:$0xff]
  %v2013 = vld [vmem:[#allocation2 + $0xc0] sm:$0xff]
  %v2014 = vld [vmem:[#allocation2 + $0x10] sm:$0xff]
  %v2015 = vld [vmem:[#allocation2 + $0x40] sm:$0xff]
  %v2016 = vld [vmem:[#allocation2 + $0x70] sm:$0xff]
  %v2017 = vld [vmem:[#allocation2 + $0xa0] sm:$0xff]
  %v2018 = vld [vmem:[#allocation2 + $0xd0] sm:$0xff]
  %v2019 = vld [vmem:[#allocation2 + $0x20] sm:$0xff]
  %v2020 = vld [vmem:[#allocation2 + $0x50] sm:$0xff]
  %v2021 = vld [vmem:[#allocation2 + $0x80] sm:$0xff]
  %v2022 = vld [vmem:[#allocation2 + $0xb0] sm:$0xff]
  %v2023 = vld [vmem:[#allocation2 + $0xe0] sm:$0xff]
  %2024 = vmatprep.subr.mxu0 0.0
  %2025 = vmatpush1.xpose.msra.mxu0 %v2014
  %2026 = vmatprep.subr.mxu0 0.0
  %2027 = vmatpush1.xpose.msra.mxu0 %v2015
  %2028 = vmatprep.subr.mxu0 0.0
  %2029 = vmatpush1.xpose.msra.mxu0 %v2016
  %2030 = vmatprep.subr.mxu0 0.0
  %2031 = vmatpush1.xpose.msra.mxu0 %v2017
  %2032 = vmatprep.subr.mxu0 0.0
  %2033 = vmatpush1.xpose.msra.mxu0 %v2018
  %2034 = vmatprep.subr.mxu0 0.0
  %2035 = vmatpush1.xpose.msra.mxu0 0.0
  %2036 = vmatprep.subr.mxu0 0.0
  %2037 = vmatpush1.xpose.msra.mxu0 0.0
  %2038 = vmatprep.subr.mxu0 0.0
  %2039 = vmatpush1.xpose.msra.mxu0 0.0
  %2040 = vmatprep.subr.mxu0 0.0
  %2041 = vmatpush1.xpose.msra.mxu0 0.0
  %2042 = vmatprep.subr.mxu0 0.0
  %2043 = vmatpush1.xpose.msra.mxu0 0.0
  %2044 = vmatprep.subr.mxu0 0.0
  %2045 = vmatpush1.xpose.msra.mxu0 0.0
  %2046 = vmatprep.subr.mxu0 0.0
  %2047 = vmatpush1.xpose.msra.mxu0 0.0
  %2048 = vmatprep.subr.mxu0 0.0
  %2049 = vmatpush1.xpose.msra.mxu0 0.0
  %2050 = vmatprep.subr.mxu0 0.0
  %2051 = vmatpush1.xpose.msra.mxu0 0.0
  %2052 = vmatprep.subr.mxu0 0.0
  %2053 = vmatpush1.xpose.msra.mxu0 0.0
  %2054 = vmatprep.subr.mxu0 0.0
  %2055 = vmatpush1.xpose.msra.mxu0 0.0
  %2056 = vmatprep.subr.mxu0 0.0
  %2057 = vmatpush1.xpose.msra.mxu0 0.0
  %2058 = vmatprep.subr.mxu0 0.0
  %2059 = vmatpush1.xpose.msra.mxu0 0.0
  %2060 = vmatprep.subr.mxu0 0.0
  %2061 = vmatpush1.xpose.msra.mxu0 0.0
  %2062 = vmatprep.subr.mxu0 0.0
  %2063 = vmatpush1.xpose.msra.mxu0 0.0
  %2064 = vmatprep.subr.mxu0 0.0
  %2065 = vmatpush1.xpose.msra.mxu0 0.0
  %2066 = vmatprep.subr.mxu0 0.0
  %2067 = vmatpush1.xpose.msra.mxu0 0.0
  %2068 = vmatprep.subr.mxu0 0.0
  %2069 = vmatpush1.xpose.msra.mxu0 0.0
  %2070 = vmatprep.subr.mxu0 0.0
  %2071 = vmatpush1.xpose.msra.mxu0 0.0
  %2072 = vmatprep.subr.mxu0 0.0
  %2073 = vmatpush1.xpose.msra.mxu0 0.0
  %2074 = vmatprep.subr.mxu0 0.0
  %2075 = vmatpush1.xpose.msra.mxu0 0.0
  %2076 = vmatprep.subr.mxu0 0.0
  %2077 = vmatpush1.xpose.msra.mxu0 0.0
  %2078 = vmatprep.subr.mxu0 0.0
  %2079 = vmatpush1.xpose.msra.mxu0 0.0
  %2080 = vmatprep.subr.mxu0 0.0
  %2081 = vmatpush1.xpose.msra.mxu0 0.0
  %2082 = vmatprep.subr.mxu0 0.0
  %2083 = vmatpush1.xpose.msra.mxu0 0.0
  %2084 = vmatprep.subr.mxu0 0.0
  %2085 = vmatpush1.xpose.msra.mxu0 0.0
  %2086 = vmatprep.subr.mxu0 0.0
  %2087 = vmatpush1.xpose.msra.mxu0 0.0
  %2088 = vmatprep.mubr.f32.mxu0 0.0
  %2089 = vmatmul.mubr.f32.gmra.mrb[0].mxu0 %v2009
  %v2090 = vpop.f32.mrb[0].mxu0
  %v2091 = vadd.f32 %v91, %v2090
  %v2092 = vpop.f32.mrb[0].mxu0
  %2093 = vmatprep.mubr.f32.mxu0 0.0
  %2094 = vmatmul.mubr.f32.gmra.mrb[0].mxu0 %v2010
  %v2095 = vpop.f32.mrb[0].mxu0
  %v2096 = vadd.f32 %v92, %v2095
  %v2097 = vpop.f32.mrb[0].mxu0
  %2098 = vmatprep.mubr.f32.mxu0 0.0
  %2099 = vmatmul.mubr.f32.gmra.mrb[0].mxu0 %v2011
  %v2100 = vpop.f32.mrb[0].mxu0
  %v2101 = vadd.f32 %v93, %v2100
  %v2102 = vpop.f32.mrb[0].mxu0
  %2103 = vmatprep.mubr.f32.mxu0 0.0
  %2104 = vmatmul.mubr.f32.gmra.mrb[0].mxu0 %v2012
  %v2105 = vpop.f32.mrb[0].mxu0
  %v2106 = vadd.f32 %v94, %v2105
  %v2107 = vpop.f32.mrb[0].mxu0
  %2108 = vmatprep.mubr.f32.mxu0 0.0
  %2109 = vmatmul.mubr.f32.gmra.mrb[0].mxu0 %v2013
  %v2110 = vpop.f32.mrb[0].mxu0
  %v2111 = vadd.f32 %v95, %v2110
  %v2112 = vpop.f32.mrb[0].mxu0
  %2113 = vdwg.mxu0
  %v2114 = vsel %vm601, %v2091, -inf
  %2115 = vmax.xlane.f32.xlu0 %v2114
  %v2116 = vpop.xlane.xlu0 %2115
  %v2117 = vsel %vm601, %v2096, -inf
  %2118 = vmax.xlane.f32.xlu0 %v2117
  %v2119 = vpop.xlane.xlu0 %2118
  %v2120 = vsel %vm601, %v2101, -inf
  %2121 = vmax.xlane.f32.xlu0 %v2120
  %v2122 = vpop.xlane.xlu0 %2121
  %v2123 = vsel %vm601, %v2106, -inf
  %2124 = vmax.xlane.f32.xlu0 %v2123
  %v2125 = vpop.xlane.xlu0 %2124
  %v2126 = vsel %vm601, %v2111, -inf
  %2127 = vmax.xlane.f32.xlu0 %v2126
  %v2128 = vpop.xlane.xlu0 %2127
  %v2129 = vsub.f32 %v2091, %v2116
  %v2130 = vsub.f32 %v2096, %v2119
  %v2131 = vsub.f32 %v2101, %v2122
  %v2132 = vsub.f32 %v2106, %v2125
  %v2133 = vsub.f32 %v2111, %v2128
  %v2134 = vmul.f32 %v2129, 1.442695
  %v2135 = vpow.pop %v2134
  %v2136 = vmul.f32 %v2130, 1.442695
  %v2137 = vpow.pop %v2136
  %v2138 = vmul.f32 %v2131, 1.442695
  %v2139 = vpow.pop %v2138
  %v2140 = vmul.f32 %v2132, 1.442695
  %v2141 = vpow.pop %v2140
  %v2142 = vmul.f32 %v2133, 1.442695
  %v2143 = vpow.pop %v2142
  %v2144 = vsel %vm601, %v2135, 0.0
  %2145 = vadd.xlane.f32.xlu0 %v2144
  %v2146 = vpop.xlane.xlu0 %2145
  %v2147 = vsel %vm601, %v2137, 0.0
  %2148 = vadd.xlane.f32.xlu0 %v2147
  %v2149 = vpop.xlane.xlu0 %2148
  %v2150 = vsel %vm601, %v2139, 0.0
  %2151 = vadd.xlane.f32.xlu0 %v2150
  %v2152 = vpop.xlane.xlu0 %2151
  %v2153 = vsel %vm601, %v2141, 0.0
  %2154 = vadd.xlane.f32.xlu0 %v2153
  %v2155 = vpop.xlane.xlu0 %2154
  %v2156 = vsel %vm601, %v2143, 0.0
  %2157 = vadd.xlane.f32.xlu0 %v2156
  %v2158 = vpop.xlane.xlu0 %2157
  %v2159 = vrcp.pop %v2146
  %v2160 = vrcp.pop %v2149
  %v2161 = vrcp.pop %v2152
  %v2162 = vrcp.pop %v2155
  %v2163 = vrcp.pop %v2158
  %v2164 = vmul.f32 %v2135, %v2159
  %v2165 = vmul.f32 %v2137, %v2160
  %v2166 = vmul.f32 %v2139, %v2161
  %v2167 = vmul.f32 %v2141, %v2162
  %v2168 = vmul.f32 %v2143, %v2163
  %v2170 = vsel %vm601, %v2164, 0
  %v2173 = vsel %vm601, %v2165, 0
  %v2176 = vsel %vm601, %v2166, 0
  %v2179 = vsel %vm601, %v2167, 0
  %v2182 = vsel %vm601, %v2168, 0
  %2184 = vmatprep.subr.mxu0 0.0
  %2185 = vmatpush1.msra.mxu0 %v2019
  %2186 = vmatprep.subr.mxu0 0.0
  %2187 = vmatpush1.msra.mxu0 %v2020
  %2188 = vmatprep.subr.mxu0 0.0
  %2189 = vmatpush1.msra.mxu0 %v2021
  %2190 = vmatprep.subr.mxu0 0.0
  %2191 = vmatpush1.msra.mxu0 %v2022
  %2192 = vmatprep.subr.mxu0 0.0
  %2193 = vmatpush1.msra.mxu0 %v2023
  %2194 = vmatprep.subr.mxu0 0.0
  %2195 = vmatpush1.msra.mxu0 0.0
  %2196 = vmatprep.subr.mxu0 0.0
  %2197 = vmatpush1.msra.mxu0 0.0
  %2198 = vmatprep.subr.mxu0 0.0
  %2199 = vmatpush1.msra.mxu0 0.0
  %2200 = vmatprep.subr.mxu0 0.0
  %2201 = vmatpush1.msra.mxu0 0.0
  %2202 = vmatprep.subr.mxu0 0.0
  %2203 = vmatpush1.msra.mxu0 0.0
  %2204 = vmatprep.subr.mxu0 0.0
  %2205 = vmatpush1.msra.mxu0 0.0
  %2206 = vmatprep.subr.mxu0 0.0
  %2207 = vmatpush1.msra.mxu0 0.0
  %2208 = vmatprep.subr.mxu0 0.0
  %2209 = vmatpush1.msra.mxu0 0.0
  %2210 = vmatprep.subr.mxu0 0.0
  %2211 = vmatpush1.msra.mxu0 0.0
  %2212 = vmatprep.subr.mxu0 0.0
  %2213 = vmatpush1.msra.mxu0 0.0
  %2214 = vmatprep.subr.mxu0 0.0
  %2215 = vmatpush1.msra.mxu0 0.0
  %2216 = vmatprep.subr.mxu0 0.0
  %2217 = vmatpush1.msra.mxu0 0.0
  %2218 = vmatprep.subr.mxu0 0.0
  %2219 = vmatpush1.msra.mxu0 0.0
  %2220 = vmatprep.subr.mxu0 0.0
  %2221 = vmatpush1.msra.mxu0 0.0
  %2222 = vmatprep.subr.mxu0 0.0
  %2223 = vmatpush1.msra.mxu0 0.0
  %2224 = vmatprep.subr.mxu0 0.0
  %2225 = vmatpush1.msra.mxu0 0.0
  %2226 = vmatprep.subr.mxu0 0.0
  %2227 = vmatpush1.msra.mxu0 0.0
  %2228 = vmatprep.subr.mxu0 0.0
  %2229 = vmatpush1.msra.mxu0 0.0
  %2230 = vmatprep.subr.mxu0 0.0
  %2231 = vmatpush1.msra.mxu0 0.0
  %2232 = vmatprep.subr.mxu0 0.0
  %2233 = vmatpush1.msra.mxu0 0.0
  %2234 = vmatprep.subr.mxu0 0.0
  %2235 = vmatpush1.msra.mxu0 0.0
  %2236 = vmatprep.subr.mxu0 0.0
  %2237 = vmatpush1.msra.mxu0 0.0
  %2238 = vmatprep.subr.mxu0 0.0
  %2239 = vmatpush1.msra.mxu0 0.0
  %2240 = vmatprep.subr.mxu0 0.0
  %2241 = vmatpush1.msra.mxu0 0.0
  %2242 = vmatprep.subr.mxu0 0.0
  %2243 = vmatpush1.msra.mxu0 0.0
  %2244 = vmatprep.subr.mxu0 0.0
  %2245 = vmatpush1.msra.mxu0 0.0
  %2246 = vmatprep.subr.mxu0 0.0
  %2247 = vmatpush1.msra.mxu0 0.0
  %2248 = vmatprep.mubr.f32.mxu0 0.0
  %2249 = vmatmul.mubr.f32.gmra.mrb[0].mxu0 %v2170
  %v2250 = vpop.f32.mrb[0].mxu0
  %v2251 = vadd.f32 0.0, %v2250
  %v2252 = vpop.f32.mrb[0].mxu0
  %2253 = vmatprep.mubr.f32.mxu0 0.0
  %2254 = vmatmul.mubr.f32.gmra.mrb[0].mxu0 %v2173
  %v2255 = vpop.f32.mrb[0].mxu0
  %v2256 = vadd.f32 0.0, %v2255
  %v2257 = vpop.f32.mrb[0].mxu0
  %2258 = vmatprep.mubr.f32.mxu0 0.0
  %2259 = vmatmul.mubr.f32.gmra.mrb[0].mxu0 %v2176
  %v2260 = vpop.f32.mrb[0].mxu0
  %v2261 = vadd.f32 0.0, %v2260
  %v2262 = vpop.f32.mrb[0].mxu0
  %2263 = vmatprep.mubr.f32.mxu0 0.0
  %2264 = vmatmul.mubr.f32.gmra.mrb[0].mxu0 %v2179
  %v2265 = vpop.f32.mrb[0].mxu0
  %v2266 = vadd.f32 0.0, %v2265
  %v2267 = vpop.f32.mrb[0].mxu0
  %2268 = vmatprep.mubr.f32.mxu0 0.0
  %2269 = vmatmul.mubr.f32.gmra.mrb[0].mxu0 %v2182
  %v2270 = vpop.f32.mrb[0].mxu0
  %v2271 = vadd.f32 0.0, %v2270
  %v2272 = vpop.f32.mrb[0].mxu0
  %2273 = vdwg.mxu0
  %2274 = vst [vmem:[#allocation3] sm:$0xff] %v2251
  %2275 = vst [vmem:[#allocation3 + $0x10] sm:$0xff] %v2256
  %2276 = vst [vmem:[#allocation3 + $0x20] sm:$0xff] %v2261
  %2277 = vst [vmem:[#allocation3 + $0x30] sm:$0xff] %v2266
  %2278 = vst [vmem:[#allocation3 + $0x40] sm:$0xff] %v2271
  %v2279 = vld [vmem:[#allocation2 + $0x8] sm:$0xff]
  %v2280 = vld [vmem:[#allocation2 + $0x38] sm:$0xff]
  %v2281 = vld [vmem:[#allocation2 + $0x68] sm:$0xff]
  %v2282 = vld [vmem:[#allocation2 + $0x98] sm:$0xff]
  %v2283 = vld [vmem:[#allocation2 + $0xc8] sm:$0xff]
  %v2284 = vld [vmem:[#allocation2 + $0x18] sm:$0xff]
  %v2285 = vld [vmem:[#allocation2 + $0x48] sm:$0xff]
  %v2286 = vld [vmem:[#allocation2 + $0x78] sm:$0xff]
  %v2287 = vld [vmem:[#allocation2 + $0xa8] sm:$0xff]
  %v2288 = vld [vmem:[#allocation2 + $0xd8] sm:$0xff]
  %v2289 = vld [vmem:[#allocation2 + $0x28] sm:$0xff]
  %v2290 = vld [vmem:[#allocation2 + $0x58] sm:$0xff]
  %v2291 = vld [vmem:[#allocation2 + $0x88] sm:$0xff]
  %v2292 = vld [vmem:[#allocation2 + $0xb8] sm:$0xff]
  %v2293 = vld [vmem:[#allocation2 + $0xe8] sm:$0xff]
  %2294 = vmatprep.subr.mxu0 0.0
  %2295 = vmatpush1.xpose.msra.mxu0 %v2284
  %2296 = vmatprep.subr.mxu0 0.0
  %2297 = vmatpush1.xpose.msra.mxu0 %v2285
  %2298 = vmatprep.subr.mxu0 0.0
  %2299 = vmatpush1.xpose.msra.mxu0 %v2286
  %2300 = vmatprep.subr.mxu0 0.0
  %2301 = vmatpush1.xpose.msra.mxu0 %v2287
  %2302 = vmatprep.subr.mxu0 0.0
  %2303 = vmatpush1.xpose.msra.mxu0 %v2288
  %2304 = vmatprep.subr.mxu0 0.0
  %2305 = vmatpush1.xpose.msra.mxu0 0.0
  %2306 = vmatprep.subr.mxu0 0.0
  %2307 = vmatpush1.xpose.msra.mxu0 0.0
  %2308 = vmatprep.subr.mxu0 0.0
  %2309 = vmatpush1.xpose.msra.mxu0 0.0
  %2310 = vmatprep.subr.mxu0 0.0
  %2311 = vmatpush1.xpose.msra.mxu0 0.0
  %2312 = vmatprep.subr.mxu0 0.0
  %2313 = vmatpush1.xpose.msra.mxu0 0.0
  %2314 = vmatprep.subr.mxu0 0.0
  %2315 = vmatpush1.xpose.msra.mxu0 0.0
  %2316 = vmatprep.subr.mxu0 0.0
  %2317 = vmatpush1.xpose.msra.mxu0 0.0
  %2318 = vmatprep.subr.mxu0 0.0
  %2319 = vmatpush1.xpose.msra.mxu0 0.0
  %2320 = vmatprep.subr.mxu0 0.0
  %2321 = vmatpush1.xpose.msra.mxu0 0.0
  %2322 = vmatprep.subr.mxu0 0.0
  %2323 = vmatpush1.xpose.msra.mxu0 0.0
  %2324 = vmatprep.subr.mxu0 0.0
  %2325 = vmatpush1.xpose.msra.mxu0 0.0
  %2326 = vmatprep.subr.mxu0 0.0
  %2327 = vmatpush1.xpose.msra.mxu0 0.0
  %2328 = vmatprep.subr.mxu0 0.0
  %2329 = vmatpush1.xpose.msra.mxu0 0.0
  %2330 = vmatprep.subr.mxu0 0.0
  %2331 = vmatpush1.xpose.msra.mxu0 0.0
  %2332 = vmatprep.subr.mxu0 0.0
  %2333 = vmatpush1.xpose.msra.mxu0 0.0
  %2334 = vmatprep.subr.mxu0 0.0
  %2335 = vmatpush1.xpose.msra.mxu0 0.0
  %2336 = vmatprep.subr.mxu0 0.0
  %2337 = vmatpush1.xpose.msra.mxu0 0.0
  %2338 = vmatprep.subr.mxu0 0.0
  %2339 = vmatpush1.xpose.msra.mxu0 0.0
  %2340 = vmatprep.subr.mxu0 0.0
  %2341 = vmatpush1.xpose.msra.mxu0 0.0
  %2342 = vmatprep.subr.mxu0 0.0
  %2343 = vmatpush1.xpose.msra.mxu0 0.0
  %2344 = vmatprep.subr.mxu0 0.0
  %2345 = vmatpush1.xpose.msra.mxu0 0.0
  %2346 = vmatprep.subr.mxu0 0.0
  %2347 = vmatpush1.xpose.msra.mxu0 0.0
  %2348 = vmatprep.subr.mxu0 0.0
  %2349 = vmatpush1.xpose.msra.mxu0 0.0
  %2350 = vmatprep.subr.mxu0 0.0
  %2351 = vmatpush1.xpose.msra.mxu0 0.0
  %2352 = vmatprep.subr.mxu0 0.0
  %2353 = vmatpush1.xpose.msra.mxu0 0.0
  %2354 = vmatprep.subr.mxu0 0.0
  %2355 = vmatpush1.xpose.msra.mxu0 0.0
  %2356 = vmatprep.subr.mxu0 0.0
  %2357 = vmatpush1.xpose.msra.mxu0 0.0
  %2358 = vmatprep.mubr.f32.mxu0 0.0
  %2359 = vmatmul.mubr.f32.gmra.mrb[0].mxu0 %v2279
  %v2360 = vpop.f32.mrb[0].mxu0
  %v2361 = vadd.f32 %v91, %v2360
  %v2362 = vpop.f32.mrb[0].mxu0
  %2363 = vmatprep.mubr.f32.mxu0 0.0
  %2364 = vmatmul.mubr.f32.gmra.mrb[0].mxu0 %v2280
  %v2365 = vpop.f32.mrb[0].mxu0
  %v2366 = vadd.f32 %v92, %v2365
  %v2367 = vpop.f32.mrb[0].mxu0
  %2368 = vmatprep.mubr.f32.mxu0 0.0
  %2369 = vmatmul.mubr.f32.gmra.mrb[0].mxu0 %v2281
  %v2370 = vpop.f32.mrb[0].mxu0
  %v2371 = vadd.f32 %v93, %v2370
  %v2372 = vpop.f32.mrb[0].mxu0
  %2373 = vmatprep.mubr.f32.mxu0 0.0
  %2374 = vmatmul.mubr.f32.gmra.mrb[0].mxu0 %v2282
  %v2375 = vpop.f32.mrb[0].mxu0
  %v2376 = vadd.f32 %v94, %v2375
  %v2377 = vpop.f32.mrb[0].mxu0
  %2378 = vmatprep.mubr.f32.mxu0 0.0
  %2379 = vmatmul.mubr.f32.gmra.mrb[0].mxu0 %v2283
  %v2380 = vpop.f32.mrb[0].mxu0
  %v2381 = vadd.f32 %v95, %v2380
  %v2382 = vpop.f32.mrb[0].mxu0
  %2383 = vdwg.mxu0
  %v2384 = vsel %vm601, %v2361, -inf
  %2385 = vmax.xlane.f32.xlu0 %v2384
  %v2386 = vpop.xlane.xlu0 %2385
  %v2387 = vsel %vm601, %v2366, -inf
  %2388 = vmax.xlane.f32.xlu0 %v2387
  %v2389 = vpop.xlane.xlu0 %2388
  %v2390 = vsel %vm601, %v2371, -inf
  %2391 = vmax.xlane.f32.xlu0 %v2390
  %v2392 = vpop.xlane.xlu0 %2391
  %v2393 = vsel %vm601, %v2376, -inf
  %2394 = vmax.xlane.f32.xlu0 %v2393
  %v2395 = vpop.xlane.xlu0 %2394
  %v2396 = vsel %vm601, %v2381, -inf
  %2397 = vmax.xlane.f32.xlu0 %v2396
  %v2398 = vpop.xlane.xlu0 %2397
  %v2399 = vsub.f32 %v2361, %v2386
  %v2400 = vsub.f32 %v2366, %v2389
  %v2401 = vsub.f32 %v2371, %v2392
  %v2402 = vsub.f32 %v2376, %v2395
  %v2403 = vsub.f32 %v2381, %v2398
  %v2404 = vmul.f32 %v2399, 1.442695
  %v2405 = vpow.pop %v2404
  %v2406 = vmul.f32 %v2400, 1.442695
  %v2407 = vpow.pop %v2406
  %v2408 = vmul.f32 %v2401, 1.442695
  %v2409 = vpow.pop %v2408
  %v2410 = vmul.f32 %v2402, 1.442695
  %v2411 = vpow.pop %v2410
  %v2412 = vmul.f32 %v2403, 1.442695
  %v2413 = vpow.pop %v2412
  %v2414 = vsel %vm601, %v2405, 0.0
  %2415 = vadd.xlane.f32.xlu0 %v2414
  %v2416 = vpop.xlane.xlu0 %2415
  %v2417 = vsel %vm601, %v2407, 0.0
  %2418 = vadd.xlane.f32.xlu0 %v2417
  %v2419 = vpop.xlane.xlu0 %2418
  %v2420 = vsel %vm601, %v2409, 0.0
  %2421 = vadd.xlane.f32.xlu0 %v2420
  %v2422 = vpop.xlane.xlu0 %2421
  %v2423 = vsel %vm601, %v2411, 0.0
  %2424 = vadd.xlane.f32.xlu0 %v2423
  %v2425 = vpop.xlane.xlu0 %2424
  %v2426 = vsel %vm601, %v2413, 0.0
  %2427 = vadd.xlane.f32.xlu0 %v2426
  %v2428 = vpop.xlane.xlu0 %2427
  %v2429 = vrcp.pop %v2416
  %v2430 = vrcp.pop %v2419
  %v2431 = vrcp.pop %v2422
  %v2432 = vrcp.pop %v2425
  %v2433 = vrcp.pop %v2428
  %v2434 = vmul.f32 %v2405, %v2429
  %v2435 = vmul.f32 %v2407, %v2430
  %v2436 = vmul.f32 %v2409, %v2431
  %v2437 = vmul.f32 %v2411, %v2432
  %v2438 = vmul.f32 %v2413, %v2433
  %v2440 = vsel %vm601, %v2434, 0
  %v2443 = vsel %vm601, %v2435, 0
  %v2446 = vsel %vm601, %v2436, 0
  %v2449 = vsel %vm601, %v2437, 0
  %v2452 = vsel %vm601, %v2438, 0
  %2454 = vmatprep.subr.mxu0 0.0
  %2455 = vmatpush1.msra.mxu0 %v2289
  %2456 = vmatprep.subr.mxu0 0.0
  %2457 = vmatpush1.msra.mxu0 %v2290
  %2458 = vmatprep.subr.mxu0 0.0
  %2459 = vmatpush1.msra.mxu0 %v2291
  %2460 = vmatprep.subr.mxu0 0.0
  %2461 = vmatpush1.msra.mxu0 %v2292
  %2462 = vmatprep.subr.mxu0 0.0
  %2463 = vmatpush1.msra.mxu0 %v2293
  %2464 = vmatprep.subr.mxu0 0.0
  %2465 = vmatpush1.msra.mxu0 0.0
  %2466 = vmatprep.subr.mxu0 0.0
  %2467 = vmatpush1.msra.mxu0 0.0
  %2468 = vmatprep.subr.mxu0 0.0
  %2469 = vmatpush1.msra.mxu0 0.0
  %2470 = vmatprep.subr.mxu0 0.0
  %2471 = vmatpush1.msra.mxu0 0.0
  %2472 = vmatprep.subr.mxu0 0.0
  %2473 = vmatpush1.msra.mxu0 0.0
  %2474 = vmatprep.subr.mxu0 0.0
  %2475 = vmatpush1.msra.mxu0 0.0
  %2476 = vmatprep.subr.mxu0 0.0
  %2477 = vmatpush1.msra.mxu0 0.0
  %2478 = vmatprep.subr.mxu0 0.0
  %2479 = vmatpush1.msra.mxu0 0.0
  %2480 = vmatprep.subr.mxu0 0.0
  %2481 = vmatpush1.msra.mxu0 0.0
  %2482 = vmatprep.subr.mxu0 0.0
  %2483 = vmatpush1.msra.mxu0 0.0
  %2484 = vmatprep.subr.mxu0 0.0
  %2485 = vmatpush1.msra.mxu0 0.0
  %2486 = vmatprep.subr.mxu0 0.0
  %2487 = vmatpush1.msra.mxu0 0.0
  %2488 = vmatprep.subr.mxu0 0.0
  %2489 = vmatpush1.msra.mxu0 0.0
  %2490 = vmatprep.subr.mxu0 0.0
  %2491 = vmatpush1.msra.mxu0 0.0
  %2492 = vmatprep.subr.mxu0 0.0
  %2493 = vmatpush1.msra.mxu0 0.0
  %2494 = vmatprep.subr.mxu0 0.0
  %2495 = vmatpush1.msra.mxu0 0.0
  %2496 = vmatprep.subr.mxu0 0.0
  %2497 = vmatpush1.msra.mxu0 0.0
  %2498 = vmatprep.subr.mxu0 0.0
  %2499 = vmatpush1.msra.mxu0 0.0
  %2500 = vmatprep.subr.mxu0 0.0
  %2501 = vmatpush1.msra.mxu0 0.0
  %2502 = vmatprep.subr.mxu0 0.0
  %2503 = vmatpush1.msra.mxu0 0.0
  %2504 = vmatprep.subr.mxu0 0.0
  %2505 = vmatpush1.msra.mxu0 0.0
  %2506 = vmatprep.subr.mxu0 0.0
  %2507 = vmatpush1.msra.mxu0 0.0
  %2508 = vmatprep.subr.mxu0 0.0
  %2509 = vmatpush1.msra.mxu0 0.0
  %2510 = vmatprep.subr.mxu0 0.0
  %2511 = vmatpush1.msra.mxu0 0.0
  %2512 = vmatprep.subr.mxu0 0.0
  %2513 = vmatpush1.msra.mxu0 0.0
  %2514 = vmatprep.subr.mxu0 0.0
  %2515 = vmatpush1.msra.mxu0 0.0
  %2516 = vmatprep.subr.mxu0 0.0
  %2517 = vmatpush1.msra.mxu0 0.0
  %2518 = vmatprep.mubr.f32.mxu0 0.0
  %2519 = vmatmul.mubr.f32.gmra.mrb[0].mxu0 %v2440
  %v2520 = vpop.f32.mrb[0].mxu0
  %v2521 = vadd.f32 0.0, %v2520
  %v2522 = vpop.f32.mrb[0].mxu0
  %2523 = vmatprep.mubr.f32.mxu0 0.0
  %2524 = vmatmul.mubr.f32.gmra.mrb[0].mxu0 %v2443
  %v2525 = vpop.f32.mrb[0].mxu0
  %v2526 = vadd.f32 0.0, %v2525
  %v2527 = vpop.f32.mrb[0].mxu0
  %2528 = vmatprep.mubr.f32.mxu0 0.0
  %2529 = vmatmul.mubr.f32.gmra.mrb[0].mxu0 %v2446
  %v2530 = vpop.f32.mrb[0].mxu0
  %v2531 = vadd.f32 0.0, %v2530
  %v2532 = vpop.f32.mrb[0].mxu0
  %2533 = vmatprep.mubr.f32.mxu0 0.0
  %2534 = vmatmul.mubr.f32.gmra.mrb[0].mxu0 %v2449
  %v2535 = vpop.f32.mrb[0].mxu0
  %v2536 = vadd.f32 0.0, %v2535
  %v2537 = vpop.f32.mrb[0].mxu0
  %2538 = vmatprep.mubr.f32.mxu0 0.0
  %2539 = vmatmul.mubr.f32.gmra.mrb[0].mxu0 %v2452
  %v2540 = vpop.f32.mrb[0].mxu0
  %v2541 = vadd.f32 0.0, %v2540
  %v2542 = vpop.f32.mrb[0].mxu0
  %2543 = vdwg.mxu0
  %2544 = vst [vmem:[#allocation3 + $0x8] sm:$0xff] %v2521
  %2545 = vst [vmem:[#allocation3 + $0x18] sm:$0xff] %v2526
  %2546 = vst [vmem:[#allocation3 + $0x28] sm:$0xff] %v2531
  %2547 = vst [vmem:[#allocation3 + $0x38] sm:$0xff] %v2536
  %2548 = vst [vmem:[#allocation3 + $0x48] sm:$0xff] %v2541
  %v2549 = vld [vmem:[#allocation3] sm:$0xff]
  %v2550 = vld [vmem:[#allocation3 + $0x8] sm:$0xff]
  %v2551 = vld [vmem:[#allocation3 + $0x10] sm:$0xff]
  %v2552 = vld [vmem:[#allocation3 + $0x18] sm:$0xff]
  %v2553 = vld [vmem:[#allocation3 + $0x20] sm:$0xff]
  %v2554 = vld [vmem:[#allocation3 + $0x28] sm:$0xff]
  %v2555 = vld [vmem:[#allocation3 + $0x30] sm:$0xff]
  %v2556 = vld [vmem:[#allocation3 + $0x38] sm:$0xff]
  %v2557 = vld [vmem:[#allocation3 + $0x40] sm:$0xff]
  %v2558 = vld [vmem:[#allocation3 + $0x48] sm:$0xff]
  %s2559 = scalar_lea.vmem %s3, 256
  %v2560 = vld [vmem:[%s2559] sm:$0xff]
  %v2561 = vld [vmem:[%s2559 + $0x8] sm:$0xff]
  %v2562 = vld [vmem:[%s2559 + $0x10] sm:$0xff]
  %v2563 = vld [vmem:[%s2559 + $0x18] sm:$0xff]
  %v2564 = vld [vmem:[%s2559 + $0x20] sm:$0xff]
  %v2565 = vld [vmem:[%s2559 + $0x28] sm:$0xff]
  %v2566 = vld [vmem:[%s2559 + $0x30] sm:$0xff]
  %v2567 = vld [vmem:[%s2559 + $0x38] sm:$0xff]
  %v2568 = vld [vmem:[%s2559 + $0x40] sm:$0xff]
  %v2569 = vld [vmem:[%s2559 + $0x48] sm:$0xff]
  %v2570 = vld [vmem:[%s2559 + $0x50] sm:$0xff]
  %v2571 = vld [vmem:[%s2559 + $0x58] sm:$0xff]
  %v2572 = vld [vmem:[%s2559 + $0x60] sm:$0xff]
  %v2573 = vld [vmem:[%s2559 + $0x68] sm:$0xff]
  %v2574 = vld [vmem:[%s2559 + $0x70] sm:$0xff]
  %v2575 = vld [vmem:[%s2559 + $0x78] sm:$0xff]
  %v2576 = vld [vmem:[%s2559 + $0x80] sm:$0xff]
  %v2577 = vld [vmem:[%s2559 + $0x88] sm:$0xff]
  %v2578 = vld [vmem:[%s2559 + $0x90] sm:$0xff]
  %v2579 = vld [vmem:[%s2559 + $0x98] sm:$0xff]
  %v2580 = vld [vmem:[%s2559 + $0xa0] sm:$0xff]
  %v2581 = vld [vmem:[%s2559 + $0xa8] sm:$0xff]
  %v2582 = vld [vmem:[%s2559 + $0xb0] sm:$0xff]
  %v2583 = vld [vmem:[%s2559 + $0xb8] sm:$0xff]
  %v2584 = vld [vmem:[%s2559 + $0xc0] sm:$0xff]
  %v2585 = vld [vmem:[%s2559 + $0xc8] sm:$0xff]
  %v2586 = vld [vmem:[%s2559 + $0xd0] sm:$0xff]
  %v2587 = vld [vmem:[%s2559 + $0xd8] sm:$0xff]
  %v2588 = vld [vmem:[%s2559 + $0xe0] sm:$0xff]
  %v2589 = vld [vmem:[%s2559 + $0xe8] sm:$0xff]
  %v2590 = vld [vmem:[%s2559 + $0xf0] sm:$0xff]
  %v2591 = vld [vmem:[%s2559 + $0xf8] sm:$0xff]
  %s2592 = scalar_lea.vmem %s4, 1
  %v2593 = vld [vmem:[%s2592] sm:$0x1]
  %v2595 = vlaneseq
  %v2596 = vshrl.u32 %v2595, 7
  %v2597 = vsub.s32 0, %v2596
  %v2598 = vrot.slane %v2593, %v2597
  %2600 = vmatprep.subr.mxu0 0.0
  %2601 = vmatpush1.msra.mxu0 %v2560
  %2602 = vmatprep.subr.mxu0 0.0
  %2603 = vmatpush1.msra.mxu0 %v2561
  %2604 = vmatprep.subr.mxu0 0.0
  %2605 = vmatpush1.msra.mxu0 %v2562
  %2606 = vmatprep.subr.mxu0 0.0
  %2607 = vmatpush1.msra.mxu0 %v2563
  %2608 = vmatprep.subr.mxu0 0.0
  %2609 = vmatpush1.msra.mxu0 %v2564
  %2610 = vmatprep.subr.mxu0 0.0
  %2611 = vmatpush1.msra.mxu0 %v2565
  %2612 = vmatprep.subr.mxu0 0.0
  %2613 = vmatpush1.msra.mxu0 %v2566
  %2614 = vmatprep.subr.mxu0 0.0
  %2615 = vmatpush1.msra.mxu0 %v2567
  %2616 = vmatprep.subr.mxu0 0.0
  %2617 = vmatpush1.msra.mxu0 %v2568
  %2618 = vmatprep.subr.mxu0 0.0
  %2619 = vmatpush1.msra.mxu0 %v2569
  %2620 = vmatprep.subr.mxu0 0.0
  %2621 = vmatpush1.msra.mxu0 %v2570
  %2622 = vmatprep.subr.mxu0 0.0
  %2623 = vmatpush1.msra.mxu0 %v2571
  %2624 = vmatprep.subr.mxu0 0.0
  %2625 = vmatpush1.msra.mxu0 %v2572
  %2626 = vmatprep.subr.mxu0 0.0
  %2627 = vmatpush1.msra.mxu0 %v2573
  %2628 = vmatprep.subr.mxu0 0.0
  %2629 = vmatpush1.msra.mxu0 %v2574
  %2630 = vmatprep.subr.mxu0 0.0
  %2631 = vmatpush1.msra.mxu0 %v2575
  %2632 = vmatprep.subr.mxu0 0.0
  %2633 = vmatpush1.msra.mxu0 %v2576
  %2634 = vmatprep.subr.mxu0 0.0
  %2635 = vmatpush1.msra.mxu0 %v2577
  %2636 = vmatprep.subr.mxu0 0.0
  %2637 = vmatpush1.msra.mxu0 %v2578
  %2638 = vmatprep.subr.mxu0 0.0
  %2639 = vmatpush1.msra.mxu0 %v2579
  %2640 = vmatprep.subr.mxu0 0.0
  %2641 = vmatpush1.msra.mxu0 %v2580
  %2642 = vmatprep.subr.mxu0 0.0
  %2643 = vmatpush1.msra.mxu0 %v2581
  %2644 = vmatprep.subr.mxu0 0.0
  %2645 = vmatpush1.msra.mxu0 %v2582
  %2646 = vmatprep.subr.mxu0 0.0
  %2647 = vmatpush1.msra.mxu0 %v2583
  %2648 = vmatprep.subr.mxu0 0.0
  %2649 = vmatpush1.msra.mxu0 %v2584
  %2650 = vmatprep.subr.mxu0 0.0
  %2651 = vmatpush1.msra.mxu0 %v2585
  %2652 = vmatprep.subr.mxu0 0.0
  %2653 = vmatpush1.msra.mxu0 %v2586
  %2654 = vmatprep.subr.mxu0 0.0
  %2655 = vmatpush1.msra.mxu0 %v2587
  %2656 = vmatprep.subr.mxu0 0.0
  %2657 = vmatpush1.msra.mxu0 %v2588
  %2658 = vmatprep.subr.mxu0 0.0
  %2659 = vmatpush1.msra.mxu0 %v2589
  %2660 = vmatprep.subr.mxu0 0.0
  %2661 = vmatpush1.msra.mxu0 %v2590
  %2662 = vmatprep.subr.mxu0 0.0
  %2663 = vmatpush1.msra.mxu0 %v2591
  %2664 = vmatprep.mubr.f32.mxu0 %v2550
  %2665 = vmatmul.mubr.f32.gmra.mrb[0].mxu0 %v2549
  %v2666 = vpop.f32.mrb[0].mxu0
  %v2667 = vadd.f32 %v2598, %v2666
  %v2668 = vpop.f32.mrb[0].mxu0
  %2669 = vmatprep.mubr.f32.mxu0 %v2552
  %2670 = vmatmul.mubr.f32.gmra.mrb[0].mxu0 %v2551
  %v2671 = vpop.f32.mrb[0].mxu0
  %v2672 = vadd.f32 %v2598, %v2671
  %v2673 = vpop.f32.mrb[0].mxu0
  %2674 = vmatprep.mubr.f32.mxu0 %v2554
  %2675 = vmatmul.mubr.f32.gmra.mrb[0].mxu0 %v2553
  %v2676 = vpop.f32.mrb[0].mxu0
  %v2677 = vadd.f32 %v2598, %v2676
  %v2678 = vpop.f32.mrb[0].mxu0
  %2679 = vmatprep.mubr.f32.mxu0 %v2556
  %2680 = vmatmul.mubr.f32.gmra.mrb[0].mxu0 %v2555
  %v2681 = vpop.f32.mrb[0].mxu0
  %v2682 = vadd.f32 %v2598, %v2681
  %v2683 = vpop.f32.mrb[0].mxu0
  %2684 = vmatprep.mubr.f32.mxu0 %v2558
  %2685 = vmatmul.mubr.f32.gmra.mrb[0].mxu0 %v2557
  %v2686 = vpop.f32.mrb[0].mxu0
  %v2687 = vadd.f32 %v2598, %v2686
  %v2688 = vpop.f32.mrb[0].mxu0
  %2689 = vdwg.mxu0
  %v2690 = vadd.f32 %v1604, %v2667
  %v2691 = vadd.f32 %v1605, %v2672
  %v2692 = vadd.f32 %v1606, %v2677
  %v2693 = vadd.f32 %v1607, %v2682
  %v2694 = vadd.f32 %v1608, %v2687
  %s2695 = scalar_lea.vmem %s9, 1
  %v2696 = vld [vmem:[%s2695] sm:$0x1]
  %s2697 = scalar_lea.vmem %s10, 1
  %v2698 = vld [vmem:[%s2697] sm:$0x1]
  %v2699 = vsel %vm146, %v2690, 0.0
  %2700 = vadd.xlane.f32.xlu0 %v2699
  %v2701 = vpop.xlane.xlu0 %2700
  %v2702 = vsel %vm146, %v2691, 0.0
  %2703 = vadd.xlane.f32.xlu0 %v2702
  %v2704 = vpop.xlane.xlu0 %2703
  %v2705 = vsel %vm146, %v2692, 0.0
  %2706 = vadd.xlane.f32.xlu0 %v2705
  %v2707 = vpop.xlane.xlu0 %2706
  %v2708 = vsel %vm146, %v2693, 0.0
  %2709 = vadd.xlane.f32.xlu0 %v2708
  %v2710 = vpop.xlane.xlu0 %2709
  %v2711 = vsel %vm146, %v2694, 0.0
  %2712 = vadd.xlane.f32.xlu0 %v2711
  %v2713 = vpop.xlane.xlu0 %2712
  %v2714 = vmul.f32 %v2701, %v1198
  %v2715 = vmul.f32 %v2704, %v1198
  %v2716 = vmul.f32 %v2707, %v1198
  %v2717 = vmul.f32 %v2710, %v1198
  %v2718 = vmul.f32 %v2713, %v1198
  %v2719 = vsub.f32 %v2690, %v2714
  %v2720 = vsub.f32 %v2691, %v2715
  %v2721 = vsub.f32 %v2692, %v2716
  %v2722 = vsub.f32 %v2693, %v2717
  %v2723 = vsub.f32 %v2694, %v2718
  %v2724 = vmul.f32 %v2719, %v2719
  %v2725 = vmul.f32 %v2720, %v2720
  %v2726 = vmul.f32 %v2721, %v2721
  %v2727 = vmul.f32 %v2722, %v2722
  %v2728 = vmul.f32 %v2723, %v2723
  %v2729 = vsel %vm146, %v2724, 0.0
  %2730 = vadd.xlane.f32.xlu0 %v2729
  %v2731 = vpop.xlane.xlu0 %2730
  %v2732 = vsel %vm146, %v2725, 0.0
  %2733 = vadd.xlane.f32.xlu0 %v2732
  %v2734 = vpop.xlane.xlu0 %2733
  %v2735 = vsel %vm146, %v2726, 0.0
  %2736 = vadd.xlane.f32.xlu0 %v2735
  %v2737 = vpop.xlane.xlu0 %2736
  %v2738 = vsel %vm146, %v2727, 0.0
  %2739 = vadd.xlane.f32.xlu0 %v2738
  %v2740 = vpop.xlane.xlu0 %2739
  %v2741 = vsel %vm146, %v2728, 0.0
  %2742 = vadd.xlane.f32.xlu0 %v2741
  %v2743 = vpop.xlane.xlu0 %2742
  %v2744 = vmul.f32 %v2731, %v1198
  %v2745 = vmul.f32 %v2734, %v1198
  %v2746 = vmul.f32 %v2737, %v1198
  %v2747 = vmul.f32 %v2740, %v1198
  %v2748 = vmul.f32 %v2743, %v1198
  %v2749 = vadd.f32 %v2744, 1e-05
  %v2750 = vadd.f32 %v2745, 1e-05
  %v2751 = vadd.f32 %v2746, 1e-05
  %v2752 = vadd.f32 %v2747, 1e-05
  %v2753 = vadd.f32 %v2748, 1e-05
  %v2754 = vrsqrt.pop %v2749
  %v2755 = vrsqrt.pop %v2750
  %v2756 = vrsqrt.pop %v2751
  %v2757 = vrsqrt.pop %v2752
  %v2758 = vrsqrt.pop %v2753
  %v2759 = vmul.f32 %v2719, %v2754
  %v2760 = vmul.f32 %v2720, %v2755
  %v2761 = vmul.f32 %v2721, %v2756
  %v2762 = vmul.f32 %v2722, %v2757
  %v2763 = vmul.f32 %v2723, %v2758
  %v2765 = vlaneseq
  %v2766 = vshrl.u32 %v2765, 7
  %v2767 = vsub.s32 0, %v2766
  %v2768 = vrot.slane %v2696, %v2767
  %v2770 = vmul.f32 %v2759, %v2768
  %v2771 = vmul.f32 %v2760, %v2768
  %v2772 = vmul.f32 %v2761, %v2768
  %v2773 = vmul.f32 %v2762, %v2768
  %v2774 = vmul.f32 %v2763, %v2768
  %v2776 = vlaneseq
  %v2777 = vshrl.u32 %v2776, 7
  %v2778 = vsub.s32 0, %v2777
  %v2779 = vrot.slane %v2698, %v2778
  %v2781 = vadd.f32 %v2770, %v2779
  %v2782 = vadd.f32 %v2771, %v2779
  %v2783 = vadd.f32 %v2772, %v2779
  %v2784 = vadd.f32 %v2773, %v2779
  %v2785 = vadd.f32 %v2774, %v2779
  %s2786 = scalar_lea.vmem %s5, 24
  %v2787 = vld [vmem:[%s2786] sm:$0xff]
  %v2788 = vld [vmem:[%s2786 + $0x8] sm:$0xff]
  %v2789 = vld [vmem:[%s2786 + $0x10] sm:$0xf]
  %s2790 = scalar_lea.vmem %s6, 1
  %v2791 = vld [vmem:[%s2790] sm:$0x1]
  %v2793 = vlaneseq
  %v2794 = vshrl.u32 %v2793, 7
  %v2795 = vsub.s32 0, %v2794
  %v2796 = vrot.slane %v2791, %v2795
  %v2799 = vsel %vm146, %v2781, 0
  %v2802 = vsel %vm146, %v2782, 0
  %v2805 = vsel %vm146, %v2783, 0
  %v2808 = vsel %vm146, %v2784, 0
  %v2811 = vsel %vm146, %v2785, 0
  %v2814 = vsel %vm162, %v2789, 0
  %2816 = vmatprep.subr.mxu0 0.0
  %2817 = vmatpush1.msra.mxu0 %v2787
  %2818 = vmatprep.subr.mxu0 0.0
  %2819 = vmatpush1.msra.mxu0 %v2788
  %2820 = vmatprep.subr.mxu0 0.0
  %2821 = vmatpush1.msra.mxu0 %v2814
  %2822 = vmatprep.subr.mxu0 0.0
  %2823 = vmatpush1.msra.mxu0 0.0
  %2824 = vmatprep.subr.mxu0 0.0
  %2825 = vmatpush1.msra.mxu0 0.0
  %2826 = vmatprep.subr.mxu0 0.0
  %2827 = vmatpush1.msra.mxu0 0.0
  %2828 = vmatprep.subr.mxu0 0.0
  %2829 = vmatpush1.msra.mxu0 0.0
  %2830 = vmatprep.subr.mxu0 0.0
  %2831 = vmatpush1.msra.mxu0 0.0
  %2832 = vmatprep.subr.mxu0 0.0
  %2833 = vmatpush1.msra.mxu0 0.0
  %2834 = vmatprep.subr.mxu0 0.0
  %2835 = vmatpush1.msra.mxu0 0.0
  %2836 = vmatprep.subr.mxu0 0.0
  %2837 = vmatpush1.msra.mxu0 0.0
  %2838 = vmatprep.subr.mxu0 0.0
  %2839 = vmatpush1.msra.mxu0 0.0
  %2840 = vmatprep.subr.mxu0 0.0
  %2841 = vmatpush1.msra.mxu0 0.0
  %2842 = vmatprep.subr.mxu0 0.0
  %2843 = vmatpush1.msra.mxu0 0.0
  %2844 = vmatprep.subr.mxu0 0.0
  %2845 = vmatpush1.msra.mxu0 0.0
  %2846 = vmatprep.subr.mxu0 0.0
  %2847 = vmatpush1.msra.mxu0 0.0
  %2848 = vmatprep.subr.mxu0 0.0
  %2849 = vmatpush1.msra.mxu0 0.0
  %2850 = vmatprep.subr.mxu0 0.0
  %2851 = vmatpush1.msra.mxu0 0.0
  %2852 = vmatprep.subr.mxu0 0.0
  %2853 = vmatpush1.msra.mxu0 0.0
  %2854 = vmatprep.subr.mxu0 0.0
  %2855 = vmatpush1.msra.mxu0 0.0
  %2856 = vmatprep.subr.mxu0 0.0
  %2857 = vmatpush1.msra.mxu0 0.0
  %2858 = vmatprep.subr.mxu0 0.0
  %2859 = vmatpush1.msra.mxu0 0.0
  %2860 = vmatprep.subr.mxu0 0.0
  %2861 = vmatpush1.msra.mxu0 0.0
  %2862 = vmatprep.subr.mxu0 0.0
  %2863 = vmatpush1.msra.mxu0 0.0
  %2864 = vmatprep.subr.mxu0 0.0
  %2865 = vmatpush1.msra.mxu0 0.0
  %2866 = vmatprep.subr.mxu0 0.0
  %2867 = vmatpush1.msra.mxu0 0.0
  %2868 = vmatprep.subr.mxu0 0.0
  %2869 = vmatpush1.msra.mxu0 0.0
  %2870 = vmatprep.subr.mxu0 0.0
  %2871 = vmatpush1.msra.mxu0 0.0
  %2872 = vmatprep.subr.mxu0 0.0
  %2873 = vmatpush1.msra.mxu0 0.0
  %2874 = vmatprep.subr.mxu0 0.0
  %2875 = vmatpush1.msra.mxu0 0.0
  %2876 = vmatprep.subr.mxu0 0.0
  %2877 = vmatpush1.msra.mxu0 0.0
  %2878 = vmatprep.subr.mxu0 0.0
  %2879 = vmatpush1.msra.mxu0 0.0
  %2880 = vmatprep.mubr.f32.mxu0 0.0
  %2881 = vmatmul.mubr.f32.gmra.mrb[0].mxu0 %v2799
  %v2882 = vpop.f32.mrb[0].mxu0
  %v2883 = vadd.f32 %v2796, %v2882
  %v2884 = vpop.f32.mrb[0].mxu0
  %2885 = vmatprep.mubr.f32.mxu0 0.0
  %2886 = vmatmul.mubr.f32.gmra.mrb[0].mxu0 %v2802
  %v2887 = vpop.f32.mrb[0].mxu0
  %v2888 = vadd.f32 %v2796, %v2887
  %v2889 = vpop.f32.mrb[0].mxu0
  %2890 = vmatprep.mubr.f32.mxu0 0.0
  %2891 = vmatmul.mubr.f32.gmra.mrb[0].mxu0 %v2805
  %v2892 = vpop.f32.mrb[0].mxu0
  %v2893 = vadd.f32 %v2796, %v2892
  %v2894 = vpop.f32.mrb[0].mxu0
  %2895 = vmatprep.mubr.f32.mxu0 0.0
  %2896 = vmatmul.mubr.f32.gmra.mrb[0].mxu0 %v2808
  %v2897 = vpop.f32.mrb[0].mxu0
  %v2898 = vadd.f32 %v2796, %v2897
  %v2899 = vpop.f32.mrb[0].mxu0
  %2900 = vmatprep.mubr.f32.mxu0 0.0
  %2901 = vmatmul.mubr.f32.gmra.mrb[0].mxu0 %v2811
  %v2902 = vpop.f32.mrb[0].mxu0
  %v2903 = vadd.f32 %v2796, %v2902
  %v2904 = vpop.f32.mrb[0].mxu0
  %2905 = vdwg.mxu0
  %v2906 = vmax.f32 %v2883, 0.0
  %v2907 = vmax.f32 %v2888, 0.0
  %v2908 = vmax.f32 %v2893, 0.0
  %v2909 = vmax.f32 %v2898, 0.0
  %v2910 = vmax.f32 %v2903, 0.0
  %s2911 = scalar_lea.vmem %s7, 64
  %v2912 = vld [vmem:[%s2911] sm:$0xff]
  %v2913 = vld [vmem:[%s2911 + $0x8] sm:$0xff]
  %v2914 = vld [vmem:[%s2911 + $0x10] sm:$0xff]
  %v2915 = vld [vmem:[%s2911 + $0x18] sm:$0xff]
  %v2916 = vld [vmem:[%s2911 + $0x20] sm:$0xff]
  %v2917 = vld [vmem:[%s2911 + $0x28] sm:$0xff]
  %v2918 = vld [vmem:[%s2911 + $0x30] sm:$0xff]
  %v2919 = vld [vmem:[%s2911 + $0x38] sm:$0xff]
  %s2920 = scalar_lea.vmem %s8, 1
  %v2921 = vld [vmem:[%s2920] sm:$0x1]
  %v2923 = vlaneseq
  %v2924 = vshrl.u32 %v2923, 7
  %v2925 = vsub.s32 0, %v2924
  %v2926 = vrot.slane %v2921, %v2925
  %v2929 = vsel %vm1409, %v2906, 0
  %v2932 = vsel %vm1409, %v2907, 0
  %v2935 = vsel %vm1409, %v2908, 0
  %v2938 = vsel %vm1409, %v2909, 0
  %v2941 = vsel %vm1409, %v2910, 0
  %2943 = vmatprep.subr.mxu0 0.0
  %2944 = vmatpush1.msra.mxu0 %v2912
  %2945 = vmatprep.subr.mxu0 0.0
  %2946 = vmatpush1.msra.mxu0 %v2913
  %2947 = vmatprep.subr.mxu0 0.0
  %2948 = vmatpush1.msra.mxu0 %v2914
  %2949 = vmatprep.subr.mxu0 0.0
  %2950 = vmatpush1.msra.mxu0 %v2915
  %2951 = vmatprep.subr.mxu0 0.0
  %2952 = vmatpush1.msra.mxu0 %v2916
  %2953 = vmatprep.subr.mxu0 0.0
  %2954 = vmatpush1.msra.mxu0 %v2917
  %2955 = vmatprep.subr.mxu0 0.0
  %2956 = vmatpush1.msra.mxu0 %v2918
  %2957 = vmatprep.subr.mxu0 0.0
  %2958 = vmatpush1.msra.mxu0 %v2919
  %2959 = vmatprep.subr.mxu0 0.0
  %2960 = vmatpush1.msra.mxu0 0.0
  %2961 = vmatprep.subr.mxu0 0.0
  %2962 = vmatpush1.msra.mxu0 0.0
  %2963 = vmatprep.subr.mxu0 0.0
  %2964 = vmatpush1.msra.mxu0 0.0
  %2965 = vmatprep.subr.mxu0 0.0
  %2966 = vmatpush1.msra.mxu0 0.0
  %2967 = vmatprep.subr.mxu0 0.0
  %2968 = vmatpush1.msra.mxu0 0.0
  %2969 = vmatprep.subr.mxu0 0.0
  %2970 = vmatpush1.msra.mxu0 0.0
  %2971 = vmatprep.subr.mxu0 0.0
  %2972 = vmatpush1.msra.mxu0 0.0
  %2973 = vmatprep.subr.mxu0 0.0
  %2974 = vmatpush1.msra.mxu0 0.0
  %2975 = vmatprep.subr.mxu0 0.0
  %2976 = vmatpush1.msra.mxu0 0.0
  %2977 = vmatprep.subr.mxu0 0.0
  %2978 = vmatpush1.msra.mxu0 0.0
  %2979 = vmatprep.subr.mxu0 0.0
  %2980 = vmatpush1.msra.mxu0 0.0
  %2981 = vmatprep.subr.mxu0 0.0
  %2982 = vmatpush1.msra.mxu0 0.0
  %2983 = vmatprep.subr.mxu0 0.0
  %2984 = vmatpush1.msra.mxu0 0.0
  %2985 = vmatprep.subr.mxu0 0.0
  %2986 = vmatpush1.msra.mxu0 0.0
  %2987 = vmatprep.subr.mxu0 0.0
  %2988 = vmatpush1.msra.mxu0 0.0
  %2989 = vmatprep.subr.mxu0 0.0
  %2990 = vmatpush1.msra.mxu0 0.0
  %2991 = vmatprep.subr.mxu0 0.0
  %2992 = vmatpush1.msra.mxu0 0.0
  %2993 = vmatprep.subr.mxu0 0.0
  %2994 = vmatpush1.msra.mxu0 0.0
  %2995 = vmatprep.subr.mxu0 0.0
  %2996 = vmatpush1.msra.mxu0 0.0
  %2997 = vmatprep.subr.mxu0 0.0
  %2998 = vmatpush1.msra.mxu0 0.0
  %2999 = vmatprep.subr.mxu0 0.0
  %3000 = vmatpush1.msra.mxu0 0.0
  %3001 = vmatprep.subr.mxu0 0.0
  %3002 = vmatpush1.msra.mxu0 0.0
  %3003 = vmatprep.subr.mxu0 0.0
  %3004 = vmatpush1.msra.mxu0 0.0
  %3005 = vmatprep.subr.mxu0 0.0
  %3006 = vmatpush1.msra.mxu0 0.0
  %3007 = vmatprep.mubr.f32.mxu0 0.0
  %3008 = vmatmul.mubr.f32.gmra.mrb[0].mxu0 %v2929
  %v3009 = vpop.f32.mrb[0].mxu0
  %v3010 = vadd.f32 %v2926, %v3009
  %v3011 = vpop.f32.mrb[0].mxu0
  %3012 = vmatprep.mubr.f32.mxu0 0.0
  %3013 = vmatmul.mubr.f32.gmra.mrb[0].mxu0 %v2932
  %v3014 = vpop.f32.mrb[0].mxu0
  %v3015 = vadd.f32 %v2926, %v3014
  %v3016 = vpop.f32.mrb[0].mxu0
  %3017 = vmatprep.mubr.f32.mxu0 0.0
  %3018 = vmatmul.mubr.f32.gmra.mrb[0].mxu0 %v2935
  %v3019 = vpop.f32.mrb[0].mxu0
  %v3020 = vadd.f32 %v2926, %v3019
  %v3021 = vpop.f32.mrb[0].mxu0
  %3022 = vmatprep.mubr.f32.mxu0 0.0
  %3023 = vmatmul.mubr.f32.gmra.mrb[0].mxu0 %v2938
  %v3024 = vpop.f32.mrb[0].mxu0
  %v3025 = vadd.f32 %v2926, %v3024
  %v3026 = vpop.f32.mrb[0].mxu0
  %3027 = vmatprep.mubr.f32.mxu0 0.0
  %3028 = vmatmul.mubr.f32.gmra.mrb[0].mxu0 %v2941
  %v3029 = vpop.f32.mrb[0].mxu0
  %v3030 = vadd.f32 %v2926, %v3029
  %v3031 = vpop.f32.mrb[0].mxu0
  %3032 = vdwg.mxu0
  %v3033 = vadd.f32 %v2781, %v3010
  %v3034 = vadd.f32 %v2782, %v3015
  %v3035 = vadd.f32 %v2783, %v3020
  %v3036 = vadd.f32 %v2784, %v3025
  %v3037 = vadd.f32 %v2785, %v3030
  %s3038 = scalar_lea.vmem %s11, 1
  %v3039 = vld [vmem:[%s3038] sm:$0x1]
  %s3040 = scalar_lea.vmem %s12, 1
  %v3041 = vld [vmem:[%s3040] sm:$0x1]
  %v3042 = vsel %vm146, %v3033, 0.0
  %3043 = vadd.xlane.f32.xlu0 %v3042
  %v3044 = vpop.xlane.xlu0 %3043
  %v3045 = vsel %vm146, %v3034, 0.0
  %3046 = vadd.xlane.f32.xlu0 %v3045
  %v3047 = vpop.xlane.xlu0 %3046
  %v3048 = vsel %vm146, %v3035, 0.0
  %3049 = vadd.xlane.f32.xlu0 %v3048
  %v3050 = vpop.xlane.xlu0 %3049
  %v3051 = vsel %vm146, %v3036, 0.0
  %3052 = vadd.xlane.f32.xlu0 %v3051
  %v3053 = vpop.xlane.xlu0 %3052
  %v3054 = vsel %vm146, %v3037, 0.0
  %3055 = vadd.xlane.f32.xlu0 %v3054
  %v3056 = vpop.xlane.xlu0 %3055
  %v3057 = vmul.f32 %v3044, %v1198
  %v3058 = vmul.f32 %v3047, %v1198
  %v3059 = vmul.f32 %v3050, %v1198
  %v3060 = vmul.f32 %v3053, %v1198
  %v3061 = vmul.f32 %v3056, %v1198
  %v3062 = vsub.f32 %v3033, %v3057
  %v3063 = vsub.f32 %v3034, %v3058
  %v3064 = vsub.f32 %v3035, %v3059
  %v3065 = vsub.f32 %v3036, %v3060
  %v3066 = vsub.f32 %v3037, %v3061
  %v3067 = vmul.f32 %v3062, %v3062
  %v3068 = vmul.f32 %v3063, %v3063
  %v3069 = vmul.f32 %v3064, %v3064
  %v3070 = vmul.f32 %v3065, %v3065
  %v3071 = vmul.f32 %v3066, %v3066
  %v3072 = vsel %vm146, %v3067, 0.0
  %3073 = vadd.xlane.f32.xlu0 %v3072
  %v3074 = vpop.xlane.xlu0 %3073
  %v3075 = vsel %vm146, %v3068, 0.0
  %3076 = vadd.xlane.f32.xlu0 %v3075
  %v3077 = vpop.xlane.xlu0 %3076
  %v3078 = vsel %vm146, %v3069, 0.0
  %3079 = vadd.xlane.f32.xlu0 %v3078
  %v3080 = vpop.xlane.xlu0 %3079
  %v3081 = vsel %vm146, %v3070, 0.0
  %3082 = vadd.xlane.f32.xlu0 %v3081
  %v3083 = vpop.xlane.xlu0 %3082
  %v3084 = vsel %vm146, %v3071, 0.0
  %3085 = vadd.xlane.f32.xlu0 %v3084
  %v3086 = vpop.xlane.xlu0 %3085
  %v3087 = vmul.f32 %v3074, %v1198
  %v3088 = vmul.f32 %v3077, %v1198
  %v3089 = vmul.f32 %v3080, %v1198
  %v3090 = vmul.f32 %v3083, %v1198
  %v3091 = vmul.f32 %v3086, %v1198
  %v3092 = vadd.f32 %v3087, 1e-05
  %v3093 = vadd.f32 %v3088, 1e-05
  %v3094 = vadd.f32 %v3089, 1e-05
  %v3095 = vadd.f32 %v3090, 1e-05
  %v3096 = vadd.f32 %v3091, 1e-05
  %v3097 = vrsqrt.pop %v3092
  %v3098 = vrsqrt.pop %v3093
  %v3099 = vrsqrt.pop %v3094
  %v3100 = vrsqrt.pop %v3095
  %v3101 = vrsqrt.pop %v3096
  %v3102 = vmul.f32 %v3062, %v3097
  %v3103 = vmul.f32 %v3063, %v3098
  %v3104 = vmul.f32 %v3064, %v3099
  %v3105 = vmul.f32 %v3065, %v3100
  %v3106 = vmul.f32 %v3066, %v3101
  %v3108 = vlaneseq
  %v3109 = vshrl.u32 %v3108, 7
  %v3110 = vsub.s32 0, %v3109
  %v3111 = vrot.slane %v3039, %v3110
  %v3113 = vmul.f32 %v3102, %v3111
  %v3114 = vmul.f32 %v3103, %v3111
  %v3115 = vmul.f32 %v3104, %v3111
  %v3116 = vmul.f32 %v3105, %v3111
  %v3117 = vmul.f32 %v3106, %v3111
  %v3119 = vlaneseq
  %v3120 = vshrl.u32 %v3119, 7
  %v3121 = vsub.s32 0, %v3120
  %v3122 = vrot.slane %v3041, %v3121
  %v3124 = vadd.f32 %v3113, %v3122
  %v3125 = vadd.f32 %v3114, %v3122
  %v3126 = vadd.f32 %v3115, %v3122
  %v3127 = vadd.f32 %v3116, %v3122
  %v3128 = vadd.f32 %v3117, %v3122
  %s3129 = scalar_lea.vmem %s1, 288
  %v3130 = vld [vmem:[%s3129] sm:$0xff]
  %v3131 = vld [vmem:[%s3129 + $0x8] sm:$0xff]
  %v3132 = vld [vmem:[%s3129 + $0x10] sm:$0xff]
  %v3133 = vld [vmem:[%s3129 + $0x18] sm:$0xff]
  %v3134 = vld [vmem:[%s3129 + $0x20] sm:$0xff]
  %v3135 = vld [vmem:[%s3129 + $0x28] sm:$0xff]
  %v3136 = vld [vmem:[%s3129 + $0x30] sm:$0xff]
  %v3137 = vld [vmem:[%s3129 + $0x38] sm:$0xff]
  %v3138 = vld [vmem:[%s3129 + $0x40] sm:$0xff]
  %v3139 = vld [vmem:[%s3129 + $0x48] sm:$0xff]
  %v3140 = vld [vmem:[%s3129 + $0x50] sm:$0xff]
  %v3141 = vld [vmem:[%s3129 + $0x58] sm:$0xff]
  %v3142 = vld [vmem:[%s3129 + $0x60] sm:$0xf]
  %v3143 = vld [vmem:[%s3129 + $0x68] sm:$0xf]
  %v3144 = vld [vmem:[%s3129 + $0x70] sm:$0xf]
  %v3145 = vld [vmem:[%s3129 + $0x78] sm:$0xf]
  %v3146 = vld [vmem:[%s3129 + $0x80] sm:$0xf]
  %v3147 = vld [vmem:[%s3129 + $0x88] sm:$0xf]
  %s3148 = scalar_lea.vmem %s2, 12
  %v3149 = vld [vmem:[%s3148] sm:$0x3f]
  %v3151 = vlaneseq
  %v3152 = vshrl.u32 %v3151, 7
  %v3153 = vsub.s32 0, %v3152
  %v3154 = vrot.slane %v3149, %v3153
  %v3155 = vlaneseq
  %v3156 = vshrl.u32 %v3155, 7
  %v3157 = vsub.s32 1, %v3156
  %v3158 = vrot.slane %v3149, %v3157
  %v3159 = vlaneseq
  %v3160 = vshrl.u32 %v3159, 7
  %v3161 = vsub.s32 2, %v3160
  %v3162 = vrot.slane %v3149, %v3161
  %v3163 = vlaneseq
  %v3164 = vshrl.u32 %v3163, 7
  %v3165 = vsub.s32 3, %v3164
  %v3166 = vrot.slane %v3149, %v3165
  %v3167 = vlaneseq
  %v3168 = vshrl.u32 %v3167, 7
  %v3169 = vsub.s32 4, %v3168
  %v3170 = vrot.slane %v3149, %v3169
  %v3171 = vlaneseq
  %v3172 = vshrl.u32 %v3171, 7
  %v3173 = vsub.s32 5, %v3172
  %v3174 = vrot.slane %v3149, %v3173
  %v3182 = vsel %vm146, %v3124, 0
  %v3185 = vsel %vm146, %v3125, 0
  %v3188 = vsel %vm146, %v3126, 0
  %v3191 = vsel %vm146, %v3127, 0
  %v3194 = vsel %vm146, %v3128, 0
  %v3197 = vsel %vm162, %v3142, 0
  %v3200 = vsel %vm162, %v3143, 0
  %v3203 = vsel %vm162, %v3144, 0
  %v3206 = vsel %vm162, %v3145, 0
  %v3209 = vsel %vm162, %v3146, 0
  %v3212 = vsel %vm162, %v3147, 0
  %3214 = vmatprep.subr.mxu0 %v3131
  %3215 = vmatpush1.msra.mxu0 %v3130
  %3216 = vmatprep.subr.mxu0 %v3137
  %3217 = vmatpush1.msra.mxu0 %v3136
  %3218 = vmatprep.subr.mxu0 %v3200
  %3219 = vmatpush1.msra.mxu0 %v3197
  %3220 = vmatprep.subr.mxu0 0.0
  %3221 = vmatpush1.msra.mxu0 0.0
  %3222 = vmatprep.subr.mxu0 0.0
  %3223 = vmatpush1.msra.mxu0 0.0
  %3224 = vmatprep.subr.mxu0 0.0
  %3225 = vmatpush1.msra.mxu0 0.0
  %3226 = vmatprep.subr.mxu0 0.0
  %3227 = vmatpush1.msra.mxu0 0.0
  %3228 = vmatprep.subr.mxu0 0.0
  %3229 = vmatpush1.msra.mxu0 0.0
  %3230 = vmatprep.subr.mxu0 0.0
  %3231 = vmatpush1.msra.mxu0 0.0
  %3232 = vmatprep.subr.mxu0 0.0
  %3233 = vmatpush1.msra.mxu0 0.0
  %3234 = vmatprep.subr.mxu0 0.0
  %3235 = vmatpush1.msra.mxu0 0.0
  %3236 = vmatprep.subr.mxu0 0.0
  %3237 = vmatpush1.msra.mxu0 0.0
  %3238 = vmatprep.subr.mxu0 0.0
  %3239 = vmatpush1.msra.mxu0 0.0
  %3240 = vmatprep.subr.mxu0 0.0
  %3241 = vmatpush1.msra.mxu0 0.0
  %3242 = vmatprep.subr.mxu0 0.0
  %3243 = vmatpush1.msra.mxu0 0.0
  %3244 = vmatprep.subr.mxu0 0.0
  %3245 = vmatpush1.msra.mxu0 0.0
  %3246 = vmatprep.subr.mxu0 0.0
  %3247 = vmatpush1.msra.mxu0 0.0
  %3248 = vmatprep.subr.mxu0 0.0
  %3249 = vmatpush1.msra.mxu0 0.0
  %3250 = vmatprep.subr.mxu0 0.0
  %3251 = vmatpush1.msra.mxu0 0.0
  %3252 = vmatprep.subr.mxu0 0.0
  %3253 = vmatpush1.msra.mxu0 0.0
  %3254 = vmatprep.subr.mxu0 0.0
  %3255 = vmatpush1.msra.mxu0 0.0
  %3256 = vmatprep.subr.mxu0 0.0
  %3257 = vmatpush1.msra.mxu0 0.0
  %3258 = vmatprep.subr.mxu0 0.0
  %3259 = vmatpush1.msra.mxu0 0.0
  %3260 = vmatprep.subr.mxu0 0.0
  %3261 = vmatpush1.msra.mxu0 0.0
  %3262 = vmatprep.subr.mxu0 0.0
  %3263 = vmatpush1.msra.mxu0 0.0
  %3264 = vmatprep.subr.mxu0 0.0
  %3265 = vmatpush1.msra.mxu0 0.0
  %3266 = vmatprep.subr.mxu0 0.0
  %3267 = vmatpush1.msra.mxu0 0.0
  %3268 = vmatprep.subr.mxu0 0.0
  %3269 = vmatpush1.msra.mxu0 0.0
  %3270 = vmatprep.subr.mxu0 0.0
  %3271 = vmatpush1.msra.mxu0 0.0
  %3272 = vmatprep.subr.mxu0 0.0
  %3273 = vmatpush1.msra.mxu0 0.0
  %3274 = vmatprep.subr.mxu0 0.0
  %3275 = vmatpush1.msra.mxu0 0.0
  %3276 = vmatprep.subr.mxu0 0.0
  %3277 = vmatpush1.msra.mxu0 0.0
  %3278 = vmatprep.mubr.f32.mxu0 0.0
  %3279 = vmatmul.mubr.f32.gmra.mrb[0].mxu0 %v3182
  %v3280 = vpop.f32.mrb[0].mxu0
  %v3281 = vadd.f32 %v3154, %v3280
  %v3282 = vpop.f32.mrb[0].mxu0
  %v3283 = vadd.f32 %v3158, %v3282
  %3284 = vmatprep.mubr.f32.mxu0 0.0
  %3285 = vmatmul.mubr.f32.gmra.mrb[0].mxu0 %v3185
  %v3286 = vpop.f32.mrb[0].mxu0
  %v3287 = vadd.f32 %v3154, %v3286
  %v3288 = vpop.f32.mrb[0].mxu0
  %v3289 = vadd.f32 %v3158, %v3288
  %3290 = vmatprep.mubr.f32.mxu0 0.0
  %3291 = vmatmul.mubr.f32.gmra.mrb[0].mxu0 %v3188
  %v3292 = vpop.f32.mrb[0].mxu0
  %v3293 = vadd.f32 %v3154, %v3292
  %v3294 = vpop.f32.mrb[0].mxu0
  %v3295 = vadd.f32 %v3158, %v3294
  %3296 = vmatprep.mubr.f32.mxu0 0.0
  %3297 = vmatmul.mubr.f32.gmra.mrb[0].mxu0 %v3191
  %v3298 = vpop.f32.mrb[0].mxu0
  %v3299 = vadd.f32 %v3154, %v3298
  %v3300 = vpop.f32.mrb[0].mxu0
  %v3301 = vadd.f32 %v3158, %v3300
  %3302 = vmatprep.mubr.f32.mxu0 0.0
  %3303 = vmatmul.mubr.f32.gmra.mrb[0].mxu0 %v3194
  %v3304 = vpop.f32.mrb[0].mxu0
  %v3305 = vadd.f32 %v3154, %v3304
  %v3306 = vpop.f32.mrb[0].mxu0
  %v3307 = vadd.f32 %v3158, %v3306
  %3308 = vdwg.mxu0
  %3309 = vmatprep.subr.mxu0 %v3133
  %3310 = vmatpush1.msra.mxu0 %v3132
  %3311 = vmatprep.subr.mxu0 %v3139
  %3312 = vmatpush1.msra.mxu0 %v3138
  %3313 = vmatprep.subr.mxu0 %v3206
  %3314 = vmatpush1.msra.mxu0 %v3203
  %3315 = vmatprep.subr.mxu0 0.0
  %3316 = vmatpush1.msra.mxu0 0.0
  %3317 = vmatprep.subr.mxu0 0.0
  %3318 = vmatpush1.msra.mxu0 0.0
  %3319 = vmatprep.subr.mxu0 0.0
  %3320 = vmatpush1.msra.mxu0 0.0
  %3321 = vmatprep.subr.mxu0 0.0
  %3322 = vmatpush1.msra.mxu0 0.0
  %3323 = vmatprep.subr.mxu0 0.0
  %3324 = vmatpush1.msra.mxu0 0.0
  %3325 = vmatprep.subr.mxu0 0.0
  %3326 = vmatpush1.msra.mxu0 0.0
  %3327 = vmatprep.subr.mxu0 0.0
  %3328 = vmatpush1.msra.mxu0 0.0
  %3329 = vmatprep.subr.mxu0 0.0
  %3330 = vmatpush1.msra.mxu0 0.0
  %3331 = vmatprep.subr.mxu0 0.0
  %3332 = vmatpush1.msra.mxu0 0.0
  %3333 = vmatprep.subr.mxu0 0.0
  %3334 = vmatpush1.msra.mxu0 0.0
  %3335 = vmatprep.subr.mxu0 0.0
  %3336 = vmatpush1.msra.mxu0 0.0
  %3337 = vmatprep.subr.mxu0 0.0
  %3338 = vmatpush1.msra.mxu0 0.0
  %3339 = vmatprep.subr.mxu0 0.0
  %3340 = vmatpush1.msra.mxu0 0.0
  %3341 = vmatprep.subr.mxu0 0.0
  %3342 = vmatpush1.msra.mxu0 0.0
  %3343 = vmatprep.subr.mxu0 0.0
  %3344 = vmatpush1.msra.mxu0 0.0
  %3345 = vmatprep.subr.mxu0 0.0
  %3346 = vmatpush1.msra.mxu0 0.0
  %3347 = vmatprep.subr.mxu0 0.0
  %3348 = vmatpush1.msra.mxu0 0.0
  %3349 = vmatprep.subr.mxu0 0.0
  %3350 = vmatpush1.msra.mxu0 0.0
  %3351 = vmatprep.subr.mxu0 0.0
  %3352 = vmatpush1.msra.mxu0 0.0
  %3353 = vmatprep.subr.mxu0 0.0
  %3354 = vmatpush1.msra.mxu0 0.0
  %3355 = vmatprep.subr.mxu0 0.0
  %3356 = vmatpush1.msra.mxu0 0.0
  %3357 = vmatprep.subr.mxu0 0.0
  %3358 = vmatpush1.msra.mxu0 0.0
  %3359 = vmatprep.subr.mxu0 0.0
  %3360 = vmatpush1.msra.mxu0 0.0
  %3361 = vmatprep.subr.mxu0 0.0
  %3362 = vmatpush1.msra.mxu0 0.0
  %3363 = vmatprep.subr.mxu0 0.0
  %3364 = vmatpush1.msra.mxu0 0.0
  %3365 = vmatprep.subr.mxu0 0.0
  %3366 = vmatpush1.msra.mxu0 0.0
  %3367 = vmatprep.subr.mxu0 0.0
  %3368 = vmatpush1.msra.mxu0 0.0
  %3369 = vmatprep.subr.mxu0 0.0
  %3370 = vmatpush1.msra.mxu0 0.0
  %3371 = vmatprep.subr.mxu0 0.0
  %3372 = vmatpush1.msra.mxu0 0.0
  %3373 = vmatprep.mubr.f32.mxu0 0.0
  %3374 = vmatmul.mubr.f32.gmra.mrb[0].mxu0 %v3182
  %v3375 = vpop.f32.mrb[0].mxu0
  %v3376 = vadd.f32 %v3162, %v3375
  %v3377 = vpop.f32.mrb[0].mxu0
  %v3378 = vadd.f32 %v3166, %v3377
  %3379 = vmatprep.mubr.f32.mxu0 0.0
  %3380 = vmatmul.mubr.f32.gmra.mrb[0].mxu0 %v3185
  %v3381 = vpop.f32.mrb[0].mxu0
  %v3382 = vadd.f32 %v3162, %v3381
  %v3383 = vpop.f32.mrb[0].mxu0
  %v3384 = vadd.f32 %v3166, %v3383
  %3385 = vmatprep.mubr.f32.mxu0 0.0
  %3386 = vmatmul.mubr.f32.gmra.mrb[0].mxu0 %v3188
  %v3387 = vpop.f32.mrb[0].mxu0
  %v3388 = vadd.f32 %v3162, %v3387
  %v3389 = vpop.f32.mrb[0].mxu0
  %v3390 = vadd.f32 %v3166, %v3389
  %3391 = vmatprep.mubr.f32.mxu0 0.0
  %3392 = vmatmul.mubr.f32.gmra.mrb[0].mxu0 %v3191
  %v3393 = vpop.f32.mrb[0].mxu0
  %v3394 = vadd.f32 %v3162, %v3393
  %v3395 = vpop.f32.mrb[0].mxu0
  %v3396 = vadd.f32 %v3166, %v3395
  %3397 = vmatprep.mubr.f32.mxu0 0.0
  %3398 = vmatmul.mubr.f32.gmra.mrb[0].mxu0 %v3194
  %v3399 = vpop.f32.mrb[0].mxu0
  %v3400 = vadd.f32 %v3162, %v3399
  %v3401 = vpop.f32.mrb[0].mxu0
  %v3402 = vadd.f32 %v3166, %v3401
  %3403 = vdwg.mxu0
  %3404 = vmatprep.subr.mxu0 %v3135
  %3405 = vmatpush1.msra.mxu0 %v3134
  %3406 = vmatprep.subr.mxu0 %v3141
  %3407 = vmatpush1.msra.mxu0 %v3140
  %3408 = vmatprep.subr.mxu0 %v3212
  %3409 = vmatpush1.msra.mxu0 %v3209
  %3410 = vmatprep.subr.mxu0 0.0
  %3411 = vmatpush1.msra.mxu0 0.0
  %3412 = vmatprep.subr.mxu0 0.0
  %3413 = vmatpush1.msra.mxu0 0.0
  %3414 = vmatprep.subr.mxu0 0.0
  %3415 = vmatpush1.msra.mxu0 0.0
  %3416 = vmatprep.subr.mxu0 0.0
  %3417 = vmatpush1.msra.mxu0 0.0
  %3418 = vmatprep.subr.mxu0 0.0
  %3419 = vmatpush1.msra.mxu0 0.0
  %3420 = vmatprep.subr.mxu0 0.0
  %3421 = vmatpush1.msra.mxu0 0.0
  %3422 = vmatprep.subr.mxu0 0.0
  %3423 = vmatpush1.msra.mxu0 0.0
  %3424 = vmatprep.subr.mxu0 0.0
  %3425 = vmatpush1.msra.mxu0 0.0
  %3426 = vmatprep.subr.mxu0 0.0
  %3427 = vmatpush1.msra.mxu0 0.0
  %3428 = vmatprep.subr.mxu0 0.0
  %3429 = vmatpush1.msra.mxu0 0.0
  %3430 = vmatprep.subr.mxu0 0.0
  %3431 = vmatpush1.msra.mxu0 0.0
  %3432 = vmatprep.subr.mxu0 0.0
  %3433 = vmatpush1.msra.mxu0 0.0
  %3434 = vmatprep.subr.mxu0 0.0
  %3435 = vmatpush1.msra.mxu0 0.0
  %3436 = vmatprep.subr.mxu0 0.0
  %3437 = vmatpush1.msra.mxu0 0.0
  %3438 = vmatprep.subr.mxu0 0.0
  %3439 = vmatpush1.msra.mxu0 0.0
  %3440 = vmatprep.subr.mxu0 0.0
  %3441 = vmatpush1.msra.mxu0 0.0
  %3442 = vmatprep.subr.mxu0 0.0
  %3443 = vmatpush1.msra.mxu0 0.0
  %3444 = vmatprep.subr.mxu0 0.0
  %3445 = vmatpush1.msra.mxu0 0.0
  %3446 = vmatprep.subr.mxu0 0.0
  %3447 = vmatpush1.msra.mxu0 0.0
  %3448 = vmatprep.subr.mxu0 0.0
  %3449 = vmatpush1.msra.mxu0 0.0
  %3450 = vmatprep.subr.mxu0 0.0
  %3451 = vmatpush1.msra.mxu0 0.0
  %3452 = vmatprep.subr.mxu0 0.0
  %3453 = vmatpush1.msra.mxu0 0.0
  %3454 = vmatprep.subr.mxu0 0.0
  %3455 = vmatpush1.msra.mxu0 0.0
  %3456 = vmatprep.subr.mxu0 0.0
  %3457 = vmatpush1.msra.mxu0 0.0
  %3458 = vmatprep.subr.mxu0 0.0
  %3459 = vmatpush1.msra.mxu0 0.0
  %3460 = vmatprep.subr.mxu0 0.0
  %3461 = vmatpush1.msra.mxu0 0.0
  %3462 = vmatprep.subr.mxu0 0.0
  %3463 = vmatpush1.msra.mxu0 0.0
  %3464 = vmatprep.subr.mxu0 0.0
  %3465 = vmatpush1.msra.mxu0 0.0
  %3466 = vmatprep.subr.mxu0 0.0
  %3467 = vmatpush1.msra.mxu0 0.0
  %3468 = vmatprep.mubr.f32.mxu0 0.0
  %3469 = vmatmul.mubr.f32.gmra.mrb[0].mxu0 %v3182
  %v3470 = vpop.f32.mrb[0].mxu0
  %v3471 = vadd.f32 %v3170, %v3470
  %v3472 = vpop.f32.mrb[0].mxu0
  %v3473 = vadd.f32 %v3174, %v3472
  %3474 = vmatprep.mubr.f32.mxu0 0.0
  %3475 = vmatmul.mubr.f32.gmra.mrb[0].mxu0 %v3185
  %v3476 = vpop.f32.mrb[0].mxu0
  %v3477 = vadd.f32 %v3170, %v3476
  %v3478 = vpop.f32.mrb[0].mxu0
  %v3479 = vadd.f32 %v3174, %v3478
  %3480 = vmatprep.mubr.f32.mxu0 0.0
  %3481 = vmatmul.mubr.f32.gmra.mrb[0].mxu0 %v3188
  %v3482 = vpop.f32.mrb[0].mxu0
  %v3483 = vadd.f32 %v3170, %v3482
  %v3484 = vpop.f32.mrb[0].mxu0
  %v3485 = vadd.f32 %v3174, %v3484
  %3486 = vmatprep.mubr.f32.mxu0 0.0
  %3487 = vmatmul.mubr.f32.gmra.mrb[0].mxu0 %v3191
  %v3488 = vpop.f32.mrb[0].mxu0
  %v3489 = vadd.f32 %v3170, %v3488
  %v3490 = vpop.f32.mrb[0].mxu0
  %v3491 = vadd.f32 %v3174, %v3490
  %3492 = vmatprep.mubr.f32.mxu0 0.0
  %3493 = vmatmul.mubr.f32.gmra.mrb[0].mxu0 %v3194
  %v3494 = vpop.f32.mrb[0].mxu0
  %v3495 = vadd.f32 %v3170, %v3494
  %v3496 = vpop.f32.mrb[0].mxu0
  %v3497 = vadd.f32 %v3174, %v3496
  %3498 = vdwg.mxu0
  %3499 = vst [vmem:[#allocation2] sm:$0xff] %v3281
  %3500 = vst [vmem:[#allocation2 + $0x8] sm:$0xff] %v3283
  %3501 = vst [vmem:[#allocation2 + $0x10] sm:$0xff] %v3376
  %3502 = vst [vmem:[#allocation2 + $0x18] sm:$0xff] %v3378
  %3503 = vst [vmem:[#allocation2 + $0x20] sm:$0xff] %v3471
  %3504 = vst [vmem:[#allocation2 + $0x28] sm:$0xff] %v3473
  %3505 = vst [vmem:[#allocation2 + $0x30] sm:$0xff] %v3287
  %3506 = vst [vmem:[#allocation2 + $0x38] sm:$0xff] %v3289
  %3507 = vst [vmem:[#allocation2 + $0x40] sm:$0xff] %v3382
  %3508 = vst [vmem:[#allocation2 + $0x48] sm:$0xff] %v3384
  %3509 = vst [vmem:[#allocation2 + $0x50] sm:$0xff] %v3477
  %3510 = vst [vmem:[#allocation2 + $0x58] sm:$0xff] %v3479
  %3511 = vst [vmem:[#allocation2 + $0x60] sm:$0xff] %v3293
  %3512 = vst [vmem:[#allocation2 + $0x68] sm:$0xff] %v3295
  %3513 = vst [vmem:[#allocation2 + $0x70] sm:$0xff] %v3388
  %3514 = vst [vmem:[#allocation2 + $0x78] sm:$0xff] %v3390
  %3515 = vst [vmem:[#allocation2 + $0x80] sm:$0xff] %v3483
  %3516 = vst [vmem:[#allocation2 + $0x88] sm:$0xff] %v3485
  %3517 = vst [vmem:[#allocation2 + $0x90] sm:$0xff] %v3299
  %3518 = vst [vmem:[#allocation2 + $0x98] sm:$0xff] %v3301
  %3519 = vst [vmem:[#allocation2 + $0xa0] sm:$0xff] %v3394
  %3520 = vst [vmem:[#allocation2 + $0xa8] sm:$0xff] %v3396
  %3521 = vst [vmem:[#allocation2 + $0xb0] sm:$0xff] %v3489
  %3522 = vst [vmem:[#allocation2 + $0xb8] sm:$0xff] %v3491
  %3523 = vst [vmem:[#allocation2 + $0xc0] sm:$0xff] %v3305
  %3524 = vst [vmem:[#allocation2 + $0xc8] sm:$0xff] %v3307
  %3525 = vst [vmem:[#allocation2 + $0xd0] sm:$0xff] %v3400
  %3526 = vst [vmem:[#allocation2 + $0xd8] sm:$0xff] %v3402
  %3527 = vst [vmem:[#allocation2 + $0xe0] sm:$0xff] %v3495
  %3528 = vst [vmem:[#allocation2 + $0xe8] sm:$0xff] %v3497
  %v3529 = vld [vmem:[#allocation2] sm:$0xff]
  %v3530 = vld [vmem:[#allocation2 + $0x30] sm:$0xff]
  %v3531 = vld [vmem:[#allocation2 + $0x60] sm:$0xff]
  %v3532 = vld [vmem:[#allocation2 + $0x90] sm:$0xff]
  %v3533 = vld [vmem:[#allocation2 + $0xc0] sm:$0xff]
  %v3534 = vld [vmem:[#allocation2 + $0x10] sm:$0xff]
  %v3535 = vld [vmem:[#allocation2 + $0x40] sm:$0xff]
  %v3536 = vld [vmem:[#allocation2 + $0x70] sm:$0xff]
  %v3537 = vld [vmem:[#allocation2 + $0xa0] sm:$0xff]
  %v3538 = vld [vmem:[#allocation2 + $0xd0] sm:$0xff]
  %v3539 = vld [vmem:[#allocation2 + $0x20] sm:$0xff]
  %v3540 = vld [vmem:[#allocation2 + $0x50] sm:$0xff]
  %v3541 = vld [vmem:[#allocation2 + $0x80] sm:$0xff]
  %v3542 = vld [vmem:[#allocation2 + $0xb0] sm:$0xff]
  %v3543 = vld [vmem:[#allocation2 + $0xe0] sm:$0xff]
  %3544 = vmatprep.subr.mxu0 0.0
  %3545 = vmatpush1.xpose.msra.mxu0 %v3534
  %3546 = vmatprep.subr.mxu0 0.0
  %3547 = vmatpush1.xpose.msra.mxu0 %v3535
  %3548 = vmatprep.subr.mxu0 0.0
  %3549 = vmatpush1.xpose.msra.mxu0 %v3536
  %3550 = vmatprep.subr.mxu0 0.0
  %3551 = vmatpush1.xpose.msra.mxu0 %v3537
  %3552 = vmatprep.subr.mxu0 0.0
  %3553 = vmatpush1.xpose.msra.mxu0 %v3538
  %3554 = vmatprep.subr.mxu0 0.0
  %3555 = vmatpush1.xpose.msra.mxu0 0.0
  %3556 = vmatprep.subr.mxu0 0.0
  %3557 = vmatpush1.xpose.msra.mxu0 0.0
  %3558 = vmatprep.subr.mxu0 0.0
  %3559 = vmatpush1.xpose.msra.mxu0 0.0
  %3560 = vmatprep.subr.mxu0 0.0
  %3561 = vmatpush1.xpose.msra.mxu0 0.0
  %3562 = vmatprep.subr.mxu0 0.0
  %3563 = vmatpush1.xpose.msra.mxu0 0.0
  %3564 = vmatprep.subr.mxu0 0.0
  %3565 = vmatpush1.xpose.msra.mxu0 0.0
  %3566 = vmatprep.subr.mxu0 0.0
  %3567 = vmatpush1.xpose.msra.mxu0 0.0
  %3568 = vmatprep.subr.mxu0 0.0
  %3569 = vmatpush1.xpose.msra.mxu0 0.0
  %3570 = vmatprep.subr.mxu0 0.0
  %3571 = vmatpush1.xpose.msra.mxu0 0.0
  %3572 = vmatprep.subr.mxu0 0.0
  %3573 = vmatpush1.xpose.msra.mxu0 0.0
  %3574 = vmatprep.subr.mxu0 0.0
  %3575 = vmatpush1.xpose.msra.mxu0 0.0
  %3576 = vmatprep.subr.mxu0 0.0
  %3577 = vmatpush1.xpose.msra.mxu0 0.0
  %3578 = vmatprep.subr.mxu0 0.0
  %3579 = vmatpush1.xpose.msra.mxu0 0.0
  %3580 = vmatprep.subr.mxu0 0.0
  %3581 = vmatpush1.xpose.msra.mxu0 0.0
  %3582 = vmatprep.subr.mxu0 0.0
  %3583 = vmatpush1.xpose.msra.mxu0 0.0
  %3584 = vmatprep.subr.mxu0 0.0
  %3585 = vmatpush1.xpose.msra.mxu0 0.0
  %3586 = vmatprep.subr.mxu0 0.0
  %3587 = vmatpush1.xpose.msra.mxu0 0.0
  %3588 = vmatprep.subr.mxu0 0.0
  %3589 = vmatpush1.xpose.msra.mxu0 0.0
  %3590 = vmatprep.subr.mxu0 0.0
  %3591 = vmatpush1.xpose.msra.mxu0 0.0
  %3592 = vmatprep.subr.mxu0 0.0
  %3593 = vmatpush1.xpose.msra.mxu0 0.0
  %3594 = vmatprep.subr.mxu0 0.0
  %3595 = vmatpush1.xpose.msra.mxu0 0.0
  %3596 = vmatprep.subr.mxu0 0.0
  %3597 = vmatpush1.xpose.msra.mxu0 0.0
  %3598 = vmatprep.subr.mxu0 0.0
  %3599 = vmatpush1.xpose.msra.mxu0 0.0
  %3600 = vmatprep.subr.mxu0 0.0
  %3601 = vmatpush1.xpose.msra.mxu0 0.0
  %3602 = vmatprep.subr.mxu0 0.0
  %3603 = vmatpush1.xpose.msra.mxu0 0.0
  %3604 = vmatprep.subr.mxu0 0.0
  %3605 = vmatpush1.xpose.msra.mxu0 0.0
  %3606 = vmatprep.subr.mxu0 0.0
  %3607 = vmatpush1.xpose.msra.mxu0 0.0
  %3608 = vmatprep.mubr.f32.mxu0 0.0
  %3609 = vmatmul.mubr.f32.gmra.mrb[0].mxu0 %v3529
  %v3610 = vpop.f32.mrb[0].mxu0
  %v3611 = vadd.f32 %v91, %v3610
  %v3612 = vpop.f32.mrb[0].mxu0
  %3613 = vmatprep.mubr.f32.mxu0 0.0
  %3614 = vmatmul.mubr.f32.gmra.mrb[0].mxu0 %v3530
  %v3615 = vpop.f32.mrb[0].mxu0
  %v3616 = vadd.f32 %v92, %v3615
  %v3617 = vpop.f32.mrb[0].mxu0
  %3618 = vmatprep.mubr.f32.mxu0 0.0
  %3619 = vmatmul.mubr.f32.gmra.mrb[0].mxu0 %v3531
  %v3620 = vpop.f32.mrb[0].mxu0
  %v3621 = vadd.f32 %v93, %v3620
  %v3622 = vpop.f32.mrb[0].mxu0
  %3623 = vmatprep.mubr.f32.mxu0 0.0
  %3624 = vmatmul.mubr.f32.gmra.mrb[0].mxu0 %v3532
  %v3625 = vpop.f32.mrb[0].mxu0
  %v3626 = vadd.f32 %v94, %v3625
  %v3627 = vpop.f32.mrb[0].mxu0
  %3628 = vmatprep.mubr.f32.mxu0 0.0
  %3629 = vmatmul.mubr.f32.gmra.mrb[0].mxu0 %v3533
  %v3630 = vpop.f32.mrb[0].mxu0
  %v3631 = vadd.f32 %v95, %v3630
  %v3632 = vpop.f32.mrb[0].mxu0
  %3633 = vdwg.mxu0
  %v3634 = vsel %vm601, %v3611, -inf
  %3635 = vmax.xlane.f32.xlu0 %v3634
  %v3636 = vpop.xlane.xlu0 %3635
  %v3637 = vsel %vm601, %v3616, -inf
  %3638 = vmax.xlane.f32.xlu0 %v3637
  %v3639 = vpop.xlane.xlu0 %3638
  %v3640 = vsel %vm601, %v3621, -inf
  %3641 = vmax.xlane.f32.xlu0 %v3640
  %v3642 = vpop.xlane.xlu0 %3641
  %v3643 = vsel %vm601, %v3626, -inf
  %3644 = vmax.xlane.f32.xlu0 %v3643
  %v3645 = vpop.xlane.xlu0 %3644
  %v3646 = vsel %vm601, %v3631, -inf
  %3647 = vmax.xlane.f32.xlu0 %v3646
  %v3648 = vpop.xlane.xlu0 %3647
  %v3649 = vsub.f32 %v3611, %v3636
  %v3650 = vsub.f32 %v3616, %v3639
  %v3651 = vsub.f32 %v3621, %v3642
  %v3652 = vsub.f32 %v3626, %v3645
  %v3653 = vsub.f32 %v3631, %v3648
  %v3654 = vmul.f32 %v3649, 1.442695
  %v3655 = vpow.pop %v3654
  %v3656 = vmul.f32 %v3650, 1.442695
  %v3657 = vpow.pop %v3656
  %v3658 = vmul.f32 %v3651, 1.442695
  %v3659 = vpow.pop %v3658
  %v3660 = vmul.f32 %v3652, 1.442695
  %v3661 = vpow.pop %v3660
  %v3662 = vmul.f32 %v3653, 1.442695
  %v3663 = vpow.pop %v3662
  %v3664 = vsel %vm601, %v3655, 0.0
  %3665 = vadd.xlane.f32.xlu0 %v3664
  %v3666 = vpop.xlane.xlu0 %3665
  %v3667 = vsel %vm601, %v3657, 0.0
  %3668 = vadd.xlane.f32.xlu0 %v3667
  %v3669 = vpop.xlane.xlu0 %3668
  %v3670 = vsel %vm601, %v3659, 0.0
  %3671 = vadd.xlane.f32.xlu0 %v3670
  %v3672 = vpop.xlane.xlu0 %3671
  %v3673 = vsel %vm601, %v3661, 0.0
  %3674 = vadd.xlane.f32.xlu0 %v3673
  %v3675 = vpop.xlane.xlu0 %3674
  %v3676 = vsel %vm601, %v3663, 0.0
  %3677 = vadd.xlane.f32.xlu0 %v3676
  %v3678 = vpop.xlane.xlu0 %3677
  %v3679 = vrcp.pop %v3666
  %v3680 = vrcp.pop %v3669
  %v3681 = vrcp.pop %v3672
  %v3682 = vrcp.pop %v3675
  %v3683 = vrcp.pop %v3678
  %v3684 = vmul.f32 %v3655, %v3679
  %v3685 = vmul.f32 %v3657, %v3680
  %v3686 = vmul.f32 %v3659, %v3681
  %v3687 = vmul.f32 %v3661, %v3682
  %v3688 = vmul.f32 %v3663, %v3683
  %v3690 = vsel %vm601, %v3684, 0
  %v3693 = vsel %vm601, %v3685, 0
  %v3696 = vsel %vm601, %v3686, 0
  %v3699 = vsel %vm601, %v3687, 0
  %v3702 = vsel %vm601, %v3688, 0
  %3704 = vmatprep.subr.mxu0 0.0
  %3705 = vmatpush1.msra.mxu0 %v3539
  %3706 = vmatprep.subr.mxu0 0.0
  %3707 = vmatpush1.msra.mxu0 %v3540
  %3708 = vmatprep.subr.mxu0 0.0
  %3709 = vmatpush1.msra.mxu0 %v3541
  %3710 = vmatprep.subr.mxu0 0.0
  %3711 = vmatpush1.msra.mxu0 %v3542
  %3712 = vmatprep.subr.mxu0 0.0
  %3713 = vmatpush1.msra.mxu0 %v3543
  %3714 = vmatprep.subr.mxu0 0.0
  %3715 = vmatpush1.msra.mxu0 0.0
  %3716 = vmatprep.subr.mxu0 0.0
  %3717 = vmatpush1.msra.mxu0 0.0
  %3718 = vmatprep.subr.mxu0 0.0
  %3719 = vmatpush1.msra.mxu0 0.0
  %3720 = vmatprep.subr.mxu0 0.0
  %3721 = vmatpush1.msra.mxu0 0.0
  %3722 = vmatprep.subr.mxu0 0.0
  %3723 = vmatpush1.msra.mxu0 0.0
  %3724 = vmatprep.subr.mxu0 0.0
  %3725 = vmatpush1.msra.mxu0 0.0
  %3726 = vmatprep.subr.mxu0 0.0
  %3727 = vmatpush1.msra.mxu0 0.0
  %3728 = vmatprep.subr.mxu0 0.0
  %3729 = vmatpush1.msra.mxu0 0.0
  %3730 = vmatprep.subr.mxu0 0.0
  %3731 = vmatpush1.msra.mxu0 0.0
  %3732 = vmatprep.subr.mxu0 0.0
  %3733 = vmatpush1.msra.mxu0 0.0
  %3734 = vmatprep.subr.mxu0 0.0
  %3735 = vmatpush1.msra.mxu0 0.0
  %3736 = vmatprep.subr.mxu0 0.0
  %3737 = vmatpush1.msra.mxu0 0.0
  %3738 = vmatprep.subr.mxu0 0.0
  %3739 = vmatpush1.msra.mxu0 0.0
  %3740 = vmatprep.subr.mxu0 0.0
  %3741 = vmatpush1.msra.mxu0 0.0
  %3742 = vmatprep.subr.mxu0 0.0
  %3743 = vmatpush1.msra.mxu0 0.0
  %3744 = vmatprep.subr.mxu0 0.0
  %3745 = vmatpush1.msra.mxu0 0.0
  %3746 = vmatprep.subr.mxu0 0.0
  %3747 = vmatpush1.msra.mxu0 0.0
  %3748 = vmatprep.subr.mxu0 0.0
  %3749 = vmatpush1.msra.mxu0 0.0
  %3750 = vmatprep.subr.mxu0 0.0
  %3751 = vmatpush1.msra.mxu0 0.0
  %3752 = vmatprep.subr.mxu0 0.0
  %3753 = vmatpush1.msra.mxu0 0.0
  %3754 = vmatprep.subr.mxu0 0.0
  %3755 = vmatpush1.msra.mxu0 0.0
  %3756 = vmatprep.subr.mxu0 0.0
  %3757 = vmatpush1.msra.mxu0 0.0
  %3758 = vmatprep.subr.mxu0 0.0
  %3759 = vmatpush1.msra.mxu0 0.0
  %3760 = vmatprep.subr.mxu0 0.0
  %3761 = vmatpush1.msra.mxu0 0.0
  %3762 = vmatprep.subr.mxu0 0.0
  %3763 = vmatpush1.msra.mxu0 0.0
  %3764 = vmatprep.subr.mxu0 0.0
  %3765 = vmatpush1.msra.mxu0 0.0
  %3766 = vmatprep.subr.mxu0 0.0
  %3767 = vmatpush1.msra.mxu0 0.0
  %3768 = vmatprep.mubr.f32.mxu0 0.0
  %3769 = vmatmul.mubr.f32.gmra.mrb[0].mxu0 %v3690
  %v3770 = vpop.f32.mrb[0].mxu0
  %v3771 = vadd.f32 0.0, %v3770
  %v3772 = vpop.f32.mrb[0].mxu0
  %3773 = vmatprep.mubr.f32.mxu0 0.0
  %3774 = vmatmul.mubr.f32.gmra.mrb[0].mxu0 %v3693
  %v3775 = vpop.f32.mrb[0].mxu0
  %v3776 = vadd.f32 0.0, %v3775
  %v3777 = vpop.f32.mrb[0].mxu0
  %3778 = vmatprep.mubr.f32.mxu0 0.0
  %3779 = vmatmul.mubr.f32.gmra.mrb[0].mxu0 %v3696
  %v3780 = vpop.f32.mrb[0].mxu0
  %v3781 = vadd.f32 0.0, %v3780
  %v3782 = vpop.f32.mrb[0].mxu0
  %3783 = vmatprep.mubr.f32.mxu0 0.0
  %3784 = vmatmul.mubr.f32.gmra.mrb[0].mxu0 %v3699
  %v3785 = vpop.f32.mrb[0].mxu0
  %v3786 = vadd.f32 0.0, %v3785
  %v3787 = vpop.f32.mrb[0].mxu0
  %3788 = vmatprep.mubr.f32.mxu0 0.0
  %3789 = vmatmul.mubr.f32.gmra.mrb[0].mxu0 %v3702
  %v3790 = vpop.f32.mrb[0].mxu0
  %v3791 = vadd.f32 0.0, %v3790
  %v3792 = vpop.f32.mrb[0].mxu0
  %3793 = vdwg.mxu0
  %3794 = vst [vmem:[#allocation3] sm:$0xff] %v3771
  %3795 = vst [vmem:[#allocation3 + $0x10] sm:$0xff] %v3776
  %3796 = vst [vmem:[#allocation3 + $0x20] sm:$0xff] %v3781
  %3797 = vst [vmem:[#allocation3 + $0x30] sm:$0xff] %v3786
  %3798 = vst [vmem:[#allocation3 + $0x40] sm:$0xff] %v3791
  %v3799 = vld [vmem:[#allocation2 + $0x8] sm:$0xff]
  %v3800 = vld [vmem:[#allocation2 + $0x38] sm:$0xff]
  %v3801 = vld [vmem:[#allocation2 + $0x68] sm:$0xff]
  %v3802 = vld [vmem:[#allocation2 + $0x98] sm:$0xff]
  %v3803 = vld [vmem:[#allocation2 + $0xc8] sm:$0xff]
  %v3804 = vld [vmem:[#allocation2 + $0x18] sm:$0xff]
  %v3805 = vld [vmem:[#allocation2 + $0x48] sm:$0xff]
  %v3806 = vld [vmem:[#allocation2 + $0x78] sm:$0xff]
  %v3807 = vld [vmem:[#allocation2 + $0xa8] sm:$0xff]
  %v3808 = vld [vmem:[#allocation2 + $0xd8] sm:$0xff]
  %v3809 = vld [vmem:[#allocation2 + $0x28] sm:$0xff]
  %v3810 = vld [vmem:[#allocation2 + $0x58] sm:$0xff]
  %v3811 = vld [vmem:[#allocation2 + $0x88] sm:$0xff]
  %v3812 = vld [vmem:[#allocation2 + $0xb8] sm:$0xff]
  %v3813 = vld [vmem:[#allocation2 + $0xe8] sm:$0xff]
  %3814 = vmatprep.subr.mxu0 0.0
  %3815 = vmatpush1.xpose.msra.mxu0 %v3804
  %3816 = vmatprep.subr.mxu0 0.0
  %3817 = vmatpush1.xpose.msra.mxu0 %v3805
  %3818 = vmatprep.subr.mxu0 0.0
  %3819 = vmatpush1.xpose.msra.mxu0 %v3806
  %3820 = vmatprep.subr.mxu0 0.0
  %3821 = vmatpush1.xpose.msra.mxu0 %v3807
  %3822 = vmatprep.subr.mxu0 0.0
  %3823 = vmatpush1.xpose.msra.mxu0 %v3808
  %3824 = vmatprep.subr.mxu0 0.0
  %3825 = vmatpush1.xpose.msra.mxu0 0.0
  %3826 = vmatprep.subr.mxu0 0.0
  %3827 = vmatpush1.xpose.msra.mxu0 0.0
  %3828 = vmatprep.subr.mxu0 0.0
  %3829 = vmatpush1.xpose.msra.mxu0 0.0
  %3830 = vmatprep.subr.mxu0 0.0
  %3831 = vmatpush1.xpose.msra.mxu0 0.0
  %3832 = vmatprep.subr.mxu0 0.0
  %3833 = vmatpush1.xpose.msra.mxu0 0.0
  %3834 = vmatprep.subr.mxu0 0.0
  %3835 = vmatpush1.xpose.msra.mxu0 0.0
  %3836 = vmatprep.subr.mxu0 0.0
  %3837 = vmatpush1.xpose.msra.mxu0 0.0
  %3838 = vmatprep.subr.mxu0 0.0
  %3839 = vmatpush1.xpose.msra.mxu0 0.0
  %3840 = vmatprep.subr.mxu0 0.0
  %3841 = vmatpush1.xpose.msra.mxu0 0.0
  %3842 = vmatprep.subr.mxu0 0.0
  %3843 = vmatpush1.xpose.msra.mxu0 0.0
  %3844 = vmatprep.subr.mxu0 0.0
  %3845 = vmatpush1.xpose.msra.mxu0 0.0
  %3846 = vmatprep.subr.mxu0 0.0
  %3847 = vmatpush1.xpose.msra.mxu0 0.0
  %3848 = vmatprep.subr.mxu0 0.0
  %3849 = vmatpush1.xpose.msra.mxu0 0.0
  %3850 = vmatprep.subr.mxu0 0.0
  %3851 = vmatpush1.xpose.msra.mxu0 0.0
  %3852 = vmatprep.subr.mxu0 0.0
  %3853 = vmatpush1.xpose.msra.mxu0 0.0
  %3854 = vmatprep.subr.mxu0 0.0
  %3855 = vmatpush1.xpose.msra.mxu0 0.0
  %3856 = vmatprep.subr.mxu0 0.0
  %3857 = vmatpush1.xpose.msra.mxu0 0.0
  %3858 = vmatprep.subr.mxu0 0.0
  %3859 = vmatpush1.xpose.msra.mxu0 0.0
  %3860 = vmatprep.subr.mxu0 0.0
  %3861 = vmatpush1.xpose.msra.mxu0 0.0
  %3862 = vmatprep.subr.mxu0 0.0
  %3863 = vmatpush1.xpose.msra.mxu0 0.0
  %3864 = vmatprep.subr.mxu0 0.0
  %3865 = vmatpush1.xpose.msra.mxu0 0.0
  %3866 = vmatprep.subr.mxu0 0.0
  %3867 = vmatpush1.xpose.msra.mxu0 0.0
  %3868 = vmatprep.subr.mxu0 0.0
  %3869 = vmatpush1.xpose.msra.mxu0 0.0
  %3870 = vmatprep.subr.mxu0 0.0
  %3871 = vmatpush1.xpose.msra.mxu0 0.0
  %3872 = vmatprep.subr.mxu0 0.0
  %3873 = vmatpush1.xpose.msra.mxu0 0.0
  %3874 = vmatprep.subr.mxu0 0.0
  %3875 = vmatpush1.xpose.msra.mxu0 0.0
  %3876 = vmatprep.subr.mxu0 0.0
  %3877 = vmatpush1.xpose.msra.mxu0 0.0
  %3878 = vmatprep.mubr.f32.mxu0 0.0
  %3879 = vmatmul.mubr.f32.gmra.mrb[0].mxu0 %v3799
  %v3880 = vpop.f32.mrb[0].mxu0
  %v3881 = vadd.f32 %v91, %v3880
  %v3882 = vpop.f32.mrb[0].mxu0
  %3883 = vmatprep.mubr.f32.mxu0 0.0
  %3884 = vmatmul.mubr.f32.gmra.mrb[0].mxu0 %v3800
  %v3885 = vpop.f32.mrb[0].mxu0
  %v3886 = vadd.f32 %v92, %v3885
  %v3887 = vpop.f32.mrb[0].mxu0
  %3888 = vmatprep.mubr.f32.mxu0 0.0
  %3889 = vmatmul.mubr.f32.gmra.mrb[0].mxu0 %v3801
  %v3890 = vpop.f32.mrb[0].mxu0
  %v3891 = vadd.f32 %v93, %v3890
  %v3892 = vpop.f32.mrb[0].mxu0
  %3893 = vmatprep.mubr.f32.mxu0 0.0
  %3894 = vmatmul.mubr.f32.gmra.mrb[0].mxu0 %v3802
  %v3895 = vpop.f32.mrb[0].mxu0
  %v3896 = vadd.f32 %v94, %v3895
  %v3897 = vpop.f32.mrb[0].mxu0
  %3898 = vmatprep.mubr.f32.mxu0 0.0
  %3899 = vmatmul.mubr.f32.gmra.mrb[0].mxu0 %v3803
  %v3900 = vpop.f32.mrb[0].mxu0
  %v3901 = vadd.f32 %v95, %v3900
  %v3902 = vpop.f32.mrb[0].mxu0
  %3903 = vdwg.mxu0
  %v3904 = vsel %vm601, %v3881, -inf
  %3905 = vmax.xlane.f32.xlu0 %v3904
  %v3906 = vpop.xlane.xlu0 %3905
  %v3907 = vsel %vm601, %v3886, -inf
  %3908 = vmax.xlane.f32.xlu0 %v3907
  %v3909 = vpop.xlane.xlu0 %3908
  %v3910 = vsel %vm601, %v3891, -inf
  %3911 = vmax.xlane.f32.xlu0 %v3910
  %v3912 = vpop.xlane.xlu0 %3911
  %v3913 = vsel %vm601, %v3896, -inf
  %3914 = vmax.xlane.f32.xlu0 %v3913
  %v3915 = vpop.xlane.xlu0 %3914
  %v3916 = vsel %vm601, %v3901, -inf
  %3917 = vmax.xlane.f32.xlu0 %v3916
  %v3918 = vpop.xlane.xlu0 %3917
  %v3919 = vsub.f32 %v3881, %v3906
  %v3920 = vsub.f32 %v3886, %v3909
  %v3921 = vsub.f32 %v3891, %v3912
  %v3922 = vsub.f32 %v3896, %v3915
  %v3923 = vsub.f32 %v3901, %v3918
  %v3924 = vmul.f32 %v3919, 1.442695
  %v3925 = vpow.pop %v3924
  %v3926 = vmul.f32 %v3920, 1.442695
  %v3927 = vpow.pop %v3926
  %v3928 = vmul.f32 %v3921, 1.442695
  %v3929 = vpow.pop %v3928
  %v3930 = vmul.f32 %v3922, 1.442695
  %v3931 = vpow.pop %v3930
  %v3932 = vmul.f32 %v3923, 1.442695
  %v3933 = vpow.pop %v3932
  %v3934 = vsel %vm601, %v3925, 0.0
  %3935 = vadd.xlane.f32.xlu0 %v3934
  %v3936 = vpop.xlane.xlu0 %3935
  %v3937 = vsel %vm601, %v3927, 0.0
  %3938 = vadd.xlane.f32.xlu0 %v3937
  %v3939 = vpop.xlane.xlu0 %3938
  %v3940 = vsel %vm601, %v3929, 0.0
  %3941 = vadd.xlane.f32.xlu0 %v3940
  %v3942 = vpop.xlane.xlu0 %3941
  %v3943 = vsel %vm601, %v3931, 0.0
  %3944 = vadd.xlane.f32.xlu0 %v3943
  %v3945 = vpop.xlane.xlu0 %3944
  %v3946 = vsel %vm601, %v3933, 0.0
  %3947 = vadd.xlane.f32.xlu0 %v3946
  %v3948 = vpop.xlane.xlu0 %3947
  %v3949 = vrcp.pop %v3936
  %v3950 = vrcp.pop %v3939
  %v3951 = vrcp.pop %v3942
  %v3952 = vrcp.pop %v3945
  %v3953 = vrcp.pop %v3948
  %v3954 = vmul.f32 %v3925, %v3949
  %v3955 = vmul.f32 %v3927, %v3950
  %v3956 = vmul.f32 %v3929, %v3951
  %v3957 = vmul.f32 %v3931, %v3952
  %v3958 = vmul.f32 %v3933, %v3953
  %v3960 = vsel %vm601, %v3954, 0
  %v3963 = vsel %vm601, %v3955, 0
  %v3966 = vsel %vm601, %v3956, 0
  %v3969 = vsel %vm601, %v3957, 0
  %v3972 = vsel %vm601, %v3958, 0
  %3974 = vmatprep.subr.mxu0 0.0
  %3975 = vmatpush1.msra.mxu0 %v3809
  %3976 = vmatprep.subr.mxu0 0.0
  %3977 = vmatpush1.msra.mxu0 %v3810
  %3978 = vmatprep.subr.mxu0 0.0
  %3979 = vmatpush1.msra.mxu0 %v3811
  %3980 = vmatprep.subr.mxu0 0.0
  %3981 = vmatpush1.msra.mxu0 %v3812
  %3982 = vmatprep.subr.mxu0 0.0
  %3983 = vmatpush1.msra.mxu0 %v3813
  %3984 = vmatprep.subr.mxu0 0.0
  %3985 = vmatpush1.msra.mxu0 0.0
  %3986 = vmatprep.subr.mxu0 0.0
  %3987 = vmatpush1.msra.mxu0 0.0
  %3988 = vmatprep.subr.mxu0 0.0
  %3989 = vmatpush1.msra.mxu0 0.0
  %3990 = vmatprep.subr.mxu0 0.0
  %3991 = vmatpush1.msra.mxu0 0.0
  %3992 = vmatprep.subr.mxu0 0.0
  %3993 = vmatpush1.msra.mxu0 0.0
  %3994 = vmatprep.subr.mxu0 0.0
  %3995 = vmatpush1.msra.mxu0 0.0
  %3996 = vmatprep.subr.mxu0 0.0
  %3997 = vmatpush1.msra.mxu0 0.0
  %3998 = vmatprep.subr.mxu0 0.0
  %3999 = vmatpush1.msra.mxu0 0.0
  %4000 = vmatprep.subr.mxu0 0.0
  %4001 = vmatpush1.msra.mxu0 0.0
  %4002 = vmatprep.subr.mxu0 0.0
  %4003 = vmatpush1.msra.mxu0 0.0
  %4004 = vmatprep.subr.mxu0 0.0
  %4005 = vmatpush1.msra.mxu0 0.0
  %4006 = vmatprep.subr.mxu0 0.0
  %4007 = vmatpush1.msra.mxu0 0.0
  %4008 = vmatprep.subr.mxu0 0.0
  %4009 = vmatpush1.msra.mxu0 0.0
  %4010 = vmatprep.subr.mxu0 0.0
  %4011 = vmatpush1.msra.mxu0 0.0
  %4012 = vmatprep.subr.mxu0 0.0
  %4013 = vmatpush1.msra.mxu0 0.0
  %4014 = vmatprep.subr.mxu0 0.0
  %4015 = vmatpush1.msra.mxu0 0.0
  %4016 = vmatprep.subr.mxu0 0.0
  %4017 = vmatpush1.msra.mxu0 0.0
  %4018 = vmatprep.subr.mxu0 0.0
  %4019 = vmatpush1.msra.mxu0 0.0
  %4020 = vmatprep.subr.mxu0 0.0
  %4021 = vmatpush1.msra.mxu0 0.0
  %4022 = vmatprep.subr.mxu0 0.0
  %4023 = vmatpush1.msra.mxu0 0.0
  %4024 = vmatprep.subr.mxu0 0.0
  %4025 = vmatpush1.msra.mxu0 0.0
  %4026 = vmatprep.subr.mxu0 0.0
  %4027 = vmatpush1.msra.mxu0 0.0
  %4028 = vmatprep.subr.mxu0 0.0
  %4029 = vmatpush1.msra.mxu0 0.0
  %4030 = vmatprep.subr.mxu0 0.0
  %4031 = vmatpush1.msra.mxu0 0.0
  %4032 = vmatprep.subr.mxu0 0.0
  %4033 = vmatpush1.msra.mxu0 0.0
  %4034 = vmatprep.subr.mxu0 0.0
  %4035 = vmatpush1.msra.mxu0 0.0
  %4036 = vmatprep.subr.mxu0 0.0
  %4037 = vmatpush1.msra.mxu0 0.0
  %4038 = vmatprep.mubr.f32.mxu0 0.0
  %4039 = vmatmul.mubr.f32.gmra.mrb[0].mxu0 %v3960
  %v4040 = vpop.f32.mrb[0].mxu0
  %v4041 = vadd.f32 0.0, %v4040
  %v4042 = vpop.f32.mrb[0].mxu0
  %4043 = vmatprep.mubr.f32.mxu0 0.0
  %4044 = vmatmul.mubr.f32.gmra.mrb[0].mxu0 %v3963
  %v4045 = vpop.f32.mrb[0].mxu0
  %v4046 = vadd.f32 0.0, %v4045
  %v4047 = vpop.f32.mrb[0].mxu0
  %4048 = vmatprep.mubr.f32.mxu0 0.0
  %4049 = vmatmul.mubr.f32.gmra.mrb[0].mxu0 %v3966
  %v4050 = vpop.f32.mrb[0].mxu0
  %v4051 = vadd.f32 0.0, %v4050
  %v4052 = vpop.f32.mrb[0].mxu0
  %4053 = vmatprep.mubr.f32.mxu0 0.0
  %4054 = vmatmul.mubr.f32.gmra.mrb[0].mxu0 %v3969
  %v4055 = vpop.f32.mrb[0].mxu0
  %v4056 = vadd.f32 0.0, %v4055
  %v4057 = vpop.f32.mrb[0].mxu0
  %4058 = vmatprep.mubr.f32.mxu0 0.0
  %4059 = vmatmul.mubr.f32.gmra.mrb[0].mxu0 %v3972
  %v4060 = vpop.f32.mrb[0].mxu0
  %v4061 = vadd.f32 0.0, %v4060
  %v4062 = vpop.f32.mrb[0].mxu0
  %4063 = vdwg.mxu0
  %4064 = vst [vmem:[#allocation3 + $0x8] sm:$0xff] %v4041
  %4065 = vst [vmem:[#allocation3 + $0x18] sm:$0xff] %v4046
  %4066 = vst [vmem:[#allocation3 + $0x28] sm:$0xff] %v4051
  %4067 = vst [vmem:[#allocation3 + $0x38] sm:$0xff] %v4056
  %4068 = vst [vmem:[#allocation3 + $0x48] sm:$0xff] %v4061
  %v4069 = vld [vmem:[#allocation3] sm:$0xff]
  %v4070 = vld [vmem:[#allocation3 + $0x8] sm:$0xff]
  %v4071 = vld [vmem:[#allocation3 + $0x10] sm:$0xff]
  %v4072 = vld [vmem:[#allocation3 + $0x18] sm:$0xff]
  %v4073 = vld [vmem:[#allocation3 + $0x20] sm:$0xff]
  %v4074 = vld [vmem:[#allocation3 + $0x28] sm:$0xff]
  %v4075 = vld [vmem:[#allocation3 + $0x30] sm:$0xff]
  %v4076 = vld [vmem:[#allocation3 + $0x38] sm:$0xff]
  %v4077 = vld [vmem:[#allocation3 + $0x40] sm:$0xff]
  %v4078 = vld [vmem:[#allocation3 + $0x48] sm:$0xff]
  %s4079 = scalar_lea.vmem %s3, 512
  %v4080 = vld [vmem:[%s4079] sm:$0xff]
  %v4081 = vld [vmem:[%s4079 + $0x8] sm:$0xff]
  %v4082 = vld [vmem:[%s4079 + $0x10] sm:$0xff]
  %v4083 = vld [vmem:[%s4079 + $0x18] sm:$0xff]
  %v4084 = vld [vmem:[%s4079 + $0x20] sm:$0xff]
  %v4085 = vld [vmem:[%s4079 + $0x28] sm:$0xff]
  %v4086 = vld [vmem:[%s4079 + $0x30] sm:$0xff]
  %v4087 = vld [vmem:[%s4079 + $0x38] sm:$0xff]
  %v4088 = vld [vmem:[%s4079 + $0x40] sm:$0xff]
  %v4089 = vld [vmem:[%s4079 + $0x48] sm:$0xff]
  %v4090 = vld [vmem:[%s4079 + $0x50] sm:$0xff]
  %v4091 = vld [vmem:[%s4079 + $0x58] sm:$0xff]
  %v4092 = vld [vmem:[%s4079 + $0x60] sm:$0xff]
  %v4093 = vld [vmem:[%s4079 + $0x68] sm:$0xff]
  %v4094 = vld [vmem:[%s4079 + $0x70] sm:$0xff]
  %v4095 = vld [vmem:[%s4079 + $0x78] sm:$0xff]
  %v4096 = vld [vmem:[%s4079 + $0x80] sm:$0xff]
  %v4097 = vld [vmem:[%s4079 + $0x88] sm:$0xff]
  %v4098 = vld [vmem:[%s4079 + $0x90] sm:$0xff]
  %v4099 = vld [vmem:[%s4079 + $0x98] sm:$0xff]
  %v4100 = vld [vmem:[%s4079 + $0xa0] sm:$0xff]
  %v4101 = vld [vmem:[%s4079 + $0xa8] sm:$0xff]
  %v4102 = vld [vmem:[%s4079 + $0xb0] sm:$0xff]
  %v4103 = vld [vmem:[%s4079 + $0xb8] sm:$0xff]
  %v4104 = vld [vmem:[%s4079 + $0xc0] sm:$0xff]
  %v4105 = vld [vmem:[%s4079 + $0xc8] sm:$0xff]
  %v4106 = vld [vmem:[%s4079 + $0xd0] sm:$0xff]
  %v4107 = vld [vmem:[%s4079 + $0xd8] sm:$0xff]
  %v4108 = vld [vmem:[%s4079 + $0xe0] sm:$0xff]
  %v4109 = vld [vmem:[%s4079 + $0xe8] sm:$0xff]
  %v4110 = vld [vmem:[%s4079 + $0xf0] sm:$0xff]
  %v4111 = vld [vmem:[%s4079 + $0xf8] sm:$0xff]
  %s4112 = scalar_lea.vmem %s4, 2
  %v4113 = vld [vmem:[%s4112] sm:$0x1]
  %v4115 = vlaneseq
  %v4116 = vshrl.u32 %v4115, 7
  %v4117 = vsub.s32 0, %v4116
  %v4118 = vrot.slane %v4113, %v4117
  %4120 = vmatprep.subr.mxu0 0.0
  %4121 = vmatpush1.msra.mxu0 %v4080
  %4122 = vmatprep.subr.mxu0 0.0
  %4123 = vmatpush1.msra.mxu0 %v4081
  %4124 = vmatprep.subr.mxu0 0.0
  %4125 = vmatpush1.msra.mxu0 %v4082
  %4126 = vmatprep.subr.mxu0 0.0
  %4127 = vmatpush1.msra.mxu0 %v4083
  %4128 = vmatprep.subr.mxu0 0.0
  %4129 = vmatpush1.msra.mxu0 %v4084
  %4130 = vmatprep.subr.mxu0 0.0
  %4131 = vmatpush1.msra.mxu0 %v4085
  %4132 = vmatprep.subr.mxu0 0.0
  %4133 = vmatpush1.msra.mxu0 %v4086
  %4134 = vmatprep.subr.mxu0 0.0
  %4135 = vmatpush1.msra.mxu0 %v4087
  %4136 = vmatprep.subr.mxu0 0.0
  %4137 = vmatpush1.msra.mxu0 %v4088
  %4138 = vmatprep.subr.mxu0 0.0
  %4139 = vmatpush1.msra.mxu0 %v4089
  %4140 = vmatprep.subr.mxu0 0.0
  %4141 = vmatpush1.msra.mxu0 %v4090
  %4142 = vmatprep.subr.mxu0 0.0
  %4143 = vmatpush1.msra.mxu0 %v4091
  %4144 = vmatprep.subr.mxu0 0.0
  %4145 = vmatpush1.msra.mxu0 %v4092
  %4146 = vmatprep.subr.mxu0 0.0
  %4147 = vmatpush1.msra.mxu0 %v4093
  %4148 = vmatprep.subr.mxu0 0.0
  %4149 = vmatpush1.msra.mxu0 %v4094
  %4150 = vmatprep.subr.mxu0 0.0
  %4151 = vmatpush1.msra.mxu0 %v4095
  %4152 = vmatprep.subr.mxu0 0.0
  %4153 = vmatpush1.msra.mxu0 %v4096
  %4154 = vmatprep.subr.mxu0 0.0
  %4155 = vmatpush1.msra.mxu0 %v4097
  %4156 = vmatprep.subr.mxu0 0.0
  %4157 = vmatpush1.msra.mxu0 %v4098
  %4158 = vmatprep.subr.mxu0 0.0
  %4159 = vmatpush1.msra.mxu0 %v4099
  %4160 = vmatprep.subr.mxu0 0.0
  %4161 = vmatpush1.msra.mxu0 %v4100
  %4162 = vmatprep.subr.mxu0 0.0
  %4163 = vmatpush1.msra.mxu0 %v4101
  %4164 = vmatprep.subr.mxu0 0.0
  %4165 = vmatpush1.msra.mxu0 %v4102
  %4166 = vmatprep.subr.mxu0 0.0
  %4167 = vmatpush1.msra.mxu0 %v4103
  %4168 = vmatprep.subr.mxu0 0.0
  %4169 = vmatpush1.msra.mxu0 %v4104
  %4170 = vmatprep.subr.mxu0 0.0
  %4171 = vmatpush1.msra.mxu0 %v4105
  %4172 = vmatprep.subr.mxu0 0.0
  %4173 = vmatpush1.msra.mxu0 %v4106
  %4174 = vmatprep.subr.mxu0 0.0
  %4175 = vmatpush1.msra.mxu0 %v4107
  %4176 = vmatprep.subr.mxu0 0.0
  %4177 = vmatpush1.msra.mxu0 %v4108
  %4178 = vmatprep.subr.mxu0 0.0
  %4179 = vmatpush1.msra.mxu0 %v4109
  %4180 = vmatprep.subr.mxu0 0.0
  %4181 = vmatpush1.msra.mxu0 %v4110
  %4182 = vmatprep.subr.mxu0 0.0
  %4183 = vmatpush1.msra.mxu0 %v4111
  %4184 = vmatprep.mubr.f32.mxu0 %v4070
  %4185 = vmatmul.mubr.f32.gmra.mrb[0].mxu0 %v4069
  %v4186 = vpop.f32.mrb[0].mxu0
  %v4187 = vadd.f32 %v4118, %v4186
  %v4188 = vpop.f32.mrb[0].mxu0
  %4189 = vmatprep.mubr.f32.mxu0 %v4072
  %4190 = vmatmul.mubr.f32.gmra.mrb[0].mxu0 %v4071
  %v4191 = vpop.f32.mrb[0].mxu0
  %v4192 = vadd.f32 %v4118, %v4191
  %v4193 = vpop.f32.mrb[0].mxu0
  %4194 = vmatprep.mubr.f32.mxu0 %v4074
  %4195 = vmatmul.mubr.f32.gmra.mrb[0].mxu0 %v4073
  %v4196 = vpop.f32.mrb[0].mxu0
  %v4197 = vadd.f32 %v4118, %v4196
  %v4198 = vpop.f32.mrb[0].mxu0
  %4199 = vmatprep.mubr.f32.mxu0 %v4076
  %4200 = vmatmul.mubr.f32.gmra.mrb[0].mxu0 %v4075
  %v4201 = vpop.f32.mrb[0].mxu0
  %v4202 = vadd.f32 %v4118, %v4201
  %v4203 = vpop.f32.mrb[0].mxu0
  %4204 = vmatprep.mubr.f32.mxu0 %v4078
  %4205 = vmatmul.mubr.f32.gmra.mrb[0].mxu0 %v4077
  %v4206 = vpop.f32.mrb[0].mxu0
  %v4207 = vadd.f32 %v4118, %v4206
  %v4208 = vpop.f32.mrb[0].mxu0
  %4209 = vdwg.mxu0
  %v4210 = vadd.f32 %v3124, %v4187
  %v4211 = vadd.f32 %v3125, %v4192
  %v4212 = vadd.f32 %v3126, %v4197
  %v4213 = vadd.f32 %v3127, %v4202
  %v4214 = vadd.f32 %v3128, %v4207
  %s4215 = scalar_lea.vmem %s9, 2
  %v4216 = vld [vmem:[%s4215] sm:$0x1]
  %s4217 = scalar_lea.vmem %s10, 2
  %v4218 = vld [vmem:[%s4217] sm:$0x1]
  %v4219 = vsel %vm146, %v4210, 0.0
  %4220 = vadd.xlane.f32.xlu0 %v4219
  %v4221 = vpop.xlane.xlu0 %4220
  %v4222 = vsel %vm146, %v4211, 0.0
  %4223 = vadd.xlane.f32.xlu0 %v4222
  %v4224 = vpop.xlane.xlu0 %4223
  %v4225 = vsel %vm146, %v4212, 0.0
  %4226 = vadd.xlane.f32.xlu0 %v4225
  %v4227 = vpop.xlane.xlu0 %4226
  %v4228 = vsel %vm146, %v4213, 0.0
  %4229 = vadd.xlane.f32.xlu0 %v4228
  %v4230 = vpop.xlane.xlu0 %4229
  %v4231 = vsel %vm146, %v4214, 0.0
  %4232 = vadd.xlane.f32.xlu0 %v4231
  %v4233 = vpop.xlane.xlu0 %4232
  %v4234 = vmul.f32 %v4221, %v1198
  %v4235 = vmul.f32 %v4224, %v1198
  %v4236 = vmul.f32 %v4227, %v1198
  %v4237 = vmul.f32 %v4230, %v1198
  %v4238 = vmul.f32 %v4233, %v1198
  %v4239 = vsub.f32 %v4210, %v4234
  %v4240 = vsub.f32 %v4211, %v4235
  %v4241 = vsub.f32 %v4212, %v4236
  %v4242 = vsub.f32 %v4213, %v4237
  %v4243 = vsub.f32 %v4214, %v4238
  %v4244 = vmul.f32 %v4239, %v4239
  %v4245 = vmul.f32 %v4240, %v4240
  %v4246 = vmul.f32 %v4241, %v4241
  %v4247 = vmul.f32 %v4242, %v4242
  %v4248 = vmul.f32 %v4243, %v4243
  %v4249 = vsel %vm146, %v4244, 0.0
  %4250 = vadd.xlane.f32.xlu0 %v4249
  %v4251 = vpop.xlane.xlu0 %4250
  %v4252 = vsel %vm146, %v4245, 0.0
  %4253 = vadd.xlane.f32.xlu0 %v4252
  %v4254 = vpop.xlane.xlu0 %4253
  %v4255 = vsel %vm146, %v4246, 0.0
  %4256 = vadd.xlane.f32.xlu0 %v4255
  %v4257 = vpop.xlane.xlu0 %4256
  %v4258 = vsel %vm146, %v4247, 0.0
  %4259 = vadd.xlane.f32.xlu0 %v4258
  %v4260 = vpop.xlane.xlu0 %4259
  %v4261 = vsel %vm146, %v4248, 0.0
  %4262 = vadd.xlane.f32.xlu0 %v4261
  %v4263 = vpop.xlane.xlu0 %4262
  %v4264 = vmul.f32 %v4251, %v1198
  %v4265 = vmul.f32 %v4254, %v1198
  %v4266 = vmul.f32 %v4257, %v1198
  %v4267 = vmul.f32 %v4260, %v1198
  %v4268 = vmul.f32 %v4263, %v1198
  %v4269 = vadd.f32 %v4264, 1e-05
  %v4270 = vadd.f32 %v4265, 1e-05
  %v4271 = vadd.f32 %v4266, 1e-05
  %v4272 = vadd.f32 %v4267, 1e-05
  %v4273 = vadd.f32 %v4268, 1e-05
  %v4274 = vrsqrt.pop %v4269
  %v4275 = vrsqrt.pop %v4270
  %v4276 = vrsqrt.pop %v4271
  %v4277 = vrsqrt.pop %v4272
  %v4278 = vrsqrt.pop %v4273
  %v4279 = vmul.f32 %v4239, %v4274
  %v4280 = vmul.f32 %v4240, %v4275
  %v4281 = vmul.f32 %v4241, %v4276
  %v4282 = vmul.f32 %v4242, %v4277
  %v4283 = vmul.f32 %v4243, %v4278
  %v4285 = vlaneseq
  %v4286 = vshrl.u32 %v4285, 7
  %v4287 = vsub.s32 0, %v4286
  %v4288 = vrot.slane %v4216, %v4287
  %v4290 = vmul.f32 %v4279, %v4288
  %v4291 = vmul.f32 %v4280, %v4288
  %v4292 = vmul.f32 %v4281, %v4288
  %v4293 = vmul.f32 %v4282, %v4288
  %v4294 = vmul.f32 %v4283, %v4288
  %v4296 = vlaneseq
  %v4297 = vshrl.u32 %v4296, 7
  %v4298 = vsub.s32 0, %v4297
  %v4299 = vrot.slane %v4218, %v4298
  %v4301 = vadd.f32 %v4290, %v4299
  %v4302 = vadd.f32 %v4291, %v4299
  %v4303 = vadd.f32 %v4292, %v4299
  %v4304 = vadd.f32 %v4293, %v4299
  %v4305 = vadd.f32 %v4294, %v4299
  %s4306 = scalar_lea.vmem %s5, 48
  %v4307 = vld [vmem:[%s4306] sm:$0xff]
  %v4308 = vld [vmem:[%s4306 + $0x8] sm:$0xff]
  %v4309 = vld [vmem:[%s4306 + $0x10] sm:$0xf]
  %s4310 = scalar_lea.vmem %s6, 2
  %v4311 = vld [vmem:[%s4310] sm:$0x1]
  %v4313 = vlaneseq
  %v4314 = vshrl.u32 %v4313, 7
  %v4315 = vsub.s32 0, %v4314
  %v4316 = vrot.slane %v4311, %v4315
  %v4319 = vsel %vm146, %v4301, 0
  %v4322 = vsel %vm146, %v4302, 0
  %v4325 = vsel %vm146, %v4303, 0
  %v4328 = vsel %vm146, %v4304, 0
  %v4331 = vsel %vm146, %v4305, 0
  %v4334 = vsel %vm162, %v4309, 0
  %4336 = vmatprep.subr.mxu0 0.0
  %4337 = vmatpush1.msra.mxu0 %v4307
  %4338 = vmatprep.subr.mxu0 0.0
  %4339 = vmatpush1.msra.mxu0 %v4308
  %4340 = vmatprep.subr.mxu0 0.0
  %4341 = vmatpush1.msra.mxu0 %v4334
  %4342 = vmatprep.subr.mxu0 0.0
  %4343 = vmatpush1.msra.mxu0 0.0
  %4344 = vmatprep.subr.mxu0 0.0
  %4345 = vmatpush1.msra.mxu0 0.0
  %4346 = vmatprep.subr.mxu0 0.0
  %4347 = vmatpush1.msra.mxu0 0.0
  %4348 = vmatprep.subr.mxu0 0.0
  %4349 = vmatpush1.msra.mxu0 0.0
  %4350 = vmatprep.subr.mxu0 0.0
  %4351 = vmatpush1.msra.mxu0 0.0
  %4352 = vmatprep.subr.mxu0 0.0
  %4353 = vmatpush1.msra.mxu0 0.0
  %4354 = vmatprep.subr.mxu0 0.0
  %4355 = vmatpush1.msra.mxu0 0.0
  %4356 = vmatprep.subr.mxu0 0.0
  %4357 = vmatpush1.msra.mxu0 0.0
  %4358 = vmatprep.subr.mxu0 0.0
  %4359 = vmatpush1.msra.mxu0 0.0
  %4360 = vmatprep.subr.mxu0 0.0
  %4361 = vmatpush1.msra.mxu0 0.0
  %4362 = vmatprep.subr.mxu0 0.0
  %4363 = vmatpush1.msra.mxu0 0.0
  %4364 = vmatprep.subr.mxu0 0.0
  %4365 = vmatpush1.msra.mxu0 0.0
  %4366 = vmatprep.subr.mxu0 0.0
  %4367 = vmatpush1.msra.mxu0 0.0
  %4368 = vmatprep.subr.mxu0 0.0
  %4369 = vmatpush1.msra.mxu0 0.0
  %4370 = vmatprep.subr.mxu0 0.0
  %4371 = vmatpush1.msra.mxu0 0.0
  %4372 = vmatprep.subr.mxu0 0.0
  %4373 = vmatpush1.msra.mxu0 0.0
  %4374 = vmatprep.subr.mxu0 0.0
  %4375 = vmatpush1.msra.mxu0 0.0
  %4376 = vmatprep.subr.mxu0 0.0
  %4377 = vmatpush1.msra.mxu0 0.0
  %4378 = vmatprep.subr.mxu0 0.0
  %4379 = vmatpush1.msra.mxu0 0.0
  %4380 = vmatprep.subr.mxu0 0.0
  %4381 = vmatpush1.msra.mxu0 0.0
  %4382 = vmatprep.subr.mxu0 0.0
  %4383 = vmatpush1.msra.mxu0 0.0
  %4384 = vmatprep.subr.mxu0 0.0
  %4385 = vmatpush1.msra.mxu0 0.0
  %4386 = vmatprep.subr.mxu0 0.0
  %4387 = vmatpush1.msra.mxu0 0.0
  %4388 = vmatprep.subr.mxu0 0.0
  %4389 = vmatpush1.msra.mxu0 0.0
  %4390 = vmatprep.subr.mxu0 0.0
  %4391 = vmatpush1.msra.mxu0 0.0
  %4392 = vmatprep.subr.mxu0 0.0
  %4393 = vmatpush1.msra.mxu0 0.0
  %4394 = vmatprep.subr.mxu0 0.0
  %4395 = vmatpush1.msra.mxu0 0.0
  %4396 = vmatprep.subr.mxu0 0.0
  %4397 = vmatpush1.msra.mxu0 0.0
  %4398 = vmatprep.subr.mxu0 0.0
  %4399 = vmatpush1.msra.mxu0 0.0
  %4400 = vmatprep.mubr.f32.mxu0 0.0
  %4401 = vmatmul.mubr.f32.gmra.mrb[0].mxu0 %v4319
  %v4402 = vpop.f32.mrb[0].mxu0
  %v4403 = vadd.f32 %v4316, %v4402
  %v4404 = vpop.f32.mrb[0].mxu0
  %4405 = vmatprep.mubr.f32.mxu0 0.0
  %4406 = vmatmul.mubr.f32.gmra.mrb[0].mxu0 %v4322
  %v4407 = vpop.f32.mrb[0].mxu0
  %v4408 = vadd.f32 %v4316, %v4407
  %v4409 = vpop.f32.mrb[0].mxu0
  %4410 = vmatprep.mubr.f32.mxu0 0.0
  %4411 = vmatmul.mubr.f32.gmra.mrb[0].mxu0 %v4325
  %v4412 = vpop.f32.mrb[0].mxu0
  %v4413 = vadd.f32 %v4316, %v4412
  %v4414 = vpop.f32.mrb[0].mxu0
  %4415 = vmatprep.mubr.f32.mxu0 0.0
  %4416 = vmatmul.mubr.f32.gmra.mrb[0].mxu0 %v4328
  %v4417 = vpop.f32.mrb[0].mxu0
  %v4418 = vadd.f32 %v4316, %v4417
  %v4419 = vpop.f32.mrb[0].mxu0
  %4420 = vmatprep.mubr.f32.mxu0 0.0
  %4421 = vmatmul.mubr.f32.gmra.mrb[0].mxu0 %v4331
  %v4422 = vpop.f32.mrb[0].mxu0
  %v4423 = vadd.f32 %v4316, %v4422
  %v4424 = vpop.f32.mrb[0].mxu0
  %4425 = vdwg.mxu0
  %v4426 = vmax.f32 %v4403, 0.0
  %v4427 = vmax.f32 %v4408, 0.0
  %v4428 = vmax.f32 %v4413, 0.0
  %v4429 = vmax.f32 %v4418, 0.0
  %v4430 = vmax.f32 %v4423, 0.0
  %s4431 = scalar_lea.vmem %s7, 128
  %v4432 = vld [vmem:[%s4431] sm:$0xff]
  %v4433 = vld [vmem:[%s4431 + $0x8] sm:$0xff]
  %v4434 = vld [vmem:[%s4431 + $0x10] sm:$0xff]
  %v4435 = vld [vmem:[%s4431 + $0x18] sm:$0xff]
  %v4436 = vld [vmem:[%s4431 + $0x20] sm:$0xff]
  %v4437 = vld [vmem:[%s4431 + $0x28] sm:$0xff]
  %v4438 = vld [vmem:[%s4431 + $0x30] sm:$0xff]
  %v4439 = vld [vmem:[%s4431 + $0x38] sm:$0xff]
  %s4440 = scalar_lea.vmem %s8, 2
  %v4441 = vld [vmem:[%s4440] sm:$0x1]
  %v4443 = vlaneseq
  %v4444 = vshrl.u32 %v4443, 7
  %v4445 = vsub.s32 0, %v4444
  %v4446 = vrot.slane %v4441, %v4445
  %v4449 = vsel %vm1409, %v4426, 0
  %v4452 = vsel %vm1409, %v4427, 0
  %v4455 = vsel %vm1409, %v4428, 0
  %v4458 = vsel %vm1409, %v4429, 0
  %v4461 = vsel %vm1409, %v4430, 0
  %4463 = vmatprep.subr.mxu0 0.0
  %4464 = vmatpush1.msra.mxu0 %v4432
  %4465 = vmatprep.subr.mxu0 0.0
  %4466 = vmatpush1.msra.mxu0 %v4433
  %4467 = vmatprep.subr.mxu0 0.0
  %4468 = vmatpush1.msra.mxu0 %v4434
  %4469 = vmatprep.subr.mxu0 0.0
  %4470 = vmatpush1.msra.mxu0 %v4435
  %4471 = vmatprep.subr.mxu0 0.0
  %4472 = vmatpush1.msra.mxu0 %v4436
  %4473 = vmatprep.subr.mxu0 0.0
  %4474 = vmatpush1.msra.mxu0 %v4437
  %4475 = vmatprep.subr.mxu0 0.0
  %4476 = vmatpush1.msra.mxu0 %v4438
  %4477 = vmatprep.subr.mxu0 0.0
  %4478 = vmatpush1.msra.mxu0 %v4439
  %4479 = vmatprep.subr.mxu0 0.0
  %4480 = vmatpush1.msra.mxu0 0.0
  %4481 = vmatprep.subr.mxu0 0.0
  %4482 = vmatpush1.msra.mxu0 0.0
  %4483 = vmatprep.subr.mxu0 0.0
  %4484 = vmatpush1.msra.mxu0 0.0
  %4485 = vmatprep.subr.mxu0 0.0
  %4486 = vmatpush1.msra.mxu0 0.0
  %4487 = vmatprep.subr.mxu0 0.0
  %4488 = vmatpush1.msra.mxu0 0.0
  %4489 = vmatprep.subr.mxu0 0.0
  %4490 = vmatpush1.msra.mxu0 0.0
  %4491 = vmatprep.subr.mxu0 0.0
  %4492 = vmatpush1.msra.mxu0 0.0
  %4493 = vmatprep.subr.mxu0 0.0
  %4494 = vmatpush1.msra.mxu0 0.0
  %4495 = vmatprep.subr.mxu0 0.0
  %4496 = vmatpush1.msra.mxu0 0.0
  %4497 = vmatprep.subr.mxu0 0.0
  %4498 = vmatpush1.msra.mxu0 0.0
  %4499 = vmatprep.subr.mxu0 0.0
  %4500 = vmatpush1.msra.mxu0 0.0
  %4501 = vmatprep.subr.mxu0 0.0
  %4502 = vmatpush1.msra.mxu0 0.0
  %4503 = vmatprep.subr.mxu0 0.0
  %4504 = vmatpush1.msra.mxu0 0.0
  %4505 = vmatprep.subr.mxu0 0.0
  %4506 = vmatpush1.msra.mxu0 0.0
  %4507 = vmatprep.subr.mxu0 0.0
  %4508 = vmatpush1.msra.mxu0 0.0
  %4509 = vmatprep.subr.mxu0 0.0
  %4510 = vmatpush1.msra.mxu0 0.0
  %4511 = vmatprep.subr.mxu0 0.0
  %4512 = vmatpush1.msra.mxu0 0.0
  %4513 = vmatprep.subr.mxu0 0.0
  %4514 = vmatpush1.msra.mxu0 0.0
  %4515 = vmatprep.subr.mxu0 0.0
  %4516 = vmatpush1.msra.mxu0 0.0
  %4517 = vmatprep.subr.mxu0 0.0
  %4518 = vmatpush1.msra.mxu0 0.0
  %4519 = vmatprep.subr.mxu0 0.0
  %4520 = vmatpush1.msra.mxu0 0.0
  %4521 = vmatprep.subr.mxu0 0.0
  %4522 = vmatpush1.msra.mxu0 0.0
  %4523 = vmatprep.subr.mxu0 0.0
  %4524 = vmatpush1.msra.mxu0 0.0
  %4525 = vmatprep.subr.mxu0 0.0
  %4526 = vmatpush1.msra.mxu0 0.0
  %4527 = vmatprep.mubr.f32.mxu0 0.0
  %4528 = vmatmul.mubr.f32.gmra.mrb[0].mxu0 %v4449
  %v4529 = vpop.f32.mrb[0].mxu0
  %v4530 = vadd.f32 %v4446, %v4529
  %v4531 = vpop.f32.mrb[0].mxu0
  %4532 = vmatprep.mubr.f32.mxu0 0.0
  %4533 = vmatmul.mubr.f32.gmra.mrb[0].mxu0 %v4452
  %v4534 = vpop.f32.mrb[0].mxu0
  %v4535 = vadd.f32 %v4446, %v4534
  %v4536 = vpop.f32.mrb[0].mxu0
  %4537 = vmatprep.mubr.f32.mxu0 0.0
  %4538 = vmatmul.mubr.f32.gmra.mrb[0].mxu0 %v4455
  %v4539 = vpop.f32.mrb[0].mxu0
  %v4540 = vadd.f32 %v4446, %v4539
  %v4541 = vpop.f32.mrb[0].mxu0
  %4542 = vmatprep.mubr.f32.mxu0 0.0
  %4543 = vmatmul.mubr.f32.gmra.mrb[0].mxu0 %v4458
  %v4544 = vpop.f32.mrb[0].mxu0
  %v4545 = vadd.f32 %v4446, %v4544
  %v4546 = vpop.f32.mrb[0].mxu0
  %4547 = vmatprep.mubr.f32.mxu0 0.0
  %4548 = vmatmul.mubr.f32.gmra.mrb[0].mxu0 %v4461
  %v4549 = vpop.f32.mrb[0].mxu0
  %v4550 = vadd.f32 %v4446, %v4549
  %v4551 = vpop.f32.mrb[0].mxu0
  %4552 = vdwg.mxu0
  %v4553 = vadd.f32 %v4301, %v4530
  %v4554 = vadd.f32 %v4302, %v4535
  %v4555 = vadd.f32 %v4303, %v4540
  %v4556 = vadd.f32 %v4304, %v4545
  %v4557 = vadd.f32 %v4305, %v4550
  %s4558 = scalar_lea.vmem %s11, 2
  %v4559 = vld [vmem:[%s4558] sm:$0x1]
  %s4560 = scalar_lea.vmem %s12, 2
  %v4561 = vld [vmem:[%s4560] sm:$0x1]
  %v4562 = vsel %vm146, %v4553, 0.0
  %4563 = vadd.xlane.f32.xlu0 %v4562
  %v4564 = vpop.xlane.xlu0 %4563
  %v4565 = vsel %vm146, %v4554, 0.0
  %4566 = vadd.xlane.f32.xlu0 %v4565
  %v4567 = vpop.xlane.xlu0 %4566
  %v4568 = vsel %vm146, %v4555, 0.0
  %4569 = vadd.xlane.f32.xlu0 %v4568
  %v4570 = vpop.xlane.xlu0 %4569
  %v4571 = vsel %vm146, %v4556, 0.0
  %4572 = vadd.xlane.f32.xlu0 %v4571
  %v4573 = vpop.xlane.xlu0 %4572
  %v4574 = vsel %vm146, %v4557, 0.0
  %4575 = vadd.xlane.f32.xlu0 %v4574
  %v4576 = vpop.xlane.xlu0 %4575
  %v4577 = vmul.f32 %v4564, %v1198
  %v4578 = vmul.f32 %v4567, %v1198
  %v4579 = vmul.f32 %v4570, %v1198
  %v4580 = vmul.f32 %v4573, %v1198
  %v4581 = vmul.f32 %v4576, %v1198
  %v4582 = vsub.f32 %v4553, %v4577
  %v4583 = vsub.f32 %v4554, %v4578
  %v4584 = vsub.f32 %v4555, %v4579
  %v4585 = vsub.f32 %v4556, %v4580
  %v4586 = vsub.f32 %v4557, %v4581
  %v4587 = vmul.f32 %v4582, %v4582
  %v4588 = vmul.f32 %v4583, %v4583
  %v4589 = vmul.f32 %v4584, %v4584
  %v4590 = vmul.f32 %v4585, %v4585
  %v4591 = vmul.f32 %v4586, %v4586
  %v4592 = vsel %vm146, %v4587, 0.0
  %4593 = vadd.xlane.f32.xlu0 %v4592
  %v4594 = vpop.xlane.xlu0 %4593
  %v4595 = vsel %vm146, %v4588, 0.0
  %4596 = vadd.xlane.f32.xlu0 %v4595
  %v4597 = vpop.xlane.xlu0 %4596
  %v4598 = vsel %vm146, %v4589, 0.0
  %4599 = vadd.xlane.f32.xlu0 %v4598
  %v4600 = vpop.xlane.xlu0 %4599
  %v4601 = vsel %vm146, %v4590, 0.0
  %4602 = vadd.xlane.f32.xlu0 %v4601
  %v4603 = vpop.xlane.xlu0 %4602
  %v4604 = vsel %vm146, %v4591, 0.0
  %4605 = vadd.xlane.f32.xlu0 %v4604
  %v4606 = vpop.xlane.xlu0 %4605
  %v4607 = vmul.f32 %v4594, %v1198
  %v4608 = vmul.f32 %v4597, %v1198
  %v4609 = vmul.f32 %v4600, %v1198
  %v4610 = vmul.f32 %v4603, %v1198
  %v4611 = vmul.f32 %v4606, %v1198
  %v4612 = vadd.f32 %v4607, 1e-05
  %v4613 = vadd.f32 %v4608, 1e-05
  %v4614 = vadd.f32 %v4609, 1e-05
  %v4615 = vadd.f32 %v4610, 1e-05
  %v4616 = vadd.f32 %v4611, 1e-05
  %v4617 = vrsqrt.pop %v4612
  %v4618 = vrsqrt.pop %v4613
  %v4619 = vrsqrt.pop %v4614
  %v4620 = vrsqrt.pop %v4615
  %v4621 = vrsqrt.pop %v4616
  %v4622 = vmul.f32 %v4582, %v4617
  %v4623 = vmul.f32 %v4583, %v4618
  %v4624 = vmul.f32 %v4584, %v4619
  %v4625 = vmul.f32 %v4585, %v4620
  %v4626 = vmul.f32 %v4586, %v4621
  %v4628 = vlaneseq
  %v4629 = vshrl.u32 %v4628, 7
  %v4630 = vsub.s32 0, %v4629
  %v4631 = vrot.slane %v4559, %v4630
  %v4633 = vmul.f32 %v4622, %v4631
  %v4634 = vmul.f32 %v4623, %v4631
  %v4635 = vmul.f32 %v4624, %v4631
  %v4636 = vmul.f32 %v4625, %v4631
  %v4637 = vmul.f32 %v4626, %v4631
  %v4639 = vlaneseq
  %v4640 = vshrl.u32 %v4639, 7
  %v4641 = vsub.s32 0, %v4640
  %v4642 = vrot.slane %v4561, %v4641
  %v4644 = vadd.f32 %v4633, %v4642
  %v4645 = vadd.f32 %v4634, %v4642
  %v4646 = vadd.f32 %v4635, %v4642
  %v4647 = vadd.f32 %v4636, %v4642
  %v4648 = vadd.f32 %v4637, %v4642
  %s4649 = scalar_lea.vmem %s1, 432
  %v4650 = vld [vmem:[%s4649] sm:$0xff]
  %v4651 = vld [vmem:[%s4649 + $0x8] sm:$0xff]
  %v4652 = vld [vmem:[%s4649 + $0x10] sm:$0xff]
  %v4653 = vld [vmem:[%s4649 + $0x18] sm:$0xff]
  %v4654 = vld [vmem:[%s4649 + $0x20] sm:$0xff]
  %v4655 = vld [vmem:[%s4649 + $0x28] sm:$0xff]
  %v4656 = vld [vmem:[%s4649 + $0x30] sm:$0xff]
  %v4657 = vld [vmem:[%s4649 + $0x38] sm:$0xff]
  %v4658 = vld [vmem:[%s4649 + $0x40] sm:$0xff]
  %v4659 = vld [vmem:[%s4649 + $0x48] sm:$0xff]
  %v4660 = vld [vmem:[%s4649 + $0x50] sm:$0xff]
  %v4661 = vld [vmem:[%s4649 + $0x58] sm:$0xff]
  %v4662 = vld [vmem:[%s4649 + $0x60] sm:$0xf]
  %v4663 = vld [vmem:[%s4649 + $0x68] sm:$0xf]
  %v4664 = vld [vmem:[%s4649 + $0x70] sm:$0xf]
  %v4665 = vld [vmem:[%s4649 + $0x78] sm:$0xf]
  %v4666 = vld [vmem:[%s4649 + $0x80] sm:$0xf]
  %v4667 = vld [vmem:[%s4649 + $0x88] sm:$0xf]
  %s4668 = scalar_lea.vmem %s2, 18
  %v4669 = vld [vmem:[%s4668] sm:$0x3f]
  %v4671 = vlaneseq
  %v4672 = vshrl.u32 %v4671, 7
  %v4673 = vsub.s32 0, %v4672
  %v4674 = vrot.slane %v4669, %v4673
  %v4675 = vlaneseq
  %v4676 = vshrl.u32 %v4675, 7
  %v4677 = vsub.s32 1, %v4676
  %v4678 = vrot.slane %v4669, %v4677
  %v4679 = vlaneseq
  %v4680 = vshrl.u32 %v4679, 7
  %v4681 = vsub.s32 2, %v4680
  %v4682 = vrot.slane %v4669, %v4681
  %v4683 = vlaneseq
  %v4684 = vshrl.u32 %v4683, 7
  %v4685 = vsub.s32 3, %v4684
  %v4686 = vrot.slane %v4669, %v4685
  %v4687 = vlaneseq
  %v4688 = vshrl.u32 %v4687, 7
  %v4689 = vsub.s32 4, %v4688
  %v4690 = vrot.slane %v4669, %v4689
  %v4691 = vlaneseq
  %v4692 = vshrl.u32 %v4691, 7
  %v4693 = vsub.s32 5, %v4692
  %v4694 = vrot.slane %v4669, %v4693
  %v4702 = vsel %vm146, %v4644, 0
  %v4705 = vsel %vm146, %v4645, 0
  %v4708 = vsel %vm146, %v4646, 0
  %v4711 = vsel %vm146, %v4647, 0
  %v4714 = vsel %vm146, %v4648, 0
  %v4717 = vsel %vm162, %v4662, 0
  %v4720 = vsel %vm162, %v4663, 0
  %v4723 = vsel %vm162, %v4664, 0
  %v4726 = vsel %vm162, %v4665, 0
  %v4729 = vsel %vm162, %v4666, 0
  %v4732 = vsel %vm162, %v4667, 0
  %4734 = vmatprep.subr.mxu0 %v4651
  %4735 = vmatpush1.msra.mxu0 %v4650
  %4736 = vmatprep.subr.mxu0 %v4657
  %4737 = vmatpush1.msra.mxu0 %v4656
  %4738 = vmatprep.subr.mxu0 %v4720
  %4739 = vmatpush1.msra.mxu0 %v4717
  %4740 = vmatprep.subr.mxu0 0.0
  %4741 = vmatpush1.msra.mxu0 0.0
  %4742 = vmatprep.subr.mxu0 0.0
  %4743 = vmatpush1.msra.mxu0 0.0
  %4744 = vmatprep.subr.mxu0 0.0
  %4745 = vmatpush1.msra.mxu0 0.0
  %4746 = vmatprep.subr.mxu0 0.0
  %4747 = vmatpush1.msra.mxu0 0.0
  %4748 = vmatprep.subr.mxu0 0.0
  %4749 = vmatpush1.msra.mxu0 0.0
  %4750 = vmatprep.subr.mxu0 0.0
  %4751 = vmatpush1.msra.mxu0 0.0
  %4752 = vmatprep.subr.mxu0 0.0
  %4753 = vmatpush1.msra.mxu0 0.0
  %4754 = vmatprep.subr.mxu0 0.0
  %4755 = vmatpush1.msra.mxu0 0.0
  %4756 = vmatprep.subr.mxu0 0.0
  %4757 = vmatpush1.msra.mxu0 0.0
  %4758 = vmatprep.subr.mxu0 0.0
  %4759 = vmatpush1.msra.mxu0 0.0
  %4760 = vmatprep.subr.mxu0 0.0
  %4761 = vmatpush1.msra.mxu0 0.0
  %4762 = vmatprep.subr.mxu0 0.0
  %4763 = vmatpush1.msra.mxu0 0.0
  %4764 = vmatprep.subr.mxu0 0.0
  %4765 = vmatpush1.msra.mxu0 0.0
  %4766 = vmatprep.subr.mxu0 0.0
  %4767 = vmatpush1.msra.mxu0 0.0
  %4768 = vmatprep.subr.mxu0 0.0
  %4769 = vmatpush1.msra.mxu0 0.0
  %4770 = vmatprep.subr.mxu0 0.0
  %4771 = vmatpush1.msra.mxu0 0.0
  %4772 = vmatprep.subr.mxu0 0.0
  %4773 = vmatpush1.msra.mxu0 0.0
  %4774 = vmatprep.subr.mxu0 0.0
  %4775 = vmatpush1.msra.mxu0 0.0
  %4776 = vmatprep.subr.mxu0 0.0
  %4777 = vmatpush1.msra.mxu0 0.0
  %4778 = vmatprep.subr.mxu0 0.0
  %4779 = vmatpush1.msra.mxu0 0.0
  %4780 = vmatprep.subr.mxu0 0.0
  %4781 = vmatpush1.msra.mxu0 0.0
  %4782 = vmatprep.subr.mxu0 0.0
  %4783 = vmatpush1.msra.mxu0 0.0
  %4784 = vmatprep.subr.mxu0 0.0
  %4785 = vmatpush1.msra.mxu0 0.0
  %4786 = vmatprep.subr.mxu0 0.0
  %4787 = vmatpush1.msra.mxu0 0.0
  %4788 = vmatprep.subr.mxu0 0.0
  %4789 = vmatpush1.msra.mxu0 0.0
  %4790 = vmatprep.subr.mxu0 0.0
  %4791 = vmatpush1.msra.mxu0 0.0
  %4792 = vmatprep.subr.mxu0 0.0
  %4793 = vmatpush1.msra.mxu0 0.0
  %4794 = vmatprep.subr.mxu0 0.0
  %4795 = vmatpush1.msra.mxu0 0.0
  %4796 = vmatprep.subr.mxu0 0.0
  %4797 = vmatpush1.msra.mxu0 0.0
  %4798 = vmatprep.mubr.f32.mxu0 0.0
  %4799 = vmatmul.mubr.f32.gmra.mrb[0].mxu0 %v4702
  %v4800 = vpop.f32.mrb[0].mxu0
  %v4801 = vadd.f32 %v4674, %v4800
  %v4802 = vpop.f32.mrb[0].mxu0
  %v4803 = vadd.f32 %v4678, %v4802
  %4804 = vmatprep.mubr.f32.mxu0 0.0
  %4805 = vmatmul.mubr.f32.gmra.mrb[0].mxu0 %v4705
  %v4806 = vpop.f32.mrb[0].mxu0
  %v4807 = vadd.f32 %v4674, %v4806
  %v4808 = vpop.f32.mrb[0].mxu0
  %v4809 = vadd.f32 %v4678, %v4808
  %4810 = vmatprep.mubr.f32.mxu0 0.0
  %4811 = vmatmul.mubr.f32.gmra.mrb[0].mxu0 %v4708
  %v4812 = vpop.f32.mrb[0].mxu0
  %v4813 = vadd.f32 %v4674, %v4812
  %v4814 = vpop.f32.mrb[0].mxu0
  %v4815 = vadd.f32 %v4678, %v4814
  %4816 = vmatprep.mubr.f32.mxu0 0.0
  %4817 = vmatmul.mubr.f32.gmra.mrb[0].mxu0 %v4711
  %v4818 = vpop.f32.mrb[0].mxu0
  %v4819 = vadd.f32 %v4674, %v4818
  %v4820 = vpop.f32.mrb[0].mxu0
  %v4821 = vadd.f32 %v4678, %v4820
  %4822 = vmatprep.mubr.f32.mxu0 0.0
  %4823 = vmatmul.mubr.f32.gmra.mrb[0].mxu0 %v4714
  %v4824 = vpop.f32.mrb[0].mxu0
  %v4825 = vadd.f32 %v4674, %v4824
  %v4826 = vpop.f32.mrb[0].mxu0
  %v4827 = vadd.f32 %v4678, %v4826
  %4828 = vdwg.mxu0
  %4829 = vmatprep.subr.mxu0 %v4653
  %4830 = vmatpush1.msra.mxu0 %v4652
  %4831 = vmatprep.subr.mxu0 %v4659
  %4832 = vmatpush1.msra.mxu0 %v4658
  %4833 = vmatprep.subr.mxu0 %v4726
  %4834 = vmatpush1.msra.mxu0 %v4723
  %4835 = vmatprep.subr.mxu0 0.0
  %4836 = vmatpush1.msra.mxu0 0.0
  %4837 = vmatprep.subr.mxu0 0.0
  %4838 = vmatpush1.msra.mxu0 0.0
  %4839 = vmatprep.subr.mxu0 0.0
  %4840 = vmatpush1.msra.mxu0 0.0
  %4841 = vmatprep.subr.mxu0 0.0
  %4842 = vmatpush1.msra.mxu0 0.0
  %4843 = vmatprep.subr.mxu0 0.0
  %4844 = vmatpush1.msra.mxu0 0.0
  %4845 = vmatprep.subr.mxu0 0.0
  %4846 = vmatpush1.msra.mxu0 0.0
  %4847 = vmatprep.subr.mxu0 0.0
  %4848 = vmatpush1.msra.mxu0 0.0
  %4849 = vmatprep.subr.mxu0 0.0
  %4850 = vmatpush1.msra.mxu0 0.0
  %4851 = vmatprep.subr.mxu0 0.0
  %4852 = vmatpush1.msra.mxu0 0.0
  %4853 = vmatprep.subr.mxu0 0.0
  %4854 = vmatpush1.msra.mxu0 0.0
  %4855 = vmatprep.subr.mxu0 0.0
  %4856 = vmatpush1.msra.mxu0 0.0
  %4857 = vmatprep.subr.mxu0 0.0
  %4858 = vmatpush1.msra.mxu0 0.0
  %4859 = vmatprep.subr.mxu0 0.0
  %4860 = vmatpush1.msra.mxu0 0.0
  %4861 = vmatprep.subr.mxu0 0.0
  %4862 = vmatpush1.msra.mxu0 0.0
  %4863 = vmatprep.subr.mxu0 0.0
  %4864 = vmatpush1.msra.mxu0 0.0
  %4865 = vmatprep.subr.mxu0 0.0
  %4866 = vmatpush1.msra.mxu0 0.0
  %4867 = vmatprep.subr.mxu0 0.0
  %4868 = vmatpush1.msra.mxu0 0.0
  %4869 = vmatprep.subr.mxu0 0.0
  %4870 = vmatpush1.msra.mxu0 0.0
  %4871 = vmatprep.subr.mxu0 0.0
  %4872 = vmatpush1.msra.mxu0 0.0
  %4873 = vmatprep.subr.mxu0 0.0
  %4874 = vmatpush1.msra.mxu0 0.0
  %4875 = vmatprep.subr.mxu0 0.0
  %4876 = vmatpush1.msra.mxu0 0.0
  %4877 = vmatprep.subr.mxu0 0.0
  %4878 = vmatpush1.msra.mxu0 0.0
  %4879 = vmatprep.subr.mxu0 0.0
  %4880 = vmatpush1.msra.mxu0 0.0
  %4881 = vmatprep.subr.mxu0 0.0
  %4882 = vmatpush1.msra.mxu0 0.0
  %4883 = vmatprep.subr.mxu0 0.0
  %4884 = vmatpush1.msra.mxu0 0.0
  %4885 = vmatprep.subr.mxu0 0.0
  %4886 = vmatpush1.msra.mxu0 0.0
  %4887 = vmatprep.subr.mxu0 0.0
  %4888 = vmatpush1.msra.mxu0 0.0
  %4889 = vmatprep.subr.mxu0 0.0
  %4890 = vmatpush1.msra.mxu0 0.0
  %4891 = vmatprep.subr.mxu0 0.0
  %4892 = vmatpush1.msra.mxu0 0.0
  %4893 = vmatprep.mubr.f32.mxu0 0.0
  %4894 = vmatmul.mubr.f32.gmra.mrb[0].mxu0 %v4702
  %v4895 = vpop.f32.mrb[0].mxu0
  %v4896 = vadd.f32 %v4682, %v4895
  %v4897 = vpop.f32.mrb[0].mxu0
  %v4898 = vadd.f32 %v4686, %v4897
  %4899 = vmatprep.mubr.f32.mxu0 0.0
  %4900 = vmatmul.mubr.f32.gmra.mrb[0].mxu0 %v4705
  %v4901 = vpop.f32.mrb[0].mxu0
  %v4902 = vadd.f32 %v4682, %v4901
  %v4903 = vpop.f32.mrb[0].mxu0
  %v4904 = vadd.f32 %v4686, %v4903
  %4905 = vmatprep.mubr.f32.mxu0 0.0
  %4906 = vmatmul.mubr.f32.gmra.mrb[0].mxu0 %v4708
  %v4907 = vpop.f32.mrb[0].mxu0
  %v4908 = vadd.f32 %v4682, %v4907
  %v4909 = vpop.f32.mrb[0].mxu0
  %v4910 = vadd.f32 %v4686, %v4909
  %4911 = vmatprep.mubr.f32.mxu0 0.0
  %4912 = vmatmul.mubr.f32.gmra.mrb[0].mxu0 %v4711
  %v4913 = vpop.f32.mrb[0].mxu0
  %v4914 = vadd.f32 %v4682, %v4913
  %v4915 = vpop.f32.mrb[0].mxu0
  %v4916 = vadd.f32 %v4686, %v4915
  %4917 = vmatprep.mubr.f32.mxu0 0.0
  %4918 = vmatmul.mubr.f32.gmra.mrb[0].mxu0 %v4714
  %v4919 = vpop.f32.mrb[0].mxu0
  %v4920 = vadd.f32 %v4682, %v4919
  %v4921 = vpop.f32.mrb[0].mxu0
  %v4922 = vadd.f32 %v4686, %v4921
  %4923 = vdwg.mxu0
  %4924 = vmatprep.subr.mxu0 %v4655
  %4925 = vmatpush1.msra.mxu0 %v4654
  %4926 = vmatprep.subr.mxu0 %v4661
  %4927 = vmatpush1.msra.mxu0 %v4660
  %4928 = vmatprep.subr.mxu0 %v4732
  %4929 = vmatpush1.msra.mxu0 %v4729
  %4930 = vmatprep.subr.mxu0 0.0
  %4931 = vmatpush1.msra.mxu0 0.0
  %4932 = vmatprep.subr.mxu0 0.0
  %4933 = vmatpush1.msra.mxu0 0.0
  %4934 = vmatprep.subr.mxu0 0.0
  %4935 = vmatpush1.msra.mxu0 0.0
  %4936 = vmatprep.subr.mxu0 0.0
  %4937 = vmatpush1.msra.mxu0 0.0
  %4938 = vmatprep.subr.mxu0 0.0
  %4939 = vmatpush1.msra.mxu0 0.0
  %4940 = vmatprep.subr.mxu0 0.0
  %4941 = vmatpush1.msra.mxu0 0.0
  %4942 = vmatprep.subr.mxu0 0.0
  %4943 = vmatpush1.msra.mxu0 0.0
  %4944 = vmatprep.subr.mxu0 0.0
  %4945 = vmatpush1.msra.mxu0 0.0
  %4946 = vmatprep.subr.mxu0 0.0
  %4947 = vmatpush1.msra.mxu0 0.0
  %4948 = vmatprep.subr.mxu0 0.0
  %4949 = vmatpush1.msra.mxu0 0.0
  %4950 = vmatprep.subr.mxu0 0.0
  %4951 = vmatpush1.msra.mxu0 0.0
  %4952 = vmatprep.subr.mxu0 0.0
  %4953 = vmatpush1.msra.mxu0 0.0
  %4954 = vmatprep.subr.mxu0 0.0
  %4955 = vmatpush1.msra.mxu0 0.0
  %4956 = vmatprep.subr.mxu0 0.0
  %4957 = vmatpush1.msra.mxu0 0.0
  %4958 = vmatprep.subr.mxu0 0.0
  %4959 = vmatpush1.msra.mxu0 0.0
  %4960 = vmatprep.subr.mxu0 0.0
  %4961 = vmatpush1.msra.mxu0 0.0
  %4962 = vmatprep.subr.mxu0 0.0
  %4963 = vmatpush1.msra.mxu0 0.0
  %4964 = vmatprep.subr.mxu0 0.0
  %4965 = vmatpush1.msra.mxu0 0.0
  %4966 = vmatprep.subr.mxu0 0.0
  %4967 = vmatpush1.msra.mxu0 0.0
  %4968 = vmatprep.subr.mxu0 0.0
  %4969 = vmatpush1.msra.mxu0 0.0
  %4970 = vmatprep.subr.mxu0 0.0
  %4971 = vmatpush1.msra.mxu0 0.0
  %4972 = vmatprep.subr.mxu0 0.0
  %4973 = vmatpush1.msra.mxu0 0.0
  %4974 = vmatprep.subr.mxu0 0.0
  %4975 = vmatpush1.msra.mxu0 0.0
  %4976 = vmatprep.subr.mxu0 0.0
  %4977 = vmatpush1.msra.mxu0 0.0
  %4978 = vmatprep.subr.mxu0 0.0
  %4979 = vmatpush1.msra.mxu0 0.0
  %4980 = vmatprep.subr.mxu0 0.0
  %4981 = vmatpush1.msra.mxu0 0.0
  %4982 = vmatprep.subr.mxu0 0.0
  %4983 = vmatpush1.msra.mxu0 0.0
  %4984 = vmatprep.subr.mxu0 0.0
  %4985 = vmatpush1.msra.mxu0 0.0
  %4986 = vmatprep.subr.mxu0 0.0
  %4987 = vmatpush1.msra.mxu0 0.0
  %4988 = vmatprep.mubr.f32.mxu0 0.0
  %4989 = vmatmul.mubr.f32.gmra.mrb[0].mxu0 %v4702
  %v4990 = vpop.f32.mrb[0].mxu0
  %v4991 = vadd.f32 %v4690, %v4990
  %v4992 = vpop.f32.mrb[0].mxu0
  %v4993 = vadd.f32 %v4694, %v4992
  %4994 = vmatprep.mubr.f32.mxu0 0.0
  %4995 = vmatmul.mubr.f32.gmra.mrb[0].mxu0 %v4705
  %v4996 = vpop.f32.mrb[0].mxu0
  %v4997 = vadd.f32 %v4690, %v4996
  %v4998 = vpop.f32.mrb[0].mxu0
  %v4999 = vadd.f32 %v4694, %v4998
  %5000 = vmatprep.mubr.f32.mxu0 0.0
  %5001 = vmatmul.mubr.f32.gmra.mrb[0].mxu0 %v4708
  %v5002 = vpop.f32.mrb[0].mxu0
  %v5003 = vadd.f32 %v4690, %v5002
  %v5004 = vpop.f32.mrb[0].mxu0
  %v5005 = vadd.f32 %v4694, %v5004
  %5006 = vmatprep.mubr.f32.mxu0 0.0
  %5007 = vmatmul.mubr.f32.gmra.mrb[0].mxu0 %v4711
  %v5008 = vpop.f32.mrb[0].mxu0
  %v5009 = vadd.f32 %v4690, %v5008
  %v5010 = vpop.f32.mrb[0].mxu0
  %v5011 = vadd.f32 %v4694, %v5010
  %5012 = vmatprep.mubr.f32.mxu0 0.0
  %5013 = vmatmul.mubr.f32.gmra.mrb[0].mxu0 %v4714
  %v5014 = vpop.f32.mrb[0].mxu0
  %v5015 = vadd.f32 %v4690, %v5014
  %v5016 = vpop.f32.mrb[0].mxu0
  %v5017 = vadd.f32 %v4694, %v5016
  %5018 = vdwg.mxu0
  %5019 = vst [vmem:[#allocation2] sm:$0xff] %v4801
  %5020 = vst [vmem:[#allocation2 + $0x8] sm:$0xff] %v4803
  %5021 = vst [vmem:[#allocation2 + $0x10] sm:$0xff] %v4896
  %5022 = vst [vmem:[#allocation2 + $0x18] sm:$0xff] %v4898
  %5023 = vst [vmem:[#allocation2 + $0x20] sm:$0xff] %v4991
  %5024 = vst [vmem:[#allocation2 + $0x28] sm:$0xff] %v4993
  %5025 = vst [vmem:[#allocation2 + $0x30] sm:$0xff] %v4807
  %5026 = vst [vmem:[#allocation2 + $0x38] sm:$0xff] %v4809
  %5027 = vst [vmem:[#allocation2 + $0x40] sm:$0xff] %v4902
  %5028 = vst [vmem:[#allocation2 + $0x48] sm:$0xff] %v4904
  %5029 = vst [vmem:[#allocation2 + $0x50] sm:$0xff] %v4997
  %5030 = vst [vmem:[#allocation2 + $0x58] sm:$0xff] %v4999
  %5031 = vst [vmem:[#allocation2 + $0x60] sm:$0xff] %v4813
  %5032 = vst [vmem:[#allocation2 + $0x68] sm:$0xff] %v4815
  %5033 = vst [vmem:[#allocation2 + $0x70] sm:$0xff] %v4908
  %5034 = vst [vmem:[#allocation2 + $0x78] sm:$0xff] %v4910
  %5035 = vst [vmem:[#allocation2 + $0x80] sm:$0xff] %v5003
  %5036 = vst [vmem:[#allocation2 + $0x88] sm:$0xff] %v5005
  %5037 = vst [vmem:[#allocation2 + $0x90] sm:$0xff] %v4819
  %5038 = vst [vmem:[#allocation2 + $0x98] sm:$0xff] %v4821
  %5039 = vst [vmem:[#allocation2 + $0xa0] sm:$0xff] %v4914
  %5040 = vst [vmem:[#allocation2 + $0xa8] sm:$0xff] %v4916
  %5041 = vst [vmem:[#allocation2 + $0xb0] sm:$0xff] %v5009
  %5042 = vst [vmem:[#allocation2 + $0xb8] sm:$0xff] %v5011
  %5043 = vst [vmem:[#allocation2 + $0xc0] sm:$0xff] %v4825
  %5044 = vst [vmem:[#allocation2 + $0xc8] sm:$0xff] %v4827
  %5045 = vst [vmem:[#allocation2 + $0xd0] sm:$0xff] %v4920
  %5046 = vst [vmem:[#allocation2 + $0xd8] sm:$0xff] %v4922
  %5047 = vst [vmem:[#allocation2 + $0xe0] sm:$0xff] %v5015
  %5048 = vst [vmem:[#allocation2 + $0xe8] sm:$0xff] %v5017
  %v5049 = vld [vmem:[#allocation2] sm:$0xff]
  %v5050 = vld [vmem:[#allocation2 + $0x30] sm:$0xff]
  %v5051 = vld [vmem:[#allocation2 + $0x60] sm:$0xff]
  %v5052 = vld [vmem:[#allocation2 + $0x90] sm:$0xff]
  %v5053 = vld [vmem:[#allocation2 + $0xc0] sm:$0xff]
  %v5054 = vld [vmem:[#allocation2 + $0x10] sm:$0xff]
  %v5055 = vld [vmem:[#allocation2 + $0x40] sm:$0xff]
  %v5056 = vld [vmem:[#allocation2 + $0x70] sm:$0xff]
  %v5057 = vld [vmem:[#allocation2 + $0xa0] sm:$0xff]
  %v5058 = vld [vmem:[#allocation2 + $0xd0] sm:$0xff]
  %v5059 = vld [vmem:[#allocation2 + $0x20] sm:$0xff]
  %v5060 = vld [vmem:[#allocation2 + $0x50] sm:$0xff]
  %v5061 = vld [vmem:[#allocation2 + $0x80] sm:$0xff]
  %v5062 = vld [vmem:[#allocation2 + $0xb0] sm:$0xff]
  %v5063 = vld [vmem:[#allocation2 + $0xe0] sm:$0xff]
  %5064 = vmatprep.subr.mxu0 0.0
  %5065 = vmatpush1.xpose.msra.mxu0 %v5054
  %5066 = vmatprep.subr.mxu0 0.0
  %5067 = vmatpush1.xpose.msra.mxu0 %v5055
  %5068 = vmatprep.subr.mxu0 0.0
  %5069 = vmatpush1.xpose.msra.mxu0 %v5056
  %5070 = vmatprep.subr.mxu0 0.0
  %5071 = vmatpush1.xpose.msra.mxu0 %v5057
  %5072 = vmatprep.subr.mxu0 0.0
  %5073 = vmatpush1.xpose.msra.mxu0 %v5058
  %5074 = vmatprep.subr.mxu0 0.0
  %5075 = vmatpush1.xpose.msra.mxu0 0.0
  %5076 = vmatprep.subr.mxu0 0.0
  %5077 = vmatpush1.xpose.msra.mxu0 0.0
  %5078 = vmatprep.subr.mxu0 0.0
  %5079 = vmatpush1.xpose.msra.mxu0 0.0
  %5080 = vmatprep.subr.mxu0 0.0
  %5081 = vmatpush1.xpose.msra.mxu0 0.0
  %5082 = vmatprep.subr.mxu0 0.0
  %5083 = vmatpush1.xpose.msra.mxu0 0.0
  %5084 = vmatprep.subr.mxu0 0.0
  %5085 = vmatpush1.xpose.msra.mxu0 0.0
  %5086 = vmatprep.subr.mxu0 0.0
  %5087 = vmatpush1.xpose.msra.mxu0 0.0
  %5088 = vmatprep.subr.mxu0 0.0
  %5089 = vmatpush1.xpose.msra.mxu0 0.0
  %5090 = vmatprep.subr.mxu0 0.0
  %5091 = vmatpush1.xpose.msra.mxu0 0.0
  %5092 = vmatprep.subr.mxu0 0.0
  %5093 = vmatpush1.xpose.msra.mxu0 0.0
  %5094 = vmatprep.subr.mxu0 0.0
  %5095 = vmatpush1.xpose.msra.mxu0 0.0
  %5096 = vmatprep.subr.mxu0 0.0
  %5097 = vmatpush1.xpose.msra.mxu0 0.0
  %5098 = vmatprep.subr.mxu0 0.0
  %5099 = vmatpush1.xpose.msra.mxu0 0.0
  %5100 = vmatprep.subr.mxu0 0.0
  %5101 = vmatpush1.xpose.msra.mxu0 0.0
  %5102 = vmatprep.subr.mxu0 0.0
  %5103 = vmatpush1.xpose.msra.mxu0 0.0
  %5104 = vmatprep.subr.mxu0 0.0
  %5105 = vmatpush1.xpose.msra.mxu0 0.0
  %5106 = vmatprep.subr.mxu0 0.0
  %5107 = vmatpush1.xpose.msra.mxu0 0.0
  %5108 = vmatprep.subr.mxu0 0.0
  %5109 = vmatpush1.xpose.msra.mxu0 0.0
  %5110 = vmatprep.subr.mxu0 0.0
  %5111 = vmatpush1.xpose.msra.mxu0 0.0
  %5112 = vmatprep.subr.mxu0 0.0
  %5113 = vmatpush1.xpose.msra.mxu0 0.0
  %5114 = vmatprep.subr.mxu0 0.0
  %5115 = vmatpush1.xpose.msra.mxu0 0.0
  %5116 = vmatprep.subr.mxu0 0.0
  %5117 = vmatpush1.xpose.msra.mxu0 0.0
  %5118 = vmatprep.subr.mxu0 0.0
  %5119 = vmatpush1.xpose.msra.mxu0 0.0
  %5120 = vmatprep.subr.mxu0 0.0
  %5121 = vmatpush1.xpose.msra.mxu0 0.0
  %5122 = vmatprep.subr.mxu0 0.0
  %5123 = vmatpush1.xpose.msra.mxu0 0.0
  %5124 = vmatprep.subr.mxu0 0.0
  %5125 = vmatpush1.xpose.msra.mxu0 0.0
  %5126 = vmatprep.subr.mxu0 0.0
  %5127 = vmatpush1.xpose.msra.mxu0 0.0
  %5128 = vmatprep.mubr.f32.mxu0 0.0
  %5129 = vmatmul.mubr.f32.gmra.mrb[0].mxu0 %v5049
  %v5130 = vpop.f32.mrb[0].mxu0
  %v5131 = vadd.f32 %v91, %v5130
  %v5132 = vpop.f32.mrb[0].mxu0
  %5133 = vmatprep.mubr.f32.mxu0 0.0
  %5134 = vmatmul.mubr.f32.gmra.mrb[0].mxu0 %v5050
  %v5135 = vpop.f32.mrb[0].mxu0
  %v5136 = vadd.f32 %v92, %v5135
  %v5137 = vpop.f32.mrb[0].mxu0
  %5138 = vmatprep.mubr.f32.mxu0 0.0
  %5139 = vmatmul.mubr.f32.gmra.mrb[0].mxu0 %v5051
  %v5140 = vpop.f32.mrb[0].mxu0
  %v5141 = vadd.f32 %v93, %v5140
  %v5142 = vpop.f32.mrb[0].mxu0
  %5143 = vmatprep.mubr.f32.mxu0 0.0
  %5144 = vmatmul.mubr.f32.gmra.mrb[0].mxu0 %v5052
  %v5145 = vpop.f32.mrb[0].mxu0
  %v5146 = vadd.f32 %v94, %v5145
  %v5147 = vpop.f32.mrb[0].mxu0
  %5148 = vmatprep.mubr.f32.mxu0 0.0
  %5149 = vmatmul.mubr.f32.gmra.mrb[0].mxu0 %v5053
  %v5150 = vpop.f32.mrb[0].mxu0
  %v5151 = vadd.f32 %v95, %v5150
  %v5152 = vpop.f32.mrb[0].mxu0
  %5153 = vdwg.mxu0
  %v5154 = vsel %vm601, %v5131, -inf
  %5155 = vmax.xlane.f32.xlu0 %v5154
  %v5156 = vpop.xlane.xlu0 %5155
  %v5157 = vsel %vm601, %v5136, -inf
  %5158 = vmax.xlane.f32.xlu0 %v5157
  %v5159 = vpop.xlane.xlu0 %5158
  %v5160 = vsel %vm601, %v5141, -inf
  %5161 = vmax.xlane.f32.xlu0 %v5160
  %v5162 = vpop.xlane.xlu0 %5161
  %v5163 = vsel %vm601, %v5146, -inf
  %5164 = vmax.xlane.f32.xlu0 %v5163
  %v5165 = vpop.xlane.xlu0 %5164
  %v5166 = vsel %vm601, %v5151, -inf
  %5167 = vmax.xlane.f32.xlu0 %v5166
  %v5168 = vpop.xlane.xlu0 %5167
  %v5169 = vsub.f32 %v5131, %v5156
  %v5170 = vsub.f32 %v5136, %v5159
  %v5171 = vsub.f32 %v5141, %v5162
  %v5172 = vsub.f32 %v5146, %v5165
  %v5173 = vsub.f32 %v5151, %v5168
  %v5174 = vmul.f32 %v5169, 1.442695
  %v5175 = vpow.pop %v5174
  %v5176 = vmul.f32 %v5170, 1.442695
  %v5177 = vpow.pop %v5176
  %v5178 = vmul.f32 %v5171, 1.442695
  %v5179 = vpow.pop %v5178
  %v5180 = vmul.f32 %v5172, 1.442695
  %v5181 = vpow.pop %v5180
  %v5182 = vmul.f32 %v5173, 1.442695
  %v5183 = vpow.pop %v5182
  %v5184 = vsel %vm601, %v5175, 0.0
  %5185 = vadd.xlane.f32.xlu0 %v5184
  %v5186 = vpop.xlane.xlu0 %5185
  %v5187 = vsel %vm601, %v5177, 0.0
  %5188 = vadd.xlane.f32.xlu0 %v5187
  %v5189 = vpop.xlane.xlu0 %5188
  %v5190 = vsel %vm601, %v5179, 0.0
  %5191 = vadd.xlane.f32.xlu0 %v5190
  %v5192 = vpop.xlane.xlu0 %5191
  %v5193 = vsel %vm601, %v5181, 0.0
  %5194 = vadd.xlane.f32.xlu0 %v5193
  %v5195 = vpop.xlane.xlu0 %5194
  %v5196 = vsel %vm601, %v5183, 0.0
  %5197 = vadd.xlane.f32.xlu0 %v5196
  %v5198 = vpop.xlane.xlu0 %5197
  %v5199 = vrcp.pop %v5186
  %v5200 = vrcp.pop %v5189
  %v5201 = vrcp.pop %v5192
  %v5202 = vrcp.pop %v5195
  %v5203 = vrcp.pop %v5198
  %v5204 = vmul.f32 %v5175, %v5199
  %v5205 = vmul.f32 %v5177, %v5200
  %v5206 = vmul.f32 %v5179, %v5201
  %v5207 = vmul.f32 %v5181, %v5202
  %v5208 = vmul.f32 %v5183, %v5203
  %v5210 = vsel %vm601, %v5204, 0
  %v5213 = vsel %vm601, %v5205, 0
  %v5216 = vsel %vm601, %v5206, 0
  %v5219 = vsel %vm601, %v5207, 0
  %v5222 = vsel %vm601, %v5208, 0
  %5224 = vmatprep.subr.mxu0 0.0
  %5225 = vmatpush1.msra.mxu0 %v5059
  %5226 = vmatprep.subr.mxu0 0.0
  %5227 = vmatpush1.msra.mxu0 %v5060
  %5228 = vmatprep.subr.mxu0 0.0
  %5229 = vmatpush1.msra.mxu0 %v5061
  %5230 = vmatprep.subr.mxu0 0.0
  %5231 = vmatpush1.msra.mxu0 %v5062
  %5232 = vmatprep.subr.mxu0 0.0
  %5233 = vmatpush1.msra.mxu0 %v5063
  %5234 = vmatprep.subr.mxu0 0.0
  %5235 = vmatpush1.msra.mxu0 0.0
  %5236 = vmatprep.subr.mxu0 0.0
  %5237 = vmatpush1.msra.mxu0 0.0
  %5238 = vmatprep.subr.mxu0 0.0
  %5239 = vmatpush1.msra.mxu0 0.0
  %5240 = vmatprep.subr.mxu0 0.0
  %5241 = vmatpush1.msra.mxu0 0.0
  %5242 = vmatprep.subr.mxu0 0.0
  %5243 = vmatpush1.msra.mxu0 0.0
  %5244 = vmatprep.subr.mxu0 0.0
  %5245 = vmatpush1.msra.mxu0 0.0
  %5246 = vmatprep.subr.mxu0 0.0
  %5247 = vmatpush1.msra.mxu0 0.0
  %5248 = vmatprep.subr.mxu0 0.0
  %5249 = vmatpush1.msra.mxu0 0.0
  %5250 = vmatprep.subr.mxu0 0.0
  %5251 = vmatpush1.msra.mxu0 0.0
  %5252 = vmatprep.subr.mxu0 0.0
  %5253 = vmatpush1.msra.mxu0 0.0
  %5254 = vmatprep.subr.mxu0 0.0
  %5255 = vmatpush1.msra.mxu0 0.0
  %5256 = vmatprep.subr.mxu0 0.0
  %5257 = vmatpush1.msra.mxu0 0.0
  %5258 = vmatprep.subr.mxu0 0.0
  %5259 = vmatpush1.msra.mxu0 0.0
  %5260 = vmatprep.subr.mxu0 0.0
  %5261 = vmatpush1.msra.mxu0 0.0
  %5262 = vmatprep.subr.mxu0 0.0
  %5263 = vmatpush1.msra.mxu0 0.0
  %5264 = vmatprep.subr.mxu0 0.0
  %5265 = vmatpush1.msra.mxu0 0.0
  %5266 = vmatprep.subr.mxu0 0.0
  %5267 = vmatpush1.msra.mxu0 0.0
  %5268 = vmatprep.subr.mxu0 0.0
  %5269 = vmatpush1.msra.mxu0 0.0
  %5270 = vmatprep.subr.mxu0 0.0
  %5271 = vmatpush1.msra.mxu0 0.0
  %5272 = vmatprep.subr.mxu0 0.0
  %5273 = vmatpush1.msra.mxu0 0.0
  %5274 = vmatprep.subr.mxu0 0.0
  %5275 = vmatpush1.msra.mxu0 0.0
  %5276 = vmatprep.subr.mxu0 0.0
  %5277 = vmatpush1.msra.mxu0 0.0
  %5278 = vmatprep.subr.mxu0 0.0
  %5279 = vmatpush1.msra.mxu0 0.0
  %5280 = vmatprep.subr.mxu0 0.0
  %5281 = vmatpush1.msra.mxu0 0.0
  %5282 = vmatprep.subr.mxu0 0.0
  %5283 = vmatpush1.msra.mxu0 0.0
  %5284 = vmatprep.subr.mxu0 0.0
  %5285 = vmatpush1.msra.mxu0 0.0
  %5286 = vmatprep.subr.mxu0 0.0
  %5287 = vmatpush1.msra.mxu0 0.0
  %5288 = vmatprep.mubr.f32.mxu0 0.0
  %5289 = vmatmul.mubr.f32.gmra.mrb[0].mxu0 %v5210
  %v5290 = vpop.f32.mrb[0].mxu0
  %v5291 = vadd.f32 0.0, %v5290
  %v5292 = vpop.f32.mrb[0].mxu0
  %5293 = vmatprep.mubr.f32.mxu0 0.0
  %5294 = vmatmul.mubr.f32.gmra.mrb[0].mxu0 %v5213
  %v5295 = vpop.f32.mrb[0].mxu0
  %v5296 = vadd.f32 0.0, %v5295
  %v5297 = vpop.f32.mrb[0].mxu0
  %5298 = vmatprep.mubr.f32.mxu0 0.0
  %5299 = vmatmul.mubr.f32.gmra.mrb[0].mxu0 %v5216
  %v5300 = vpop.f32.mrb[0].mxu0
  %v5301 = vadd.f32 0.0, %v5300
  %v5302 = vpop.f32.mrb[0].mxu0
  %5303 = vmatprep.mubr.f32.mxu0 0.0
  %5304 = vmatmul.mubr.f32.gmra.mrb[0].mxu0 %v5219
  %v5305 = vpop.f32.mrb[0].mxu0
  %v5306 = vadd.f32 0.0, %v5305
  %v5307 = vpop.f32.mrb[0].mxu0
  %5308 = vmatprep.mubr.f32.mxu0 0.0
  %5309 = vmatmul.mubr.f32.gmra.mrb[0].mxu0 %v5222
  %v5310 = vpop.f32.mrb[0].mxu0
  %v5311 = vadd.f32 0.0, %v5310
  %v5312 = vpop.f32.mrb[0].mxu0
  %5313 = vdwg.mxu0
  %5314 = vst [vmem:[#allocation3] sm:$0xff] %v5291
  %5315 = vst [vmem:[#allocation3 + $0x10] sm:$0xff] %v5296
  %5316 = vst [vmem:[#allocation3 + $0x20] sm:$0xff] %v5301
  %5317 = vst [vmem:[#allocation3 + $0x30] sm:$0xff] %v5306
  %5318 = vst [vmem:[#allocation3 + $0x40] sm:$0xff] %v5311
  %v5319 = vld [vmem:[#allocation2 + $0x8] sm:$0xff]
  %v5320 = vld [vmem:[#allocation2 + $0x38] sm:$0xff]
  %v5321 = vld [vmem:[#allocation2 + $0x68] sm:$0xff]
  %v5322 = vld [vmem:[#allocation2 + $0x98] sm:$0xff]
  %v5323 = vld [vmem:[#allocation2 + $0xc8] sm:$0xff]
  %v5324 = vld [vmem:[#allocation2 + $0x18] sm:$0xff]
  %v5325 = vld [vmem:[#allocation2 + $0x48] sm:$0xff]
  %v5326 = vld [vmem:[#allocation2 + $0x78] sm:$0xff]
  %v5327 = vld [vmem:[#allocation2 + $0xa8] sm:$0xff]
  %v5328 = vld [vmem:[#allocation2 + $0xd8] sm:$0xff]
  %v5329 = vld [vmem:[#allocation2 + $0x28] sm:$0xff]
  %v5330 = vld [vmem:[#allocation2 + $0x58] sm:$0xff]
  %v5331 = vld [vmem:[#allocation2 + $0x88] sm:$0xff]
  %v5332 = vld [vmem:[#allocation2 + $0xb8] sm:$0xff]
  %v5333 = vld [vmem:[#allocation2 + $0xe8] sm:$0xff]
  %5334 = vmatprep.subr.mxu0 0.0
  %5335 = vmatpush1.xpose.msra.mxu0 %v5324
  %5336 = vmatprep.subr.mxu0 0.0
  %5337 = vmatpush1.xpose.msra.mxu0 %v5325
  %5338 = vmatprep.subr.mxu0 0.0
  %5339 = vmatpush1.xpose.msra.mxu0 %v5326
  %5340 = vmatprep.subr.mxu0 0.0
  %5341 = vmatpush1.xpose.msra.mxu0 %v5327
  %5342 = vmatprep.subr.mxu0 0.0
  %5343 = vmatpush1.xpose.msra.mxu0 %v5328
  %5344 = vmatprep.subr.mxu0 0.0
  %5345 = vmatpush1.xpose.msra.mxu0 0.0
  %5346 = vmatprep.subr.mxu0 0.0
  %5347 = vmatpush1.xpose.msra.mxu0 0.0
  %5348 = vmatprep.subr.mxu0 0.0
  %5349 = vmatpush1.xpose.msra.mxu0 0.0
  %5350 = vmatprep.subr.mxu0 0.0
  %5351 = vmatpush1.xpose.msra.mxu0 0.0
  %5352 = vmatprep.subr.mxu0 0.0
  %5353 = vmatpush1.xpose.msra.mxu0 0.0
  %5354 = vmatprep.subr.mxu0 0.0
  %5355 = vmatpush1.xpose.msra.mxu0 0.0
  %5356 = vmatprep.subr.mxu0 0.0
  %5357 = vmatpush1.xpose.msra.mxu0 0.0
  %5358 = vmatprep.subr.mxu0 0.0
  %5359 = vmatpush1.xpose.msra.mxu0 0.0
  %5360 = vmatprep.subr.mxu0 0.0
  %5361 = vmatpush1.xpose.msra.mxu0 0.0
  %5362 = vmatprep.subr.mxu0 0.0
  %5363 = vmatpush1.xpose.msra.mxu0 0.0
  %5364 = vmatprep.subr.mxu0 0.0
  %5365 = vmatpush1.xpose.msra.mxu0 0.0
  %5366 = vmatprep.subr.mxu0 0.0
  %5367 = vmatpush1.xpose.msra.mxu0 0.0
  %5368 = vmatprep.subr.mxu0 0.0
  %5369 = vmatpush1.xpose.msra.mxu0 0.0
  %5370 = vmatprep.subr.mxu0 0.0
  %5371 = vmatpush1.xpose.msra.mxu0 0.0
  %5372 = vmatprep.subr.mxu0 0.0
  %5373 = vmatpush1.xpose.msra.mxu0 0.0
  %5374 = vmatprep.subr.mxu0 0.0
  %5375 = vmatpush1.xpose.msra.mxu0 0.0
  %5376 = vmatprep.subr.mxu0 0.0
  %5377 = vmatpush1.xpose.msra.mxu0 0.0
  %5378 = vmatprep.subr.mxu0 0.0
  %5379 = vmatpush1.xpose.msra.mxu0 0.0
  %5380 = vmatprep.subr.mxu0 0.0
  %5381 = vmatpush1.xpose.msra.mxu0 0.0
  %5382 = vmatprep.subr.mxu0 0.0
  %5383 = vmatpush1.xpose.msra.mxu0 0.0
  %5384 = vmatprep.subr.mxu0 0.0
  %5385 = vmatpush1.xpose.msra.mxu0 0.0
  %5386 = vmatprep.subr.mxu0 0.0
  %5387 = vmatpush1.xpose.msra.mxu0 0.0
  %5388 = vmatprep.subr.mxu0 0.0
  %5389 = vmatpush1.xpose.msra.mxu0 0.0
  %5390 = vmatprep.subr.mxu0 0.0
  %5391 = vmatpush1.xpose.msra.mxu0 0.0
  %5392 = vmatprep.subr.mxu0 0.0
  %5393 = vmatpush1.xpose.msra.mxu0 0.0
  %5394 = vmatprep.subr.mxu0 0.0
  %5395 = vmatpush1.xpose.msra.mxu0 0.0
  %5396 = vmatprep.subr.mxu0 0.0
  %5397 = vmatpush1.xpose.msra.mxu0 0.0
  %5398 = vmatprep.mubr.f32.mxu0 0.0
  %5399 = vmatmul.mubr.f32.gmra.mrb[0].mxu0 %v5319
  %v5400 = vpop.f32.mrb[0].mxu0
  %v5401 = vadd.f32 %v91, %v5400
  %v5402 = vpop.f32.mrb[0].mxu0
  %5403 = vmatprep.mubr.f32.mxu0 0.0
  %5404 = vmatmul.mubr.f32.gmra.mrb[0].mxu0 %v5320
  %v5405 = vpop.f32.mrb[0].mxu0
  %v5406 = vadd.f32 %v92, %v5405
  %v5407 = vpop.f32.mrb[0].mxu0
  %5408 = vmatprep.mubr.f32.mxu0 0.0
  %5409 = vmatmul.mubr.f32.gmra.mrb[0].mxu0 %v5321
  %v5410 = vpop.f32.mrb[0].mxu0
  %v5411 = vadd.f32 %v93, %v5410
  %v5412 = vpop.f32.mrb[0].mxu0
  %5413 = vmatprep.mubr.f32.mxu0 0.0
  %5414 = vmatmul.mubr.f32.gmra.mrb[0].mxu0 %v5322
  %v5415 = vpop.f32.mrb[0].mxu0
  %v5416 = vadd.f32 %v94, %v5415
  %v5417 = vpop.f32.mrb[0].mxu0
  %5418 = vmatprep.mubr.f32.mxu0 0.0
  %5419 = vmatmul.mubr.f32.gmra.mrb[0].mxu0 %v5323
  %v5420 = vpop.f32.mrb[0].mxu0
  %v5421 = vadd.f32 %v95, %v5420
  %v5422 = vpop.f32.mrb[0].mxu0
  %5423 = vdwg.mxu0
  %v5424 = vsel %vm601, %v5401, -inf
  %5425 = vmax.xlane.f32.xlu0 %v5424
  %v5426 = vpop.xlane.xlu0 %5425
  %v5427 = vsel %vm601, %v5406, -inf
  %5428 = vmax.xlane.f32.xlu0 %v5427
  %v5429 = vpop.xlane.xlu0 %5428
  %v5430 = vsel %vm601, %v5411, -inf
  %5431 = vmax.xlane.f32.xlu0 %v5430
  %v5432 = vpop.xlane.xlu0 %5431
  %v5433 = vsel %vm601, %v5416, -inf
  %5434 = vmax.xlane.f32.xlu0 %v5433
  %v5435 = vpop.xlane.xlu0 %5434
  %v5436 = vsel %vm601, %v5421, -inf
  %5437 = vmax.xlane.f32.xlu0 %v5436
  %v5438 = vpop.xlane.xlu0 %5437
  %v5439 = vsub.f32 %v5401, %v5426
  %v5440 = vsub.f32 %v5406, %v5429
  %v5441 = vsub.f32 %v5411, %v5432
  %v5442 = vsub.f32 %v5416, %v5435
  %v5443 = vsub.f32 %v5421, %v5438
  %v5444 = vmul.f32 %v5439, 1.442695
  %v5445 = vpow.pop %v5444
  %v5446 = vmul.f32 %v5440, 1.442695
  %v5447 = vpow.pop %v5446
  %v5448 = vmul.f32 %v5441, 1.442695
  %v5449 = vpow.pop %v5448
  %v5450 = vmul.f32 %v5442, 1.442695
  %v5451 = vpow.pop %v5450
  %v5452 = vmul.f32 %v5443, 1.442695
  %v5453 = vpow.pop %v5452
  %v5454 = vsel %vm601, %v5445, 0.0
  %5455 = vadd.xlane.f32.xlu0 %v5454
  %v5456 = vpop.xlane.xlu0 %5455
  %v5457 = vsel %vm601, %v5447, 0.0
  %5458 = vadd.xlane.f32.xlu0 %v5457
  %v5459 = vpop.xlane.xlu0 %5458
  %v5460 = vsel %vm601, %v5449, 0.0
  %5461 = vadd.xlane.f32.xlu0 %v5460
  %v5462 = vpop.xlane.xlu0 %5461
  %v5463 = vsel %vm601, %v5451, 0.0
  %5464 = vadd.xlane.f32.xlu0 %v5463
  %v5465 = vpop.xlane.xlu0 %5464
  %v5466 = vsel %vm601, %v5453, 0.0
  %5467 = vadd.xlane.f32.xlu0 %v5466
  %v5468 = vpop.xlane.xlu0 %5467
  %v5469 = vrcp.pop %v5456
  %v5470 = vrcp.pop %v5459
  %v5471 = vrcp.pop %v5462
  %v5472 = vrcp.pop %v5465
  %v5473 = vrcp.pop %v5468
  %v5474 = vmul.f32 %v5445, %v5469
  %v5475 = vmul.f32 %v5447, %v5470
  %v5476 = vmul.f32 %v5449, %v5471
  %v5477 = vmul.f32 %v5451, %v5472
  %v5478 = vmul.f32 %v5453, %v5473
  %v5480 = vsel %vm601, %v5474, 0
  %v5483 = vsel %vm601, %v5475, 0
  %v5486 = vsel %vm601, %v5476, 0
  %v5489 = vsel %vm601, %v5477, 0
  %v5492 = vsel %vm601, %v5478, 0
  %5494 = vmatprep.subr.mxu0 0.0
  %5495 = vmatpush1.msra.mxu0 %v5329
  %5496 = vmatprep.subr.mxu0 0.0
  %5497 = vmatpush1.msra.mxu0 %v5330
  %5498 = vmatprep.subr.mxu0 0.0
  %5499 = vmatpush1.msra.mxu0 %v5331
  %5500 = vmatprep.subr.mxu0 0.0
  %5501 = vmatpush1.msra.mxu0 %v5332
  %5502 = vmatprep.subr.mxu0 0.0
  %5503 = vmatpush1.msra.mxu0 %v5333
  %5504 = vmatprep.subr.mxu0 0.0
  %5505 = vmatpush1.msra.mxu0 0.0
  %5506 = vmatprep.subr.mxu0 0.0
  %5507 = vmatpush1.msra.mxu0 0.0
  %5508 = vmatprep.subr.mxu0 0.0
  %5509 = vmatpush1.msra.mxu0 0.0
  %5510 = vmatprep.subr.mxu0 0.0
  %5511 = vmatpush1.msra.mxu0 0.0
  %5512 = vmatprep.subr.mxu0 0.0
  %5513 = vmatpush1.msra.mxu0 0.0
  %5514 = vmatprep.subr.mxu0 0.0
  %5515 = vmatpush1.msra.mxu0 0.0
  %5516 = vmatprep.subr.mxu0 0.0
  %5517 = vmatpush1.msra.mxu0 0.0
  %5518 = vmatprep.subr.mxu0 0.0
  %5519 = vmatpush1.msra.mxu0 0.0
  %5520 = vmatprep.subr.mxu0 0.0
  %5521 = vmatpush1.msra.mxu0 0.0
  %5522 = vmatprep.subr.mxu0 0.0
  %5523 = vmatpush1.msra.mxu0 0.0
  %5524 = vmatprep.subr.mxu0 0.0
  %5525 = vmatpush1.msra.mxu0 0.0
  %5526 = vmatprep.subr.mxu0 0.0
  %5527 = vmatpush1.msra.mxu0 0.0
  %5528 = vmatprep.subr.mxu0 0.0
  %5529 = vmatpush1.msra.mxu0 0.0
  %5530 = vmatprep.subr.mxu0 0.0
  %5531 = vmatpush1.msra.mxu0 0.0
  %5532 = vmatprep.subr.mxu0 0.0
  %5533 = vmatpush1.msra.mxu0 0.0
  %5534 = vmatprep.subr.mxu0 0.0
  %5535 = vmatpush1.msra.mxu0 0.0
  %5536 = vmatprep.subr.mxu0 0.0
  %5537 = vmatpush1.msra.mxu0 0.0
  %5538 = vmatprep.subr.mxu0 0.0
  %5539 = vmatpush1.msra.mxu0 0.0
  %5540 = vmatprep.subr.mxu0 0.0
  %5541 = vmatpush1.msra.mxu0 0.0
  %5542 = vmatprep.subr.mxu0 0.0
  %5543 = vmatpush1.msra.mxu0 0.0
  %5544 = vmatprep.subr.mxu0 0.0
  %5545 = vmatpush1.msra.mxu0 0.0
  %5546 = vmatprep.subr.mxu0 0.0
  %5547 = vmatpush1.msra.mxu0 0.0
  %5548 = vmatprep.subr.mxu0 0.0
  %5549 = vmatpush1.msra.mxu0 0.0
  %5550 = vmatprep.subr.mxu0 0.0
  %5551 = vmatpush1.msra.mxu0 0.0
  %5552 = vmatprep.subr.mxu0 0.0
  %5553 = vmatpush1.msra.mxu0 0.0
  %5554 = vmatprep.subr.mxu0 0.0
  %5555 = vmatpush1.msra.mxu0 0.0
  %5556 = vmatprep.subr.mxu0 0.0
  %5557 = vmatpush1.msra.mxu0 0.0
  %5558 = vmatprep.mubr.f32.mxu0 0.0
  %5559 = vmatmul.mubr.f32.gmra.mrb[0].mxu0 %v5480
  %v5560 = vpop.f32.mrb[0].mxu0
  %v5561 = vadd.f32 0.0, %v5560
  %v5562 = vpop.f32.mrb[0].mxu0
  %5563 = vmatprep.mubr.f32.mxu0 0.0
  %5564 = vmatmul.mubr.f32.gmra.mrb[0].mxu0 %v5483
  %v5565 = vpop.f32.mrb[0].mxu0
  %v5566 = vadd.f32 0.0, %v5565
  %v5567 = vpop.f32.mrb[0].mxu0
  %5568 = vmatprep.mubr.f32.mxu0 0.0
  %5569 = vmatmul.mubr.f32.gmra.mrb[0].mxu0 %v5486
  %v5570 = vpop.f32.mrb[0].mxu0
  %v5571 = vadd.f32 0.0, %v5570
  %v5572 = vpop.f32.mrb[0].mxu0
  %5573 = vmatprep.mubr.f32.mxu0 0.0
  %5574 = vmatmul.mubr.f32.gmra.mrb[0].mxu0 %v5489
  %v5575 = vpop.f32.mrb[0].mxu0
  %v5576 = vadd.f32 0.0, %v5575
  %v5577 = vpop.f32.mrb[0].mxu0
  %5578 = vmatprep.mubr.f32.mxu0 0.0
  %5579 = vmatmul.mubr.f32.gmra.mrb[0].mxu0 %v5492
  %v5580 = vpop.f32.mrb[0].mxu0
  %v5581 = vadd.f32 0.0, %v5580
  %v5582 = vpop.f32.mrb[0].mxu0
  %5583 = vdwg.mxu0
  %5584 = vst [vmem:[#allocation3 + $0x8] sm:$0xff] %v5561
  %5585 = vst [vmem:[#allocation3 + $0x18] sm:$0xff] %v5566
  %5586 = vst [vmem:[#allocation3 + $0x28] sm:$0xff] %v5571
  %5587 = vst [vmem:[#allocation3 + $0x38] sm:$0xff] %v5576
  %5588 = vst [vmem:[#allocation3 + $0x48] sm:$0xff] %v5581
  %v5589 = vld [vmem:[#allocation3] sm:$0xff]
  %v5590 = vld [vmem:[#allocation3 + $0x8] sm:$0xff]
  %v5591 = vld [vmem:[#allocation3 + $0x10] sm:$0xff]
  %v5592 = vld [vmem:[#allocation3 + $0x18] sm:$0xff]
  %v5593 = vld [vmem:[#allocation3 + $0x20] sm:$0xff]
  %v5594 = vld [vmem:[#allocation3 + $0x28] sm:$0xff]
  %v5595 = vld [vmem:[#allocation3 + $0x30] sm:$0xff]
  %v5596 = vld [vmem:[#allocation3 + $0x38] sm:$0xff]
  %v5597 = vld [vmem:[#allocation3 + $0x40] sm:$0xff]
  %v5598 = vld [vmem:[#allocation3 + $0x48] sm:$0xff]
  %s5599 = scalar_lea.vmem %s3, 768
  %v5600 = vld [vmem:[%s5599] sm:$0xff]
  %v5601 = vld [vmem:[%s5599 + $0x8] sm:$0xff]
  %v5602 = vld [vmem:[%s5599 + $0x10] sm:$0xff]
  %v5603 = vld [vmem:[%s5599 + $0x18] sm:$0xff]
  %v5604 = vld [vmem:[%s5599 + $0x20] sm:$0xff]
  %v5605 = vld [vmem:[%s5599 + $0x28] sm:$0xff]
  %v5606 = vld [vmem:[%s5599 + $0x30] sm:$0xff]
  %v5607 = vld [vmem:[%s5599 + $0x38] sm:$0xff]
  %v5608 = vld [vmem:[%s5599 + $0x40] sm:$0xff]
  %v5609 = vld [vmem:[%s5599 + $0x48] sm:$0xff]
  %v5610 = vld [vmem:[%s5599 + $0x50] sm:$0xff]
  %v5611 = vld [vmem:[%s5599 + $0x58] sm:$0xff]
  %v5612 = vld [vmem:[%s5599 + $0x60] sm:$0xff]
  %v5613 = vld [vmem:[%s5599 + $0x68] sm:$0xff]
  %v5614 = vld [vmem:[%s5599 + $0x70] sm:$0xff]
  %v5615 = vld [vmem:[%s5599 + $0x78] sm:$0xff]
  %v5616 = vld [vmem:[%s5599 + $0x80] sm:$0xff]
  %v5617 = vld [vmem:[%s5599 + $0x88] sm:$0xff]
  %v5618 = vld [vmem:[%s5599 + $0x90] sm:$0xff]
  %v5619 = vld [vmem:[%s5599 + $0x98] sm:$0xff]
  %v5620 = vld [vmem:[%s5599 + $0xa0] sm:$0xff]
  %v5621 = vld [vmem:[%s5599 + $0xa8] sm:$0xff]
  %v5622 = vld [vmem:[%s5599 + $0xb0] sm:$0xff]
  %v5623 = vld [vmem:[%s5599 + $0xb8] sm:$0xff]
  %v5624 = vld [vmem:[%s5599 + $0xc0] sm:$0xff]
  %v5625 = vld [vmem:[%s5599 + $0xc8] sm:$0xff]
  %v5626 = vld [vmem:[%s5599 + $0xd0] sm:$0xff]
  %v5627 = vld [vmem:[%s5599 + $0xd8] sm:$0xff]
  %v5628 = vld [vmem:[%s5599 + $0xe0] sm:$0xff]
  %v5629 = vld [vmem:[%s5599 + $0xe8] sm:$0xff]
  %v5630 = vld [vmem:[%s5599 + $0xf0] sm:$0xff]
  %v5631 = vld [vmem:[%s5599 + $0xf8] sm:$0xff]
  %s5632 = scalar_lea.vmem %s4, 3
  %v5633 = vld [vmem:[%s5632] sm:$0x1]
  %v5635 = vlaneseq
  %v5636 = vshrl.u32 %v5635, 7
  %v5637 = vsub.s32 0, %v5636
  %v5638 = vrot.slane %v5633, %v5637
  %5640 = vmatprep.subr.mxu0 0.0
  %5641 = vmatpush1.msra.mxu0 %v5600
  %5642 = vmatprep.subr.mxu0 0.0
  %5643 = vmatpush1.msra.mxu0 %v5601
  %5644 = vmatprep.subr.mxu0 0.0
  %5645 = vmatpush1.msra.mxu0 %v5602
  %5646 = vmatprep.subr.mxu0 0.0
  %5647 = vmatpush1.msra.mxu0 %v5603
  %5648 = vmatprep.subr.mxu0 0.0
  %5649 = vmatpush1.msra.mxu0 %v5604
  %5650 = vmatprep.subr.mxu0 0.0
  %5651 = vmatpush1.msra.mxu0 %v5605
  %5652 = vmatprep.subr.mxu0 0.0
  %5653 = vmatpush1.msra.mxu0 %v5606
  %5654 = vmatprep.subr.mxu0 0.0
  %5655 = vmatpush1.msra.mxu0 %v5607
  %5656 = vmatprep.subr.mxu0 0.0
  %5657 = vmatpush1.msra.mxu0 %v5608
  %5658 = vmatprep.subr.mxu0 0.0
  %5659 = vmatpush1.msra.mxu0 %v5609
  %5660 = vmatprep.subr.mxu0 0.0
  %5661 = vmatpush1.msra.mxu0 %v5610
  %5662 = vmatprep.subr.mxu0 0.0
  %5663 = vmatpush1.msra.mxu0 %v5611
  %5664 = vmatprep.subr.mxu0 0.0
  %5665 = vmatpush1.msra.mxu0 %v5612
  %5666 = vmatprep.subr.mxu0 0.0
  %5667 = vmatpush1.msra.mxu0 %v5613
  %5668 = vmatprep.subr.mxu0 0.0
  %5669 = vmatpush1.msra.mxu0 %v5614
  %5670 = vmatprep.subr.mxu0 0.0
  %5671 = vmatpush1.msra.mxu0 %v5615
  %5672 = vmatprep.subr.mxu0 0.0
  %5673 = vmatpush1.msra.mxu0 %v5616
  %5674 = vmatprep.subr.mxu0 0.0
  %5675 = vmatpush1.msra.mxu0 %v5617
  %5676 = vmatprep.subr.mxu0 0.0
  %5677 = vmatpush1.msra.mxu0 %v5618
  %5678 = vmatprep.subr.mxu0 0.0
  %5679 = vmatpush1.msra.mxu0 %v5619
  %5680 = vmatprep.subr.mxu0 0.0
  %5681 = vmatpush1.msra.mxu0 %v5620
  %5682 = vmatprep.subr.mxu0 0.0
  %5683 = vmatpush1.msra.mxu0 %v5621
  %5684 = vmatprep.subr.mxu0 0.0
  %5685 = vmatpush1.msra.mxu0 %v5622
  %5686 = vmatprep.subr.mxu0 0.0
  %5687 = vmatpush1.msra.mxu0 %v5623
  %5688 = vmatprep.subr.mxu0 0.0
  %5689 = vmatpush1.msra.mxu0 %v5624
  %5690 = vmatprep.subr.mxu0 0.0
  %5691 = vmatpush1.msra.mxu0 %v5625
  %5692 = vmatprep.subr.mxu0 0.0
  %5693 = vmatpush1.msra.mxu0 %v5626
  %5694 = vmatprep.subr.mxu0 0.0
  %5695 = vmatpush1.msra.mxu0 %v5627
  %5696 = vmatprep.subr.mxu0 0.0
  %5697 = vmatpush1.msra.mxu0 %v5628
  %5698 = vmatprep.subr.mxu0 0.0
  %5699 = vmatpush1.msra.mxu0 %v5629
  %5700 = vmatprep.subr.mxu0 0.0
  %5701 = vmatpush1.msra.mxu0 %v5630
  %5702 = vmatprep.subr.mxu0 0.0
  %5703 = vmatpush1.msra.mxu0 %v5631
  %5704 = vmatprep.mubr.f32.mxu0 %v5590
  %5705 = vmatmul.mubr.f32.gmra.mrb[0].mxu0 %v5589
  %v5706 = vpop.f32.mrb[0].mxu0
  %v5707 = vadd.f32 %v5638, %v5706
  %v5708 = vpop.f32.mrb[0].mxu0
  %5709 = vmatprep.mubr.f32.mxu0 %v5592
  %5710 = vmatmul.mubr.f32.gmra.mrb[0].mxu0 %v5591
  %v5711 = vpop.f32.mrb[0].mxu0
  %v5712 = vadd.f32 %v5638, %v5711
  %v5713 = vpop.f32.mrb[0].mxu0
  %5714 = vmatprep.mubr.f32.mxu0 %v5594
  %5715 = vmatmul.mubr.f32.gmra.mrb[0].mxu0 %v5593
  %v5716 = vpop.f32.mrb[0].mxu0
  %v5717 = vadd.f32 %v5638, %v5716
  %v5718 = vpop.f32.mrb[0].mxu0
  %5719 = vmatprep.mubr.f32.mxu0 %v5596
  %5720 = vmatmul.mubr.f32.gmra.mrb[0].mxu0 %v5595
  %v5721 = vpop.f32.mrb[0].mxu0
  %v5722 = vadd.f32 %v5638, %v5721
  %v5723 = vpop.f32.mrb[0].mxu0
  %5724 = vmatprep.mubr.f32.mxu0 %v5598
  %5725 = vmatmul.mubr.f32.gmra.mrb[0].mxu0 %v5597
  %v5726 = vpop.f32.mrb[0].mxu0
  %v5727 = vadd.f32 %v5638, %v5726
  %v5728 = vpop.f32.mrb[0].mxu0
  %5729 = vdwg.mxu0
  %v5730 = vadd.f32 %v4644, %v5707
  %v5731 = vadd.f32 %v4645, %v5712
  %v5732 = vadd.f32 %v4646, %v5717
  %v5733 = vadd.f32 %v4647, %v5722
  %v5734 = vadd.f32 %v4648, %v5727
  %s5735 = scalar_lea.vmem %s9, 3
  %v5736 = vld [vmem:[%s5735] sm:$0x1]
  %s5737 = scalar_lea.vmem %s10, 3
  %v5738 = vld [vmem:[%s5737] sm:$0x1]
  %v5739 = vsel %vm146, %v5730, 0.0
  %5740 = vadd.xlane.f32.xlu0 %v5739
  %v5741 = vpop.xlane.xlu0 %5740
  %v5742 = vsel %vm146, %v5731, 0.0
  %5743 = vadd.xlane.f32.xlu0 %v5742
  %v5744 = vpop.xlane.xlu0 %5743
  %v5745 = vsel %vm146, %v5732, 0.0
  %5746 = vadd.xlane.f32.xlu0 %v5745
  %v5747 = vpop.xlane.xlu0 %5746
  %v5748 = vsel %vm146, %v5733, 0.0
  %5749 = vadd.xlane.f32.xlu0 %v5748
  %v5750 = vpop.xlane.xlu0 %5749
  %v5751 = vsel %vm146, %v5734, 0.0
  %5752 = vadd.xlane.f32.xlu0 %v5751
  %v5753 = vpop.xlane.xlu0 %5752
  %v5754 = vmul.f32 %v5741, %v1198
  %v5755 = vmul.f32 %v5744, %v1198
  %v5756 = vmul.f32 %v5747, %v1198
  %v5757 = vmul.f32 %v5750, %v1198
  %v5758 = vmul.f32 %v5753, %v1198
  %v5759 = vsub.f32 %v5730, %v5754
  %v5760 = vsub.f32 %v5731, %v5755
  %v5761 = vsub.f32 %v5732, %v5756
  %v5762 = vsub.f32 %v5733, %v5757
  %v5763 = vsub.f32 %v5734, %v5758
  %v5764 = vmul.f32 %v5759, %v5759
  %v5765 = vmul.f32 %v5760, %v5760
  %v5766 = vmul.f32 %v5761, %v5761
  %v5767 = vmul.f32 %v5762, %v5762
  %v5768 = vmul.f32 %v5763, %v5763
  %v5769 = vsel %vm146, %v5764, 0.0
  %5770 = vadd.xlane.f32.xlu0 %v5769
  %v5771 = vpop.xlane.xlu0 %5770
  %v5772 = vsel %vm146, %v5765, 0.0
  %5773 = vadd.xlane.f32.xlu0 %v5772
  %v5774 = vpop.xlane.xlu0 %5773
  %v5775 = vsel %vm146, %v5766, 0.0
  %5776 = vadd.xlane.f32.xlu0 %v5775
  %v5777 = vpop.xlane.xlu0 %5776
  %v5778 = vsel %vm146, %v5767, 0.0
  %5779 = vadd.xlane.f32.xlu0 %v5778
  %v5780 = vpop.xlane.xlu0 %5779
  %v5781 = vsel %vm146, %v5768, 0.0
  %5782 = vadd.xlane.f32.xlu0 %v5781
  %v5783 = vpop.xlane.xlu0 %5782
  %v5784 = vmul.f32 %v5771, %v1198
  %v5785 = vmul.f32 %v5774, %v1198
  %v5786 = vmul.f32 %v5777, %v1198
  %v5787 = vmul.f32 %v5780, %v1198
  %v5788 = vmul.f32 %v5783, %v1198
  %v5789 = vadd.f32 %v5784, 1e-05
  %v5790 = vadd.f32 %v5785, 1e-05
  %v5791 = vadd.f32 %v5786, 1e-05
  %v5792 = vadd.f32 %v5787, 1e-05
  %v5793 = vadd.f32 %v5788, 1e-05
  %v5794 = vrsqrt.pop %v5789
  %v5795 = vrsqrt.pop %v5790
  %v5796 = vrsqrt.pop %v5791
  %v5797 = vrsqrt.pop %v5792
  %v5798 = vrsqrt.pop %v5793
  %v5799 = vmul.f32 %v5759, %v5794
  %v5800 = vmul.f32 %v5760, %v5795
  %v5801 = vmul.f32 %v5761, %v5796
  %v5802 = vmul.f32 %v5762, %v5797
  %v5803 = vmul.f32 %v5763, %v5798
  %v5805 = vlaneseq
  %v5806 = vshrl.u32 %v5805, 7
  %v5807 = vsub.s32 0, %v5806
  %v5808 = vrot.slane %v5736, %v5807
  %v5810 = vmul.f32 %v5799, %v5808
  %v5811 = vmul.f32 %v5800, %v5808
  %v5812 = vmul.f32 %v5801, %v5808
  %v5813 = vmul.f32 %v5802, %v5808
  %v5814 = vmul.f32 %v5803, %v5808
  %v5816 = vlaneseq
  %v5817 = vshrl.u32 %v5816, 7
  %v5818 = vsub.s32 0, %v5817
  %v5819 = vrot.slane %v5738, %v5818
  %v5821 = vadd.f32 %v5810, %v5819
  %v5822 = vadd.f32 %v5811, %v5819
  %v5823 = vadd.f32 %v5812, %v5819
  %v5824 = vadd.f32 %v5813, %v5819
  %v5825 = vadd.f32 %v5814, %v5819
  %s5826 = scalar_lea.vmem %s5, 72
  %v5827 = vld [vmem:[%s5826] sm:$0xff]
  %v5828 = vld [vmem:[%s5826 + $0x8] sm:$0xff]
  %v5829 = vld [vmem:[%s5826 + $0x10] sm:$0xf]
  %s5830 = scalar_lea.vmem %s6, 3
  %v5831 = vld [vmem:[%s5830] sm:$0x1]
  %v5833 = vlaneseq
  %v5834 = vshrl.u32 %v5833, 7
  %v5835 = vsub.s32 0, %v5834
  %v5836 = vrot.slane %v5831, %v5835
  %v5839 = vsel %vm146, %v5821, 0
  %v5842 = vsel %vm146, %v5822, 0
  %v5845 = vsel %vm146, %v5823, 0
  %v5848 = vsel %vm146, %v5824, 0
  %v5851 = vsel %vm146, %v5825, 0
  %v5854 = vsel %vm162, %v5829, 0
  %5856 = vmatprep.subr.mxu0 0.0
  %5857 = vmatpush1.msra.mxu0 %v5827
  %5858 = vmatprep.subr.mxu0 0.0
  %5859 = vmatpush1.msra.mxu0 %v5828
  %5860 = vmatprep.subr.mxu0 0.0
  %5861 = vmatpush1.msra.mxu0 %v5854
  %5862 = vmatprep.subr.mxu0 0.0
  %5863 = vmatpush1.msra.mxu0 0.0
  %5864 = vmatprep.subr.mxu0 0.0
  %5865 = vmatpush1.msra.mxu0 0.0
  %5866 = vmatprep.subr.mxu0 0.0
  %5867 = vmatpush1.msra.mxu0 0.0
  %5868 = vmatprep.subr.mxu0 0.0
  %5869 = vmatpush1.msra.mxu0 0.0
  %5870 = vmatprep.subr.mxu0 0.0
  %5871 = vmatpush1.msra.mxu0 0.0
  %5872 = vmatprep.subr.mxu0 0.0
  %5873 = vmatpush1.msra.mxu0 0.0
  %5874 = vmatprep.subr.mxu0 0.0
  %5875 = vmatpush1.msra.mxu0 0.0
  %5876 = vmatprep.subr.mxu0 0.0
  %5877 = vmatpush1.msra.mxu0 0.0
  %5878 = vmatprep.subr.mxu0 0.0
  %5879 = vmatpush1.msra.mxu0 0.0
  %5880 = vmatprep.subr.mxu0 0.0
  %5881 = vmatpush1.msra.mxu0 0.0
  %5882 = vmatprep.subr.mxu0 0.0
  %5883 = vmatpush1.msra.mxu0 0.0
  %5884 = vmatprep.subr.mxu0 0.0
  %5885 = vmatpush1.msra.mxu0 0.0
  %5886 = vmatprep.subr.mxu0 0.0
  %5887 = vmatpush1.msra.mxu0 0.0
  %5888 = vmatprep.subr.mxu0 0.0
  %5889 = vmatpush1.msra.mxu0 0.0
  %5890 = vmatprep.subr.mxu0 0.0
  %5891 = vmatpush1.msra.mxu0 0.0
  %5892 = vmatprep.subr.mxu0 0.0
  %5893 = vmatpush1.msra.mxu0 0.0
  %5894 = vmatprep.subr.mxu0 0.0
  %5895 = vmatpush1.msra.mxu0 0.0
  %5896 = vmatprep.subr.mxu0 0.0
  %5897 = vmatpush1.msra.mxu0 0.0
  %5898 = vmatprep.subr.mxu0 0.0
  %5899 = vmatpush1.msra.mxu0 0.0
  %5900 = vmatprep.subr.mxu0 0.0
  %5901 = vmatpush1.msra.mxu0 0.0
  %5902 = vmatprep.subr.mxu0 0.0
  %5903 = vmatpush1.msra.mxu0 0.0
  %5904 = vmatprep.subr.mxu0 0.0
  %5905 = vmatpush1.msra.mxu0 0.0
  %5906 = vmatprep.subr.mxu0 0.0
  %5907 = vmatpush1.msra.mxu0 0.0
  %5908 = vmatprep.subr.mxu0 0.0
  %5909 = vmatpush1.msra.mxu0 0.0
  %5910 = vmatprep.subr.mxu0 0.0
  %5911 = vmatpush1.msra.mxu0 0.0
  %5912 = vmatprep.subr.mxu0 0.0
  %5913 = vmatpush1.msra.mxu0 0.0
  %5914 = vmatprep.subr.mxu0 0.0
  %5915 = vmatpush1.msra.mxu0 0.0
  %5916 = vmatprep.subr.mxu0 0.0
  %5917 = vmatpush1.msra.mxu0 0.0
  %5918 = vmatprep.subr.mxu0 0.0
  %5919 = vmatpush1.msra.mxu0 0.0
  %5920 = vmatprep.mubr.f32.mxu0 0.0
  %5921 = vmatmul.mubr.f32.gmra.mrb[0].mxu0 %v5839
  %v5922 = vpop.f32.mrb[0].mxu0
  %v5923 = vadd.f32 %v5836, %v5922
  %v5924 = vpop.f32.mrb[0].mxu0
  %5925 = vmatprep.mubr.f32.mxu0 0.0
  %5926 = vmatmul.mubr.f32.gmra.mrb[0].mxu0 %v5842
  %v5927 = vpop.f32.mrb[0].mxu0
  %v5928 = vadd.f32 %v5836, %v5927
  %v5929 = vpop.f32.mrb[0].mxu0
  %5930 = vmatprep.mubr.f32.mxu0 0.0
  %5931 = vmatmul.mubr.f32.gmra.mrb[0].mxu0 %v5845
  %v5932 = vpop.f32.mrb[0].mxu0
  %v5933 = vadd.f32 %v5836, %v5932
  %v5934 = vpop.f32.mrb[0].mxu0
  %5935 = vmatprep.mubr.f32.mxu0 0.0
  %5936 = vmatmul.mubr.f32.gmra.mrb[0].mxu0 %v5848
  %v5937 = vpop.f32.mrb[0].mxu0
  %v5938 = vadd.f32 %v5836, %v5937
  %v5939 = vpop.f32.mrb[0].mxu0
  %5940 = vmatprep.mubr.f32.mxu0 0.0
  %5941 = vmatmul.mubr.f32.gmra.mrb[0].mxu0 %v5851
  %v5942 = vpop.f32.mrb[0].mxu0
  %v5943 = vadd.f32 %v5836, %v5942
  %v5944 = vpop.f32.mrb[0].mxu0
  %5945 = vdwg.mxu0
  %v5946 = vmax.f32 %v5923, 0.0
  %v5947 = vmax.f32 %v5928, 0.0
  %v5948 = vmax.f32 %v5933, 0.0
  %v5949 = vmax.f32 %v5938, 0.0
  %v5950 = vmax.f32 %v5943, 0.0
  %s5951 = scalar_lea.vmem %s7, 192
  %v5952 = vld [vmem:[%s5951] sm:$0xff]
  %v5953 = vld [vmem:[%s5951 + $0x8] sm:$0xff]
  %v5954 = vld [vmem:[%s5951 + $0x10] sm:$0xff]
  %v5955 = vld [vmem:[%s5951 + $0x18] sm:$0xff]
  %v5956 = vld [vmem:[%s5951 + $0x20] sm:$0xff]
  %v5957 = vld [vmem:[%s5951 + $0x28] sm:$0xff]
  %v5958 = vld [vmem:[%s5951 + $0x30] sm:$0xff]
  %v5959 = vld [vmem:[%s5951 + $0x38] sm:$0xff]
  %s5960 = scalar_lea.vmem %s8, 3
  %v5961 = vld [vmem:[%s5960] sm:$0x1]
  %v5963 = vlaneseq
  %v5964 = vshrl.u32 %v5963, 7
  %v5965 = vsub.s32 0, %v5964
  %v5966 = vrot.slane %v5961, %v5965
  %v5969 = vsel %vm1409, %v5946, 0
  %v5972 = vsel %vm1409, %v5947, 0
  %v5975 = vsel %vm1409, %v5948, 0
  %v5978 = vsel %vm1409, %v5949, 0
  %v5981 = vsel %vm1409, %v5950, 0
  %5983 = vmatprep.subr.mxu0 0.0
  %5984 = vmatpush1.msra.mxu0 %v5952
  %5985 = vmatprep.subr.mxu0 0.0
  %5986 = vmatpush1.msra.mxu0 %v5953
  %5987 = vmatprep.subr.mxu0 0.0
  %5988 = vmatpush1.msra.mxu0 %v5954
  %5989 = vmatprep.subr.mxu0 0.0
  %5990 = vmatpush1.msra.mxu0 %v5955
  %5991 = vmatprep.subr.mxu0 0.0
  %5992 = vmatpush1.msra.mxu0 %v5956
  %5993 = vmatprep.subr.mxu0 0.0
  %5994 = vmatpush1.msra.mxu0 %v5957
  %5995 = vmatprep.subr.mxu0 0.0
  %5996 = vmatpush1.msra.mxu0 %v5958
  %5997 = vmatprep.subr.mxu0 0.0
  %5998 = vmatpush1.msra.mxu0 %v5959
  %5999 = vmatprep.subr.mxu0 0.0
  %6000 = vmatpush1.msra.mxu0 0.0
  %6001 = vmatprep.subr.mxu0 0.0
  %6002 = vmatpush1.msra.mxu0 0.0
  %6003 = vmatprep.subr.mxu0 0.0
  %6004 = vmatpush1.msra.mxu0 0.0
  %6005 = vmatprep.subr.mxu0 0.0
  %6006 = vmatpush1.msra.mxu0 0.0
  %6007 = vmatprep.subr.mxu0 0.0
  %6008 = vmatpush1.msra.mxu0 0.0
  %6009 = vmatprep.subr.mxu0 0.0
  %6010 = vmatpush1.msra.mxu0 0.0
  %6011 = vmatprep.subr.mxu0 0.0
  %6012 = vmatpush1.msra.mxu0 0.0
  %6013 = vmatprep.subr.mxu0 0.0
  %6014 = vmatpush1.msra.mxu0 0.0
  %6015 = vmatprep.subr.mxu0 0.0
  %6016 = vmatpush1.msra.mxu0 0.0
  %6017 = vmatprep.subr.mxu0 0.0
  %6018 = vmatpush1.msra.mxu0 0.0
  %6019 = vmatprep.subr.mxu0 0.0
  %6020 = vmatpush1.msra.mxu0 0.0
  %6021 = vmatprep.subr.mxu0 0.0
  %6022 = vmatpush1.msra.mxu0 0.0
  %6023 = vmatprep.subr.mxu0 0.0
  %6024 = vmatpush1.msra.mxu0 0.0
  %6025 = vmatprep.subr.mxu0 0.0
  %6026 = vmatpush1.msra.mxu0 0.0
  %6027 = vmatprep.subr.mxu0 0.0
  %6028 = vmatpush1.msra.mxu0 0.0
  %6029 = vmatprep.subr.mxu0 0.0
  %6030 = vmatpush1.msra.mxu0 0.0
  %6031 = vmatprep.subr.mxu0 0.0
  %6032 = vmatpush1.msra.mxu0 0.0
  %6033 = vmatprep.subr.mxu0 0.0
  %6034 = vmatpush1.msra.mxu0 0.0
  %6035 = vmatprep.subr.mxu0 0.0
  %6036 = vmatpush1.msra.mxu0 0.0
  %6037 = vmatprep.subr.mxu0 0.0
  %6038 = vmatpush1.msra.mxu0 0.0
  %6039 = vmatprep.subr.mxu0 0.0
  %6040 = vmatpush1.msra.mxu0 0.0
  %6041 = vmatprep.subr.mxu0 0.0
  %6042 = vmatpush1.msra.mxu0 0.0
  %6043 = vmatprep.subr.mxu0 0.0
  %6044 = vmatpush1.msra.mxu0 0.0
  %6045 = vmatprep.subr.mxu0 0.0
  %6046 = vmatpush1.msra.mxu0 0.0
  %6047 = vmatprep.mubr.f32.mxu0 0.0
  %6048 = vmatmul.mubr.f32.gmra.mrb[0].mxu0 %v5969
  %v6049 = vpop.f32.mrb[0].mxu0
  %v6050 = vadd.f32 %v5966, %v6049
  %v6051 = vpop.f32.mrb[0].mxu0
  %6052 = vmatprep.mubr.f32.mxu0 0.0
  %6053 = vmatmul.mubr.f32.gmra.mrb[0].mxu0 %v5972
  %v6054 = vpop.f32.mrb[0].mxu0
  %v6055 = vadd.f32 %v5966, %v6054
  %v6056 = vpop.f32.mrb[0].mxu0
  %6057 = vmatprep.mubr.f32.mxu0 0.0
  %6058 = vmatmul.mubr.f32.gmra.mrb[0].mxu0 %v5975
  %v6059 = vpop.f32.mrb[0].mxu0
  %v6060 = vadd.f32 %v5966, %v6059
  %v6061 = vpop.f32.mrb[0].mxu0
  %6062 = vmatprep.mubr.f32.mxu0 0.0
  %6063 = vmatmul.mubr.f32.gmra.mrb[0].mxu0 %v5978
  %v6064 = vpop.f32.mrb[0].mxu0
  %v6065 = vadd.f32 %v5966, %v6064
  %v6066 = vpop.f32.mrb[0].mxu0
  %6067 = vmatprep.mubr.f32.mxu0 0.0
  %6068 = vmatmul.mubr.f32.gmra.mrb[0].mxu0 %v5981
  %v6069 = vpop.f32.mrb[0].mxu0
  %v6070 = vadd.f32 %v5966, %v6069
  %v6071 = vpop.f32.mrb[0].mxu0
  %6072 = vdwg.mxu0
  %v6073 = vadd.f32 %v5821, %v6050
  %v6074 = vadd.f32 %v5822, %v6055
  %v6075 = vadd.f32 %v5823, %v6060
  %v6076 = vadd.f32 %v5824, %v6065
  %v6077 = vadd.f32 %v5825, %v6070
  %s6078 = scalar_lea.vmem %s11, 3
  %v6079 = vld [vmem:[%s6078] sm:$0x1]
  %s6080 = scalar_lea.vmem %s12, 3
  %v6081 = vld [vmem:[%s6080] sm:$0x1]
  %v6082 = vsel %vm146, %v6073, 0.0
  %6083 = vadd.xlane.f32.xlu0 %v6082
  %v6084 = vpop.xlane.xlu0 %6083
  %v6085 = vsel %vm146, %v6074, 0.0
  %6086 = vadd.xlane.f32.xlu0 %v6085
  %v6087 = vpop.xlane.xlu0 %6086
  %v6088 = vsel %vm146, %v6075, 0.0
  %6089 = vadd.xlane.f32.xlu0 %v6088
  %v6090 = vpop.xlane.xlu0 %6089
  %v6091 = vsel %vm146, %v6076, 0.0
  %6092 = vadd.xlane.f32.xlu0 %v6091
  %v6093 = vpop.xlane.xlu0 %6092
  %v6094 = vsel %vm146, %v6077, 0.0
  %6095 = vadd.xlane.f32.xlu0 %v6094
  %v6096 = vpop.xlane.xlu0 %6095
  %v6097 = vmul.f32 %v6084, %v1198
  %v6098 = vmul.f32 %v6087, %v1198
  %v6099 = vmul.f32 %v6090, %v1198
  %v6100 = vmul.f32 %v6093, %v1198
  %v6101 = vmul.f32 %v6096, %v1198
  %v6102 = vsub.f32 %v6073, %v6097
  %v6103 = vsub.f32 %v6074, %v6098
  %v6104 = vsub.f32 %v6075, %v6099
  %v6105 = vsub.f32 %v6076, %v6100
  %v6106 = vsub.f32 %v6077, %v6101
  %v6107 = vmul.f32 %v6102, %v6102
  %v6108 = vmul.f32 %v6103, %v6103
  %v6109 = vmul.f32 %v6104, %v6104
  %v6110 = vmul.f32 %v6105, %v6105
  %v6111 = vmul.f32 %v6106, %v6106
  %v6112 = vsel %vm146, %v6107, 0.0
  %6113 = vadd.xlane.f32.xlu0 %v6112
  %v6114 = vpop.xlane.xlu0 %6113
  %v6115 = vsel %vm146, %v6108, 0.0
  %6116 = vadd.xlane.f32.xlu0 %v6115
  %v6117 = vpop.xlane.xlu0 %6116
  %v6118 = vsel %vm146, %v6109, 0.0
  %6119 = vadd.xlane.f32.xlu0 %v6118
  %v6120 = vpop.xlane.xlu0 %6119
  %v6121 = vsel %vm146, %v6110, 0.0
  %6122 = vadd.xlane.f32.xlu0 %v6121
  %v6123 = vpop.xlane.xlu0 %6122
  %v6124 = vsel %vm146, %v6111, 0.0
  %6125 = vadd.xlane.f32.xlu0 %v6124
  %v6126 = vpop.xlane.xlu0 %6125
  %v6127 = vmul.f32 %v6114, %v1198
  %v6128 = vmul.f32 %v6117, %v1198
  %v6129 = vmul.f32 %v6120, %v1198
  %v6130 = vmul.f32 %v6123, %v1198
  %v6131 = vmul.f32 %v6126, %v1198
  %v6132 = vadd.f32 %v6127, 1e-05
  %v6133 = vadd.f32 %v6128, 1e-05
  %v6134 = vadd.f32 %v6129, 1e-05
  %v6135 = vadd.f32 %v6130, 1e-05
  %v6136 = vadd.f32 %v6131, 1e-05
  %v6137 = vrsqrt.pop %v6132
  %v6138 = vrsqrt.pop %v6133
  %v6139 = vrsqrt.pop %v6134
  %v6140 = vrsqrt.pop %v6135
  %v6141 = vrsqrt.pop %v6136
  %v6142 = vmul.f32 %v6102, %v6137
  %v6143 = vmul.f32 %v6103, %v6138
  %v6144 = vmul.f32 %v6104, %v6139
  %v6145 = vmul.f32 %v6105, %v6140
  %v6146 = vmul.f32 %v6106, %v6141
  %v6148 = vlaneseq
  %v6149 = vshrl.u32 %v6148, 7
  %v6150 = vsub.s32 0, %v6149
  %v6151 = vrot.slane %v6079, %v6150
  %v6153 = vmul.f32 %v6142, %v6151
  %v6154 = vmul.f32 %v6143, %v6151
  %v6155 = vmul.f32 %v6144, %v6151
  %v6156 = vmul.f32 %v6145, %v6151
  %v6157 = vmul.f32 %v6146, %v6151
  %v6159 = vlaneseq
  %v6160 = vshrl.u32 %v6159, 7
  %v6161 = vsub.s32 0, %v6160
  %v6162 = vrot.slane %v6081, %v6161
  %v6164 = vadd.f32 %v6153, %v6162
  %v6165 = vadd.f32 %v6154, %v6162
  %v6166 = vadd.f32 %v6155, %v6162
  %v6167 = vadd.f32 %v6156, %v6162
  %v6168 = vadd.f32 %v6157, %v6162
  %s6169 = scalar_lea.vmem %s1, 576
  %v6170 = vld [vmem:[%s6169] sm:$0xff]
  %v6171 = vld [vmem:[%s6169 + $0x8] sm:$0xff]
  %v6172 = vld [vmem:[%s6169 + $0x10] sm:$0xff]
  %v6173 = vld [vmem:[%s6169 + $0x18] sm:$0xff]
  %v6174 = vld [vmem:[%s6169 + $0x20] sm:$0xff]
  %v6175 = vld [vmem:[%s6169 + $0x28] sm:$0xff]
  %v6176 = vld [vmem:[%s6169 + $0x30] sm:$0xff]
  %v6177 = vld [vmem:[%s6169 + $0x38] sm:$0xff]
  %v6178 = vld [vmem:[%s6169 + $0x40] sm:$0xff]
  %v6179 = vld [vmem:[%s6169 + $0x48] sm:$0xff]
  %v6180 = vld [vmem:[%s6169 + $0x50] sm:$0xff]
  %v6181 = vld [vmem:[%s6169 + $0x58] sm:$0xff]
  %v6182 = vld [vmem:[%s6169 + $0x60] sm:$0xf]
  %v6183 = vld [vmem:[%s6169 + $0x68] sm:$0xf]
  %v6184 = vld [vmem:[%s6169 + $0x70] sm:$0xf]
  %v6185 = vld [vmem:[%s6169 + $0x78] sm:$0xf]
  %v6186 = vld [vmem:[%s6169 + $0x80] sm:$0xf]
  %v6187 = vld [vmem:[%s6169 + $0x88] sm:$0xf]
  %s6188 = scalar_lea.vmem %s2, 24
  %v6189 = vld [vmem:[%s6188] sm:$0x3f]
  %v6191 = vlaneseq
  %v6192 = vshrl.u32 %v6191, 7
  %v6193 = vsub.s32 0, %v6192
  %v6194 = vrot.slane %v6189, %v6193
  %v6195 = vlaneseq
  %v6196 = vshrl.u32 %v6195, 7
  %v6197 = vsub.s32 1, %v6196
  %v6198 = vrot.slane %v6189, %v6197
  %v6199 = vlaneseq
  %v6200 = vshrl.u32 %v6199, 7
  %v6201 = vsub.s32 2, %v6200
  %v6202 = vrot.slane %v6189, %v6201
  %v6203 = vlaneseq
  %v6204 = vshrl.u32 %v6203, 7
  %v6205 = vsub.s32 3, %v6204
  %v6206 = vrot.slane %v6189, %v6205
  %v6207 = vlaneseq
  %v6208 = vshrl.u32 %v6207, 7
  %v6209 = vsub.s32 4, %v6208
  %v6210 = vrot.slane %v6189, %v6209
  %v6211 = vlaneseq
  %v6212 = vshrl.u32 %v6211, 7
  %v6213 = vsub.s32 5, %v6212
  %v6214 = vrot.slane %v6189, %v6213
  %v6222 = vsel %vm146, %v6164, 0
  %v6225 = vsel %vm146, %v6165, 0
  %v6228 = vsel %vm146, %v6166, 0
  %v6231 = vsel %vm146, %v6167, 0
  %v6234 = vsel %vm146, %v6168, 0
  %v6237 = vsel %vm162, %v6182, 0
  %v6240 = vsel %vm162, %v6183, 0
  %v6243 = vsel %vm162, %v6184, 0
  %v6246 = vsel %vm162, %v6185, 0
  %v6249 = vsel %vm162, %v6186, 0
  %v6252 = vsel %vm162, %v6187, 0
  %6254 = vmatprep.subr.mxu0 %v6171
  %6255 = vmatpush1.msra.mxu0 %v6170
  %6256 = vmatprep.subr.mxu0 %v6177
  %6257 = vmatpush1.msra.mxu0 %v6176
  %6258 = vmatprep.subr.mxu0 %v6240
  %6259 = vmatpush1.msra.mxu0 %v6237
  %6260 = vmatprep.subr.mxu0 0.0
  %6261 = vmatpush1.msra.mxu0 0.0
  %6262 = vmatprep.subr.mxu0 0.0
  %6263 = vmatpush1.msra.mxu0 0.0
  %6264 = vmatprep.subr.mxu0 0.0
  %6265 = vmatpush1.msra.mxu0 0.0
  %6266 = vmatprep.subr.mxu0 0.0
  %6267 = vmatpush1.msra.mxu0 0.0
  %6268 = vmatprep.subr.mxu0 0.0
  %6269 = vmatpush1.msra.mxu0 0.0
  %6270 = vmatprep.subr.mxu0 0.0
  %6271 = vmatpush1.msra.mxu0 0.0
  %6272 = vmatprep.subr.mxu0 0.0
  %6273 = vmatpush1.msra.mxu0 0.0
  %6274 = vmatprep.subr.mxu0 0.0
  %6275 = vmatpush1.msra.mxu0 0.0
  %6276 = vmatprep.subr.mxu0 0.0
  %6277 = vmatpush1.msra.mxu0 0.0
  %6278 = vmatprep.subr.mxu0 0.0
  %6279 = vmatpush1.msra.mxu0 0.0
  %6280 = vmatprep.subr.mxu0 0.0
  %6281 = vmatpush1.msra.mxu0 0.0
  %6282 = vmatprep.subr.mxu0 0.0
  %6283 = vmatpush1.msra.mxu0 0.0
  %6284 = vmatprep.subr.mxu0 0.0
  %6285 = vmatpush1.msra.mxu0 0.0
  %6286 = vmatprep.subr.mxu0 0.0
  %6287 = vmatpush1.msra.mxu0 0.0
  %6288 = vmatprep.subr.mxu0 0.0
  %6289 = vmatpush1.msra.mxu0 0.0
  %6290 = vmatprep.subr.mxu0 0.0
  %6291 = vmatpush1.msra.mxu0 0.0
  %6292 = vmatprep.subr.mxu0 0.0
  %6293 = vmatpush1.msra.mxu0 0.0
  %6294 = vmatprep.subr.mxu0 0.0
  %6295 = vmatpush1.msra.mxu0 0.0
  %6296 = vmatprep.subr.mxu0 0.0
  %6297 = vmatpush1.msra.mxu0 0.0
  %6298 = vmatprep.subr.mxu0 0.0
  %6299 = vmatpush1.msra.mxu0 0.0
  %6300 = vmatprep.subr.mxu0 0.0
  %6301 = vmatpush1.msra.mxu0 0.0
  %6302 = vmatprep.subr.mxu0 0.0
  %6303 = vmatpush1.msra.mxu0 0.0
  %6304 = vmatprep.subr.mxu0 0.0
  %6305 = vmatpush1.msra.mxu0 0.0
  %6306 = vmatprep.subr.mxu0 0.0
  %6307 = vmatpush1.msra.mxu0 0.0
  %6308 = vmatprep.subr.mxu0 0.0
  %6309 = vmatpush1.msra.mxu0 0.0
  %6310 = vmatprep.subr.mxu0 0.0
  %6311 = vmatpush1.msra.mxu0 0.0
  %6312 = vmatprep.subr.mxu0 0.0
  %6313 = vmatpush1.msra.mxu0 0.0
  %6314 = vmatprep.subr.mxu0 0.0
  %6315 = vmatpush1.msra.mxu0 0.0
  %6316 = vmatprep.subr.mxu0 0.0
  %6317 = vmatpush1.msra.mxu0 0.0
  %6318 = vmatprep.mubr.f32.mxu0 0.0
  %6319 = vmatmul.mubr.f32.gmra.mrb[0].mxu0 %v6222
  %v6320 = vpop.f32.mrb[0].mxu0
  %v6321 = vadd.f32 %v6194, %v6320
  %v6322 = vpop.f32.mrb[0].mxu0
  %v6323 = vadd.f32 %v6198, %v6322
  %6324 = vmatprep.mubr.f32.mxu0 0.0
  %6325 = vmatmul.mubr.f32.gmra.mrb[0].mxu0 %v6225
  %v6326 = vpop.f32.mrb[0].mxu0
  %v6327 = vadd.f32 %v6194, %v6326
  %v6328 = vpop.f32.mrb[0].mxu0
  %v6329 = vadd.f32 %v6198, %v6328
  %6330 = vmatprep.mubr.f32.mxu0 0.0
  %6331 = vmatmul.mubr.f32.gmra.mrb[0].mxu0 %v6228
  %v6332 = vpop.f32.mrb[0].mxu0
  %v6333 = vadd.f32 %v6194, %v6332
  %v6334 = vpop.f32.mrb[0].mxu0
  %v6335 = vadd.f32 %v6198, %v6334
  %6336 = vmatprep.mubr.f32.mxu0 0.0
  %6337 = vmatmul.mubr.f32.gmra.mrb[0].mxu0 %v6231
  %v6338 = vpop.f32.mrb[0].mxu0
  %v6339 = vadd.f32 %v6194, %v6338
  %v6340 = vpop.f32.mrb[0].mxu0
  %v6341 = vadd.f32 %v6198, %v6340
  %6342 = vmatprep.mubr.f32.mxu0 0.0
  %6343 = vmatmul.mubr.f32.gmra.mrb[0].mxu0 %v6234
  %v6344 = vpop.f32.mrb[0].mxu0
  %v6345 = vadd.f32 %v6194, %v6344
  %v6346 = vpop.f32.mrb[0].mxu0
  %v6347 = vadd.f32 %v6198, %v6346
  %6348 = vdwg.mxu0
  %6349 = vmatprep.subr.mxu0 %v6173
  %6350 = vmatpush1.msra.mxu0 %v6172
  %6351 = vmatprep.subr.mxu0 %v6179
  %6352 = vmatpush1.msra.mxu0 %v6178
  %6353 = vmatprep.subr.mxu0 %v6246
  %6354 = vmatpush1.msra.mxu0 %v6243
  %6355 = vmatprep.subr.mxu0 0.0
  %6356 = vmatpush1.msra.mxu0 0.0
  %6357 = vmatprep.subr.mxu0 0.0
  %6358 = vmatpush1.msra.mxu0 0.0
  %6359 = vmatprep.subr.mxu0 0.0
  %6360 = vmatpush1.msra.mxu0 0.0
  %6361 = vmatprep.subr.mxu0 0.0
  %6362 = vmatpush1.msra.mxu0 0.0
  %6363 = vmatprep.subr.mxu0 0.0
  %6364 = vmatpush1.msra.mxu0 0.0
  %6365 = vmatprep.subr.mxu0 0.0
  %6366 = vmatpush1.msra.mxu0 0.0
  %6367 = vmatprep.subr.mxu0 0.0
  %6368 = vmatpush1.msra.mxu0 0.0
  %6369 = vmatprep.subr.mxu0 0.0
  %6370 = vmatpush1.msra.mxu0 0.0
  %6371 = vmatprep.subr.mxu0 0.0
  %6372 = vmatpush1.msra.mxu0 0.0
  %6373 = vmatprep.subr.mxu0 0.0
  %6374 = vmatpush1.msra.mxu0 0.0
  %6375 = vmatprep.subr.mxu0 0.0
  %6376 = vmatpush1.msra.mxu0 0.0
  %6377 = vmatprep.subr.mxu0 0.0
  %6378 = vmatpush1.msra.mxu0 0.0
  %6379 = vmatprep.subr.mxu0 0.0
  %6380 = vmatpush1.msra.mxu0 0.0
  %6381 = vmatprep.subr.mxu0 0.0
  %6382 = vmatpush1.msra.mxu0 0.0
  %6383 = vmatprep.subr.mxu0 0.0
  %6384 = vmatpush1.msra.mxu0 0.0
  %6385 = vmatprep.subr.mxu0 0.0
  %6386 = vmatpush1.msra.mxu0 0.0
  %6387 = vmatprep.subr.mxu0 0.0
  %6388 = vmatpush1.msra.mxu0 0.0
  %6389 = vmatprep.subr.mxu0 0.0
  %6390 = vmatpush1.msra.mxu0 0.0
  %6391 = vmatprep.subr.mxu0 0.0
  %6392 = vmatpush1.msra.mxu0 0.0
  %6393 = vmatprep.subr.mxu0 0.0
  %6394 = vmatpush1.msra.mxu0 0.0
  %6395 = vmatprep.subr.mxu0 0.0
  %6396 = vmatpush1.msra.mxu0 0.0
  %6397 = vmatprep.subr.mxu0 0.0
  %6398 = vmatpush1.msra.mxu0 0.0
  %6399 = vmatprep.subr.mxu0 0.0
  %6400 = vmatpush1.msra.mxu0 0.0
  %6401 = vmatprep.subr.mxu0 0.0
  %6402 = vmatpush1.msra.mxu0 0.0
  %6403 = vmatprep.subr.mxu0 0.0
  %6404 = vmatpush1.msra.mxu0 0.0
  %6405 = vmatprep.subr.mxu0 0.0
  %6406 = vmatpush1.msra.mxu0 0.0
  %6407 = vmatprep.subr.mxu0 0.0
  %6408 = vmatpush1.msra.mxu0 0.0
  %6409 = vmatprep.subr.mxu0 0.0
  %6410 = vmatpush1.msra.mxu0 0.0
  %6411 = vmatprep.subr.mxu0 0.0
  %6412 = vmatpush1.msra.mxu0 0.0
  %6413 = vmatprep.mubr.f32.mxu0 0.0
  %6414 = vmatmul.mubr.f32.gmra.mrb[0].mxu0 %v6222
  %v6415 = vpop.f32.mrb[0].mxu0
  %v6416 = vadd.f32 %v6202, %v6415
  %v6417 = vpop.f32.mrb[0].mxu0
  %v6418 = vadd.f32 %v6206, %v6417
  %6419 = vmatprep.mubr.f32.mxu0 0.0
  %6420 = vmatmul.mubr.f32.gmra.mrb[0].mxu0 %v6225
  %v6421 = vpop.f32.mrb[0].mxu0
  %v6422 = vadd.f32 %v6202, %v6421
  %v6423 = vpop.f32.mrb[0].mxu0
  %v6424 = vadd.f32 %v6206, %v6423
  %6425 = vmatprep.mubr.f32.mxu0 0.0
  %6426 = vmatmul.mubr.f32.gmra.mrb[0].mxu0 %v6228
  %v6427 = vpop.f32.mrb[0].mxu0
  %v6428 = vadd.f32 %v6202, %v6427
  %v6429 = vpop.f32.mrb[0].mxu0
  %v6430 = vadd.f32 %v6206, %v6429
  %6431 = vmatprep.mubr.f32.mxu0 0.0
  %6432 = vmatmul.mubr.f32.gmra.mrb[0].mxu0 %v6231
  %v6433 = vpop.f32.mrb[0].mxu0
  %v6434 = vadd.f32 %v6202, %v6433
  %v6435 = vpop.f32.mrb[0].mxu0
  %v6436 = vadd.f32 %v6206, %v6435
  %6437 = vmatprep.mubr.f32.mxu0 0.0
  %6438 = vmatmul.mubr.f32.gmra.mrb[0].mxu0 %v6234
  %v6439 = vpop.f32.mrb[0].mxu0
  %v6440 = vadd.f32 %v6202, %v6439
  %v6441 = vpop.f32.mrb[0].mxu0
  %v6442 = vadd.f32 %v6206, %v6441
  %6443 = vdwg.mxu0
  %6444 = vmatprep.subr.mxu0 %v6175
  %6445 = vmatpush1.msra.mxu0 %v6174
  %6446 = vmatprep.subr.mxu0 %v6181
  %6447 = vmatpush1.msra.mxu0 %v6180
  %6448 = vmatprep.subr.mxu0 %v6252
  %6449 = vmatpush1.msra.mxu0 %v6249
  %6450 = vmatprep.subr.mxu0 0.0
  %6451 = vmatpush1.msra.mxu0 0.0
  %6452 = vmatprep.subr.mxu0 0.0
  %6453 = vmatpush1.msra.mxu0 0.0
  %6454 = vmatprep.subr.mxu0 0.0
  %6455 = vmatpush1.msra.mxu0 0.0
  %6456 = vmatprep.subr.mxu0 0.0
  %6457 = vmatpush1.msra.mxu0 0.0
  %6458 = vmatprep.subr.mxu0 0.0
  %6459 = vmatpush1.msra.mxu0 0.0
  %6460 = vmatprep.subr.mxu0 0.0
  %6461 = vmatpush1.msra.mxu0 0.0
  %6462 = vmatprep.subr.mxu0 0.0
  %6463 = vmatpush1.msra.mxu0 0.0
  %6464 = vmatprep.subr.mxu0 0.0
  %6465 = vmatpush1.msra.mxu0 0.0
  %6466 = vmatprep.subr.mxu0 0.0
  %6467 = vmatpush1.msra.mxu0 0.0
  %6468 = vmatprep.subr.mxu0 0.0
  %6469 = vmatpush1.msra.mxu0 0.0
  %6470 = vmatprep.subr.mxu0 0.0
  %6471 = vmatpush1.msra.mxu0 0.0
  %6472 = vmatprep.subr.mxu0 0.0
  %6473 = vmatpush1.msra.mxu0 0.0
  %6474 = vmatprep.subr.mxu0 0.0
  %6475 = vmatpush1.msra.mxu0 0.0
  %6476 = vmatprep.subr.mxu0 0.0
  %6477 = vmatpush1.msra.mxu0 0.0
  %6478 = vmatprep.subr.mxu0 0.0
  %6479 = vmatpush1.msra.mxu0 0.0
  %6480 = vmatprep.subr.mxu0 0.0
  %6481 = vmatpush1.msra.mxu0 0.0
  %6482 = vmatprep.subr.mxu0 0.0
  %6483 = vmatpush1.msra.mxu0 0.0
  %6484 = vmatprep.subr.mxu0 0.0
  %6485 = vmatpush1.msra.mxu0 0.0
  %6486 = vmatprep.subr.mxu0 0.0
  %6487 = vmatpush1.msra.mxu0 0.0
  %6488 = vmatprep.subr.mxu0 0.0
  %6489 = vmatpush1.msra.mxu0 0.0
  %6490 = vmatprep.subr.mxu0 0.0
  %6491 = vmatpush1.msra.mxu0 0.0
  %6492 = vmatprep.subr.mxu0 0.0
  %6493 = vmatpush1.msra.mxu0 0.0
  %6494 = vmatprep.subr.mxu0 0.0
  %6495 = vmatpush1.msra.mxu0 0.0
  %6496 = vmatprep.subr.mxu0 0.0
  %6497 = vmatpush1.msra.mxu0 0.0
  %6498 = vmatprep.subr.mxu0 0.0
  %6499 = vmatpush1.msra.mxu0 0.0
  %6500 = vmatprep.subr.mxu0 0.0
  %6501 = vmatpush1.msra.mxu0 0.0
  %6502 = vmatprep.subr.mxu0 0.0
  %6503 = vmatpush1.msra.mxu0 0.0
  %6504 = vmatprep.subr.mxu0 0.0
  %6505 = vmatpush1.msra.mxu0 0.0
  %6506 = vmatprep.subr.mxu0 0.0
  %6507 = vmatpush1.msra.mxu0 0.0
  %6508 = vmatprep.mubr.f32.mxu0 0.0
  %6509 = vmatmul.mubr.f32.gmra.mrb[0].mxu0 %v6222
  %v6510 = vpop.f32.mrb[0].mxu0
  %v6511 = vadd.f32 %v6210, %v6510
  %v6512 = vpop.f32.mrb[0].mxu0
  %v6513 = vadd.f32 %v6214, %v6512
  %6514 = vmatprep.mubr.f32.mxu0 0.0
  %6515 = vmatmul.mubr.f32.gmra.mrb[0].mxu0 %v6225
  %v6516 = vpop.f32.mrb[0].mxu0
  %v6517 = vadd.f32 %v6210, %v6516
  %v6518 = vpop.f32.mrb[0].mxu0
  %v6519 = vadd.f32 %v6214, %v6518
  %6520 = vmatprep.mubr.f32.mxu0 0.0
  %6521 = vmatmul.mubr.f32.gmra.mrb[0].mxu0 %v6228
  %v6522 = vpop.f32.mrb[0].mxu0
  %v6523 = vadd.f32 %v6210, %v6522
  %v6524 = vpop.f32.mrb[0].mxu0
  %v6525 = vadd.f32 %v6214, %v6524
  %6526 = vmatprep.mubr.f32.mxu0 0.0
  %6527 = vmatmul.mubr.f32.gmra.mrb[0].mxu0 %v6231
  %v6528 = vpop.f32.mrb[0].mxu0
  %v6529 = vadd.f32 %v6210, %v6528
  %v6530 = vpop.f32.mrb[0].mxu0
  %v6531 = vadd.f32 %v6214, %v6530
  %6532 = vmatprep.mubr.f32.mxu0 0.0
  %6533 = vmatmul.mubr.f32.gmra.mrb[0].mxu0 %v6234
  %v6534 = vpop.f32.mrb[0].mxu0
  %v6535 = vadd.f32 %v6210, %v6534
  %v6536 = vpop.f32.mrb[0].mxu0
  %v6537 = vadd.f32 %v6214, %v6536
  %6538 = vdwg.mxu0
  %6539 = vst [vmem:[#allocation2] sm:$0xff] %v6321
  %6540 = vst [vmem:[#allocation2 + $0x8] sm:$0xff] %v6323
  %6541 = vst [vmem:[#allocation2 + $0x10] sm:$0xff] %v6416
  %6542 = vst [vmem:[#allocation2 + $0x18] sm:$0xff] %v6418
  %6543 = vst [vmem:[#allocation2 + $0x20] sm:$0xff] %v6511
  %6544 = vst [vmem:[#allocation2 + $0x28] sm:$0xff] %v6513
  %6545 = vst [vmem:[#allocation2 + $0x30] sm:$0xff] %v6327
  %6546 = vst [vmem:[#allocation2 + $0x38] sm:$0xff] %v6329
  %6547 = vst [vmem:[#allocation2 + $0x40] sm:$0xff] %v6422
  %6548 = vst [vmem:[#allocation2 + $0x48] sm:$0xff] %v6424
  %6549 = vst [vmem:[#allocation2 + $0x50] sm:$0xff] %v6517
  %6550 = vst [vmem:[#allocation2 + $0x58] sm:$0xff] %v6519
  %6551 = vst [vmem:[#allocation2 + $0x60] sm:$0xff] %v6333
  %6552 = vst [vmem:[#allocation2 + $0x68] sm:$0xff] %v6335
  %6553 = vst [vmem:[#allocation2 + $0x70] sm:$0xff] %v6428
  %6554 = vst [vmem:[#allocation2 + $0x78] sm:$0xff] %v6430
  %6555 = vst [vmem:[#allocation2 + $0x80] sm:$0xff] %v6523
  %6556 = vst [vmem:[#allocation2 + $0x88] sm:$0xff] %v6525
  %6557 = vst [vmem:[#allocation2 + $0x90] sm:$0xff] %v6339
  %6558 = vst [vmem:[#allocation2 + $0x98] sm:$0xff] %v6341
  %6559 = vst [vmem:[#allocation2 + $0xa0] sm:$0xff] %v6434
  %6560 = vst [vmem:[#allocation2 + $0xa8] sm:$0xff] %v6436
  %6561 = vst [vmem:[#allocation2 + $0xb0] sm:$0xff] %v6529
  %6562 = vst [vmem:[#allocation2 + $0xb8] sm:$0xff] %v6531
  %6563 = vst [vmem:[#allocation2 + $0xc0] sm:$0xff] %v6345
  %6564 = vst [vmem:[#allocation2 + $0xc8] sm:$0xff] %v6347
  %6565 = vst [vmem:[#allocation2 + $0xd0] sm:$0xff] %v6440
  %6566 = vst [vmem:[#allocation2 + $0xd8] sm:$0xff] %v6442
  %6567 = vst [vmem:[#allocation2 + $0xe0] sm:$0xff] %v6535
  %6568 = vst [vmem:[#allocation2 + $0xe8] sm:$0xff] %v6537
  %v6569 = vld [vmem:[#allocation2] sm:$0xff]
  %v6570 = vld [vmem:[#allocation2 + $0x30] sm:$0xff]
  %v6571 = vld [vmem:[#allocation2 + $0x60] sm:$0xff]
  %v6572 = vld [vmem:[#allocation2 + $0x90] sm:$0xff]
  %v6573 = vld [vmem:[#allocation2 + $0xc0] sm:$0xff]
  %v6574 = vld [vmem:[#allocation2 + $0x10] sm:$0xff]
  %v6575 = vld [vmem:[#allocation2 + $0x40] sm:$0xff]
  %v6576 = vld [vmem:[#allocation2 + $0x70] sm:$0xff]
  %v6577 = vld [vmem:[#allocation2 + $0xa0] sm:$0xff]
  %v6578 = vld [vmem:[#allocation2 + $0xd0] sm:$0xff]
  %v6579 = vld [vmem:[#allocation2 + $0x20] sm:$0xff]
  %v6580 = vld [vmem:[#allocation2 + $0x50] sm:$0xff]
  %v6581 = vld [vmem:[#allocation2 + $0x80] sm:$0xff]
  %v6582 = vld [vmem:[#allocation2 + $0xb0] sm:$0xff]
  %v6583 = vld [vmem:[#allocation2 + $0xe0] sm:$0xff]
  %6584 = vmatprep.subr.mxu0 0.0
  %6585 = vmatpush1.xpose.msra.mxu0 %v6574
  %6586 = vmatprep.subr.mxu0 0.0
  %6587 = vmatpush1.xpose.msra.mxu0 %v6575
  %6588 = vmatprep.subr.mxu0 0.0
  %6589 = vmatpush1.xpose.msra.mxu0 %v6576
  %6590 = vmatprep.subr.mxu0 0.0
  %6591 = vmatpush1.xpose.msra.mxu0 %v6577
  %6592 = vmatprep.subr.mxu0 0.0
  %6593 = vmatpush1.xpose.msra.mxu0 %v6578
  %6594 = vmatprep.subr.mxu0 0.0
  %6595 = vmatpush1.xpose.msra.mxu0 0.0
  %6596 = vmatprep.subr.mxu0 0.0
  %6597 = vmatpush1.xpose.msra.mxu0 0.0
  %6598 = vmatprep.subr.mxu0 0.0
  %6599 = vmatpush1.xpose.msra.mxu0 0.0
  %6600 = vmatprep.subr.mxu0 0.0
  %6601 = vmatpush1.xpose.msra.mxu0 0.0
  %6602 = vmatprep.subr.mxu0 0.0
  %6603 = vmatpush1.xpose.msra.mxu0 0.0
  %6604 = vmatprep.subr.mxu0 0.0
  %6605 = vmatpush1.xpose.msra.mxu0 0.0
  %6606 = vmatprep.subr.mxu0 0.0
  %6607 = vmatpush1.xpose.msra.mxu0 0.0
  %6608 = vmatprep.subr.mxu0 0.0
  %6609 = vmatpush1.xpose.msra.mxu0 0.0
  %6610 = vmatprep.subr.mxu0 0.0
  %6611 = vmatpush1.xpose.msra.mxu0 0.0
  %6612 = vmatprep.subr.mxu0 0.0
  %6613 = vmatpush1.xpose.msra.mxu0 0.0
  %6614 = vmatprep.subr.mxu0 0.0
  %6615 = vmatpush1.xpose.msra.mxu0 0.0
  %6616 = vmatprep.subr.mxu0 0.0
  %6617 = vmatpush1.xpose.msra.mxu0 0.0
  %6618 = vmatprep.subr.mxu0 0.0
  %6619 = vmatpush1.xpose.msra.mxu0 0.0
  %6620 = vmatprep.subr.mxu0 0.0
  %6621 = vmatpush1.xpose.msra.mxu0 0.0
  %6622 = vmatprep.subr.mxu0 0.0
  %6623 = vmatpush1.xpose.msra.mxu0 0.0
  %6624 = vmatprep.subr.mxu0 0.0
  %6625 = vmatpush1.xpose.msra.mxu0 0.0
  %6626 = vmatprep.subr.mxu0 0.0
  %6627 = vmatpush1.xpose.msra.mxu0 0.0
  %6628 = vmatprep.subr.mxu0 0.0
  %6629 = vmatpush1.xpose.msra.mxu0 0.0
  %6630 = vmatprep.subr.mxu0 0.0
  %6631 = vmatpush1.xpose.msra.mxu0 0.0
  %6632 = vmatprep.subr.mxu0 0.0
  %6633 = vmatpush1.xpose.msra.mxu0 0.0
  %6634 = vmatprep.subr.mxu0 0.0
  %6635 = vmatpush1.xpose.msra.mxu0 0.0
  %6636 = vmatprep.subr.mxu0 0.0
  %6637 = vmatpush1.xpose.msra.mxu0 0.0
  %6638 = vmatprep.subr.mxu0 0.0
  %6639 = vmatpush1.xpose.msra.mxu0 0.0
  %6640 = vmatprep.subr.mxu0 0.0
  %6641 = vmatpush1.xpose.msra.mxu0 0.0
  %6642 = vmatprep.subr.mxu0 0.0
  %6643 = vmatpush1.xpose.msra.mxu0 0.0
  %6644 = vmatprep.subr.mxu0 0.0
  %6645 = vmatpush1.xpose.msra.mxu0 0.0
  %6646 = vmatprep.subr.mxu0 0.0
  %6647 = vmatpush1.xpose.msra.mxu0 0.0
  %6648 = vmatprep.mubr.f32.mxu0 0.0
  %6649 = vmatmul.mubr.f32.gmra.mrb[0].mxu0 %v6569
  %v6650 = vpop.f32.mrb[0].mxu0
  %v6651 = vadd.f32 %v91, %v6650
  %v6652 = vpop.f32.mrb[0].mxu0
  %6653 = vmatprep.mubr.f32.mxu0 0.0
  %6654 = vmatmul.mubr.f32.gmra.mrb[0].mxu0 %v6570
  %v6655 = vpop.f32.mrb[0].mxu0
  %v6656 = vadd.f32 %v92, %v6655
  %v6657 = vpop.f32.mrb[0].mxu0
  %6658 = vmatprep.mubr.f32.mxu0 0.0
  %6659 = vmatmul.mubr.f32.gmra.mrb[0].mxu0 %v6571
  %v6660 = vpop.f32.mrb[0].mxu0
  %v6661 = vadd.f32 %v93, %v6660
  %v6662 = vpop.f32.mrb[0].mxu0
  %6663 = vmatprep.mubr.f32.mxu0 0.0
  %6664 = vmatmul.mubr.f32.gmra.mrb[0].mxu0 %v6572
  %v6665 = vpop.f32.mrb[0].mxu0
  %v6666 = vadd.f32 %v94, %v6665
  %v6667 = vpop.f32.mrb[0].mxu0
  %6668 = vmatprep.mubr.f32.mxu0 0.0
  %6669 = vmatmul.mubr.f32.gmra.mrb[0].mxu0 %v6573
  %v6670 = vpop.f32.mrb[0].mxu0
  %v6671 = vadd.f32 %v95, %v6670
  %v6672 = vpop.f32.mrb[0].mxu0
  %6673 = vdwg.mxu0
  %v6674 = vsel %vm601, %v6651, -inf
  %6675 = vmax.xlane.f32.xlu0 %v6674
  %v6676 = vpop.xlane.xlu0 %6675
  %v6677 = vsel %vm601, %v6656, -inf
  %6678 = vmax.xlane.f32.xlu0 %v6677
  %v6679 = vpop.xlane.xlu0 %6678
  %v6680 = vsel %vm601, %v6661, -inf
  %6681 = vmax.xlane.f32.xlu0 %v6680
  %v6682 = vpop.xlane.xlu0 %6681
  %v6683 = vsel %vm601, %v6666, -inf
  %6684 = vmax.xlane.f32.xlu0 %v6683
  %v6685 = vpop.xlane.xlu0 %6684
  %v6686 = vsel %vm601, %v6671, -inf
  %6687 = vmax.xlane.f32.xlu0 %v6686
  %v6688 = vpop.xlane.xlu0 %6687
  %v6689 = vsub.f32 %v6651, %v6676
  %v6690 = vsub.f32 %v6656, %v6679
  %v6691 = vsub.f32 %v6661, %v6682
  %v6692 = vsub.f32 %v6666, %v6685
  %v6693 = vsub.f32 %v6671, %v6688
  %v6694 = vmul.f32 %v6689, 1.442695
  %v6695 = vpow.pop %v6694
  %v6696 = vmul.f32 %v6690, 1.442695
  %v6697 = vpow.pop %v6696
  %v6698 = vmul.f32 %v6691, 1.442695
  %v6699 = vpow.pop %v6698
  %v6700 = vmul.f32 %v6692, 1.442695
  %v6701 = vpow.pop %v6700
  %v6702 = vmul.f32 %v6693, 1.442695
  %v6703 = vpow.pop %v6702
  %v6704 = vsel %vm601, %v6695, 0.0
  %6705 = vadd.xlane.f32.xlu0 %v6704
  %v6706 = vpop.xlane.xlu0 %6705
  %v6707 = vsel %vm601, %v6697, 0.0
  %6708 = vadd.xlane.f32.xlu0 %v6707
  %v6709 = vpop.xlane.xlu0 %6708
  %v6710 = vsel %vm601, %v6699, 0.0
  %6711 = vadd.xlane.f32.xlu0 %v6710
  %v6712 = vpop.xlane.xlu0 %6711
  %v6713 = vsel %vm601, %v6701, 0.0
  %6714 = vadd.xlane.f32.xlu0 %v6713
  %v6715 = vpop.xlane.xlu0 %6714
  %v6716 = vsel %vm601, %v6703, 0.0
  %6717 = vadd.xlane.f32.xlu0 %v6716
  %v6718 = vpop.xlane.xlu0 %6717
  %v6719 = vrcp.pop %v6706
  %v6720 = vrcp.pop %v6709
  %v6721 = vrcp.pop %v6712
  %v6722 = vrcp.pop %v6715
  %v6723 = vrcp.pop %v6718
  %v6724 = vmul.f32 %v6695, %v6719
  %v6725 = vmul.f32 %v6697, %v6720
  %v6726 = vmul.f32 %v6699, %v6721
  %v6727 = vmul.f32 %v6701, %v6722
  %v6728 = vmul.f32 %v6703, %v6723
  %v6730 = vsel %vm601, %v6724, 0
  %v6733 = vsel %vm601, %v6725, 0
  %v6736 = vsel %vm601, %v6726, 0
  %v6739 = vsel %vm601, %v6727, 0
  %v6742 = vsel %vm601, %v6728, 0
  %6744 = vmatprep.subr.mxu0 0.0
  %6745 = vmatpush1.msra.mxu0 %v6579
  %6746 = vmatprep.subr.mxu0 0.0
  %6747 = vmatpush1.msra.mxu0 %v6580
  %6748 = vmatprep.subr.mxu0 0.0
  %6749 = vmatpush1.msra.mxu0 %v6581
  %6750 = vmatprep.subr.mxu0 0.0
  %6751 = vmatpush1.msra.mxu0 %v6582
  %6752 = vmatprep.subr.mxu0 0.0
  %6753 = vmatpush1.msra.mxu0 %v6583
  %6754 = vmatprep.subr.mxu0 0.0
  %6755 = vmatpush1.msra.mxu0 0.0
  %6756 = vmatprep.subr.mxu0 0.0
  %6757 = vmatpush1.msra.mxu0 0.0
  %6758 = vmatprep.subr.mxu0 0.0
  %6759 = vmatpush1.msra.mxu0 0.0
  %6760 = vmatprep.subr.mxu0 0.0
  %6761 = vmatpush1.msra.mxu0 0.0
  %6762 = vmatprep.subr.mxu0 0.0
  %6763 = vmatpush1.msra.mxu0 0.0
  %6764 = vmatprep.subr.mxu0 0.0
  %6765 = vmatpush1.msra.mxu0 0.0
  %6766 = vmatprep.subr.mxu0 0.0
  %6767 = vmatpush1.msra.mxu0 0.0
  %6768 = vmatprep.subr.mxu0 0.0
  %6769 = vmatpush1.msra.mxu0 0.0
  %6770 = vmatprep.subr.mxu0 0.0
  %6771 = vmatpush1.msra.mxu0 0.0
  %6772 = vmatprep.subr.mxu0 0.0
  %6773 = vmatpush1.msra.mxu0 0.0
  %6774 = vmatprep.subr.mxu0 0.0
  %6775 = vmatpush1.msra.mxu0 0.0
  %6776 = vmatprep.subr.mxu0 0.0
  %6777 = vmatpush1.msra.mxu0 0.0
  %6778 = vmatprep.subr.mxu0 0.0
  %6779 = vmatpush1.msra.mxu0 0.0
  %6780 = vmatprep.subr.mxu0 0.0
  %6781 = vmatpush1.msra.mxu0 0.0
  %6782 = vmatprep.subr.mxu0 0.0
  %6783 = vmatpush1.msra.mxu0 0.0
  %6784 = vmatprep.subr.mxu0 0.0
  %6785 = vmatpush1.msra.mxu0 0.0
  %6786 = vmatprep.subr.mxu0 0.0
  %6787 = vmatpush1.msra.mxu0 0.0
  %6788 = vmatprep.subr.mxu0 0.0
  %6789 = vmatpush1.msra.mxu0 0.0
  %6790 = vmatprep.subr.mxu0 0.0
  %6791 = vmatpush1.msra.mxu0 0.0
  %6792 = vmatprep.subr.mxu0 0.0
  %6793 = vmatpush1.msra.mxu0 0.0
  %6794 = vmatprep.subr.mxu0 0.0
  %6795 = vmatpush1.msra.mxu0 0.0
  %6796 = vmatprep.subr.mxu0 0.0
  %6797 = vmatpush1.msra.mxu0 0.0
  %6798 = vmatprep.subr.mxu0 0.0
  %6799 = vmatpush1.msra.mxu0 0.0
  %6800 = vmatprep.subr.mxu0 0.0
  %6801 = vmatpush1.msra.mxu0 0.0
  %6802 = vmatprep.subr.mxu0 0.0
  %6803 = vmatpush1.msra.mxu0 0.0
  %6804 = vmatprep.subr.mxu0 0.0
  %6805 = vmatpush1.msra.mxu0 0.0
  %6806 = vmatprep.subr.mxu0 0.0
  %6807 = vmatpush1.msra.mxu0 0.0
  %6808 = vmatprep.mubr.f32.mxu0 0.0
  %6809 = vmatmul.mubr.f32.gmra.mrb[0].mxu0 %v6730
  %v6810 = vpop.f32.mrb[0].mxu0
  %v6811 = vadd.f32 0.0, %v6810
  %v6812 = vpop.f32.mrb[0].mxu0
  %6813 = vmatprep.mubr.f32.mxu0 0.0
  %6814 = vmatmul.mubr.f32.gmra.mrb[0].mxu0 %v6733
  %v6815 = vpop.f32.mrb[0].mxu0
  %v6816 = vadd.f32 0.0, %v6815
  %v6817 = vpop.f32.mrb[0].mxu0
  %6818 = vmatprep.mubr.f32.mxu0 0.0
  %6819 = vmatmul.mubr.f32.gmra.mrb[0].mxu0 %v6736
  %v6820 = vpop.f32.mrb[0].mxu0
  %v6821 = vadd.f32 0.0, %v6820
  %v6822 = vpop.f32.mrb[0].mxu0
  %6823 = vmatprep.mubr.f32.mxu0 0.0
  %6824 = vmatmul.mubr.f32.gmra.mrb[0].mxu0 %v6739
  %v6825 = vpop.f32.mrb[0].mxu0
  %v6826 = vadd.f32 0.0, %v6825
  %v6827 = vpop.f32.mrb[0].mxu0
  %6828 = vmatprep.mubr.f32.mxu0 0.0
  %6829 = vmatmul.mubr.f32.gmra.mrb[0].mxu0 %v6742
  %v6830 = vpop.f32.mrb[0].mxu0
  %v6831 = vadd.f32 0.0, %v6830
  %v6832 = vpop.f32.mrb[0].mxu0
  %6833 = vdwg.mxu0
  %6834 = vst [vmem:[#allocation3] sm:$0xff] %v6811
  %6835 = vst [vmem:[#allocation3 + $0x10] sm:$0xff] %v6816
  %6836 = vst [vmem:[#allocation3 + $0x20] sm:$0xff] %v6821
  %6837 = vst [vmem:[#allocation3 + $0x30] sm:$0xff] %v6826
  %6838 = vst [vmem:[#allocation3 + $0x40] sm:$0xff] %v6831
  %v6839 = vld [vmem:[#allocation2 + $0x8] sm:$0xff]
  %v6840 = vld [vmem:[#allocation2 + $0x38] sm:$0xff]
  %v6841 = vld [vmem:[#allocation2 + $0x68] sm:$0xff]
  %v6842 = vld [vmem:[#allocation2 + $0x98] sm:$0xff]
  %v6843 = vld [vmem:[#allocation2 + $0xc8] sm:$0xff]
  %v6844 = vld [vmem:[#allocation2 + $0x18] sm:$0xff]
  %v6845 = vld [vmem:[#allocation2 + $0x48] sm:$0xff]
  %v6846 = vld [vmem:[#allocation2 + $0x78] sm:$0xff]
  %v6847 = vld [vmem:[#allocation2 + $0xa8] sm:$0xff]
  %v6848 = vld [vmem:[#allocation2 + $0xd8] sm:$0xff]
  %v6849 = vld [vmem:[#allocation2 + $0x28] sm:$0xff]
  %v6850 = vld [vmem:[#allocation2 + $0x58] sm:$0xff]
  %v6851 = vld [vmem:[#allocation2 + $0x88] sm:$0xff]
  %v6852 = vld [vmem:[#allocation2 + $0xb8] sm:$0xff]
  %v6853 = vld [vmem:[#allocation2 + $0xe8] sm:$0xff]
  %6854 = vmatprep.subr.mxu0 0.0
  %6855 = vmatpush1.xpose.msra.mxu0 %v6844
  %6856 = vmatprep.subr.mxu0 0.0
  %6857 = vmatpush1.xpose.msra.mxu0 %v6845
  %6858 = vmatprep.subr.mxu0 0.0
  %6859 = vmatpush1.xpose.msra.mxu0 %v6846
  %6860 = vmatprep.subr.mxu0 0.0
  %6861 = vmatpush1.xpose.msra.mxu0 %v6847
  %6862 = vmatprep.subr.mxu0 0.0
  %6863 = vmatpush1.xpose.msra.mxu0 %v6848
  %6864 = vmatprep.subr.mxu0 0.0
  %6865 = vmatpush1.xpose.msra.mxu0 0.0
  %6866 = vmatprep.subr.mxu0 0.0
  %6867 = vmatpush1.xpose.msra.mxu0 0.0
  %6868 = vmatprep.subr.mxu0 0.0
  %6869 = vmatpush1.xpose.msra.mxu0 0.0
  %6870 = vmatprep.subr.mxu0 0.0
  %6871 = vmatpush1.xpose.msra.mxu0 0.0
  %6872 = vmatprep.subr.mxu0 0.0
  %6873 = vmatpush1.xpose.msra.mxu0 0.0
  %6874 = vmatprep.subr.mxu0 0.0
  %6875 = vmatpush1.xpose.msra.mxu0 0.0
  %6876 = vmatprep.subr.mxu0 0.0
  %6877 = vmatpush1.xpose.msra.mxu0 0.0
  %6878 = vmatprep.subr.mxu0 0.0
  %6879 = vmatpush1.xpose.msra.mxu0 0.0
  %6880 = vmatprep.subr.mxu0 0.0
  %6881 = vmatpush1.xpose.msra.mxu0 0.0
  %6882 = vmatprep.subr.mxu0 0.0
  %6883 = vmatpush1.xpose.msra.mxu0 0.0
  %6884 = vmatprep.subr.mxu0 0.0
  %6885 = vmatpush1.xpose.msra.mxu0 0.0
  %6886 = vmatprep.subr.mxu0 0.0
  %6887 = vmatpush1.xpose.msra.mxu0 0.0
  %6888 = vmatprep.subr.mxu0 0.0
  %6889 = vmatpush1.xpose.msra.mxu0 0.0
  %6890 = vmatprep.subr.mxu0 0.0
  %6891 = vmatpush1.xpose.msra.mxu0 0.0
  %6892 = vmatprep.subr.mxu0 0.0
  %6893 = vmatpush1.xpose.msra.mxu0 0.0
  %6894 = vmatprep.subr.mxu0 0.0
  %6895 = vmatpush1.xpose.msra.mxu0 0.0
  %6896 = vmatprep.subr.mxu0 0.0
  %6897 = vmatpush1.xpose.msra.mxu0 0.0
  %6898 = vmatprep.subr.mxu0 0.0
  %6899 = vmatpush1.xpose.msra.mxu0 0.0
  %6900 = vmatprep.subr.mxu0 0.0
  %6901 = vmatpush1.xpose.msra.mxu0 0.0
  %6902 = vmatprep.subr.mxu0 0.0
  %6903 = vmatpush1.xpose.msra.mxu0 0.0
  %6904 = vmatprep.subr.mxu0 0.0
  %6905 = vmatpush1.xpose.msra.mxu0 0.0
  %6906 = vmatprep.subr.mxu0 0.0
  %6907 = vmatpush1.xpose.msra.mxu0 0.0
  %6908 = vmatprep.subr.mxu0 0.0
  %6909 = vmatpush1.xpose.msra.mxu0 0.0
  %6910 = vmatprep.subr.mxu0 0.0
  %6911 = vmatpush1.xpose.msra.mxu0 0.0
  %6912 = vmatprep.subr.mxu0 0.0
  %6913 = vmatpush1.xpose.msra.mxu0 0.0
  %6914 = vmatprep.subr.mxu0 0.0
  %6915 = vmatpush1.xpose.msra.mxu0 0.0
  %6916 = vmatprep.subr.mxu0 0.0
  %6917 = vmatpush1.xpose.msra.mxu0 0.0
  %6918 = vmatprep.mubr.f32.mxu0 0.0
  %6919 = vmatmul.mubr.f32.gmra.mrb[0].mxu0 %v6839
  %v6920 = vpop.f32.mrb[0].mxu0
  %v6921 = vadd.f32 %v91, %v6920
  %v6922 = vpop.f32.mrb[0].mxu0
  %6923 = vmatprep.mubr.f32.mxu0 0.0
  %6924 = vmatmul.mubr.f32.gmra.mrb[0].mxu0 %v6840
  %v6925 = vpop.f32.mrb[0].mxu0
  %v6926 = vadd.f32 %v92, %v6925
  %v6927 = vpop.f32.mrb[0].mxu0
  %6928 = vmatprep.mubr.f32.mxu0 0.0
  %6929 = vmatmul.mubr.f32.gmra.mrb[0].mxu0 %v6841
  %v6930 = vpop.f32.mrb[0].mxu0
  %v6931 = vadd.f32 %v93, %v6930
  %v6932 = vpop.f32.mrb[0].mxu0
  %6933 = vmatprep.mubr.f32.mxu0 0.0
  %6934 = vmatmul.mubr.f32.gmra.mrb[0].mxu0 %v6842
  %v6935 = vpop.f32.mrb[0].mxu0
  %v6936 = vadd.f32 %v94, %v6935
  %v6937 = vpop.f32.mrb[0].mxu0
  %6938 = vmatprep.mubr.f32.mxu0 0.0
  %6939 = vmatmul.mubr.f32.gmra.mrb[0].mxu0 %v6843
  %v6940 = vpop.f32.mrb[0].mxu0
  %v6941 = vadd.f32 %v95, %v6940
  %v6942 = vpop.f32.mrb[0].mxu0
  %6943 = vdwg.mxu0
  %v6944 = vsel %vm601, %v6921, -inf
  %6945 = vmax.xlane.f32.xlu0 %v6944
  %v6946 = vpop.xlane.xlu0 %6945
  %v6947 = vsel %vm601, %v6926, -inf
  %6948 = vmax.xlane.f32.xlu0 %v6947
  %v6949 = vpop.xlane.xlu0 %6948
  %v6950 = vsel %vm601, %v6931, -inf
  %6951 = vmax.xlane.f32.xlu0 %v6950
  %v6952 = vpop.xlane.xlu0 %6951
  %v6953 = vsel %vm601, %v6936, -inf
  %6954 = vmax.xlane.f32.xlu0 %v6953
  %v6955 = vpop.xlane.xlu0 %6954
  %v6956 = vsel %vm601, %v6941, -inf
  %6957 = vmax.xlane.f32.xlu0 %v6956
  %v6958 = vpop.xlane.xlu0 %6957
  %v6959 = vsub.f32 %v6921, %v6946
  %v6960 = vsub.f32 %v6926, %v6949
  %v6961 = vsub.f32 %v6931, %v6952
  %v6962 = vsub.f32 %v6936, %v6955
  %v6963 = vsub.f32 %v6941, %v6958
  %v6964 = vmul.f32 %v6959, 1.442695
  %v6965 = vpow.pop %v6964
  %v6966 = vmul.f32 %v6960, 1.442695
  %v6967 = vpow.pop %v6966
  %v6968 = vmul.f32 %v6961, 1.442695
  %v6969 = vpow.pop %v6968
  %v6970 = vmul.f32 %v6962, 1.442695
  %v6971 = vpow.pop %v6970
  %v6972 = vmul.f32 %v6963, 1.442695
  %v6973 = vpow.pop %v6972
  %v6974 = vsel %vm601, %v6965, 0.0
  %6975 = vadd.xlane.f32.xlu0 %v6974
  %v6976 = vpop.xlane.xlu0 %6975
  %v6977 = vsel %vm601, %v6967, 0.0
  %6978 = vadd.xlane.f32.xlu0 %v6977
  %v6979 = vpop.xlane.xlu0 %6978
  %v6980 = vsel %vm601, %v6969, 0.0
  %6981 = vadd.xlane.f32.xlu0 %v6980
  %v6982 = vpop.xlane.xlu0 %6981
  %v6983 = vsel %vm601, %v6971, 0.0
  %6984 = vadd.xlane.f32.xlu0 %v6983
  %v6985 = vpop.xlane.xlu0 %6984
  %v6986 = vsel %vm601, %v6973, 0.0
  %6987 = vadd.xlane.f32.xlu0 %v6986
  %v6988 = vpop.xlane.xlu0 %6987
  %v6989 = vrcp.pop %v6976
  %v6990 = vrcp.pop %v6979
  %v6991 = vrcp.pop %v6982
  %v6992 = vrcp.pop %v6985
  %v6993 = vrcp.pop %v6988
  %v6994 = vmul.f32 %v6965, %v6989
  %v6995 = vmul.f32 %v6967, %v6990
  %v6996 = vmul.f32 %v6969, %v6991
  %v6997 = vmul.f32 %v6971, %v6992
  %v6998 = vmul.f32 %v6973, %v6993
  %v7000 = vsel %vm601, %v6994, 0
  %v7003 = vsel %vm601, %v6995, 0
  %v7006 = vsel %vm601, %v6996, 0
  %v7009 = vsel %vm601, %v6997, 0
  %v7012 = vsel %vm601, %v6998, 0
  %7014 = vmatprep.subr.mxu0 0.0
  %7015 = vmatpush1.msra.mxu0 %v6849
  %7016 = vmatprep.subr.mxu0 0.0
  %7017 = vmatpush1.msra.mxu0 %v6850
  %7018 = vmatprep.subr.mxu0 0.0
  %7019 = vmatpush1.msra.mxu0 %v6851
  %7020 = vmatprep.subr.mxu0 0.0
  %7021 = vmatpush1.msra.mxu0 %v6852
  %7022 = vmatprep.subr.mxu0 0.0
  %7023 = vmatpush1.msra.mxu0 %v6853
  %7024 = vmatprep.subr.mxu0 0.0
  %7025 = vmatpush1.msra.mxu0 0.0
  %7026 = vmatprep.subr.mxu0 0.0
  %7027 = vmatpush1.msra.mxu0 0.0
  %7028 = vmatprep.subr.mxu0 0.0
  %7029 = vmatpush1.msra.mxu0 0.0
  %7030 = vmatprep.subr.mxu0 0.0
  %7031 = vmatpush1.msra.mxu0 0.0
  %7032 = vmatprep.subr.mxu0 0.0
  %7033 = vmatpush1.msra.mxu0 0.0
  %7034 = vmatprep.subr.mxu0 0.0
  %7035 = vmatpush1.msra.mxu0 0.0
  %7036 = vmatprep.subr.mxu0 0.0
  %7037 = vmatpush1.msra.mxu0 0.0
  %7038 = vmatprep.subr.mxu0 0.0
  %7039 = vmatpush1.msra.mxu0 0.0
  %7040 = vmatprep.subr.mxu0 0.0
  %7041 = vmatpush1.msra.mxu0 0.0
  %7042 = vmatprep.subr.mxu0 0.0
  %7043 = vmatpush1.msra.mxu0 0.0
  %7044 = vmatprep.subr.mxu0 0.0
  %7045 = vmatpush1.msra.mxu0 0.0
  %7046 = vmatprep.subr.mxu0 0.0
  %7047 = vmatpush1.msra.mxu0 0.0
  %7048 = vmatprep.subr.mxu0 0.0
  %7049 = vmatpush1.msra.mxu0 0.0
  %7050 = vmatprep.subr.mxu0 0.0
  %7051 = vmatpush1.msra.mxu0 0.0
  %7052 = vmatprep.subr.mxu0 0.0
  %7053 = vmatpush1.msra.mxu0 0.0
  %7054 = vmatprep.subr.mxu0 0.0
  %7055 = vmatpush1.msra.mxu0 0.0
  %7056 = vmatprep.subr.mxu0 0.0
  %7057 = vmatpush1.msra.mxu0 0.0
  %7058 = vmatprep.subr.mxu0 0.0
  %7059 = vmatpush1.msra.mxu0 0.0
  %7060 = vmatprep.subr.mxu0 0.0
  %7061 = vmatpush1.msra.mxu0 0.0
  %7062 = vmatprep.subr.mxu0 0.0
  %7063 = vmatpush1.msra.mxu0 0.0
  %7064 = vmatprep.subr.mxu0 0.0
  %7065 = vmatpush1.msra.mxu0 0.0
  %7066 = vmatprep.subr.mxu0 0.0
  %7067 = vmatpush1.msra.mxu0 0.0
  %7068 = vmatprep.subr.mxu0 0.0
  %7069 = vmatpush1.msra.mxu0 0.0
  %7070 = vmatprep.subr.mxu0 0.0
  %7071 = vmatpush1.msra.mxu0 0.0
  %7072 = vmatprep.subr.mxu0 0.0
  %7073 = vmatpush1.msra.mxu0 0.0
  %7074 = vmatprep.subr.mxu0 0.0
  %7075 = vmatpush1.msra.mxu0 0.0
  %7076 = vmatprep.subr.mxu0 0.0
  %7077 = vmatpush1.msra.mxu0 0.0
  %7078 = vmatprep.mubr.f32.mxu0 0.0
  %7079 = vmatmul.mubr.f32.gmra.mrb[0].mxu0 %v7000
  %v7080 = vpop.f32.mrb[0].mxu0
  %v7081 = vadd.f32 0.0, %v7080
  %v7082 = vpop.f32.mrb[0].mxu0
  %7083 = vmatprep.mubr.f32.mxu0 0.0
  %7084 = vmatmul.mubr.f32.gmra.mrb[0].mxu0 %v7003
  %v7085 = vpop.f32.mrb[0].mxu0
  %v7086 = vadd.f32 0.0, %v7085
  %v7087 = vpop.f32.mrb[0].mxu0
  %7088 = vmatprep.mubr.f32.mxu0 0.0
  %7089 = vmatmul.mubr.f32.gmra.mrb[0].mxu0 %v7006
  %v7090 = vpop.f32.mrb[0].mxu0
  %v7091 = vadd.f32 0.0, %v7090
  %v7092 = vpop.f32.mrb[0].mxu0
  %7093 = vmatprep.mubr.f32.mxu0 0.0
  %7094 = vmatmul.mubr.f32.gmra.mrb[0].mxu0 %v7009
  %v7095 = vpop.f32.mrb[0].mxu0
  %v7096 = vadd.f32 0.0, %v7095
  %v7097 = vpop.f32.mrb[0].mxu0
  %7098 = vmatprep.mubr.f32.mxu0 0.0
  %7099 = vmatmul.mubr.f32.gmra.mrb[0].mxu0 %v7012
  %v7100 = vpop.f32.mrb[0].mxu0
  %v7101 = vadd.f32 0.0, %v7100
  %v7102 = vpop.f32.mrb[0].mxu0
  %7103 = vdwg.mxu0
  %7104 = vst [vmem:[#allocation3 + $0x8] sm:$0xff] %v7081
  %7105 = vst [vmem:[#allocation3 + $0x18] sm:$0xff] %v7086
  %7106 = vst [vmem:[#allocation3 + $0x28] sm:$0xff] %v7091
  %7107 = vst [vmem:[#allocation3 + $0x38] sm:$0xff] %v7096
  %7108 = vst [vmem:[#allocation3 + $0x48] sm:$0xff] %v7101
  %v7109 = vld [vmem:[#allocation3] sm:$0xff]
  %v7110 = vld [vmem:[#allocation3 + $0x8] sm:$0xff]
  %v7111 = vld [vmem:[#allocation3 + $0x10] sm:$0xff]
  %v7112 = vld [vmem:[#allocation3 + $0x18] sm:$0xff]
  %v7113 = vld [vmem:[#allocation3 + $0x20] sm:$0xff]
  %v7114 = vld [vmem:[#allocation3 + $0x28] sm:$0xff]
  %v7115 = vld [vmem:[#allocation3 + $0x30] sm:$0xff]
  %v7116 = vld [vmem:[#allocation3 + $0x38] sm:$0xff]
  %v7117 = vld [vmem:[#allocation3 + $0x40] sm:$0xff]
  %v7118 = vld [vmem:[#allocation3 + $0x48] sm:$0xff]
  %s7119 = scalar_lea.vmem %s3, 1024
  %v7120 = vld [vmem:[%s7119] sm:$0xff]
  %v7121 = vld [vmem:[%s7119 + $0x8] sm:$0xff]
  %v7122 = vld [vmem:[%s7119 + $0x10] sm:$0xff]
  %v7123 = vld [vmem:[%s7119 + $0x18] sm:$0xff]
  %v7124 = vld [vmem:[%s7119 + $0x20] sm:$0xff]
  %v7125 = vld [vmem:[%s7119 + $0x28] sm:$0xff]
  %v7126 = vld [vmem:[%s7119 + $0x30] sm:$0xff]
  %v7127 = vld [vmem:[%s7119 + $0x38] sm:$0xff]
  %v7128 = vld [vmem:[%s7119 + $0x40] sm:$0xff]
  %v7129 = vld [vmem:[%s7119 + $0x48] sm:$0xff]
  %v7130 = vld [vmem:[%s7119 + $0x50] sm:$0xff]
  %v7131 = vld [vmem:[%s7119 + $0x58] sm:$0xff]
  %v7132 = vld [vmem:[%s7119 + $0x60] sm:$0xff]
  %v7133 = vld [vmem:[%s7119 + $0x68] sm:$0xff]
  %v7134 = vld [vmem:[%s7119 + $0x70] sm:$0xff]
  %v7135 = vld [vmem:[%s7119 + $0x78] sm:$0xff]
  %v7136 = vld [vmem:[%s7119 + $0x80] sm:$0xff]
  %v7137 = vld [vmem:[%s7119 + $0x88] sm:$0xff]
  %v7138 = vld [vmem:[%s7119 + $0x90] sm:$0xff]
  %v7139 = vld [vmem:[%s7119 + $0x98] sm:$0xff]
  %v7140 = vld [vmem:[%s7119 + $0xa0] sm:$0xff]
  %v7141 = vld [vmem:[%s7119 + $0xa8] sm:$0xff]
  %v7142 = vld [vmem:[%s7119 + $0xb0] sm:$0xff]
  %v7143 = vld [vmem:[%s7119 + $0xb8] sm:$0xff]
  %v7144 = vld [vmem:[%s7119 + $0xc0] sm:$0xff]
  %v7145 = vld [vmem:[%s7119 + $0xc8] sm:$0xff]
  %v7146 = vld [vmem:[%s7119 + $0xd0] sm:$0xff]
  %v7147 = vld [vmem:[%s7119 + $0xd8] sm:$0xff]
  %v7148 = vld [vmem:[%s7119 + $0xe0] sm:$0xff]
  %v7149 = vld [vmem:[%s7119 + $0xe8] sm:$0xff]
  %v7150 = vld [vmem:[%s7119 + $0xf0] sm:$0xff]
  %v7151 = vld [vmem:[%s7119 + $0xf8] sm:$0xff]
  %s7152 = scalar_lea.vmem %s4, 4
  %v7153 = vld [vmem:[%s7152] sm:$0x1]
  %v7155 = vlaneseq
  %v7156 = vshrl.u32 %v7155, 7
  %v7157 = vsub.s32 0, %v7156
  %v7158 = vrot.slane %v7153, %v7157
  %7160 = vmatprep.subr.mxu0 0.0
  %7161 = vmatpush1.msra.mxu0 %v7120
  %7162 = vmatprep.subr.mxu0 0.0
  %7163 = vmatpush1.msra.mxu0 %v7121
  %7164 = vmatprep.subr.mxu0 0.0
  %7165 = vmatpush1.msra.mxu0 %v7122
  %7166 = vmatprep.subr.mxu0 0.0
  %7167 = vmatpush1.msra.mxu0 %v7123
  %7168 = vmatprep.subr.mxu0 0.0
  %7169 = vmatpush1.msra.mxu0 %v7124
  %7170 = vmatprep.subr.mxu0 0.0
  %7171 = vmatpush1.msra.mxu0 %v7125
  %7172 = vmatprep.subr.mxu0 0.0
  %7173 = vmatpush1.msra.mxu0 %v7126
  %7174 = vmatprep.subr.mxu0 0.0
  %7175 = vmatpush1.msra.mxu0 %v7127
  %7176 = vmatprep.subr.mxu0 0.0
  %7177 = vmatpush1.msra.mxu0 %v7128
  %7178 = vmatprep.subr.mxu0 0.0
  %7179 = vmatpush1.msra.mxu0 %v7129
  %7180 = vmatprep.subr.mxu0 0.0
  %7181 = vmatpush1.msra.mxu0 %v7130
  %7182 = vmatprep.subr.mxu0 0.0
  %7183 = vmatpush1.msra.mxu0 %v7131
  %7184 = vmatprep.subr.mxu0 0.0
  %7185 = vmatpush1.msra.mxu0 %v7132
  %7186 = vmatprep.subr.mxu0 0.0
  %7187 = vmatpush1.msra.mxu0 %v7133
  %7188 = vmatprep.subr.mxu0 0.0
  %7189 = vmatpush1.msra.mxu0 %v7134
  %7190 = vmatprep.subr.mxu0 0.0
  %7191 = vmatpush1.msra.mxu0 %v7135
  %7192 = vmatprep.subr.mxu0 0.0
  %7193 = vmatpush1.msra.mxu0 %v7136
  %7194 = vmatprep.subr.mxu0 0.0
  %7195 = vmatpush1.msra.mxu0 %v7137
  %7196 = vmatprep.subr.mxu0 0.0
  %7197 = vmatpush1.msra.mxu0 %v7138
  %7198 = vmatprep.subr.mxu0 0.0
  %7199 = vmatpush1.msra.mxu0 %v7139
  %7200 = vmatprep.subr.mxu0 0.0
  %7201 = vmatpush1.msra.mxu0 %v7140
  %7202 = vmatprep.subr.mxu0 0.0
  %7203 = vmatpush1.msra.mxu0 %v7141
  %7204 = vmatprep.subr.mxu0 0.0
  %7205 = vmatpush1.msra.mxu0 %v7142
  %7206 = vmatprep.subr.mxu0 0.0
  %7207 = vmatpush1.msra.mxu0 %v7143
  %7208 = vmatprep.subr.mxu0 0.0
  %7209 = vmatpush1.msra.mxu0 %v7144
  %7210 = vmatprep.subr.mxu0 0.0
  %7211 = vmatpush1.msra.mxu0 %v7145
  %7212 = vmatprep.subr.mxu0 0.0
  %7213 = vmatpush1.msra.mxu0 %v7146
  %7214 = vmatprep.subr.mxu0 0.0
  %7215 = vmatpush1.msra.mxu0 %v7147
  %7216 = vmatprep.subr.mxu0 0.0
  %7217 = vmatpush1.msra.mxu0 %v7148
  %7218 = vmatprep.subr.mxu0 0.0
  %7219 = vmatpush1.msra.mxu0 %v7149
  %7220 = vmatprep.subr.mxu0 0.0
  %7221 = vmatpush1.msra.mxu0 %v7150
  %7222 = vmatprep.subr.mxu0 0.0
  %7223 = vmatpush1.msra.mxu0 %v7151
  %7224 = vmatprep.mubr.f32.mxu0 %v7110
  %7225 = vmatmul.mubr.f32.gmra.mrb[0].mxu0 %v7109
  %v7226 = vpop.f32.mrb[0].mxu0
  %v7227 = vadd.f32 %v7158, %v7226
  %v7228 = vpop.f32.mrb[0].mxu0
  %7229 = vmatprep.mubr.f32.mxu0 %v7112
  %7230 = vmatmul.mubr.f32.gmra.mrb[0].mxu0 %v7111
  %v7231 = vpop.f32.mrb[0].mxu0
  %v7232 = vadd.f32 %v7158, %v7231
  %v7233 = vpop.f32.mrb[0].mxu0
  %7234 = vmatprep.mubr.f32.mxu0 %v7114
  %7235 = vmatmul.mubr.f32.gmra.mrb[0].mxu0 %v7113
  %v7236 = vpop.f32.mrb[0].mxu0
  %v7237 = vadd.f32 %v7158, %v7236
  %v7238 = vpop.f32.mrb[0].mxu0
  %7239 = vmatprep.mubr.f32.mxu0 %v7116
  %7240 = vmatmul.mubr.f32.gmra.mrb[0].mxu0 %v7115
  %v7241 = vpop.f32.mrb[0].mxu0
  %v7242 = vadd.f32 %v7158, %v7241
  %v7243 = vpop.f32.mrb[0].mxu0
  %7244 = vmatprep.mubr.f32.mxu0 %v7118
  %7245 = vmatmul.mubr.f32.gmra.mrb[0].mxu0 %v7117
  %v7246 = vpop.f32.mrb[0].mxu0
  %v7247 = vadd.f32 %v7158, %v7246
  %v7248 = vpop.f32.mrb[0].mxu0
  %7249 = vdwg.mxu0
  %v7250 = vadd.f32 %v6164, %v7227
  %v7251 = vadd.f32 %v6165, %v7232
  %v7252 = vadd.f32 %v6166, %v7237
  %v7253 = vadd.f32 %v6167, %v7242
  %v7254 = vadd.f32 %v6168, %v7247
  %s7255 = scalar_lea.vmem %s9, 4
  %v7256 = vld [vmem:[%s7255] sm:$0x1]
  %s7257 = scalar_lea.vmem %s10, 4
  %v7258 = vld [vmem:[%s7257] sm:$0x1]
  %v7259 = vsel %vm146, %v7250, 0.0
  %7260 = vadd.xlane.f32.xlu0 %v7259
  %v7261 = vpop.xlane.xlu0 %7260
  %v7262 = vsel %vm146, %v7251, 0.0
  %7263 = vadd.xlane.f32.xlu0 %v7262
  %v7264 = vpop.xlane.xlu0 %7263
  %v7265 = vsel %vm146, %v7252, 0.0
  %7266 = vadd.xlane.f32.xlu0 %v7265
  %v7267 = vpop.xlane.xlu0 %7266
  %v7268 = vsel %vm146, %v7253, 0.0
  %7269 = vadd.xlane.f32.xlu0 %v7268
  %v7270 = vpop.xlane.xlu0 %7269
  %v7271 = vsel %vm146, %v7254, 0.0
  %7272 = vadd.xlane.f32.xlu0 %v7271
  %v7273 = vpop.xlane.xlu0 %7272
  %v7274 = vmul.f32 %v7261, %v1198
  %v7275 = vmul.f32 %v7264, %v1198
  %v7276 = vmul.f32 %v7267, %v1198
  %v7277 = vmul.f32 %v7270, %v1198
  %v7278 = vmul.f32 %v7273, %v1198
  %v7279 = vsub.f32 %v7250, %v7274
  %v7280 = vsub.f32 %v7251, %v7275
  %v7281 = vsub.f32 %v7252, %v7276
  %v7282 = vsub.f32 %v7253, %v7277
  %v7283 = vsub.f32 %v7254, %v7278
  %v7284 = vmul.f32 %v7279, %v7279
  %v7285 = vmul.f32 %v7280, %v7280
  %v7286 = vmul.f32 %v7281, %v7281
  %v7287 = vmul.f32 %v7282, %v7282
  %v7288 = vmul.f32 %v7283, %v7283
  %v7289 = vsel %vm146, %v7284, 0.0
  %7290 = vadd.xlane.f32.xlu0 %v7289
  %v7291 = vpop.xlane.xlu0 %7290
  %v7292 = vsel %vm146, %v7285, 0.0
  %7293 = vadd.xlane.f32.xlu0 %v7292
  %v7294 = vpop.xlane.xlu0 %7293
  %v7295 = vsel %vm146, %v7286, 0.0
  %7296 = vadd.xlane.f32.xlu0 %v7295
  %v7297 = vpop.xlane.xlu0 %7296
  %v7298 = vsel %vm146, %v7287, 0.0
  %7299 = vadd.xlane.f32.xlu0 %v7298
  %v7300 = vpop.xlane.xlu0 %7299
  %v7301 = vsel %vm146, %v7288, 0.0
  %7302 = vadd.xlane.f32.xlu0 %v7301
  %v7303 = vpop.xlane.xlu0 %7302
  %v7304 = vmul.f32 %v7291, %v1198
  %v7305 = vmul.f32 %v7294, %v1198
  %v7306 = vmul.f32 %v7297, %v1198
  %v7307 = vmul.f32 %v7300, %v1198
  %v7308 = vmul.f32 %v7303, %v1198
  %v7309 = vadd.f32 %v7304, 1e-05
  %v7310 = vadd.f32 %v7305, 1e-05
  %v7311 = vadd.f32 %v7306, 1e-05
  %v7312 = vadd.f32 %v7307, 1e-05
  %v7313 = vadd.f32 %v7308, 1e-05
  %v7314 = vrsqrt.pop %v7309
  %v7315 = vrsqrt.pop %v7310
  %v7316 = vrsqrt.pop %v7311
  %v7317 = vrsqrt.pop %v7312
  %v7318 = vrsqrt.pop %v7313
  %v7319 = vmul.f32 %v7279, %v7314
  %v7320 = vmul.f32 %v7280, %v7315
  %v7321 = vmul.f32 %v7281, %v7316
  %v7322 = vmul.f32 %v7282, %v7317
  %v7323 = vmul.f32 %v7283, %v7318
  %v7325 = vlaneseq
  %v7326 = vshrl.u32 %v7325, 7
  %v7327 = vsub.s32 0, %v7326
  %v7328 = vrot.slane %v7256, %v7327
  %v7330 = vmul.f32 %v7319, %v7328
  %v7331 = vmul.f32 %v7320, %v7328
  %v7332 = vmul.f32 %v7321, %v7328
  %v7333 = vmul.f32 %v7322, %v7328
  %v7334 = vmul.f32 %v7323, %v7328
  %v7336 = vlaneseq
  %v7337 = vshrl.u32 %v7336, 7
  %v7338 = vsub.s32 0, %v7337
  %v7339 = vrot.slane %v7258, %v7338
  %v7341 = vadd.f32 %v7330, %v7339
  %v7342 = vadd.f32 %v7331, %v7339
  %v7343 = vadd.f32 %v7332, %v7339
  %v7344 = vadd.f32 %v7333, %v7339
  %v7345 = vadd.f32 %v7334, %v7339
  %s7346 = scalar_lea.vmem %s5, 96
  %v7347 = vld [vmem:[%s7346] sm:$0xff]
  %v7348 = vld [vmem:[%s7346 + $0x8] sm:$0xff]
  %v7349 = vld [vmem:[%s7346 + $0x10] sm:$0xf]
  %s7350 = scalar_lea.vmem %s6, 4
  %v7351 = vld [vmem:[%s7350] sm:$0x1]
  %v7353 = vlaneseq
  %v7354 = vshrl.u32 %v7353, 7
  %v7355 = vsub.s32 0, %v7354
  %v7356 = vrot.slane %v7351, %v7355
  %v7359 = vsel %vm146, %v7341, 0
  %v7362 = vsel %vm146, %v7342, 0
  %v7365 = vsel %vm146, %v7343, 0
  %v7368 = vsel %vm146, %v7344, 0
  %v7371 = vsel %vm146, %v7345, 0
  %v7374 = vsel %vm162, %v7349, 0
  %7376 = vmatprep.subr.mxu0 0.0
  %7377 = vmatpush1.msra.mxu0 %v7347
  %7378 = vmatprep.subr.mxu0 0.0
  %7379 = vmatpush1.msra.mxu0 %v7348
  %7380 = vmatprep.subr.mxu0 0.0
  %7381 = vmatpush1.msra.mxu0 %v7374
  %7382 = vmatprep.subr.mxu0 0.0
  %7383 = vmatpush1.msra.mxu0 0.0
  %7384 = vmatprep.subr.mxu0 0.0
  %7385 = vmatpush1.msra.mxu0 0.0
  %7386 = vmatprep.subr.mxu0 0.0
  %7387 = vmatpush1.msra.mxu0 0.0
  %7388 = vmatprep.subr.mxu0 0.0
  %7389 = vmatpush1.msra.mxu0 0.0
  %7390 = vmatprep.subr.mxu0 0.0
  %7391 = vmatpush1.msra.mxu0 0.0
  %7392 = vmatprep.subr.mxu0 0.0
  %7393 = vmatpush1.msra.mxu0 0.0
  %7394 = vmatprep.subr.mxu0 0.0
  %7395 = vmatpush1.msra.mxu0 0.0
  %7396 = vmatprep.subr.mxu0 0.0
  %7397 = vmatpush1.msra.mxu0 0.0
  %7398 = vmatprep.subr.mxu0 0.0
  %7399 = vmatpush1.msra.mxu0 0.0
  %7400 = vmatprep.subr.mxu0 0.0
  %7401 = vmatpush1.msra.mxu0 0.0
  %7402 = vmatprep.subr.mxu0 0.0
  %7403 = vmatpush1.msra.mxu0 0.0
  %7404 = vmatprep.subr.mxu0 0.0
  %7405 = vmatpush1.msra.mxu0 0.0
  %7406 = vmatprep.subr.mxu0 0.0
  %7407 = vmatpush1.msra.mxu0 0.0
  %7408 = vmatprep.subr.mxu0 0.0
  %7409 = vmatpush1.msra.mxu0 0.0
  %7410 = vmatprep.subr.mxu0 0.0
  %7411 = vmatpush1.msra.mxu0 0.0
  %7412 = vmatprep.subr.mxu0 0.0
  %7413 = vmatpush1.msra.mxu0 0.0
  %7414 = vmatprep.subr.mxu0 0.0
  %7415 = vmatpush1.msra.mxu0 0.0
  %7416 = vmatprep.subr.mxu0 0.0
  %7417 = vmatpush1.msra.mxu0 0.0
  %7418 = vmatprep.subr.mxu0 0.0
  %7419 = vmatpush1.msra.mxu0 0.0
  %7420 = vmatprep.subr.mxu0 0.0
  %7421 = vmatpush1.msra.mxu0 0.0
  %7422 = vmatprep.subr.mxu0 0.0
  %7423 = vmatpush1.msra.mxu0 0.0
  %7424 = vmatprep.subr.mxu0 0.0
  %7425 = vmatpush1.msra.mxu0 0.0
  %7426 = vmatprep.subr.mxu0 0.0
  %7427 = vmatpush1.msra.mxu0 0.0
  %7428 = vmatprep.subr.mxu0 0.0
  %7429 = vmatpush1.msra.mxu0 0.0
  %7430 = vmatprep.subr.mxu0 0.0
  %7431 = vmatpush1.msra.mxu0 0.0
  %7432 = vmatprep.subr.mxu0 0.0
  %7433 = vmatpush1.msra.mxu0 0.0
  %7434 = vmatprep.subr.mxu0 0.0
  %7435 = vmatpush1.msra.mxu0 0.0
  %7436 = vmatprep.subr.mxu0 0.0
  %7437 = vmatpush1.msra.mxu0 0.0
  %7438 = vmatprep.subr.mxu0 0.0
  %7439 = vmatpush1.msra.mxu0 0.0
  %7440 = vmatprep.mubr.f32.mxu0 0.0
  %7441 = vmatmul.mubr.f32.gmra.mrb[0].mxu0 %v7359
  %v7442 = vpop.f32.mrb[0].mxu0
  %v7443 = vadd.f32 %v7356, %v7442
  %v7444 = vpop.f32.mrb[0].mxu0
  %7445 = vmatprep.mubr.f32.mxu0 0.0
  %7446 = vmatmul.mubr.f32.gmra.mrb[0].mxu0 %v7362
  %v7447 = vpop.f32.mrb[0].mxu0
  %v7448 = vadd.f32 %v7356, %v7447
  %v7449 = vpop.f32.mrb[0].mxu0
  %7450 = vmatprep.mubr.f32.mxu0 0.0
  %7451 = vmatmul.mubr.f32.gmra.mrb[0].mxu0 %v7365
  %v7452 = vpop.f32.mrb[0].mxu0
  %v7453 = vadd.f32 %v7356, %v7452
  %v7454 = vpop.f32.mrb[0].mxu0
  %7455 = vmatprep.mubr.f32.mxu0 0.0
  %7456 = vmatmul.mubr.f32.gmra.mrb[0].mxu0 %v7368
  %v7457 = vpop.f32.mrb[0].mxu0
  %v7458 = vadd.f32 %v7356, %v7457
  %v7459 = vpop.f32.mrb[0].mxu0
  %7460 = vmatprep.mubr.f32.mxu0 0.0
  %7461 = vmatmul.mubr.f32.gmra.mrb[0].mxu0 %v7371
  %v7462 = vpop.f32.mrb[0].mxu0
  %v7463 = vadd.f32 %v7356, %v7462
  %v7464 = vpop.f32.mrb[0].mxu0
  %7465 = vdwg.mxu0
  %v7466 = vmax.f32 %v7443, 0.0
  %v7467 = vmax.f32 %v7448, 0.0
  %v7468 = vmax.f32 %v7453, 0.0
  %v7469 = vmax.f32 %v7458, 0.0
  %v7470 = vmax.f32 %v7463, 0.0
  %s7471 = scalar_lea.vmem %s7, 256
  %v7472 = vld [vmem:[%s7471] sm:$0xff]
  %v7473 = vld [vmem:[%s7471 + $0x8] sm:$0xff]
  %v7474 = vld [vmem:[%s7471 + $0x10] sm:$0xff]
  %v7475 = vld [vmem:[%s7471 + $0x18] sm:$0xff]
  %v7476 = vld [vmem:[%s7471 + $0x20] sm:$0xff]
  %v7477 = vld [vmem:[%s7471 + $0x28] sm:$0xff]
  %v7478 = vld [vmem:[%s7471 + $0x30] sm:$0xff]
  %v7479 = vld [vmem:[%s7471 + $0x38] sm:$0xff]
  %s7480 = scalar_lea.vmem %s8, 4
  %v7481 = vld [vmem:[%s7480] sm:$0x1]
  %v7483 = vlaneseq
  %v7484 = vshrl.u32 %v7483, 7
  %v7485 = vsub.s32 0, %v7484
  %v7486 = vrot.slane %v7481, %v7485
  %v7489 = vsel %vm1409, %v7466, 0
  %v7492 = vsel %vm1409, %v7467, 0
  %v7495 = vsel %vm1409, %v7468, 0
  %v7498 = vsel %vm1409, %v7469, 0
  %v7501 = vsel %vm1409, %v7470, 0
  %7503 = vmatprep.subr.mxu0 0.0
  %7504 = vmatpush1.msra.mxu0 %v7472
  %7505 = vmatprep.subr.mxu0 0.0
  %7506 = vmatpush1.msra.mxu0 %v7473
  %7507 = vmatprep.subr.mxu0 0.0
  %7508 = vmatpush1.msra.mxu0 %v7474
  %7509 = vmatprep.subr.mxu0 0.0
  %7510 = vmatpush1.msra.mxu0 %v7475
  %7511 = vmatprep.subr.mxu0 0.0
  %7512 = vmatpush1.msra.mxu0 %v7476
  %7513 = vmatprep.subr.mxu0 0.0
  %7514 = vmatpush1.msra.mxu0 %v7477
  %7515 = vmatprep.subr.mxu0 0.0
  %7516 = vmatpush1.msra.mxu0 %v7478
  %7517 = vmatprep.subr.mxu0 0.0
  %7518 = vmatpush1.msra.mxu0 %v7479
  %7519 = vmatprep.subr.mxu0 0.0
  %7520 = vmatpush1.msra.mxu0 0.0
  %7521 = vmatprep.subr.mxu0 0.0
  %7522 = vmatpush1.msra.mxu0 0.0
  %7523 = vmatprep.subr.mxu0 0.0
  %7524 = vmatpush1.msra.mxu0 0.0
  %7525 = vmatprep.subr.mxu0 0.0
  %7526 = vmatpush1.msra.mxu0 0.0
  %7527 = vmatprep.subr.mxu0 0.0
  %7528 = vmatpush1.msra.mxu0 0.0
  %7529 = vmatprep.subr.mxu0 0.0
  %7530 = vmatpush1.msra.mxu0 0.0
  %7531 = vmatprep.subr.mxu0 0.0
  %7532 = vmatpush1.msra.mxu0 0.0
  %7533 = vmatprep.subr.mxu0 0.0
  %7534 = vmatpush1.msra.mxu0 0.0
  %7535 = vmatprep.subr.mxu0 0.0
  %7536 = vmatpush1.msra.mxu0 0.0
  %7537 = vmatprep.subr.mxu0 0.0
  %7538 = vmatpush1.msra.mxu0 0.0
  %7539 = vmatprep.subr.mxu0 0.0
  %7540 = vmatpush1.msra.mxu0 0.0
  %7541 = vmatprep.subr.mxu0 0.0
  %7542 = vmatpush1.msra.mxu0 0.0
  %7543 = vmatprep.subr.mxu0 0.0
  %7544 = vmatpush1.msra.mxu0 0.0
  %7545 = vmatprep.subr.mxu0 0.0
  %7546 = vmatpush1.msra.mxu0 0.0
  %7547 = vmatprep.subr.mxu0 0.0
  %7548 = vmatpush1.msra.mxu0 0.0
  %7549 = vmatprep.subr.mxu0 0.0
  %7550 = vmatpush1.msra.mxu0 0.0
  %7551 = vmatprep.subr.mxu0 0.0
  %7552 = vmatpush1.msra.mxu0 0.0
  %7553 = vmatprep.subr.mxu0 0.0
  %7554 = vmatpush1.msra.mxu0 0.0
  %7555 = vmatprep.subr.mxu0 0.0
  %7556 = vmatpush1.msra.mxu0 0.0
  %7557 = vmatprep.subr.mxu0 0.0
  %7558 = vmatpush1.msra.mxu0 0.0
  %7559 = vmatprep.subr.mxu0 0.0
  %7560 = vmatpush1.msra.mxu0 0.0
  %7561 = vmatprep.subr.mxu0 0.0
  %7562 = vmatpush1.msra.mxu0 0.0
  %7563 = vmatprep.subr.mxu0 0.0
  %7564 = vmatpush1.msra.mxu0 0.0
  %7565 = vmatprep.subr.mxu0 0.0
  %7566 = vmatpush1.msra.mxu0 0.0
  %7567 = vmatprep.mubr.f32.mxu0 0.0
  %7568 = vmatmul.mubr.f32.gmra.mrb[0].mxu0 %v7489
  %v7569 = vpop.f32.mrb[0].mxu0
  %v7570 = vadd.f32 %v7486, %v7569
  %v7571 = vpop.f32.mrb[0].mxu0
  %7572 = vmatprep.mubr.f32.mxu0 0.0
  %7573 = vmatmul.mubr.f32.gmra.mrb[0].mxu0 %v7492
  %v7574 = vpop.f32.mrb[0].mxu0
  %v7575 = vadd.f32 %v7486, %v7574
  %v7576 = vpop.f32.mrb[0].mxu0
  %7577 = vmatprep.mubr.f32.mxu0 0.0
  %7578 = vmatmul.mubr.f32.gmra.mrb[0].mxu0 %v7495
  %v7579 = vpop.f32.mrb[0].mxu0
  %v7580 = vadd.f32 %v7486, %v7579
  %v7581 = vpop.f32.mrb[0].mxu0
  %7582 = vmatprep.mubr.f32.mxu0 0.0
  %7583 = vmatmul.mubr.f32.gmra.mrb[0].mxu0 %v7498
  %v7584 = vpop.f32.mrb[0].mxu0
  %v7585 = vadd.f32 %v7486, %v7584
  %v7586 = vpop.f32.mrb[0].mxu0
  %7587 = vmatprep.mubr.f32.mxu0 0.0
  %7588 = vmatmul.mubr.f32.gmra.mrb[0].mxu0 %v7501
  %v7589 = vpop.f32.mrb[0].mxu0
  %v7590 = vadd.f32 %v7486, %v7589
  %v7591 = vpop.f32.mrb[0].mxu0
  %7592 = vdwg.mxu0
  %v7593 = vadd.f32 %v7341, %v7570
  %v7594 = vadd.f32 %v7342, %v7575
  %v7595 = vadd.f32 %v7343, %v7580
  %v7596 = vadd.f32 %v7344, %v7585
  %v7597 = vadd.f32 %v7345, %v7590
  %s7598 = scalar_lea.vmem %s11, 4
  %v7599 = vld [vmem:[%s7598] sm:$0x1]
  %s7600 = scalar_lea.vmem %s12, 4
  %v7601 = vld [vmem:[%s7600] sm:$0x1]
  %v7602 = vsel %vm146, %v7593, 0.0
  %7603 = vadd.xlane.f32.xlu0 %v7602
  %v7604 = vpop.xlane.xlu0 %7603
  %v7605 = vsel %vm146, %v7594, 0.0
  %7606 = vadd.xlane.f32.xlu0 %v7605
  %v7607 = vpop.xlane.xlu0 %7606
  %v7608 = vsel %vm146, %v7595, 0.0
  %7609 = vadd.xlane.f32.xlu0 %v7608
  %v7610 = vpop.xlane.xlu0 %7609
  %v7611 = vsel %vm146, %v7596, 0.0
  %7612 = vadd.xlane.f32.xlu0 %v7611
  %v7613 = vpop.xlane.xlu0 %7612
  %v7614 = vsel %vm146, %v7597, 0.0
  %7615 = vadd.xlane.f32.xlu0 %v7614
  %v7616 = vpop.xlane.xlu0 %7615
  %v7617 = vmul.f32 %v7604, %v1198
  %v7618 = vmul.f32 %v7607, %v1198
  %v7619 = vmul.f32 %v7610, %v1198
  %v7620 = vmul.f32 %v7613, %v1198
  %v7621 = vmul.f32 %v7616, %v1198
  %v7622 = vsub.f32 %v7593, %v7617
  %v7623 = vsub.f32 %v7594, %v7618
  %v7624 = vsub.f32 %v7595, %v7619
  %v7625 = vsub.f32 %v7596, %v7620
  %v7626 = vsub.f32 %v7597, %v7621
  %v7627 = vmul.f32 %v7622, %v7622
  %v7628 = vmul.f32 %v7623, %v7623
  %v7629 = vmul.f32 %v7624, %v7624
  %v7630 = vmul.f32 %v7625, %v7625
  %v7631 = vmul.f32 %v7626, %v7626
  %v7632 = vsel %vm146, %v7627, 0.0
  %7633 = vadd.xlane.f32.xlu0 %v7632
  %v7634 = vpop.xlane.xlu0 %7633
  %v7635 = vsel %vm146, %v7628, 0.0
  %7636 = vadd.xlane.f32.xlu0 %v7635
  %v7637 = vpop.xlane.xlu0 %7636
  %v7638 = vsel %vm146, %v7629, 0.0
  %7639 = vadd.xlane.f32.xlu0 %v7638
  %v7640 = vpop.xlane.xlu0 %7639
  %v7641 = vsel %vm146, %v7630, 0.0
  %7642 = vadd.xlane.f32.xlu0 %v7641
  %v7643 = vpop.xlane.xlu0 %7642
  %v7644 = vsel %vm146, %v7631, 0.0
  %7645 = vadd.xlane.f32.xlu0 %v7644
  %v7646 = vpop.xlane.xlu0 %7645
  %v7647 = vmul.f32 %v7634, %v1198
  %v7648 = vmul.f32 %v7637, %v1198
  %v7649 = vmul.f32 %v7640, %v1198
  %v7650 = vmul.f32 %v7643, %v1198
  %v7651 = vmul.f32 %v7646, %v1198
  %v7652 = vadd.f32 %v7647, 1e-05
  %v7653 = vadd.f32 %v7648, 1e-05
  %v7654 = vadd.f32 %v7649, 1e-05
  %v7655 = vadd.f32 %v7650, 1e-05
  %v7656 = vadd.f32 %v7651, 1e-05
  %v7657 = vrsqrt.pop %v7652
  %v7658 = vrsqrt.pop %v7653
  %v7659 = vrsqrt.pop %v7654
  %v7660 = vrsqrt.pop %v7655
  %v7661 = vrsqrt.pop %v7656
  %v7662 = vmul.f32 %v7622, %v7657
  %v7663 = vmul.f32 %v7623, %v7658
  %v7664 = vmul.f32 %v7624, %v7659
  %v7665 = vmul.f32 %v7625, %v7660
  %v7666 = vmul.f32 %v7626, %v7661
  %v7668 = vlaneseq
  %v7669 = vshrl.u32 %v7668, 7
  %v7670 = vsub.s32 0, %v7669
  %v7671 = vrot.slane %v7599, %v7670
  %v7673 = vmul.f32 %v7662, %v7671
  %v7674 = vmul.f32 %v7663, %v7671
  %v7675 = vmul.f32 %v7664, %v7671
  %v7676 = vmul.f32 %v7665, %v7671
  %v7677 = vmul.f32 %v7666, %v7671
  %v7679 = vlaneseq
  %v7680 = vshrl.u32 %v7679, 7
  %v7681 = vsub.s32 0, %v7680
  %v7682 = vrot.slane %v7601, %v7681
  %v7684 = vadd.f32 %v7673, %v7682
  %v7685 = vadd.f32 %v7674, %v7682
  %v7686 = vadd.f32 %v7675, %v7682
  %v7687 = vadd.f32 %v7676, %v7682
  %v7688 = vadd.f32 %v7677, %v7682
  %v7689 = vsel %vm146, %v7684, -inf
  %v7690 = vsel %vm146, %v7685, -inf
  %vm7691 = vcmask 158720
  %v7692 = vsel %vm7691, %v7686, -inf
  %v7693 = vmax.f32 %v7689, %v7690
  %v7694 = vmax.f32 %v7693, %v7692
  %v7695 = vrot.slane %v7694, 4
  %v7696 = vmax.f32 %v7694, %v7695
  %v7697 = vrot.slane %v7696, 2
  %v7698 = vmax.f32 %v7696, %v7697
  %v7699 = vrot.slane %v7698, 1
  %v7700 = vmax.f32 %v7698, %v7699
  %v7701 = vsub.f32 %v7684, %v7700
  %v7702 = vsub.f32 %v7685, %v7700
  %v7703 = vsub.f32 %v7686, %v7700
  %v7704 = vmul.f32 %v7701, 1.442695
  %v7705 = vpow.pop %v7704
  %v7706 = vmul.f32 %v7702, 1.442695
  %v7707 = vpow.pop %v7706
  %v7708 = vmul.f32 %v7703, 1.442695
  %v7709 = vpow.pop %v7708
  %v7710 = vsel %vm146, %v7705, 0.0
  %v7711 = vsel %vm146, %v7707, 0.0
  %v7712 = vadd.f32 %v7710, %v7711
  %v7713 = vsel %vm7691, %v7709, 0.0
  %v7714 = vadd.f32 %v7712, %v7713
  %v7715 = vrot.slane %v7714, 4
  %v7716 = vadd.f32 %v7714, %v7715
  %v7717 = vrot.slane %v7716, 2
  %v7718 = vadd.f32 %v7716, %v7717
  %v7719 = vrot.slane %v7718, 1
  %v7720 = vadd.f32 %v7718, %v7719
  %v7721 = vrcp.pop %v7720
  %v7722 = vmul.f32 %v7705, %v7721
  %v7723 = vmul.f32 %v7707, %v7721
  %v7724 = vmul.f32 %v7709, %v7721
  %7725 = vxpose.xlu0.b32.start [1/16] %v7722, 128
  %7726 = vxpose.xlu0.b32.cont [2/16] %v7723, 128
  %7727 = vxpose.xlu0.b32.cont [3/16] %v7724, 128
  %7728 = vxpose.xlu0.b32.cont [4/16] 0.0, 128
  %7729 = vxpose.xlu0.b32.cont [5/16] 0.0, 128
  %7730 = vxpose.xlu0.b32.cont [6/16] 0.0, 128
  %7731 = vxpose.xlu0.b32.cont [7/16] 0.0, 128
  %7732 = vxpose.xlu0.b32.cont [8/16] 0.0, 128
  %7733 = vxpose.xlu0.b32.cont [9/16] 0.0, 128
  %7734 = vxpose.xlu0.b32.cont [10/16] 0.0, 128
  %7735 = vxpose.xlu0.b32.cont [11/16] 0.0, 128
  %7736 = vxpose.xlu0.b32.cont [12/16] 0.0, 128
  %7737 = vxpose.xlu0.b32.cont [13/16] 0.0, 128
  %7738 = vxpose.xlu0.b32.cont [14/16] 0.0, 128
  %7739 = vxpose.xlu0.b32.cont [15/16] 0.0, 128
  %7740 = vxpose.xlu0.b32.end [16/16] 0.0, 128
  %v7741 = vpop.trf.xlu0
  %v7742 = vpop.trf.xlu0
  %v7743 = vpop.trf.xlu0
  %v7744 = vpop.trf.xlu0
  %v7745 = vpop.trf.xlu0
  %v7746 = vpop.trf.xlu0
  %v7747 = vpop.trf.xlu0
  %v7748 = vpop.trf.xlu0
  %v7749 = vpop.trf.xlu0
  %v7750 = vpop.trf.xlu0
  %v7751 = vpop.trf.xlu0
  %v7752 = vpop.trf.xlu0
  %v7753 = vpop.trf.xlu0
  %v7754 = vpop.trf.xlu0
  %v7755 = vpop.trf.xlu0
  %v7756 = vpop.trf.xlu0
  %v7757 = vadd.f32 %v7722, %v7741
  %v7758 = vadd.f32 %v7723, %v7742
  %v7759 = vadd.f32 %v7724, %v7743
  %v7760 = vmax.f32 %v7757, 0.0
  %v7761 = vmax.f32 %v7758, 0.0
  %v7762 = vmax.f32 %v7759, 0.0
  %v7763 = vmin.f32 %v7760, 1.0
  %v7764 = vmin.f32 %v7761, 1.0
  %v7765 = vmin.f32 %v7762, 1.0
  %7766 = vst.msk [vmem:[%s13] sm:$0xff] %vm146, %v7763
  %7767 = vst.msk [vmem:[%s13 + $0x8] sm:$0xff] %vm146, %v7764
  %7768 = vst.msk [vmem:[%s13 + $0x10] sm:$0xf] %vm7691, %v7765
  %vm7769 = vcmask 162820
  %v7770 = vsel %vm7769, %v7686, -inf
  %v7771 = vsel %vm146, %v7687, -inf
  %v7772 = vsel %vm146, %v7688, -inf
  %v7773 = vmax.f32 %v7770, %v7771
  %v7774 = vmax.f32 %v7773, %v7772
  %v7775 = vrot.slane %v7774, 4
  %v7776 = vmax.f32 %v7774, %v7775
  %v7777 = vrot.slane %v7776, 2
  %v7778 = vmax.f32 %v7776, %v7777
  %v7779 = vrot.slane %v7778, 1
  %v7780 = vmax.f32 %v7778, %v7779
  %v7781 = vsub.f32 %v7686, %v7780
  %v7782 = vsub.f32 %v7687, %v7780
  %v7783 = vsub.f32 %v7688, %v7780
  %v7784 = vmul.f32 %v7781, 1.442695
  %v7785 = vpow.pop %v7784
  %v7786 = vmul.f32 %v7782, 1.442695
  %v7787 = vpow.pop %v7786
  %v7788 = vmul.f32 %v7783, 1.442695
  %v7789 = vpow.pop %v7788
  %v7793 = vrot.slane %v7785, 4
  %v7794 = vrot.slane %v7787, 4
  %v7795 = vsel %vm162, %v7793, %v7794
  %v7796 = vrot.slane %v7789, 4
  %v7797 = vsel %vm162, %v7794, %v7796
  %v7801 = vsel %vm146, %v7795, 0.0
  %v7802 = vsel %vm146, %v7797, 0.0
  %v7803 = vadd.f32 %v7801, %v7802
  %v7804 = vsel %vm7691, %v7796, 0.0
  %v7805 = vadd.f32 %v7803, %v7804
  %v7806 = vrot.slane %v7805, 4
  %v7807 = vadd.f32 %v7805, %v7806
  %v7808 = vrot.slane %v7807, 2
  %v7809 = vadd.f32 %v7807, %v7808
  %v7810 = vrot.slane %v7809, 1
  %v7811 = vadd.f32 %v7809, %v7810
  %v7812 = vrcp.pop %v7811
  %v7813 = vmul.f32 %v7785, %v7812
  %v7814 = vmul.f32 %v7787, %v7812
  %v7815 = vmul.f32 %v7789, %v7812
  %v7819 = vrot.slane %v7813, 4
  %v7820 = vrot.slane %v7814, 4
  %v7821 = vsel %vm162, %v7819, %v7820
  %v7822 = vrot.slane %v7815, 4
  %v7823 = vsel %vm162, %v7820, %v7822
  %7827 = vxpose.xlu0.b32.start [1/16] %v7821, 128
  %7828 = vxpose.xlu0.b32.cont [2/16] %v7823, 128
  %7829 = vxpose.xlu0.b32.cont [3/16] %v7822, 128
  %7830 = vxpose.xlu0.b32.cont [4/16] 0.0, 128
  %7831 = vxpose.xlu0.b32.cont [5/16] 0.0, 128
  %7832 = vxpose.xlu0.b32.cont [6/16] 0.0, 128
  %7833 = vxpose.xlu0.b32.cont [7/16] 0.0, 128
  %7834 = vxpose.xlu0.b32.cont [8/16] 0.0, 128
  %7835 = vxpose.xlu0.b32.cont [9/16] 0.0, 128
  %7836 = vxpose.xlu0.b32.cont [10/16] 0.0, 128
  %7837 = vxpose.xlu0.b32.cont [11/16] 0.0, 128
  %7838 = vxpose.xlu0.b32.cont [12/16] 0.0, 128
  %7839 = vxpose.xlu0.b32.cont [13/16] 0.0, 128
  %7840 = vxpose.xlu0.b32.cont [14/16] 0.0, 128
  %7841 = vxpose.xlu0.b32.cont [15/16] 0.0, 128
  %7842 = vxpose.xlu0.b32.end [16/16] 0.0, 128
  %v7843 = vpop.trf.xlu0
  %v7844 = vpop.trf.xlu0
  %v7845 = vpop.trf.xlu0
  %v7846 = vpop.trf.xlu0
  %v7847 = vpop.trf.xlu0
  %v7848 = vpop.trf.xlu0
  %v7849 = vpop.trf.xlu0
  %v7850 = vpop.trf.xlu0
  %v7851 = vpop.trf.xlu0
  %v7852 = vpop.trf.xlu0
  %v7853 = vpop.trf.xlu0
  %v7854 = vpop.trf.xlu0
  %v7855 = vpop.trf.xlu0
  %v7856 = vpop.trf.xlu0
  %v7857 = vpop.trf.xlu0
  %v7858 = vpop.trf.xlu0
  %v7862 = vrot.slane %v7843, 4
  %v7863 = vrot.slane %v7844, 4
  %v7864 = vsel %vm162, %v7862, %v7863
  %v7865 = vrot.slane %v7845, 4
  %v7866 = vsel %vm162, %v7863, %v7865
  %v7870 = vadd.f32 %v7813, %v7862
  %v7871 = vadd.f32 %v7814, %v7864
  %v7872 = vadd.f32 %v7815, %v7866
  %v7873 = vmax.f32 %v7870, 0.0
  %v7874 = vmax.f32 %v7871, 0.0
  %v7875 = vmax.f32 %v7872, 0.0
  %v7876 = vmin.f32 %v7873, 1.0
  %v7877 = vmin.f32 %v7874, 1.0
  %v7878 = vmin.f32 %v7875, 1.0
  %s7879 = scalar_lea.vmem %s13, 24
  %7880 = vst.msk [vmem:[%s7879 - $0x4] sm:$0xf0] %vm7769, %v7876
  %7881 = vst.msk [vmem:[%s7879 + $0x4] sm:$0xff] %vm146, %v7877
  %7882 = vst.msk [vmem:[%s7879 + $0xc] sm:$0xff] %vm146, %v7878
  // Predicated region
  $region54: #{tpu_custom_call.1} parent=0 // pred_check
    _
  $region55: #{tpu_custom_call.1} parent=0 // pred_check_branch
    %7884 = sbr.rel (0) target = $region57
  $region56: #{tpu_custom_call.1} parent=0 // pred_region
    _
  $region57: #{tpu_custom_call.1} parent=0 // pred_fallthru
    _
  // Predicated region
  $region58: #{tpu_custom_call.1} parent=0 // pred_check
    _
  $region59: #{tpu_custom_call.1} parent=0 // pred_check_branch
    %7886 = sbr.rel (0) target = $region61
  $region60: #{tpu_custom_call.1} parent=0 // pred_region
    _
  $region61: #{tpu_custom_call.1} parent=0 // pred_fallthru
    _

</llo_original>
